<compile_context>
chip_gen: v6e
topology: v6e:2x2x1
jax: 0.10.0
libtpu: 0.0.40
codegen_flags: <defaults>
</compile_context>

<pallas_src>
import functools

import jax
import jax.numpy as jnp
from jax.experimental import pallas as pl
from jax.experimental.pallas import tpu as pltpu

_LANES = 128
_GROUP = 4  # bins gathered per shared threshold compare (power of 2)


# ---------------------------------------------------------------------------
# Pallas kernel
# ---------------------------------------------------------------------------
def _mtlu_kernel(x_ref, t_ref, o_ref, *, bin_num, inv_bin_width):
    # x_ref: (NB, C, T) f32
    # t_ref: (C, ng*G) uint32 -- bf16(weight) in high 16 bits, bf16(bias) low,
    #        padded along bins to a multiple of G by replicating the last bin.
    # o_ref: (NB, C, T) f32
    x = x_ref[...]
    tbl = t_ref[...]                      # hoisted: one full-table load per step
    half = bin_num // 2
    G = _GROUP
    ng = t_ref.shape[-1] // G

    # Scaled input; true bin index is clamp(floor(s) + half, 0, bin_num - 1).
    s = x * inv_bin_width

    # Within-group offset bits from the clamped integer bin index.
    idx_f = jnp.clip(jnp.floor(s) + float(half), 0.0, float(bin_num - 1))
    idx = idx_f.astype(jnp.int32)
    bit0 = (idx & 1) != 0
    bit1 = (idx & 2) != 0

    # Coarse gather: one threshold compare per group of G bins; G selects
    # sharing that mask keep the packed (weight, bias) entry for each
    # within-group offset.  Thresholds are integers, so `s >= g*G - half`
    # selects exactly the group containing clamp(floor(s)+half, 0, bin_num-1).
    sel = [tbl[:, r:r + 1] for r in range(G)]            # (C, 1) group-0 columns
    for g in range(1, ng):
        cond = s >= float(g * G - half)
        for r in range(G):
            col = tbl[:, g * G + r:g * G + r + 1]        # (C, 1) channel column
            sel[r] = jnp.where(cond, col, sel[r])

    # Fine gather: 2-level select on the bin-index low bits.
    sel01 = jnp.where(bit0, sel[1], sel[0])
    sel23 = jnp.where(bit0, sel[3], sel[2])
    psel = jnp.where(bit1, sel23, sel01)

    # Unpack: weight = high 16 bits (bf16 pattern, low mantissa zeroed),
    #         bias   = low 16 bits shifted up.  Bitcasts are free.
    w = pltpu.bitcast(psel & jnp.uint32(0xFFFF0000), jnp.float32)
    b = pltpu.bitcast(jnp.left_shift(psel, 16), jnp.float32)

    o_ref[...] = (x * w + b).astype(o_ref.dtype)


# ---------------------------------------------------------------------------
# Table packing (wrapper side)
# ---------------------------------------------------------------------------
def pack_mtlu_table(weight, bias, *, group=_GROUP):
    """Pack per-channel (weight, bias) tables into one uint32 per bin and pad
    the bin axis to a multiple of `group` by replicating the last bin."""
    w16 = jax.lax.bitcast_convert_type(
        weight.astype(jnp.bfloat16), jnp.uint16).astype(jnp.uint32)
    b16 = jax.lax.bitcast_convert_type(
        bias.astype(jnp.bfloat16), jnp.uint16).astype(jnp.uint32)
    packed = (w16 << 16) | b16
    bins = packed.shape[-1]
    padded = -(-bins // group) * group
    if padded != bins:
        packed = jnp.pad(packed, ((0, 0), (0, padded - bins)), mode="edge")
    return packed


# ---------------------------------------------------------------------------
# Tiling selection
# ---------------------------------------------------------------------------
def _ceil_to(a, m):
    return ((a + m - 1) // m) * m


def _choose_tiling(N, C, HW, *, itemsize=4, target_block_bytes=2 << 20,
                   max_lanes=4096):
    """Pick (batch_fold, hw_tile, padded_HW) for large lane-dense blocks."""
    hw128 = _ceil_to(HW, _LANES)
    per_lane = max(1, C * itemsize)
    budget_lanes = max(_LANES, (target_block_bytes // per_lane) // _LANES * _LANES)
    hw_tile = min(hw128, max_lanes, budget_lanes)
    # Balance tiles to minimize padding of the last spatial tile.
    n_hw = -(-hw128 // hw_tile)
    hw_tile = _ceil_to(-(-hw128 // n_hw), _LANES)
    hw_pad = n_hw * hw_tile

    nb = 1
    if n_hw == 1 and N > 1:
        # Small per-image plane: fold several images into one block.
        max_nb = max(1, target_block_bytes // (C * hw_tile * itemsize))
        for d in range(min(N, max_nb), 0, -1):
            if N % d == 0:
                nb = d
                break
    return nb, hw_tile, hw_pad


# ---------------------------------------------------------------------------
# Forward wrapper
# ---------------------------------------------------------------------------
def mtlu_forward(x, weight, bias, *, bin_num, bin_width):
    """x: (N, C, H, W) float32.  weight/bias: (C, bin_num) float32."""
    N, C, H, W = x.shape
    HW = H * W
    inv_bw = 1.0 / float(bin_width)

    nb, hw_tile, hw_pad = _choose_tiling(N, C, HW)

    x2 = x.reshape(N, C, HW)
    if hw_pad != HW:
        # Pad so the output block's last dim is a 128-multiple (unmasked vst).
        x2 = jnp.pad(x2, ((0, 0), (0, 0), (0, hw_pad - HW)))

    packed = pack_mtlu_table(weight, bias)      # (C, padded_bins) uint32
    pbins = packed.shape[-1]

    kernel = functools.partial(_mtlu_kernel, bin_num=bin_num,
                               inv_bin_width=inv_bw)

    grid = (N // nb, hw_pad // hw_tile)
    out = pl.pallas_call(
        kernel,
        out_shape=jax.ShapeDtypeStruct((N, C, hw_pad), x.dtype),
        grid_spec=pltpu.PrefetchScalarGridSpec(
            num_scalar_prefetch=0,
            grid=grid,
            in_specs=[
                pl.BlockSpec((nb, C, hw_tile), lambda n, h: (n, 0, h)),  # x tile
                pl.BlockSpec((C, pbins), lambda n, h: (0, 0)),           # table
            ],
            out_specs=pl.BlockSpec((nb, C, hw_tile), lambda n, h: (n, 0, h)),
        ),
        compiler_params=pltpu.CompilerParams(
            dimension_semantics=("parallel", "parallel"),
            vmem_limit_bytes=32 * 1024 * 1024,
        ),
    )(x2, packed)

    if hw_pad != HW:
        out = out[:, :, :HW]
    return out.reshape(N, C, H, W)


# ---------------------------------------------------------------------------
# Pure-JAX reference (same floor/clamp gather as the CUDA kernel; uses the
# reciprocal-multiply like the Pallas kernel so bin indices match bit-exactly)
# ---------------------------------------------------------------------------
def mtlu_reference(x, weight, bias, *, bin_num, bin_width):
    N, C, H, W = x.shape
    inv_bw = 1.0 / float(bin_width)
    idx = jnp.clip(
        jnp.floor(x * inv_bw).astype(jnp.int32) + bin_num // 2, 0, bin_num - 1)
    c_idx = jnp.arange(C).reshape(1, C, 1, 1)
    w_g = weight[c_idx, idx]
    b_g = bias[c_idx, idx]
    return x * w_g + b_g


if __name__ == "__main__":
    # MTLU_6 defaults: BinNum=122, BinWidth=0.1, FeatMapNum=64.
    BIN_NUM = 122
    BIN_WIDTH = 0.1
    FEAT_MAP_NUM = 64
    N, H, W = 2, 16, 16

    key = jax.random.PRNGKey(0)
    k_x, k_w, k_b = jax.random.split(key, 3)

    x = 2.0 * jax.random.normal(k_x, (N, FEAT_MAP_NUM, H, W), jnp.float32)

    # Parameters as initialized by MTLU_6.__init__ ...
    half = BIN_NUM // 2
    weight = jnp.zeros((FEAT_MAP_NUM, BIN_NUM), jnp.float32)
    weight = weight.at[:, half:-1].set(1.0)
    bias = jnp.zeros((FEAT_MAP_NUM, BIN_NUM), jnp.float32)
    bias = bias.at[:, -1].set(6.0)
    # ... plus a small "learned" perturbation so every bin is exercised.
    weight = weight + 0.01 * jax.random.normal(k_w, weight.shape, jnp.float32)
    bias = bias + 0.01 * jax.random.normal(k_b, bias.shape, jnp.float32)

    y = mtlu_forward(x, weight, bias, bin_num=BIN_NUM, bin_width=BIN_WIDTH)
    y = jax.block_until_ready(y)

    # The kernel applies the table at bf16 precision; verify against a
    # reference using the identically-rounded tables.
    w_tbl = weight.astype(jnp.bfloat16).astype(jnp.float32)
    b_tbl = bias.astype(jnp.bfloat16).astype(jnp.float32)
    y_ref = mtlu_reference(x, w_tbl, b_tbl, bin_num=BIN_NUM, bin_width=BIN_WIDTH)

    assert y.shape == x.shape and y.dtype == x.dtype
    assert jnp.allclose(y, y_ref, rtol=1e-5, atol=1e-5), "mismatch vs reference"

    # TODO(synk): MTLU_AF.backward (grad_input / grad_weight / grad_bias) is not
    # implemented here; only the forward pass is translated.
    print("KERNEL_OK")
</pallas_src>

<mosaic_0001>
module attributes {stable_mosaic.version = 11 : i64} {
  func.func @_mtlu_kernel(%arg0: i32, %arg1: i32, %arg2: memref<2x64x256xf32, #tpu.memory_space<vmem>>, %arg3: memref<64x124xi32, #tpu.memory_space<vmem>>, %arg4: memref<2x64x256xf32, #tpu.memory_space<vmem>>) attributes {dimension_semantics = [#tpu.dimension_semantics<parallel>, #tpu.dimension_semantics<parallel>], iteration_bounds = array<i64: 1, 1>, scalar_prefetch = 0 : i64, scratch_operands = 0 : i64, tpu.core_type = #tpu.core_type<tc>, window_params = [{transform_indices = @transform_0, window_bounds = array<i64: 2, 64, 256>}, {pipeline_mode = #tpu.pipeline_mode<synchronous>, transform_indices = @transform_1, window_bounds = array<i64: 64, 124>}, {transform_indices = @transform_2, window_bounds = array<i64: 2, 64, 256>}]} {
    %c0 = arith.constant 0 : index
    %c0_0 = arith.constant 0 : index
    %c0_1 = arith.constant 0 : index
    %0 = vector.load %arg2[%c0, %c0_0, %c0_1] : memref<2x64x256xf32, #tpu.memory_space<vmem>>, vector<2x64x256xf32>
    %c0_2 = arith.constant 0 : index
    %c0_3 = arith.constant 0 : index
    %1 = vector.load %arg3[%c0_2, %c0_3] : memref<64x124xi32, #tpu.memory_space<vmem>>, vector<64x124xi32>
    %cst = arith.constant 1.000000e+01 : f32
    %2 = vector.broadcast %cst : f32 to vector<2x64x256xf32>
    %3 = arith.mulf %0, %2 : vector<2x64x256xf32>
    %4 = math.floor %3 : vector<2x64x256xf32>
    %cst_4 = arith.constant 6.100000e+01 : f32
    %5 = vector.broadcast %cst_4 : f32 to vector<2x64x256xf32>
    %6 = arith.addf %4, %5 : vector<2x64x256xf32>
    %cst_5 = arith.constant 0.000000e+00 : f32
    %cst_6 = arith.constant 1.210000e+02 : f32
    %7 = vector.broadcast %cst_5 : f32 to vector<2x64x256xf32>
    %8 = arith.maximumf %7, %6 : vector<2x64x256xf32>
    %9 = vector.broadcast %cst_6 : f32 to vector<2x64x256xf32>
    %10 = arith.minimumf %9, %8 : vector<2x64x256xf32>
    %11 = arith.fptosi %10 : vector<2x64x256xf32> to vector<2x64x256xi32>
    %c1_i32 = arith.constant 1 : i32
    %12 = vector.broadcast %c1_i32 : i32 to vector<2x64x256xi32>
    %13 = arith.andi %11, %12 : vector<2x64x256xi32>
    %c0_i32 = arith.constant 0 : i32
    %14 = vector.broadcast %c0_i32 : i32 to vector<2x64x256xi32>
    %15 = arith.cmpi ne, %13, %14 : vector<2x64x256xi32>
    %c2_i32 = arith.constant 2 : i32
    %16 = vector.broadcast %c2_i32 : i32 to vector<2x64x256xi32>
    %17 = arith.andi %11, %16 : vector<2x64x256xi32>
    %c0_i32_7 = arith.constant 0 : i32
    %18 = vector.broadcast %c0_i32_7 : i32 to vector<2x64x256xi32>
    %19 = arith.cmpi ne, %17, %18 : vector<2x64x256xi32>
    %20 = vector.extract_strided_slice %1 {offsets = [0, 0], sizes = [64, 1], strides = [1, 1]} : vector<64x124xi32> to vector<64x1xi32>
    %21 = vector.extract_strided_slice %1 {offsets = [0, 1], sizes = [64, 1], strides = [1, 1]} : vector<64x124xi32> to vector<64x1xi32>
    %22 = vector.extract_strided_slice %1 {offsets = [0, 2], sizes = [64, 1], strides = [1, 1]} : vector<64x124xi32> to vector<64x1xi32>
    %23 = vector.extract_strided_slice %1 {offsets = [0, 3], sizes = [64, 1], strides = [1, 1]} : vector<64x124xi32> to vector<64x1xi32>
    %cst_8 = arith.constant -5.700000e+01 : f32
    %24 = vector.broadcast %cst_8 : f32 to vector<2x64x256xf32>
    %25 = arith.cmpf oge, %3, %24 : vector<2x64x256xf32>
    %26 = vector.extract_strided_slice %1 {offsets = [0, 4], sizes = [64, 1], strides = [1, 1]} : vector<64x124xi32> to vector<64x1xi32>
    %27 = vector.shape_cast %26 : vector<64x1xi32> to vector<1x64x1xi32>
    %28 = vector.broadcast %27 : vector<1x64x1xi32> to vector<2x64x256xi32>
    %29 = vector.shape_cast %20 : vector<64x1xi32> to vector<1x64x1xi32>
    %30 = vector.broadcast %29 : vector<1x64x1xi32> to vector<2x64x256xi32>
    %31 = arith.select %25, %28, %30 : vector<2x64x256xi1>, vector<2x64x256xi32>
    %32 = vector.extract_strided_slice %1 {offsets = [0, 5], sizes = [64, 1], strides = [1, 1]} : vector<64x124xi32> to vector<64x1xi32>
    %33 = vector.shape_cast %32 : vector<64x1xi32> to vector<1x64x1xi32>
    %34 = vector.broadcast %33 : vector<1x64x1xi32> to vector<2x64x256xi32>
    %35 = vector.shape_cast %21 : vector<64x1xi32> to vector<1x64x1xi32>
    %36 = vector.broadcast %35 : vector<1x64x1xi32> to vector<2x64x256xi32>
    %37 = arith.select %25, %34, %36 : vector<2x64x256xi1>, vector<2x64x256xi32>
    %38 = vector.extract_strided_slice %1 {offsets = [0, 6], sizes = [64, 1], strides = [1, 1]} : vector<64x124xi32> to vector<64x1xi32>
    %39 = vector.shape_cast %38 : vector<64x1xi32> to vector<1x64x1xi32>
    %40 = vector.broadcast %39 : vector<1x64x1xi32> to vector<2x64x256xi32>
    %41 = vector.shape_cast %22 : vector<64x1xi32> to vector<1x64x1xi32>
    %42 = vector.broadcast %41 : vector<1x64x1xi32> to vector<2x64x256xi32>
    %43 = arith.select %25, %40, %42 : vector<2x64x256xi1>, vector<2x64x256xi32>
    %44 = vector.extract_strided_slice %1 {offsets = [0, 7], sizes = [64, 1], strides = [1, 1]} : vector<64x124xi32> to vector<64x1xi32>
    %45 = vector.shape_cast %44 : vector<64x1xi32> to vector<1x64x1xi32>
    %46 = vector.broadcast %45 : vector<1x64x1xi32> to vector<2x64x256xi32>
    %47 = vector.shape_cast %23 : vector<64x1xi32> to vector<1x64x1xi32>
    %48 = vector.broadcast %47 : vector<1x64x1xi32> to vector<2x64x256xi32>
    %49 = arith.select %25, %46, %48 : vector<2x64x256xi1>, vector<2x64x256xi32>
    %cst_9 = arith.constant -5.300000e+01 : f32
    %50 = vector.broadcast %cst_9 : f32 to vector<2x64x256xf32>
    %51 = arith.cmpf oge, %3, %50 : vector<2x64x256xf32>
    %52 = vector.extract_strided_slice %1 {offsets = [0, 8], sizes = [64, 1], strides = [1, 1]} : vector<64x124xi32> to vector<64x1xi32>
    %53 = vector.shape_cast %52 : vector<64x1xi32> to vector<1x64x1xi32>
    %54 = vector.broadcast %53 : vector<1x64x1xi32> to vector<2x64x256xi32>
    %55 = arith.select %51, %54, %31 : vector<2x64x256xi1>, vector<2x64x256xi32>
    %56 = vector.extract_strided_slice %1 {offsets = [0, 9], sizes = [64, 1], strides = [1, 1]} : vector<64x124xi32> to vector<64x1xi32>
    %57 = vector.shape_cast %56 : vector<64x1xi32> to vector<1x64x1xi32>
    %58 = vector.broadcast %57 : vector<1x64x1xi32> to vector<2x64x256xi32>
    %59 = arith.select %51, %58, %37 : vector<2x64x256xi1>, vector<2x64x256xi32>
    %60 = vector.extract_strided_slice %1 {offsets = [0, 10], sizes = [64, 1], strides = [1, 1]} : vector<64x124xi32> to vector<64x1xi32>
    %61 = vector.shape_cast %60 : vector<64x1xi32> to vector<1x64x1xi32>
    %62 = vector.broadcast %61 : vector<1x64x1xi32> to vector<2x64x256xi32>
    %63 = arith.select %51, %62, %43 : vector<2x64x256xi1>, vector<2x64x256xi32>
    %64 = vector.extract_strided_slice %1 {offsets = [0, 11], sizes = [64, 1], strides = [1, 1]} : vector<64x124xi32> to vector<64x1xi32>
    %65 = vector.shape_cast %64 : vector<64x1xi32> to vector<1x64x1xi32>
    %66 = vector.broadcast %65 : vector<1x64x1xi32> to vector<2x64x256xi32>
    %67 = arith.select %51, %66, %49 : vector<2x64x256xi1>, vector<2x64x256xi32>
    %cst_10 = arith.constant -4.900000e+01 : f32
    %68 = vector.broadcast %cst_10 : f32 to vector<2x64x256xf32>
    %69 = arith.cmpf oge, %3, %68 : vector<2x64x256xf32>
    %70 = vector.extract_strided_slice %1 {offsets = [0, 12], sizes = [64, 1], strides = [1, 1]} : vector<64x124xi32> to vector<64x1xi32>
    %71 = vector.shape_cast %70 : vector<64x1xi32> to vector<1x64x1xi32>
    %72 = vector.broadcast %71 : vector<1x64x1xi32> to vector<2x64x256xi32>
    %73 = arith.select %69, %72, %55 : vector<2x64x256xi1>, vector<2x64x256xi32>
    %74 = vector.extract_strided_slice %1 {offsets = [0, 13], sizes = [64, 1], strides = [1, 1]} : vector<64x124xi32> to vector<64x1xi32>
    %75 = vector.shape_cast %74 : vector<64x1xi32> to vector<1x64x1xi32>
    %76 = vector.broadcast %75 : vector<1x64x1xi32> to vector<2x64x256xi32>
    %77 = arith.select %69, %76, %59 : vector<2x64x256xi1>, vector<2x64x256xi32>
    %78 = vector.extract_strided_slice %1 {offsets = [0, 14], sizes = [64, 1], strides = [1, 1]} : vector<64x124xi32> to vector<64x1xi32>
    %79 = vector.shape_cast %78 : vector<64x1xi32> to vector<1x64x1xi32>
    %80 = vector.broadcast %79 : vector<1x64x1xi32> to vector<2x64x256xi32>
    %81 = arith.select %69, %80, %63 : vector<2x64x256xi1>, vector<2x64x256xi32>
    %82 = vector.extract_strided_slice %1 {offsets = [0, 15], sizes = [64, 1], strides = [1, 1]} : vector<64x124xi32> to vector<64x1xi32>
    %83 = vector.shape_cast %82 : vector<64x1xi32> to vector<1x64x1xi32>
    %84 = vector.broadcast %83 : vector<1x64x1xi32> to vector<2x64x256xi32>
    %85 = arith.select %69, %84, %67 : vector<2x64x256xi1>, vector<2x64x256xi32>
    %cst_11 = arith.constant -4.500000e+01 : f32
    %86 = vector.broadcast %cst_11 : f32 to vector<2x64x256xf32>
    %87 = arith.cmpf oge, %3, %86 : vector<2x64x256xf32>
    %88 = vector.extract_strided_slice %1 {offsets = [0, 16], sizes = [64, 1], strides = [1, 1]} : vector<64x124xi32> to vector<64x1xi32>
    %89 = vector.shape_cast %88 : vector<64x1xi32> to vector<1x64x1xi32>
    %90 = vector.broadcast %89 : vector<1x64x1xi32> to vector<2x64x256xi32>
    %91 = arith.select %87, %90, %73 : vector<2x64x256xi1>, vector<2x64x256xi32>
    %92 = vector.extract_strided_slice %1 {offsets = [0, 17], sizes = [64, 1], strides = [1, 1]} : vector<64x124xi32> to vector<64x1xi32>
    %93 = vector.shape_cast %92 : vector<64x1xi32> to vector<1x64x1xi32>
    %94 = vector.broadcast %93 : vector<1x64x1xi32> to vector<2x64x256xi32>
    %95 = arith.select %87, %94, %77 : vector<2x64x256xi1>, vector<2x64x256xi32>
    %96 = vector.extract_strided_slice %1 {offsets = [0, 18], sizes = [64, 1], strides = [1, 1]} : vector<64x124xi32> to vector<64x1xi32>
    %97 = vector.shape_cast %96 : vector<64x1xi32> to vector<1x64x1xi32>
    %98 = vector.broadcast %97 : vector<1x64x1xi32> to vector<2x64x256xi32>
    %99 = arith.select %87, %98, %81 : vector<2x64x256xi1>, vector<2x64x256xi32>
    %100 = vector.extract_strided_slice %1 {offsets = [0, 19], sizes = [64, 1], strides = [1, 1]} : vector<64x124xi32> to vector<64x1xi32>
    %101 = vector.shape_cast %100 : vector<64x1xi32> to vector<1x64x1xi32>
    %102 = vector.broadcast %101 : vector<1x64x1xi32> to vector<2x64x256xi32>
    %103 = arith.select %87, %102, %85 : vector<2x64x256xi1>, vector<2x64x256xi32>
    %cst_12 = arith.constant -4.100000e+01 : f32
    %104 = vector.broadcast %cst_12 : f32 to vector<2x64x256xf32>
    %105 = arith.cmpf oge, %3, %104 : vector<2x64x256xf32>
    %106 = vector.extract_strided_slice %1 {offsets = [0, 20], sizes = [64, 1], strides = [1, 1]} : vector<64x124xi32> to vector<64x1xi32>
    %107 = vector.shape_cast %106 : vector<64x1xi32> to vector<1x64x1xi32>
    %108 = vector.broadcast %107 : vector<1x64x1xi32> to vector<2x64x256xi32>
    %109 = arith.select %105, %108, %91 : vector<2x64x256xi1>, vector<2x64x256xi32>
    %110 = vector.extract_strided_slice %1 {offsets = [0, 21], sizes = [64, 1], strides = [1, 1]} : vector<64x124xi32> to vector<64x1xi32>
    %111 = vector.shape_cast %110 : vector<64x1xi32> to vector<1x64x1xi32>
    %112 = vector.broadcast %111 : vector<1x64x1xi32> to vector<2x64x256xi32>
    %113 = arith.select %105, %112, %95 : vector<2x64x256xi1>, vector<2x64x256xi32>
    %114 = vector.extract_strided_slice %1 {offsets = [0, 22], sizes = [64, 1], strides = [1, 1]} : vector<64x124xi32> to vector<64x1xi32>
    %115 = vector.shape_cast %114 : vector<64x1xi32> to vector<1x64x1xi32>
    %116 = vector.broadcast %115 : vector<1x64x1xi32> to vector<2x64x256xi32>
    %117 = arith.select %105, %116, %99 : vector<2x64x256xi1>, vector<2x64x256xi32>
    %118 = vector.extract_strided_slice %1 {offsets = [0, 23], sizes = [64, 1], strides = [1, 1]} : vector<64x124xi32> to vector<64x1xi32>
    %119 = vector.shape_cast %118 : vector<64x1xi32> to vector<1x64x1xi32>
    %120 = vector.broadcast %119 : vector<1x64x1xi32> to vector<2x64x256xi32>
    %121 = arith.select %105, %120, %103 : vector<2x64x256xi1>, vector<2x64x256xi32>
    %cst_13 = arith.constant -3.700000e+01 : f32
    %122 = vector.broadcast %cst_13 : f32 to vector<2x64x256xf32>
    %123 = arith.cmpf oge, %3, %122 : vector<2x64x256xf32>
    %124 = vector.extract_strided_slice %1 {offsets = [0, 24], sizes = [64, 1], strides = [1, 1]} : vector<64x124xi32> to vector<64x1xi32>
    %125 = vector.shape_cast %124 : vector<64x1xi32> to vector<1x64x1xi32>
    %126 = vector.broadcast %125 : vector<1x64x1xi32> to vector<2x64x256xi32>
    %127 = arith.select %123, %126, %109 : vector<2x64x256xi1>, vector<2x64x256xi32>
    %128 = vector.extract_strided_slice %1 {offsets = [0, 25], sizes = [64, 1], strides = [1, 1]} : vector<64x124xi32> to vector<64x1xi32>
    %129 = vector.shape_cast %128 : vector<64x1xi32> to vector<1x64x1xi32>
    %130 = vector.broadcast %129 : vector<1x64x1xi32> to vector<2x64x256xi32>
    %131 = arith.select %123, %130, %113 : vector<2x64x256xi1>, vector<2x64x256xi32>
    %132 = vector.extract_strided_slice %1 {offsets = [0, 26], sizes = [64, 1], strides = [1, 1]} : vector<64x124xi32> to vector<64x1xi32>
    %133 = vector.shape_cast %132 : vector<64x1xi32> to vector<1x64x1xi32>
    %134 = vector.broadcast %133 : vector<1x64x1xi32> to vector<2x64x256xi32>
    %135 = arith.select %123, %134, %117 : vector<2x64x256xi1>, vector<2x64x256xi32>
    %136 = vector.extract_strided_slice %1 {offsets = [0, 27], sizes = [64, 1], strides = [1, 1]} : vector<64x124xi32> to vector<64x1xi32>
    %137 = vector.shape_cast %136 : vector<64x1xi32> to vector<1x64x1xi32>
    %138 = vector.broadcast %137 : vector<1x64x1xi32> to vector<2x64x256xi32>
    %139 = arith.select %123, %138, %121 : vector<2x64x256xi1>, vector<2x64x256xi32>
    %cst_14 = arith.constant -3.300000e+01 : f32
    %140 = vector.broadcast %cst_14 : f32 to vector<2x64x256xf32>
    %141 = arith.cmpf oge, %3, %140 : vector<2x64x256xf32>
    %142 = vector.extract_strided_slice %1 {offsets = [0, 28], sizes = [64, 1], strides = [1, 1]} : vector<64x124xi32> to vector<64x1xi32>
    %143 = vector.shape_cast %142 : vector<64x1xi32> to vector<1x64x1xi32>
    %144 = vector.broadcast %143 : vector<1x64x1xi32> to vector<2x64x256xi32>
    %145 = arith.select %141, %144, %127 : vector<2x64x256xi1>, vector<2x64x256xi32>
    %146 = vector.extract_strided_slice %1 {offsets = [0, 29], sizes = [64, 1], strides = [1, 1]} : vector<64x124xi32> to vector<64x1xi32>
    %147 = vector.shape_cast %146 : vector<64x1xi32> to vector<1x64x1xi32>
    %148 = vector.broadcast %147 : vector<1x64x1xi32> to vector<2x64x256xi32>
    %149 = arith.select %141, %148, %131 : vector<2x64x256xi1>, vector<2x64x256xi32>
    %150 = vector.extract_strided_slice %1 {offsets = [0, 30], sizes = [64, 1], strides = [1, 1]} : vector<64x124xi32> to vector<64x1xi32>
    %151 = vector.shape_cast %150 : vector<64x1xi32> to vector<1x64x1xi32>
    %152 = vector.broadcast %151 : vector<1x64x1xi32> to vector<2x64x256xi32>
    %153 = arith.select %141, %152, %135 : vector<2x64x256xi1>, vector<2x64x256xi32>
    %154 = vector.extract_strided_slice %1 {offsets = [0, 31], sizes = [64, 1], strides = [1, 1]} : vector<64x124xi32> to vector<64x1xi32>
    %155 = vector.shape_cast %154 : vector<64x1xi32> to vector<1x64x1xi32>
    %156 = vector.broadcast %155 : vector<1x64x1xi32> to vector<2x64x256xi32>
    %157 = arith.select %141, %156, %139 : vector<2x64x256xi1>, vector<2x64x256xi32>
    %cst_15 = arith.constant -2.900000e+01 : f32
    %158 = vector.broadcast %cst_15 : f32 to vector<2x64x256xf32>
    %159 = arith.cmpf oge, %3, %158 : vector<2x64x256xf32>
    %160 = vector.extract_strided_slice %1 {offsets = [0, 32], sizes = [64, 1], strides = [1, 1]} : vector<64x124xi32> to vector<64x1xi32>
    %161 = vector.shape_cast %160 : vector<64x1xi32> to vector<1x64x1xi32>
    %162 = vector.broadcast %161 : vector<1x64x1xi32> to vector<2x64x256xi32>
    %163 = arith.select %159, %162, %145 : vector<2x64x256xi1>, vector<2x64x256xi32>
    %164 = vector.extract_strided_slice %1 {offsets = [0, 33], sizes = [64, 1], strides = [1, 1]} : vector<64x124xi32> to vector<64x1xi32>
    %165 = vector.shape_cast %164 : vector<64x1xi32> to vector<1x64x1xi32>
    %166 = vector.broadcast %165 : vector<1x64x1xi32> to vector<2x64x256xi32>
    %167 = arith.select %159, %166, %149 : vector<2x64x256xi1>, vector<2x64x256xi32>
    %168 = vector.extract_strided_slice %1 {offsets = [0, 34], sizes = [64, 1], strides = [1, 1]} : vector<64x124xi32> to vector<64x1xi32>
    %169 = vector.shape_cast %168 : vector<64x1xi32> to vector<1x64x1xi32>
    %170 = vector.broadcast %169 : vector<1x64x1xi32> to vector<2x64x256xi32>
    %171 = arith.select %159, %170, %153 : vector<2x64x256xi1>, vector<2x64x256xi32>
    %172 = vector.extract_strided_slice %1 {offsets = [0, 35], sizes = [64, 1], strides = [1, 1]} : vector<64x124xi32> to vector<64x1xi32>
    %173 = vector.shape_cast %172 : vector<64x1xi32> to vector<1x64x1xi32>
    %174 = vector.broadcast %173 : vector<1x64x1xi32> to vector<2x64x256xi32>
    %175 = arith.select %159, %174, %157 : vector<2x64x256xi1>, vector<2x64x256xi32>
    %cst_16 = arith.constant -2.500000e+01 : f32
    %176 = vector.broadcast %cst_16 : f32 to vector<2x64x256xf32>
    %177 = arith.cmpf oge, %3, %176 : vector<2x64x256xf32>
    %178 = vector.extract_strided_slice %1 {offsets = [0, 36], sizes = [64, 1], strides = [1, 1]} : vector<64x124xi32> to vector<64x1xi32>
    %179 = vector.shape_cast %178 : vector<64x1xi32> to vector<1x64x1xi32>
    %180 = vector.broadcast %179 : vector<1x64x1xi32> to vector<2x64x256xi32>
    %181 = arith.select %177, %180, %163 : vector<2x64x256xi1>, vector<2x64x256xi32>
    %182 = vector.extract_strided_slice %1 {offsets = [0, 37], sizes = [64, 1], strides = [1, 1]} : vector<64x124xi32> to vector<64x1xi32>
    %183 = vector.shape_cast %182 : vector<64x1xi32> to vector<1x64x1xi32>
    %184 = vector.broadcast %183 : vector<1x64x1xi32> to vector<2x64x256xi32>
    %185 = arith.select %177, %184, %167 : vector<2x64x256xi1>, vector<2x64x256xi32>
    %186 = vector.extract_strided_slice %1 {offsets = [0, 38], sizes = [64, 1], strides = [1, 1]} : vector<64x124xi32> to vector<64x1xi32>
    %187 = vector.shape_cast %186 : vector<64x1xi32> to vector<1x64x1xi32>
    %188 = vector.broadcast %187 : vector<1x64x1xi32> to vector<2x64x256xi32>
    %189 = arith.select %177, %188, %171 : vector<2x64x256xi1>, vector<2x64x256xi32>
    %190 = vector.extract_strided_slice %1 {offsets = [0, 39], sizes = [64, 1], strides = [1, 1]} : vector<64x124xi32> to vector<64x1xi32>
    %191 = vector.shape_cast %190 : vector<64x1xi32> to vector<1x64x1xi32>
    %192 = vector.broadcast %191 : vector<1x64x1xi32> to vector<2x64x256xi32>
    %193 = arith.select %177, %192, %175 : vector<2x64x256xi1>, vector<2x64x256xi32>
    %cst_17 = arith.constant -2.100000e+01 : f32
    %194 = vector.broadcast %cst_17 : f32 to vector<2x64x256xf32>
    %195 = arith.cmpf oge, %3, %194 : vector<2x64x256xf32>
    %196 = vector.extract_strided_slice %1 {offsets = [0, 40], sizes = [64, 1], strides = [1, 1]} : vector<64x124xi32> to vector<64x1xi32>
    %197 = vector.shape_cast %196 : vector<64x1xi32> to vector<1x64x1xi32>
    %198 = vector.broadcast %197 : vector<1x64x1xi32> to vector<2x64x256xi32>
    %199 = arith.select %195, %198, %181 : vector<2x64x256xi1>, vector<2x64x256xi32>
    %200 = vector.extract_strided_slice %1 {offsets = [0, 41], sizes = [64, 1], strides = [1, 1]} : vector<64x124xi32> to vector<64x1xi32>
    %201 = vector.shape_cast %200 : vector<64x1xi32> to vector<1x64x1xi32>
    %202 = vector.broadcast %201 : vector<1x64x1xi32> to vector<2x64x256xi32>
    %203 = arith.select %195, %202, %185 : vector<2x64x256xi1>, vector<2x64x256xi32>
    %204 = vector.extract_strided_slice %1 {offsets = [0, 42], sizes = [64, 1], strides = [1, 1]} : vector<64x124xi32> to vector<64x1xi32>
    %205 = vector.shape_cast %204 : vector<64x1xi32> to vector<1x64x1xi32>
    %206 = vector.broadcast %205 : vector<1x64x1xi32> to vector<2x64x256xi32>
    %207 = arith.select %195, %206, %189 : vector<2x64x256xi1>, vector<2x64x256xi32>
    %208 = vector.extract_strided_slice %1 {offsets = [0, 43], sizes = [64, 1], strides = [1, 1]} : vector<64x124xi32> to vector<64x1xi32>
    %209 = vector.shape_cast %208 : vector<64x1xi32> to vector<1x64x1xi32>
    %210 = vector.broadcast %209 : vector<1x64x1xi32> to vector<2x64x256xi32>
    %211 = arith.select %195, %210, %193 : vector<2x64x256xi1>, vector<2x64x256xi32>
    %cst_18 = arith.constant -1.700000e+01 : f32
    %212 = vector.broadcast %cst_18 : f32 to vector<2x64x256xf32>
    %213 = arith.cmpf oge, %3, %212 : vector<2x64x256xf32>
    %214 = vector.extract_strided_slice %1 {offsets = [0, 44], sizes = [64, 1], strides = [1, 1]} : vector<64x124xi32> to vector<64x1xi32>
    %215 = vector.shape_cast %214 : vector<64x1xi32> to vector<1x64x1xi32>
    %216 = vector.broadcast %215 : vector<1x64x1xi32> to vector<2x64x256xi32>
    %217 = arith.select %213, %216, %199 : vector<2x64x256xi1>, vector<2x64x256xi32>
    %218 = vector.extract_strided_slice %1 {offsets = [0, 45], sizes = [64, 1], strides = [1, 1]} : vector<64x124xi32> to vector<64x1xi32>
    %219 = vector.shape_cast %218 : vector<64x1xi32> to vector<1x64x1xi32>
    %220 = vector.broadcast %219 : vector<1x64x1xi32> to vector<2x64x256xi32>
    %221 = arith.select %213, %220, %203 : vector<2x64x256xi1>, vector<2x64x256xi32>
    %222 = vector.extract_strided_slice %1 {offsets = [0, 46], sizes = [64, 1], strides = [1, 1]} : vector<64x124xi32> to vector<64x1xi32>
    %223 = vector.shape_cast %222 : vector<64x1xi32> to vector<1x64x1xi32>
    %224 = vector.broadcast %223 : vector<1x64x1xi32> to vector<2x64x256xi32>
    %225 = arith.select %213, %224, %207 : vector<2x64x256xi1>, vector<2x64x256xi32>
    %226 = vector.extract_strided_slice %1 {offsets = [0, 47], sizes = [64, 1], strides = [1, 1]} : vector<64x124xi32> to vector<64x1xi32>
    %227 = vector.shape_cast %226 : vector<64x1xi32> to vector<1x64x1xi32>
    %228 = vector.broadcast %227 : vector<1x64x1xi32> to vector<2x64x256xi32>
    %229 = arith.select %213, %228, %211 : vector<2x64x256xi1>, vector<2x64x256xi32>
    %cst_19 = arith.constant -1.300000e+01 : f32
    %230 = vector.broadcast %cst_19 : f32 to vector<2x64x256xf32>
    %231 = arith.cmpf oge, %3, %230 : vector<2x64x256xf32>
    %232 = vector.extract_strided_slice %1 {offsets = [0, 48], sizes = [64, 1], strides = [1, 1]} : vector<64x124xi32> to vector<64x1xi32>
    %233 = vector.shape_cast %232 : vector<64x1xi32> to vector<1x64x1xi32>
    %234 = vector.broadcast %233 : vector<1x64x1xi32> to vector<2x64x256xi32>
    %235 = arith.select %231, %234, %217 : vector<2x64x256xi1>, vector<2x64x256xi32>
    %236 = vector.extract_strided_slice %1 {offsets = [0, 49], sizes = [64, 1], strides = [1, 1]} : vector<64x124xi32> to vector<64x1xi32>
    %237 = vector.shape_cast %236 : vector<64x1xi32> to vector<1x64x1xi32>
    %238 = vector.broadcast %237 : vector<1x64x1xi32> to vector<2x64x256xi32>
    %239 = arith.select %231, %238, %221 : vector<2x64x256xi1>, vector<2x64x256xi32>
    %240 = vector.extract_strided_slice %1 {offsets = [0, 50], sizes = [64, 1], strides = [1, 1]} : vector<64x124xi32> to vector<64x1xi32>
    %241 = vector.shape_cast %240 : vector<64x1xi32> to vector<1x64x1xi32>
    %242 = vector.broadcast %241 : vector<1x64x1xi32> to vector<2x64x256xi32>
    %243 = arith.select %231, %242, %225 : vector<2x64x256xi1>, vector<2x64x256xi32>
    %244 = vector.extract_strided_slice %1 {offsets = [0, 51], sizes = [64, 1], strides = [1, 1]} : vector<64x124xi32> to vector<64x1xi32>
    %245 = vector.shape_cast %244 : vector<64x1xi32> to vector<1x64x1xi32>
    %246 = vector.broadcast %245 : vector<1x64x1xi32> to vector<2x64x256xi32>
    %247 = arith.select %231, %246, %229 : vector<2x64x256xi1>, vector<2x64x256xi32>
    %cst_20 = arith.constant -9.000000e+00 : f32
    %248 = vector.broadcast %cst_20 : f32 to vector<2x64x256xf32>
    %249 = arith.cmpf oge, %3, %248 : vector<2x64x256xf32>
    %250 = vector.extract_strided_slice %1 {offsets = [0, 52], sizes = [64, 1], strides = [1, 1]} : vector<64x124xi32> to vector<64x1xi32>
    %251 = vector.shape_cast %250 : vector<64x1xi32> to vector<1x64x1xi32>
    %252 = vector.broadcast %251 : vector<1x64x1xi32> to vector<2x64x256xi32>
    %253 = arith.select %249, %252, %235 : vector<2x64x256xi1>, vector<2x64x256xi32>
    %254 = vector.extract_strided_slice %1 {offsets = [0, 53], sizes = [64, 1], strides = [1, 1]} : vector<64x124xi32> to vector<64x1xi32>
    %255 = vector.shape_cast %254 : vector<64x1xi32> to vector<1x64x1xi32>
    %256 = vector.broadcast %255 : vector<1x64x1xi32> to vector<2x64x256xi32>
    %257 = arith.select %249, %256, %239 : vector<2x64x256xi1>, vector<2x64x256xi32>
    %258 = vector.extract_strided_slice %1 {offsets = [0, 54], sizes = [64, 1], strides = [1, 1]} : vector<64x124xi32> to vector<64x1xi32>
    %259 = vector.shape_cast %258 : vector<64x1xi32> to vector<1x64x1xi32>
    %260 = vector.broadcast %259 : vector<1x64x1xi32> to vector<2x64x256xi32>
    %261 = arith.select %249, %260, %243 : vector<2x64x256xi1>, vector<2x64x256xi32>
    %262 = vector.extract_strided_slice %1 {offsets = [0, 55], sizes = [64, 1], strides = [1, 1]} : vector<64x124xi32> to vector<64x1xi32>
    %263 = vector.shape_cast %262 : vector<64x1xi32> to vector<1x64x1xi32>
    %264 = vector.broadcast %263 : vector<1x64x1xi32> to vector<2x64x256xi32>
    %265 = arith.select %249, %264, %247 : vector<2x64x256xi1>, vector<2x64x256xi32>
    %cst_21 = arith.constant -5.000000e+00 : f32
    %266 = vector.broadcast %cst_21 : f32 to vector<2x64x256xf32>
    %267 = arith.cmpf oge, %3, %266 : vector<2x64x256xf32>
    %268 = vector.extract_strided_slice %1 {offsets = [0, 56], sizes = [64, 1], strides = [1, 1]} : vector<64x124xi32> to vector<64x1xi32>
    %269 = vector.shape_cast %268 : vector<64x1xi32> to vector<1x64x1xi32>
    %270 = vector.broadcast %269 : vector<1x64x1xi32> to vector<2x64x256xi32>
    %271 = arith.select %267, %270, %253 : vector<2x64x256xi1>, vector<2x64x256xi32>
    %272 = vector.extract_strided_slice %1 {offsets = [0, 57], sizes = [64, 1], strides = [1, 1]} : vector<64x124xi32> to vector<64x1xi32>
    %273 = vector.shape_cast %272 : vector<64x1xi32> to vector<1x64x1xi32>
    %274 = vector.broadcast %273 : vector<1x64x1xi32> to vector<2x64x256xi32>
    %275 = arith.select %267, %274, %257 : vector<2x64x256xi1>, vector<2x64x256xi32>
    %276 = vector.extract_strided_slice %1 {offsets = [0, 58], sizes = [64, 1], strides = [1, 1]} : vector<64x124xi32> to vector<64x1xi32>
    %277 = vector.shape_cast %276 : vector<64x1xi32> to vector<1x64x1xi32>
    %278 = vector.broadcast %277 : vector<1x64x1xi32> to vector<2x64x256xi32>
    %279 = arith.select %267, %278, %261 : vector<2x64x256xi1>, vector<2x64x256xi32>
    %280 = vector.extract_strided_slice %1 {offsets = [0, 59], sizes = [64, 1], strides = [1, 1]} : vector<64x124xi32> to vector<64x1xi32>
    %281 = vector.shape_cast %280 : vector<64x1xi32> to vector<1x64x1xi32>
    %282 = vector.broadcast %281 : vector<1x64x1xi32> to vector<2x64x256xi32>
    %283 = arith.select %267, %282, %265 : vector<2x64x256xi1>, vector<2x64x256xi32>
    %cst_22 = arith.constant -1.000000e+00 : f32
    %284 = vector.broadcast %cst_22 : f32 to vector<2x64x256xf32>
    %285 = arith.cmpf oge, %3, %284 : vector<2x64x256xf32>
    %286 = vector.extract_strided_slice %1 {offsets = [0, 60], sizes = [64, 1], strides = [1, 1]} : vector<64x124xi32> to vector<64x1xi32>
    %287 = vector.shape_cast %286 : vector<64x1xi32> to vector<1x64x1xi32>
    %288 = vector.broadcast %287 : vector<1x64x1xi32> to vector<2x64x256xi32>
    %289 = arith.select %285, %288, %271 : vector<2x64x256xi1>, vector<2x64x256xi32>
    %290 = vector.extract_strided_slice %1 {offsets = [0, 61], sizes = [64, 1], strides = [1, 1]} : vector<64x124xi32> to vector<64x1xi32>
    %291 = vector.shape_cast %290 : vector<64x1xi32> to vector<1x64x1xi32>
    %292 = vector.broadcast %291 : vector<1x64x1xi32> to vector<2x64x256xi32>
    %293 = arith.select %285, %292, %275 : vector<2x64x256xi1>, vector<2x64x256xi32>
    %294 = vector.extract_strided_slice %1 {offsets = [0, 62], sizes = [64, 1], strides = [1, 1]} : vector<64x124xi32> to vector<64x1xi32>
    %295 = vector.shape_cast %294 : vector<64x1xi32> to vector<1x64x1xi32>
    %296 = vector.broadcast %295 : vector<1x64x1xi32> to vector<2x64x256xi32>
    %297 = arith.select %285, %296, %279 : vector<2x64x256xi1>, vector<2x64x256xi32>
    %298 = vector.extract_strided_slice %1 {offsets = [0, 63], sizes = [64, 1], strides = [1, 1]} : vector<64x124xi32> to vector<64x1xi32>
    %299 = vector.shape_cast %298 : vector<64x1xi32> to vector<1x64x1xi32>
    %300 = vector.broadcast %299 : vector<1x64x1xi32> to vector<2x64x256xi32>
    %301 = arith.select %285, %300, %283 : vector<2x64x256xi1>, vector<2x64x256xi32>
    %cst_23 = arith.constant 3.000000e+00 : f32
    %302 = vector.broadcast %cst_23 : f32 to vector<2x64x256xf32>
    %303 = arith.cmpf oge, %3, %302 : vector<2x64x256xf32>
    %304 = vector.extract_strided_slice %1 {offsets = [0, 64], sizes = [64, 1], strides = [1, 1]} : vector<64x124xi32> to vector<64x1xi32>
    %305 = vector.shape_cast %304 : vector<64x1xi32> to vector<1x64x1xi32>
    %306 = vector.broadcast %305 : vector<1x64x1xi32> to vector<2x64x256xi32>
    %307 = arith.select %303, %306, %289 : vector<2x64x256xi1>, vector<2x64x256xi32>
    %308 = vector.extract_strided_slice %1 {offsets = [0, 65], sizes = [64, 1], strides = [1, 1]} : vector<64x124xi32> to vector<64x1xi32>
    %309 = vector.shape_cast %308 : vector<64x1xi32> to vector<1x64x1xi32>
    %310 = vector.broadcast %309 : vector<1x64x1xi32> to vector<2x64x256xi32>
    %311 = arith.select %303, %310, %293 : vector<2x64x256xi1>, vector<2x64x256xi32>
    %312 = vector.extract_strided_slice %1 {offsets = [0, 66], sizes = [64, 1], strides = [1, 1]} : vector<64x124xi32> to vector<64x1xi32>
    %313 = vector.shape_cast %312 : vector<64x1xi32> to vector<1x64x1xi32>
    %314 = vector.broadcast %313 : vector<1x64x1xi32> to vector<2x64x256xi32>
    %315 = arith.select %303, %314, %297 : vector<2x64x256xi1>, vector<2x64x256xi32>
    %316 = vector.extract_strided_slice %1 {offsets = [0, 67], sizes = [64, 1], strides = [1, 1]} : vector<64x124xi32> to vector<64x1xi32>
    %317 = vector.shape_cast %316 : vector<64x1xi32> to vector<1x64x1xi32>
    %318 = vector.broadcast %317 : vector<1x64x1xi32> to vector<2x64x256xi32>
    %319 = arith.select %303, %318, %301 : vector<2x64x256xi1>, vector<2x64x256xi32>
    %cst_24 = arith.constant 7.000000e+00 : f32
    %320 = vector.broadcast %cst_24 : f32 to vector<2x64x256xf32>
    %321 = arith.cmpf oge, %3, %320 : vector<2x64x256xf32>
    %322 = vector.extract_strided_slice %1 {offsets = [0, 68], sizes = [64, 1], strides = [1, 1]} : vector<64x124xi32> to vector<64x1xi32>
    %323 = vector.shape_cast %322 : vector<64x1xi32> to vector<1x64x1xi32>
    %324 = vector.broadcast %323 : vector<1x64x1xi32> to vector<2x64x256xi32>
    %325 = arith.select %321, %324, %307 : vector<2x64x256xi1>, vector<2x64x256xi32>
    %326 = vector.extract_strided_slice %1 {offsets = [0, 69], sizes = [64, 1], strides = [1, 1]} : vector<64x124xi32> to vector<64x1xi32>
    %327 = vector.shape_cast %326 : vector<64x1xi32> to vector<1x64x1xi32>
    %328 = vector.broadcast %327 : vector<1x64x1xi32> to vector<2x64x256xi32>
    %329 = arith.select %321, %328, %311 : vector<2x64x256xi1>, vector<2x64x256xi32>
    %330 = vector.extract_strided_slice %1 {offsets = [0, 70], sizes = [64, 1], strides = [1, 1]} : vector<64x124xi32> to vector<64x1xi32>
    %331 = vector.shape_cast %330 : vector<64x1xi32> to vector<1x64x1xi32>
    %332 = vector.broadcast %331 : vector<1x64x1xi32> to vector<2x64x256xi32>
    %333 = arith.select %321, %332, %315 : vector<2x64x256xi1>, vector<2x64x256xi32>
    %334 = vector.extract_strided_slice %1 {offsets = [0, 71], sizes = [64, 1], strides = [1, 1]} : vector<64x124xi32> to vector<64x1xi32>
    %335 = vector.shape_cast %334 : vector<64x1xi32> to vector<1x64x1xi32>
    %336 = vector.broadcast %335 : vector<1x64x1xi32> to vector<2x64x256xi32>
    %337 = arith.select %321, %336, %319 : vector<2x64x256xi1>, vector<2x64x256xi32>
    %cst_25 = arith.constant 1.100000e+01 : f32
    %338 = vector.broadcast %cst_25 : f32 to vector<2x64x256xf32>
    %339 = arith.cmpf oge, %3, %338 : vector<2x64x256xf32>
    %340 = vector.extract_strided_slice %1 {offsets = [0, 72], sizes = [64, 1], strides = [1, 1]} : vector<64x124xi32> to vector<64x1xi32>
    %341 = vector.shape_cast %340 : vector<64x1xi32> to vector<1x64x1xi32>
    %342 = vector.broadcast %341 : vector<1x64x1xi32> to vector<2x64x256xi32>
    %343 = arith.select %339, %342, %325 : vector<2x64x256xi1>, vector<2x64x256xi32>
    %344 = vector.extract_strided_slice %1 {offsets = [0, 73], sizes = [64, 1], strides = [1, 1]} : vector<64x124xi32> to vector<64x1xi32>
    %345 = vector.shape_cast %344 : vector<64x1xi32> to vector<1x64x1xi32>
    %346 = vector.broadcast %345 : vector<1x64x1xi32> to vector<2x64x256xi32>
    %347 = arith.select %339, %346, %329 : vector<2x64x256xi1>, vector<2x64x256xi32>
    %348 = vector.extract_strided_slice %1 {offsets = [0, 74], sizes = [64, 1], strides = [1, 1]} : vector<64x124xi32> to vector<64x1xi32>
    %349 = vector.shape_cast %348 : vector<64x1xi32> to vector<1x64x1xi32>
    %350 = vector.broadcast %349 : vector<1x64x1xi32> to vector<2x64x256xi32>
    %351 = arith.select %339, %350, %333 : vector<2x64x256xi1>, vector<2x64x256xi32>
    %352 = vector.extract_strided_slice %1 {offsets = [0, 75], sizes = [64, 1], strides = [1, 1]} : vector<64x124xi32> to vector<64x1xi32>
    %353 = vector.shape_cast %352 : vector<64x1xi32> to vector<1x64x1xi32>
    %354 = vector.broadcast %353 : vector<1x64x1xi32> to vector<2x64x256xi32>
    %355 = arith.select %339, %354, %337 : vector<2x64x256xi1>, vector<2x64x256xi32>
    %cst_26 = arith.constant 1.500000e+01 : f32
    %356 = vector.broadcast %cst_26 : f32 to vector<2x64x256xf32>
    %357 = arith.cmpf oge, %3, %356 : vector<2x64x256xf32>
    %358 = vector.extract_strided_slice %1 {offsets = [0, 76], sizes = [64, 1], strides = [1, 1]} : vector<64x124xi32> to vector<64x1xi32>
    %359 = vector.shape_cast %358 : vector<64x1xi32> to vector<1x64x1xi32>
    %360 = vector.broadcast %359 : vector<1x64x1xi32> to vector<2x64x256xi32>
    %361 = arith.select %357, %360, %343 : vector<2x64x256xi1>, vector<2x64x256xi32>
    %362 = vector.extract_strided_slice %1 {offsets = [0, 77], sizes = [64, 1], strides = [1, 1]} : vector<64x124xi32> to vector<64x1xi32>
    %363 = vector.shape_cast %362 : vector<64x1xi32> to vector<1x64x1xi32>
    %364 = vector.broadcast %363 : vector<1x64x1xi32> to vector<2x64x256xi32>
    %365 = arith.select %357, %364, %347 : vector<2x64x256xi1>, vector<2x64x256xi32>
    %366 = vector.extract_strided_slice %1 {offsets = [0, 78], sizes = [64, 1], strides = [1, 1]} : vector<64x124xi32> to vector<64x1xi32>
    %367 = vector.shape_cast %366 : vector<64x1xi32> to vector<1x64x1xi32>
    %368 = vector.broadcast %367 : vector<1x64x1xi32> to vector<2x64x256xi32>
    %369 = arith.select %357, %368, %351 : vector<2x64x256xi1>, vector<2x64x256xi32>
    %370 = vector.extract_strided_slice %1 {offsets = [0, 79], sizes = [64, 1], strides = [1, 1]} : vector<64x124xi32> to vector<64x1xi32>
    %371 = vector.shape_cast %370 : vector<64x1xi32> to vector<1x64x1xi32>
    %372 = vector.broadcast %371 : vector<1x64x1xi32> to vector<2x64x256xi32>
    %373 = arith.select %357, %372, %355 : vector<2x64x256xi1>, vector<2x64x256xi32>
    %cst_27 = arith.constant 1.900000e+01 : f32
    %374 = vector.broadcast %cst_27 : f32 to vector<2x64x256xf32>
    %375 = arith.cmpf oge, %3, %374 : vector<2x64x256xf32>
    %376 = vector.extract_strided_slice %1 {offsets = [0, 80], sizes = [64, 1], strides = [1, 1]} : vector<64x124xi32> to vector<64x1xi32>
    %377 = vector.shape_cast %376 : vector<64x1xi32> to vector<1x64x1xi32>
    %378 = vector.broadcast %377 : vector<1x64x1xi32> to vector<2x64x256xi32>
    %379 = arith.select %375, %378, %361 : vector<2x64x256xi1>, vector<2x64x256xi32>
    %380 = vector.extract_strided_slice %1 {offsets = [0, 81], sizes = [64, 1], strides = [1, 1]} : vector<64x124xi32> to vector<64x1xi32>
    %381 = vector.shape_cast %380 : vector<64x1xi32> to vector<1x64x1xi32>
    %382 = vector.broadcast %381 : vector<1x64x1xi32> to vector<2x64x256xi32>
    %383 = arith.select %375, %382, %365 : vector<2x64x256xi1>, vector<2x64x256xi32>
    %384 = vector.extract_strided_slice %1 {offsets = [0, 82], sizes = [64, 1], strides = [1, 1]} : vector<64x124xi32> to vector<64x1xi32>
    %385 = vector.shape_cast %384 : vector<64x1xi32> to vector<1x64x1xi32>
    %386 = vector.broadcast %385 : vector<1x64x1xi32> to vector<2x64x256xi32>
    %387 = arith.select %375, %386, %369 : vector<2x64x256xi1>, vector<2x64x256xi32>
    %388 = vector.extract_strided_slice %1 {offsets = [0, 83], sizes = [64, 1], strides = [1, 1]} : vector<64x124xi32> to vector<64x1xi32>
    %389 = vector.shape_cast %388 : vector<64x1xi32> to vector<1x64x1xi32>
    %390 = vector.broadcast %389 : vector<1x64x1xi32> to vector<2x64x256xi32>
    %391 = arith.select %375, %390, %373 : vector<2x64x256xi1>, vector<2x64x256xi32>
    %cst_28 = arith.constant 2.300000e+01 : f32
    %392 = vector.broadcast %cst_28 : f32 to vector<2x64x256xf32>
    %393 = arith.cmpf oge, %3, %392 : vector<2x64x256xf32>
    %394 = vector.extract_strided_slice %1 {offsets = [0, 84], sizes = [64, 1], strides = [1, 1]} : vector<64x124xi32> to vector<64x1xi32>
    %395 = vector.shape_cast %394 : vector<64x1xi32> to vector<1x64x1xi32>
    %396 = vector.broadcast %395 : vector<1x64x1xi32> to vector<2x64x256xi32>
    %397 = arith.select %393, %396, %379 : vector<2x64x256xi1>, vector<2x64x256xi32>
    %398 = vector.extract_strided_slice %1 {offsets = [0, 85], sizes = [64, 1], strides = [1, 1]} : vector<64x124xi32> to vector<64x1xi32>
    %399 = vector.shape_cast %398 : vector<64x1xi32> to vector<1x64x1xi32>
    %400 = vector.broadcast %399 : vector<1x64x1xi32> to vector<2x64x256xi32>
    %401 = arith.select %393, %400, %383 : vector<2x64x256xi1>, vector<2x64x256xi32>
    %402 = vector.extract_strided_slice %1 {offsets = [0, 86], sizes = [64, 1], strides = [1, 1]} : vector<64x124xi32> to vector<64x1xi32>
    %403 = vector.shape_cast %402 : vector<64x1xi32> to vector<1x64x1xi32>
    %404 = vector.broadcast %403 : vector<1x64x1xi32> to vector<2x64x256xi32>
    %405 = arith.select %393, %404, %387 : vector<2x64x256xi1>, vector<2x64x256xi32>
    %406 = vector.extract_strided_slice %1 {offsets = [0, 87], sizes = [64, 1], strides = [1, 1]} : vector<64x124xi32> to vector<64x1xi32>
    %407 = vector.shape_cast %406 : vector<64x1xi32> to vector<1x64x1xi32>
    %408 = vector.broadcast %407 : vector<1x64x1xi32> to vector<2x64x256xi32>
    %409 = arith.select %393, %408, %391 : vector<2x64x256xi1>, vector<2x64x256xi32>
    %cst_29 = arith.constant 2.700000e+01 : f32
    %410 = vector.broadcast %cst_29 : f32 to vector<2x64x256xf32>
    %411 = arith.cmpf oge, %3, %410 : vector<2x64x256xf32>
    %412 = vector.extract_strided_slice %1 {offsets = [0, 88], sizes = [64, 1], strides = [1, 1]} : vector<64x124xi32> to vector<64x1xi32>
    %413 = vector.shape_cast %412 : vector<64x1xi32> to vector<1x64x1xi32>
    %414 = vector.broadcast %413 : vector<1x64x1xi32> to vector<2x64x256xi32>
    %415 = arith.select %411, %414, %397 : vector<2x64x256xi1>, vector<2x64x256xi32>
    %416 = vector.extract_strided_slice %1 {offsets = [0, 89], sizes = [64, 1], strides = [1, 1]} : vector<64x124xi32> to vector<64x1xi32>
    %417 = vector.shape_cast %416 : vector<64x1xi32> to vector<1x64x1xi32>
    %418 = vector.broadcast %417 : vector<1x64x1xi32> to vector<2x64x256xi32>
    %419 = arith.select %411, %418, %401 : vector<2x64x256xi1>, vector<2x64x256xi32>
    %420 = vector.extract_strided_slice %1 {offsets = [0, 90], sizes = [64, 1], strides = [1, 1]} : vector<64x124xi32> to vector<64x1xi32>
    %421 = vector.shape_cast %420 : vector<64x1xi32> to vector<1x64x1xi32>
    %422 = vector.broadcast %421 : vector<1x64x1xi32> to vector<2x64x256xi32>
    %423 = arith.select %411, %422, %405 : vector<2x64x256xi1>, vector<2x64x256xi32>
    %424 = vector.extract_strided_slice %1 {offsets = [0, 91], sizes = [64, 1], strides = [1, 1]} : vector<64x124xi32> to vector<64x1xi32>
    %425 = vector.shape_cast %424 : vector<64x1xi32> to vector<1x64x1xi32>
    %426 = vector.broadcast %425 : vector<1x64x1xi32> to vector<2x64x256xi32>
    %427 = arith.select %411, %426, %409 : vector<2x64x256xi1>, vector<2x64x256xi32>
    %cst_30 = arith.constant 3.100000e+01 : f32
    %428 = vector.broadcast %cst_30 : f32 to vector<2x64x256xf32>
    %429 = arith.cmpf oge, %3, %428 : vector<2x64x256xf32>
    %430 = vector.extract_strided_slice %1 {offsets = [0, 92], sizes = [64, 1], strides = [1, 1]} : vector<64x124xi32> to vector<64x1xi32>
    %431 = vector.shape_cast %430 : vector<64x1xi32> to vector<1x64x1xi32>
    %432 = vector.broadcast %431 : vector<1x64x1xi32> to vector<2x64x256xi32>
    %433 = arith.select %429, %432, %415 : vector<2x64x256xi1>, vector<2x64x256xi32>
    %434 = vector.extract_strided_slice %1 {offsets = [0, 93], sizes = [64, 1], strides = [1, 1]} : vector<64x124xi32> to vector<64x1xi32>
    %435 = vector.shape_cast %434 : vector<64x1xi32> to vector<1x64x1xi32>
    %436 = vector.broadcast %435 : vector<1x64x1xi32> to vector<2x64x256xi32>
    %437 = arith.select %429, %436, %419 : vector<2x64x256xi1>, vector<2x64x256xi32>
    %438 = vector.extract_strided_slice %1 {offsets = [0, 94], sizes = [64, 1], strides = [1, 1]} : vector<64x124xi32> to vector<64x1xi32>
    %439 = vector.shape_cast %438 : vector<64x1xi32> to vector<1x64x1xi32>
    %440 = vector.broadcast %439 : vector<1x64x1xi32> to vector<2x64x256xi32>
    %441 = arith.select %429, %440, %423 : vector<2x64x256xi1>, vector<2x64x256xi32>
    %442 = vector.extract_strided_slice %1 {offsets = [0, 95], sizes = [64, 1], strides = [1, 1]} : vector<64x124xi32> to vector<64x1xi32>
    %443 = vector.shape_cast %442 : vector<64x1xi32> to vector<1x64x1xi32>
    %444 = vector.broadcast %443 : vector<1x64x1xi32> to vector<2x64x256xi32>
    %445 = arith.select %429, %444, %427 : vector<2x64x256xi1>, vector<2x64x256xi32>
    %cst_31 = arith.constant 3.500000e+01 : f32
    %446 = vector.broadcast %cst_31 : f32 to vector<2x64x256xf32>
    %447 = arith.cmpf oge, %3, %446 : vector<2x64x256xf32>
    %448 = vector.extract_strided_slice %1 {offsets = [0, 96], sizes = [64, 1], strides = [1, 1]} : vector<64x124xi32> to vector<64x1xi32>
    %449 = vector.shape_cast %448 : vector<64x1xi32> to vector<1x64x1xi32>
    %450 = vector.broadcast %449 : vector<1x64x1xi32> to vector<2x64x256xi32>
    %451 = arith.select %447, %450, %433 : vector<2x64x256xi1>, vector<2x64x256xi32>
    %452 = vector.extract_strided_slice %1 {offsets = [0, 97], sizes = [64, 1], strides = [1, 1]} : vector<64x124xi32> to vector<64x1xi32>
    %453 = vector.shape_cast %452 : vector<64x1xi32> to vector<1x64x1xi32>
    %454 = vector.broadcast %453 : vector<1x64x1xi32> to vector<2x64x256xi32>
    %455 = arith.select %447, %454, %437 : vector<2x64x256xi1>, vector<2x64x256xi32>
    %456 = vector.extract_strided_slice %1 {offsets = [0, 98], sizes = [64, 1], strides = [1, 1]} : vector<64x124xi32> to vector<64x1xi32>
    %457 = vector.shape_cast %456 : vector<64x1xi32> to vector<1x64x1xi32>
    %458 = vector.broadcast %457 : vector<1x64x1xi32> to vector<2x64x256xi32>
    %459 = arith.select %447, %458, %441 : vector<2x64x256xi1>, vector<2x64x256xi32>
    %460 = vector.extract_strided_slice %1 {offsets = [0, 99], sizes = [64, 1], strides = [1, 1]} : vector<64x124xi32> to vector<64x1xi32>
    %461 = vector.shape_cast %460 : vector<64x1xi32> to vector<1x64x1xi32>
    %462 = vector.broadcast %461 : vector<1x64x1xi32> to vector<2x64x256xi32>
    %463 = arith.select %447, %462, %445 : vector<2x64x256xi1>, vector<2x64x256xi32>
    %cst_32 = arith.constant 3.900000e+01 : f32
    %464 = vector.broadcast %cst_32 : f32 to vector<2x64x256xf32>
    %465 = arith.cmpf oge, %3, %464 : vector<2x64x256xf32>
    %466 = vector.extract_strided_slice %1 {offsets = [0, 100], sizes = [64, 1], strides = [1, 1]} : vector<64x124xi32> to vector<64x1xi32>
    %467 = vector.shape_cast %466 : vector<64x1xi32> to vector<1x64x1xi32>
    %468 = vector.broadcast %467 : vector<1x64x1xi32> to vector<2x64x256xi32>
    %469 = arith.select %465, %468, %451 : vector<2x64x256xi1>, vector<2x64x256xi32>
    %470 = vector.extract_strided_slice %1 {offsets = [0, 101], sizes = [64, 1], strides = [1, 1]} : vector<64x124xi32> to vector<64x1xi32>
    %471 = vector.shape_cast %470 : vector<64x1xi32> to vector<1x64x1xi32>
    %472 = vector.broadcast %471 : vector<1x64x1xi32> to vector<2x64x256xi32>
    %473 = arith.select %465, %472, %455 : vector<2x64x256xi1>, vector<2x64x256xi32>
    %474 = vector.extract_strided_slice %1 {offsets = [0, 102], sizes = [64, 1], strides = [1, 1]} : vector<64x124xi32> to vector<64x1xi32>
    %475 = vector.shape_cast %474 : vector<64x1xi32> to vector<1x64x1xi32>
    %476 = vector.broadcast %475 : vector<1x64x1xi32> to vector<2x64x256xi32>
    %477 = arith.select %465, %476, %459 : vector<2x64x256xi1>, vector<2x64x256xi32>
    %478 = vector.extract_strided_slice %1 {offsets = [0, 103], sizes = [64, 1], strides = [1, 1]} : vector<64x124xi32> to vector<64x1xi32>
    %479 = vector.shape_cast %478 : vector<64x1xi32> to vector<1x64x1xi32>
    %480 = vector.broadcast %479 : vector<1x64x1xi32> to vector<2x64x256xi32>
    %481 = arith.select %465, %480, %463 : vector<2x64x256xi1>, vector<2x64x256xi32>
    %cst_33 = arith.constant 4.300000e+01 : f32
    %482 = vector.broadcast %cst_33 : f32 to vector<2x64x256xf32>
    %483 = arith.cmpf oge, %3, %482 : vector<2x64x256xf32>
    %484 = vector.extract_strided_slice %1 {offsets = [0, 104], sizes = [64, 1], strides = [1, 1]} : vector<64x124xi32> to vector<64x1xi32>
    %485 = vector.shape_cast %484 : vector<64x1xi32> to vector<1x64x1xi32>
    %486 = vector.broadcast %485 : vector<1x64x1xi32> to vector<2x64x256xi32>
    %487 = arith.select %483, %486, %469 : vector<2x64x256xi1>, vector<2x64x256xi32>
    %488 = vector.extract_strided_slice %1 {offsets = [0, 105], sizes = [64, 1], strides = [1, 1]} : vector<64x124xi32> to vector<64x1xi32>
    %489 = vector.shape_cast %488 : vector<64x1xi32> to vector<1x64x1xi32>
    %490 = vector.broadcast %489 : vector<1x64x1xi32> to vector<2x64x256xi32>
    %491 = arith.select %483, %490, %473 : vector<2x64x256xi1>, vector<2x64x256xi32>
    %492 = vector.extract_strided_slice %1 {offsets = [0, 106], sizes = [64, 1], strides = [1, 1]} : vector<64x124xi32> to vector<64x1xi32>
    %493 = vector.shape_cast %492 : vector<64x1xi32> to vector<1x64x1xi32>
    %494 = vector.broadcast %493 : vector<1x64x1xi32> to vector<2x64x256xi32>
    %495 = arith.select %483, %494, %477 : vector<2x64x256xi1>, vector<2x64x256xi32>
    %496 = vector.extract_strided_slice %1 {offsets = [0, 107], sizes = [64, 1], strides = [1, 1]} : vector<64x124xi32> to vector<64x1xi32>
    %497 = vector.shape_cast %496 : vector<64x1xi32> to vector<1x64x1xi32>
    %498 = vector.broadcast %497 : vector<1x64x1xi32> to vector<2x64x256xi32>
    %499 = arith.select %483, %498, %481 : vector<2x64x256xi1>, vector<2x64x256xi32>
    %cst_34 = arith.constant 4.700000e+01 : f32
    %500 = vector.broadcast %cst_34 : f32 to vector<2x64x256xf32>
    %501 = arith.cmpf oge, %3, %500 : vector<2x64x256xf32>
    %502 = vector.extract_strided_slice %1 {offsets = [0, 108], sizes = [64, 1], strides = [1, 1]} : vector<64x124xi32> to vector<64x1xi32>
    %503 = vector.shape_cast %502 : vector<64x1xi32> to vector<1x64x1xi32>
    %504 = vector.broadcast %503 : vector<1x64x1xi32> to vector<2x64x256xi32>
    %505 = arith.select %501, %504, %487 : vector<2x64x256xi1>, vector<2x64x256xi32>
    %506 = vector.extract_strided_slice %1 {offsets = [0, 109], sizes = [64, 1], strides = [1, 1]} : vector<64x124xi32> to vector<64x1xi32>
    %507 = vector.shape_cast %506 : vector<64x1xi32> to vector<1x64x1xi32>
    %508 = vector.broadcast %507 : vector<1x64x1xi32> to vector<2x64x256xi32>
    %509 = arith.select %501, %508, %491 : vector<2x64x256xi1>, vector<2x64x256xi32>
    %510 = vector.extract_strided_slice %1 {offsets = [0, 110], sizes = [64, 1], strides = [1, 1]} : vector<64x124xi32> to vector<64x1xi32>
    %511 = vector.shape_cast %510 : vector<64x1xi32> to vector<1x64x1xi32>
    %512 = vector.broadcast %511 : vector<1x64x1xi32> to vector<2x64x256xi32>
    %513 = arith.select %501, %512, %495 : vector<2x64x256xi1>, vector<2x64x256xi32>
    %514 = vector.extract_strided_slice %1 {offsets = [0, 111], sizes = [64, 1], strides = [1, 1]} : vector<64x124xi32> to vector<64x1xi32>
    %515 = vector.shape_cast %514 : vector<64x1xi32> to vector<1x64x1xi32>
    %516 = vector.broadcast %515 : vector<1x64x1xi32> to vector<2x64x256xi32>
    %517 = arith.select %501, %516, %499 : vector<2x64x256xi1>, vector<2x64x256xi32>
    %cst_35 = arith.constant 5.100000e+01 : f32
    %518 = vector.broadcast %cst_35 : f32 to vector<2x64x256xf32>
    %519 = arith.cmpf oge, %3, %518 : vector<2x64x256xf32>
    %520 = vector.extract_strided_slice %1 {offsets = [0, 112], sizes = [64, 1], strides = [1, 1]} : vector<64x124xi32> to vector<64x1xi32>
    %521 = vector.shape_cast %520 : vector<64x1xi32> to vector<1x64x1xi32>
    %522 = vector.broadcast %521 : vector<1x64x1xi32> to vector<2x64x256xi32>
    %523 = arith.select %519, %522, %505 : vector<2x64x256xi1>, vector<2x64x256xi32>
    %524 = vector.extract_strided_slice %1 {offsets = [0, 113], sizes = [64, 1], strides = [1, 1]} : vector<64x124xi32> to vector<64x1xi32>
    %525 = vector.shape_cast %524 : vector<64x1xi32> to vector<1x64x1xi32>
    %526 = vector.broadcast %525 : vector<1x64x1xi32> to vector<2x64x256xi32>
    %527 = arith.select %519, %526, %509 : vector<2x64x256xi1>, vector<2x64x256xi32>
    %528 = vector.extract_strided_slice %1 {offsets = [0, 114], sizes = [64, 1], strides = [1, 1]} : vector<64x124xi32> to vector<64x1xi32>
    %529 = vector.shape_cast %528 : vector<64x1xi32> to vector<1x64x1xi32>
    %530 = vector.broadcast %529 : vector<1x64x1xi32> to vector<2x64x256xi32>
    %531 = arith.select %519, %530, %513 : vector<2x64x256xi1>, vector<2x64x256xi32>
    %532 = vector.extract_strided_slice %1 {offsets = [0, 115], sizes = [64, 1], strides = [1, 1]} : vector<64x124xi32> to vector<64x1xi32>
    %533 = vector.shape_cast %532 : vector<64x1xi32> to vector<1x64x1xi32>
    %534 = vector.broadcast %533 : vector<1x64x1xi32> to vector<2x64x256xi32>
    %535 = arith.select %519, %534, %517 : vector<2x64x256xi1>, vector<2x64x256xi32>
    %cst_36 = arith.constant 5.500000e+01 : f32
    %536 = vector.broadcast %cst_36 : f32 to vector<2x64x256xf32>
    %537 = arith.cmpf oge, %3, %536 : vector<2x64x256xf32>
    %538 = vector.extract_strided_slice %1 {offsets = [0, 116], sizes = [64, 1], strides = [1, 1]} : vector<64x124xi32> to vector<64x1xi32>
    %539 = vector.shape_cast %538 : vector<64x1xi32> to vector<1x64x1xi32>
    %540 = vector.broadcast %539 : vector<1x64x1xi32> to vector<2x64x256xi32>
    %541 = arith.select %537, %540, %523 : vector<2x64x256xi1>, vector<2x64x256xi32>
    %542 = vector.extract_strided_slice %1 {offsets = [0, 117], sizes = [64, 1], strides = [1, 1]} : vector<64x124xi32> to vector<64x1xi32>
    %543 = vector.shape_cast %542 : vector<64x1xi32> to vector<1x64x1xi32>
    %544 = vector.broadcast %543 : vector<1x64x1xi32> to vector<2x64x256xi32>
    %545 = arith.select %537, %544, %527 : vector<2x64x256xi1>, vector<2x64x256xi32>
    %546 = vector.extract_strided_slice %1 {offsets = [0, 118], sizes = [64, 1], strides = [1, 1]} : vector<64x124xi32> to vector<64x1xi32>
    %547 = vector.shape_cast %546 : vector<64x1xi32> to vector<1x64x1xi32>
    %548 = vector.broadcast %547 : vector<1x64x1xi32> to vector<2x64x256xi32>
    %549 = arith.select %537, %548, %531 : vector<2x64x256xi1>, vector<2x64x256xi32>
    %550 = vector.extract_strided_slice %1 {offsets = [0, 119], sizes = [64, 1], strides = [1, 1]} : vector<64x124xi32> to vector<64x1xi32>
    %551 = vector.shape_cast %550 : vector<64x1xi32> to vector<1x64x1xi32>
    %552 = vector.broadcast %551 : vector<1x64x1xi32> to vector<2x64x256xi32>
    %553 = arith.select %537, %552, %535 : vector<2x64x256xi1>, vector<2x64x256xi32>
    %cst_37 = arith.constant 5.900000e+01 : f32
    %554 = vector.broadcast %cst_37 : f32 to vector<2x64x256xf32>
    %555 = arith.cmpf oge, %3, %554 : vector<2x64x256xf32>
    %556 = vector.extract_strided_slice %1 {offsets = [0, 120], sizes = [64, 1], strides = [1, 1]} : vector<64x124xi32> to vector<64x1xi32>
    %557 = vector.shape_cast %556 : vector<64x1xi32> to vector<1x64x1xi32>
    %558 = vector.broadcast %557 : vector<1x64x1xi32> to vector<2x64x256xi32>
    %559 = arith.select %555, %558, %541 : vector<2x64x256xi1>, vector<2x64x256xi32>
    %560 = vector.extract_strided_slice %1 {offsets = [0, 121], sizes = [64, 1], strides = [1, 1]} : vector<64x124xi32> to vector<64x1xi32>
    %561 = vector.shape_cast %560 : vector<64x1xi32> to vector<1x64x1xi32>
    %562 = vector.broadcast %561 : vector<1x64x1xi32> to vector<2x64x256xi32>
    %563 = arith.select %555, %562, %545 : vector<2x64x256xi1>, vector<2x64x256xi32>
    %564 = vector.extract_strided_slice %1 {offsets = [0, 122], sizes = [64, 1], strides = [1, 1]} : vector<64x124xi32> to vector<64x1xi32>
    %565 = vector.shape_cast %564 : vector<64x1xi32> to vector<1x64x1xi32>
    %566 = vector.broadcast %565 : vector<1x64x1xi32> to vector<2x64x256xi32>
    %567 = arith.select %555, %566, %549 : vector<2x64x256xi1>, vector<2x64x256xi32>
    %568 = vector.extract_strided_slice %1 {offsets = [0, 123], sizes = [64, 1], strides = [1, 1]} : vector<64x124xi32> to vector<64x1xi32>
    %569 = vector.shape_cast %568 : vector<64x1xi32> to vector<1x64x1xi32>
    %570 = vector.broadcast %569 : vector<1x64x1xi32> to vector<2x64x256xi32>
    %571 = arith.select %555, %570, %553 : vector<2x64x256xi1>, vector<2x64x256xi32>
    %572 = arith.select %15, %563, %559 : vector<2x64x256xi1>, vector<2x64x256xi32>
    %573 = arith.select %15, %571, %567 : vector<2x64x256xi1>, vector<2x64x256xi32>
    %574 = arith.select %19, %573, %572 : vector<2x64x256xi1>, vector<2x64x256xi32>
    %c-65536_i32 = arith.constant -65536 : i32
    %575 = vector.broadcast %c-65536_i32 : i32 to vector<2x64x256xi32>
    %576 = arith.andi %574, %575 : vector<2x64x256xi32>
    %577 = tpu.bitcast %576 : vector<2x64x256xi32> -> vector<2x64x256xf32>
    %c16_i32 = arith.constant 16 : i32
    %578 = vector.broadcast %c16_i32 : i32 to vector<2x64x256xi32>
    %579 = arith.shli %574, %578 : vector<2x64x256xi32>
    %580 = tpu.bitcast %579 : vector<2x64x256xi32> -> vector<2x64x256xf32>
    %581 = arith.mulf %0, %577 : vector<2x64x256xf32>
    %582 = arith.addf %581, %580 : vector<2x64x256xf32>
    %c0_38 = arith.constant 0 : index
    %c0_39 = arith.constant 0 : index
    %c0_40 = arith.constant 0 : index
    %583 = vector.load %arg4[%c0_38, %c0_39, %c0_40] : memref<2x64x256xf32, #tpu.memory_space<vmem>>, vector<2x64x256xf32>
    tpu.vector_store %arg4[%c0_38, %c0_39, %c0_40], %582 {strides = array<i32>} : memref<2x64x256xf32, #tpu.memory_space<vmem>>, vector<2x64x256xf32>,
    return
  }
  func.func @transform_0(%arg0: i32, %arg1: i32) -> (i32, i32, i32) {
    %c0_i32 = arith.constant 0 : i32
    %c0_i32_0 = arith.constant 0 : i32
    return %arg0, %c0_i32, %arg1 : i32, i32, i32
  }
  func.func @transform_1(%arg0: i32, %arg1: i32) -> (i32, i32) {
    %c0_i32 = arith.constant 0 : i32
    %c0_i32_0 = arith.constant 0 : i32
    %c0_i32_1 = arith.constant 0 : i32
    return %c0_i32, %c0_i32_0 : i32, i32
  }
  func.func @transform_2(%arg0: i32, %arg1: i32) -> (i32, i32, i32) {
    %c0_i32 = arith.constant 0 : i32
    %c0_i32_0 = arith.constant 0 : i32
    return %arg0, %c0_i32, %arg1 : i32, i32, i32
  }
}

</mosaic_0001>

<llo_original>
// kernel: tpu_custom_call.1
$region0: #{tpu_custom_call.1}
  #allocation0 [shape = 'u32[]', space=smem, size = 0x4, offset = 0x4, fixed_abs, tag = 'smem constant byte address 0x4 - core index']
  #allocation1 [shape = 'u32[144,128]{1,0:T(1,128)}', space=vmem, size = 0x12000, scoped, tag = 'internal scratch']
  %s0 = inlined_call_operand.hbm [shape: f32[2,64,256], index: 0, kind: input, shape index: {}]
  %s1 = inlined_call_operand.hbm [shape: u32[64,124], index: 1, kind: input, shape index: {}]
  %s2 = inlined_call_operand.hbm [shape: f32[2,64,256], index: 2, kind: output, shape index: {}]
  %s3 = sld [smem:[#allocation0]]
  $region26: #{tpu_custom_call.1} parent=0
    _
  %s5 = ssub.s32 1, %s3
  %s6 = scalar_select 0, %s5, %s3
  $region1: #{tpu_custom_call.1} parent=0
    #allocation2 [shape = 'u8[131072]{0}', space=vmem, size = 0x20000, scoped, tag = 'input window, operand 0, single buffered']
    #allocation3 [shape = 's32[1]{0}', space=sflag, size = 0x4, scoped, tag = 'scoped memory for tpu_custom_call.1']
    #allocation4 [shape = 's32[1]{0}', space=sflag, size = 0x4, scoped, tag = 'scoped memory for tpu_custom_call.1']
    #allocation5 [shape = 'u8[32768]{0}', space=vmem, size = 0x8000, scoped, tag = 'input window, operand 1, single buffered']
    #allocation6 [shape = 's32[1]{0}', space=sflag, size = 0x4, scoped, tag = 'scoped memory for tpu_custom_call.1']
    #allocation7 [shape = 'u8[131072]{0}', space=vmem, size = 0x20000, scoped, tag = 'output window, operand 0, single buffered']
    %7 = vsyncpa [#allocation3], 0
    %8 = vsyncpa [#allocation6], 0
    %9 = vsyncpa [#allocation4], 0
    // Predicated region
    $region2: #{tpu_custom_call.1} parent=1 // pred_check
      _
    $region3: #{tpu_custom_call.1} parent=1 // pred_check_branch
      %11 = sbr.rel (0) target = $region5
    $region4: #{tpu_custom_call.1} parent=1 // pred_region
      %s13 = ssub.s32 4096, 4096
      %14 = vsyncadd [#allocation3], %s13
      %s15 = sshll.u32 [#allocation2], 4
      %s16 = int_to_ptr.vmem [resolvable:$true] %s15
      %21 = dma.hbm_to_vmem [thread:$0]  %s0, 4096, %s16, [#allocation3], 256, 256, 16
    $region5: #{tpu_custom_call.1} parent=1 // pred_fallthru
      _
    // Predicated region
    $region6: #{tpu_custom_call.1} parent=1 // pred_check
      _
    $region7: #{tpu_custom_call.1} parent=1 // pred_check_branch
      %23 = sbr.rel (0) target = $region9
    $region8: #{tpu_custom_call.1} parent=1 // pred_region
      %s25 = ssub.s32 1024, 1024
      %26 = vsyncadd [#allocation6], %s25
      %s27 = sshll.u32 [#allocation5], 4
      %s28 = int_to_ptr.vmem [resolvable:$true] %s27
      %33 = dma.hbm_to_vmem [thread:$0]  %s1, 1024, %s28, [#allocation6], 128, 128, 8
    $region9: #{tpu_custom_call.1} parent=1 // pred_fallthru
      _
    // Predicated region
    $region10: #{tpu_custom_call.1} parent=1 // pred_check
      _
    $region11: #{tpu_custom_call.1} parent=1 // pred_check_branch
      %35 = sbr.rel (0) target = $region13
    $region12: #{tpu_custom_call.1} parent=1 // pred_region
      %36 = dma.done [#allocation3], 4096
    $region13: #{tpu_custom_call.1} parent=1 // pred_fallthru
      _
    // Predicated region
    $region14: #{tpu_custom_call.1} parent=1 // pred_check
      _
    $region15: #{tpu_custom_call.1} parent=1 // pred_check_branch
      %38 = sbr.rel (0) target = $region17
    $region16: #{tpu_custom_call.1} parent=1 // pred_region
      %39 = dma.done [#allocation6], 1024
    $region17: #{tpu_custom_call.1} parent=1 // pred_fallthru
      _
    %v40 = vld [vmem:[#allocation2] sm:$0xff]
    %v41 = vld [vmem:[#allocation2 + $0x8] sm:$0xff]
    %v42 = vld [vmem:[#allocation2 + $0x10] sm:$0xff]
    %v43 = vld [vmem:[#allocation2 + $0x18] sm:$0xff]
    %v44 = vld [vmem:[#allocation2 + $0x20] sm:$0xff]
    %v45 = vld [vmem:[#allocation2 + $0x28] sm:$0xff]
    %v46 = vld [vmem:[#allocation2 + $0x30] sm:$0xff]
    %v47 = vld [vmem:[#allocation2 + $0x38] sm:$0xff]
    %v48 = vld [vmem:[#allocation2 + $0x40] sm:$0xff]
    %v49 = vld [vmem:[#allocation2 + $0x48] sm:$0xff]
    %v50 = vld [vmem:[#allocation2 + $0x50] sm:$0xff]
    %v51 = vld [vmem:[#allocation2 + $0x58] sm:$0xff]
    %v52 = vld [vmem:[#allocation2 + $0x60] sm:$0xff]
    %v53 = vld [vmem:[#allocation2 + $0x68] sm:$0xff]
    %v54 = vld [vmem:[#allocation2 + $0x70] sm:$0xff]
    %v55 = vld [vmem:[#allocation2 + $0x78] sm:$0xff]
    %v56 = vld [vmem:[#allocation2 + $0x80] sm:$0xff]
    %v57 = vld [vmem:[#allocation2 + $0x88] sm:$0xff]
    %v58 = vld [vmem:[#allocation2 + $0x90] sm:$0xff]
    %v59 = vld [vmem:[#allocation2 + $0x98] sm:$0xff]
    %v60 = vld [vmem:[#allocation2 + $0xa0] sm:$0xff]
    %v61 = vld [vmem:[#allocation2 + $0xa8] sm:$0xff]
    %v62 = vld [vmem:[#allocation2 + $0xb0] sm:$0xff]
    %v63 = vld [vmem:[#allocation2 + $0xb8] sm:$0xff]
    %v64 = vld [vmem:[#allocation2 + $0xc0] sm:$0xff]
    %v65 = vld [vmem:[#allocation2 + $0xc8] sm:$0xff]
    %v66 = vld [vmem:[#allocation2 + $0xd0] sm:$0xff]
    %v67 = vld [vmem:[#allocation2 + $0xd8] sm:$0xff]
    %v68 = vld [vmem:[#allocation2 + $0xe0] sm:$0xff]
    %v69 = vld [vmem:[#allocation2 + $0xe8] sm:$0xff]
    %v70 = vld [vmem:[#allocation2 + $0xf0] sm:$0xff]
    %v71 = vld [vmem:[#allocation2 + $0xf8] sm:$0xff]
    %v72 = vld [vmem:[#allocation5] sm:$0xff]
    %v73 = vld [vmem:[#allocation5 + $0x8] sm:$0xff]
    %v74 = vld [vmem:[#allocation5 + $0x10] sm:$0xff]
    %v75 = vld [vmem:[#allocation5 + $0x18] sm:$0xff]
    %v76 = vld [vmem:[#allocation5 + $0x20] sm:$0xff]
    %v77 = vld [vmem:[#allocation5 + $0x28] sm:$0xff]
    %v78 = vld [vmem:[#allocation5 + $0x30] sm:$0xff]
    %v79 = vld [vmem:[#allocation5 + $0x38] sm:$0xff]
    %v80 = vmul.f32 %v40, 10.0
    %v81 = vmul.f32 %v41, 10.0
    %v82 = vmul.f32 %v42, 10.0
    %v83 = vmul.f32 %v43, 10.0
    %v84 = vmul.f32 %v44, 10.0
    %v85 = vmul.f32 %v45, 10.0
    %v86 = vmul.f32 %v46, 10.0
    %v87 = vmul.f32 %v47, 10.0
    %v88 = vmul.f32 %v48, 10.0
    %v89 = vmul.f32 %v49, 10.0
    %v90 = vmul.f32 %v50, 10.0
    %v91 = vmul.f32 %v51, 10.0
    %v92 = vmul.f32 %v52, 10.0
    %v93 = vmul.f32 %v53, 10.0
    %v94 = vmul.f32 %v54, 10.0
    %v95 = vmul.f32 %v55, 10.0
    %v96 = vmul.f32 %v56, 10.0
    %v97 = vmul.f32 %v57, 10.0
    %v98 = vmul.f32 %v58, 10.0
    %v99 = vmul.f32 %v59, 10.0
    %v100 = vmul.f32 %v60, 10.0
    %v101 = vmul.f32 %v61, 10.0
    %v102 = vmul.f32 %v62, 10.0
    %v103 = vmul.f32 %v63, 10.0
    %v104 = vmul.f32 %v64, 10.0
    %v105 = vmul.f32 %v65, 10.0
    %v106 = vmul.f32 %v66, 10.0
    %v107 = vmul.f32 %v67, 10.0
    %v108 = vmul.f32 %v68, 10.0
    %v109 = vmul.f32 %v69, 10.0
    %v110 = vmul.f32 %v70, 10.0
    %v111 = vmul.f32 %v71, 10.0
    %v112 = vfloor.f32 %v80
    %v113 = vfloor.f32 %v81
    %v114 = vfloor.f32 %v82
    %v115 = vfloor.f32 %v83
    %v116 = vfloor.f32 %v84
    %v117 = vfloor.f32 %v85
    %v118 = vfloor.f32 %v86
    %v119 = vfloor.f32 %v87
    %v120 = vfloor.f32 %v88
    %v121 = vfloor.f32 %v89
    %v122 = vfloor.f32 %v90
    %v123 = vfloor.f32 %v91
    %v124 = vfloor.f32 %v92
    %v125 = vfloor.f32 %v93
    %v126 = vfloor.f32 %v94
    %v127 = vfloor.f32 %v95
    %v128 = vfloor.f32 %v96
    %v129 = vfloor.f32 %v97
    %v130 = vfloor.f32 %v98
    %v131 = vfloor.f32 %v99
    %v132 = vfloor.f32 %v100
    %v133 = vfloor.f32 %v101
    %v134 = vfloor.f32 %v102
    %v135 = vfloor.f32 %v103
    %v136 = vfloor.f32 %v104
    %v137 = vfloor.f32 %v105
    %v138 = vfloor.f32 %v106
    %v139 = vfloor.f32 %v107
    %v140 = vfloor.f32 %v108
    %v141 = vfloor.f32 %v109
    %v142 = vfloor.f32 %v110
    %v143 = vfloor.f32 %v111
    %v144 = vadd.f32 %v112, 61.0
    %v145 = vadd.f32 %v113, 61.0
    %v146 = vadd.f32 %v114, 61.0
    %v147 = vadd.f32 %v115, 61.0
    %v148 = vadd.f32 %v116, 61.0
    %v149 = vadd.f32 %v117, 61.0
    %v150 = vadd.f32 %v118, 61.0
    %v151 = vadd.f32 %v119, 61.0
    %v152 = vadd.f32 %v120, 61.0
    %v153 = vadd.f32 %v121, 61.0
    %v154 = vadd.f32 %v122, 61.0
    %v155 = vadd.f32 %v123, 61.0
    %v156 = vadd.f32 %v124, 61.0
    %v157 = vadd.f32 %v125, 61.0
    %v158 = vadd.f32 %v126, 61.0
    %v159 = vadd.f32 %v127, 61.0
    %v160 = vadd.f32 %v128, 61.0
    %v161 = vadd.f32 %v129, 61.0
    %v162 = vadd.f32 %v130, 61.0
    %v163 = vadd.f32 %v131, 61.0
    %v164 = vadd.f32 %v132, 61.0
    %v165 = vadd.f32 %v133, 61.0
    %v166 = vadd.f32 %v134, 61.0
    %v167 = vadd.f32 %v135, 61.0
    %v168 = vadd.f32 %v136, 61.0
    %v169 = vadd.f32 %v137, 61.0
    %v170 = vadd.f32 %v138, 61.0
    %v171 = vadd.f32 %v139, 61.0
    %v172 = vadd.f32 %v140, 61.0
    %v173 = vadd.f32 %v141, 61.0
    %v174 = vadd.f32 %v142, 61.0
    %v175 = vadd.f32 %v143, 61.0
    %v176 = vmax.f32 %v144, 0.0
    %v177 = vmax.f32 %v145, 0.0
    %v178 = vmax.f32 %v146, 0.0
    %v179 = vmax.f32 %v147, 0.0
    %v180 = vmax.f32 %v148, 0.0
    %v181 = vmax.f32 %v149, 0.0
    %v182 = vmax.f32 %v150, 0.0
    %v183 = vmax.f32 %v151, 0.0
    %v184 = vmax.f32 %v152, 0.0
    %v185 = vmax.f32 %v153, 0.0
    %v186 = vmax.f32 %v154, 0.0
    %v187 = vmax.f32 %v155, 0.0
    %v188 = vmax.f32 %v156, 0.0
    %v189 = vmax.f32 %v157, 0.0
    %v190 = vmax.f32 %v158, 0.0
    %v191 = vmax.f32 %v159, 0.0
    %v192 = vmax.f32 %v160, 0.0
    %v193 = vmax.f32 %v161, 0.0
    %v194 = vmax.f32 %v162, 0.0
    %v195 = vmax.f32 %v163, 0.0
    %v196 = vmax.f32 %v164, 0.0
    %v197 = vmax.f32 %v165, 0.0
    %v198 = vmax.f32 %v166, 0.0
    %v199 = vmax.f32 %v167, 0.0
    %v200 = vmax.f32 %v168, 0.0
    %v201 = vmax.f32 %v169, 0.0
    %v202 = vmax.f32 %v170, 0.0
    %v203 = vmax.f32 %v171, 0.0
    %v204 = vmax.f32 %v172, 0.0
    %v205 = vmax.f32 %v173, 0.0
    %v206 = vmax.f32 %v174, 0.0
    %v207 = vmax.f32 %v175, 0.0
    %v208 = vmin.f32 %v176, 121.0
    %v209 = vmin.f32 %v177, 121.0
    %v210 = vmin.f32 %v178, 121.0
    %v211 = vmin.f32 %v179, 121.0
    %v212 = vmin.f32 %v180, 121.0
    %v213 = vmin.f32 %v181, 121.0
    %v214 = vmin.f32 %v182, 121.0
    %v215 = vmin.f32 %v183, 121.0
    %v216 = vmin.f32 %v184, 121.0
    %v217 = vmin.f32 %v185, 121.0
    %v218 = vmin.f32 %v186, 121.0
    %v219 = vmin.f32 %v187, 121.0
    %v220 = vmin.f32 %v188, 121.0
    %v221 = vmin.f32 %v189, 121.0
    %v222 = vmin.f32 %v190, 121.0
    %v223 = vmin.f32 %v191, 121.0
    %v224 = vmin.f32 %v192, 121.0
    %v225 = vmin.f32 %v193, 121.0
    %v226 = vmin.f32 %v194, 121.0
    %v227 = vmin.f32 %v195, 121.0
    %v228 = vmin.f32 %v196, 121.0
    %v229 = vmin.f32 %v197, 121.0
    %v230 = vmin.f32 %v198, 121.0
    %v231 = vmin.f32 %v199, 121.0
    %v232 = vmin.f32 %v200, 121.0
    %v233 = vmin.f32 %v201, 121.0
    %v234 = vmin.f32 %v202, 121.0
    %v235 = vmin.f32 %v203, 121.0
    %v236 = vmin.f32 %v204, 121.0
    %v237 = vmin.f32 %v205, 121.0
    %v238 = vmin.f32 %v206, 121.0
    %v239 = vmin.f32 %v207, 121.0
    %v240 = vcvt.f32.s32.to.zero.pseudo %v208
    %v241 = vcvt.f32.s32.to.zero.pseudo %v209
    %v242 = vcvt.f32.s32.to.zero.pseudo %v210
    %v243 = vcvt.f32.s32.to.zero.pseudo %v211
    %v244 = vcvt.f32.s32.to.zero.pseudo %v212
    %v245 = vcvt.f32.s32.to.zero.pseudo %v213
    %v246 = vcvt.f32.s32.to.zero.pseudo %v214
    %v247 = vcvt.f32.s32.to.zero.pseudo %v215
    %v248 = vcvt.f32.s32.to.zero.pseudo %v216
    %v249 = vcvt.f32.s32.to.zero.pseudo %v217
    %v250 = vcvt.f32.s32.to.zero.pseudo %v218
    %v251 = vcvt.f32.s32.to.zero.pseudo %v219
    %v252 = vcvt.f32.s32.to.zero.pseudo %v220
    %v253 = vcvt.f32.s32.to.zero.pseudo %v221
    %v254 = vcvt.f32.s32.to.zero.pseudo %v222
    %v255 = vcvt.f32.s32.to.zero.pseudo %v223
    %v256 = vcvt.f32.s32.to.zero.pseudo %v224
    %v257 = vcvt.f32.s32.to.zero.pseudo %v225
    %v258 = vcvt.f32.s32.to.zero.pseudo %v226
    %v259 = vcvt.f32.s32.to.zero.pseudo %v227
    %v260 = vcvt.f32.s32.to.zero.pseudo %v228
    %v261 = vcvt.f32.s32.to.zero.pseudo %v229
    %v262 = vcvt.f32.s32.to.zero.pseudo %v230
    %v263 = vcvt.f32.s32.to.zero.pseudo %v231
    %v264 = vcvt.f32.s32.to.zero.pseudo %v232
    %v265 = vcvt.f32.s32.to.zero.pseudo %v233
    %v266 = vcvt.f32.s32.to.zero.pseudo %v234
    %v267 = vcvt.f32.s32.to.zero.pseudo %v235
    %v268 = vcvt.f32.s32.to.zero.pseudo %v236
    %v269 = vcvt.f32.s32.to.zero.pseudo %v237
    %v270 = vcvt.f32.s32.to.zero.pseudo %v238
    %v271 = vcvt.f32.s32.to.zero.pseudo %v239
    %v272 = vand.u32 %v240, 1
    %v273 = vand.u32 %v241, 1
    %v274 = vand.u32 %v242, 1
    %v275 = vand.u32 %v243, 1
    %v276 = vand.u32 %v244, 1
    %v277 = vand.u32 %v245, 1
    %v278 = vand.u32 %v246, 1
    %v279 = vand.u32 %v247, 1
    %v280 = vand.u32 %v248, 1
    %v281 = vand.u32 %v249, 1
    %v282 = vand.u32 %v250, 1
    %v283 = vand.u32 %v251, 1
    %v284 = vand.u32 %v252, 1
    %v285 = vand.u32 %v253, 1
    %v286 = vand.u32 %v254, 1
    %v287 = vand.u32 %v255, 1
    %v288 = vand.u32 %v256, 1
    %v289 = vand.u32 %v257, 1
    %v290 = vand.u32 %v258, 1
    %v291 = vand.u32 %v259, 1
    %v292 = vand.u32 %v260, 1
    %v293 = vand.u32 %v261, 1
    %v294 = vand.u32 %v262, 1
    %v295 = vand.u32 %v263, 1
    %v296 = vand.u32 %v264, 1
    %v297 = vand.u32 %v265, 1
    %v298 = vand.u32 %v266, 1
    %v299 = vand.u32 %v267, 1
    %v300 = vand.u32 %v268, 1
    %v301 = vand.u32 %v269, 1
    %v302 = vand.u32 %v270, 1
    %v303 = vand.u32 %v271, 1
    %vm304 = vcmp.ne.s32.totalorder %v272, 0
    %vm305 = vcmp.ne.s32.totalorder %v273, 0
    %vm306 = vcmp.ne.s32.totalorder %v274, 0
    %vm307 = vcmp.ne.s32.totalorder %v275, 0
    %vm308 = vcmp.ne.s32.totalorder %v276, 0
    %vm309 = vcmp.ne.s32.totalorder %v277, 0
    %vm310 = vcmp.ne.s32.totalorder %v278, 0
    %vm311 = vcmp.ne.s32.totalorder %v279, 0
    %vm312 = vcmp.ne.s32.totalorder %v280, 0
    %vm313 = vcmp.ne.s32.totalorder %v281, 0
    %vm314 = vcmp.ne.s32.totalorder %v282, 0
    %vm315 = vcmp.ne.s32.totalorder %v283, 0
    %vm316 = vcmp.ne.s32.totalorder %v284, 0
    %vm317 = vcmp.ne.s32.totalorder %v285, 0
    %vm318 = vcmp.ne.s32.totalorder %v286, 0
    %vm319 = vcmp.ne.s32.totalorder %v287, 0
    %vm320 = vcmp.ne.s32.totalorder %v288, 0
    %vm321 = vcmp.ne.s32.totalorder %v289, 0
    %vm322 = vcmp.ne.s32.totalorder %v290, 0
    %vm323 = vcmp.ne.s32.totalorder %v291, 0
    %vm324 = vcmp.ne.s32.totalorder %v292, 0
    %vm325 = vcmp.ne.s32.totalorder %v293, 0
    %vm326 = vcmp.ne.s32.totalorder %v294, 0
    %vm327 = vcmp.ne.s32.totalorder %v295, 0
    %vm328 = vcmp.ne.s32.totalorder %v296, 0
    %vm329 = vcmp.ne.s32.totalorder %v297, 0
    %vm330 = vcmp.ne.s32.totalorder %v298, 0
    %vm331 = vcmp.ne.s32.totalorder %v299, 0
    %vm332 = vcmp.ne.s32.totalorder %v300, 0
    %vm333 = vcmp.ne.s32.totalorder %v301, 0
    %vm334 = vcmp.ne.s32.totalorder %v302, 0
    %vm335 = vcmp.ne.s32.totalorder %v303, 0
    %v336 = vand.u32 %v240, 2
    %v337 = vand.u32 %v241, 2
    %v338 = vand.u32 %v242, 2
    %v339 = vand.u32 %v243, 2
    %v340 = vand.u32 %v244, 2
    %v341 = vand.u32 %v245, 2
    %v342 = vand.u32 %v246, 2
    %v343 = vand.u32 %v247, 2
    %v344 = vand.u32 %v248, 2
    %v345 = vand.u32 %v249, 2
    %v346 = vand.u32 %v250, 2
    %v347 = vand.u32 %v251, 2
    %v348 = vand.u32 %v252, 2
    %v349 = vand.u32 %v253, 2
    %v350 = vand.u32 %v254, 2
    %v351 = vand.u32 %v255, 2
    %v352 = vand.u32 %v256, 2
    %v353 = vand.u32 %v257, 2
    %v354 = vand.u32 %v258, 2
    %v355 = vand.u32 %v259, 2
    %v356 = vand.u32 %v260, 2
    %v357 = vand.u32 %v261, 2
    %v358 = vand.u32 %v262, 2
    %v359 = vand.u32 %v263, 2
    %v360 = vand.u32 %v264, 2
    %v361 = vand.u32 %v265, 2
    %v362 = vand.u32 %v266, 2
    %v363 = vand.u32 %v267, 2
    %v364 = vand.u32 %v268, 2
    %v365 = vand.u32 %v269, 2
    %v366 = vand.u32 %v270, 2
    %v367 = vand.u32 %v271, 2
    %vm368 = vcmp.ne.s32.totalorder %v336, 0
    %vm369 = vcmp.ne.s32.totalorder %v337, 0
    %vm370 = vcmp.ne.s32.totalorder %v338, 0
    %vm371 = vcmp.ne.s32.totalorder %v339, 0
    %vm372 = vcmp.ne.s32.totalorder %v340, 0
    %vm373 = vcmp.ne.s32.totalorder %v341, 0
    %vm374 = vcmp.ne.s32.totalorder %v342, 0
    %vm375 = vcmp.ne.s32.totalorder %v343, 0
    %vm376 = vcmp.ne.s32.totalorder %v344, 0
    %vm377 = vcmp.ne.s32.totalorder %v345, 0
    %vm378 = vcmp.ne.s32.totalorder %v346, 0
    %vm379 = vcmp.ne.s32.totalorder %v347, 0
    %vm380 = vcmp.ne.s32.totalorder %v348, 0
    %vm381 = vcmp.ne.s32.totalorder %v349, 0
    %vm382 = vcmp.ne.s32.totalorder %v350, 0
    %vm383 = vcmp.ne.s32.totalorder %v351, 0
    %vm384 = vcmp.ne.s32.totalorder %v352, 0
    %vm385 = vcmp.ne.s32.totalorder %v353, 0
    %vm386 = vcmp.ne.s32.totalorder %v354, 0
    %vm387 = vcmp.ne.s32.totalorder %v355, 0
    %vm388 = vcmp.ne.s32.totalorder %v356, 0
    %vm389 = vcmp.ne.s32.totalorder %v357, 0
    %vm390 = vcmp.ne.s32.totalorder %v358, 0
    %vm391 = vcmp.ne.s32.totalorder %v359, 0
    %vm392 = vcmp.ne.s32.totalorder %v360, 0
    %vm393 = vcmp.ne.s32.totalorder %v361, 0
    %vm394 = vcmp.ne.s32.totalorder %v362, 0
    %vm395 = vcmp.ne.s32.totalorder %v363, 0
    %vm396 = vcmp.ne.s32.totalorder %v364, 0
    %vm397 = vcmp.ne.s32.totalorder %v365, 0
    %vm398 = vcmp.ne.s32.totalorder %v366, 0
    %vm399 = vcmp.ne.s32.totalorder %v367, 0
    %vm400 = vcmp.ge.f32.partialorder %v80, -57.0
    %vm401 = vcmp.ge.f32.partialorder %v81, -57.0
    %vm402 = vcmp.ge.f32.partialorder %v82, -57.0
    %vm403 = vcmp.ge.f32.partialorder %v83, -57.0
    %vm404 = vcmp.ge.f32.partialorder %v84, -57.0
    %vm405 = vcmp.ge.f32.partialorder %v85, -57.0
    %vm406 = vcmp.ge.f32.partialorder %v86, -57.0
    %vm407 = vcmp.ge.f32.partialorder %v87, -57.0
    %vm408 = vcmp.ge.f32.partialorder %v88, -57.0
    %vm409 = vcmp.ge.f32.partialorder %v89, -57.0
    %vm410 = vcmp.ge.f32.partialorder %v90, -57.0
    %vm411 = vcmp.ge.f32.partialorder %v91, -57.0
    %vm412 = vcmp.ge.f32.partialorder %v92, -57.0
    %vm413 = vcmp.ge.f32.partialorder %v93, -57.0
    %vm414 = vcmp.ge.f32.partialorder %v94, -57.0
    %vm415 = vcmp.ge.f32.partialorder %v95, -57.0
    %vm416 = vcmp.ge.f32.partialorder %v96, -57.0
    %vm417 = vcmp.ge.f32.partialorder %v97, -57.0
    %vm418 = vcmp.ge.f32.partialorder %v98, -57.0
    %vm419 = vcmp.ge.f32.partialorder %v99, -57.0
    %vm420 = vcmp.ge.f32.partialorder %v100, -57.0
    %vm421 = vcmp.ge.f32.partialorder %v101, -57.0
    %vm422 = vcmp.ge.f32.partialorder %v102, -57.0
    %vm423 = vcmp.ge.f32.partialorder %v103, -57.0
    %vm424 = vcmp.ge.f32.partialorder %v104, -57.0
    %vm425 = vcmp.ge.f32.partialorder %v105, -57.0
    %vm426 = vcmp.ge.f32.partialorder %v106, -57.0
    %vm427 = vcmp.ge.f32.partialorder %v107, -57.0
    %vm428 = vcmp.ge.f32.partialorder %v108, -57.0
    %vm429 = vcmp.ge.f32.partialorder %v109, -57.0
    %vm430 = vcmp.ge.f32.partialorder %v110, -57.0
    %vm431 = vcmp.ge.f32.partialorder %v111, -57.0
    %432 = vset.pattern.permute.xlu0 4
    %433 = vperm.xlu0 %432, %v72
    %v434 = vpop.permute.xlu0 %433
    %435 = vset.pattern.permute.xlu0 4
    %436 = vperm.xlu0 %435, %v73
    %v437 = vpop.permute.xlu0 %436
    %438 = vset.pattern.permute.xlu0 4
    %439 = vperm.xlu0 %438, %v74
    %v440 = vpop.permute.xlu0 %439
    %441 = vset.pattern.permute.xlu0 4
    %442 = vperm.xlu0 %441, %v75
    %v443 = vpop.permute.xlu0 %442
    %444 = vset.pattern.permute.xlu0 4
    %445 = vperm.xlu0 %444, %v76
    %v446 = vpop.permute.xlu0 %445
    %447 = vset.pattern.permute.xlu0 4
    %448 = vperm.xlu0 %447, %v77
    %v449 = vpop.permute.xlu0 %448
    %450 = vset.pattern.permute.xlu0 4
    %451 = vperm.xlu0 %450, %v78
    %v452 = vpop.permute.xlu0 %451
    %453 = vset.pattern.permute.xlu0 4
    %454 = vperm.xlu0 %453, %v79
    %v455 = vpop.permute.xlu0 %454
    %456 = vset.pattern.permute.xlu0 0
    %457 = vperm.xlu0 %456, %v72
    %v458 = vpop.permute.xlu0 %457
    %459 = vset.pattern.permute.xlu0 0
    %460 = vperm.xlu0 %459, %v73
    %v461 = vpop.permute.xlu0 %460
    %462 = vset.pattern.permute.xlu0 0
    %463 = vperm.xlu0 %462, %v74
    %v464 = vpop.permute.xlu0 %463
    %465 = vset.pattern.permute.xlu0 0
    %466 = vperm.xlu0 %465, %v75
    %v467 = vpop.permute.xlu0 %466
    %468 = vset.pattern.permute.xlu0 0
    %469 = vperm.xlu0 %468, %v76
    %v470 = vpop.permute.xlu0 %469
    %471 = vset.pattern.permute.xlu0 0
    %472 = vperm.xlu0 %471, %v77
    %v473 = vpop.permute.xlu0 %472
    %474 = vset.pattern.permute.xlu0 0
    %475 = vperm.xlu0 %474, %v78
    %v476 = vpop.permute.xlu0 %475
    %477 = vset.pattern.permute.xlu0 0
    %478 = vperm.xlu0 %477, %v79
    %v479 = vpop.permute.xlu0 %478
    %v480 = vsel %vm400, %v434, %v458
    %v481 = vsel %vm401, %v434, %v458
    %v482 = vsel %vm402, %v437, %v461
    %v483 = vsel %vm403, %v437, %v461
    %v484 = vsel %vm404, %v440, %v464
    %v485 = vsel %vm405, %v440, %v464
    %v486 = vsel %vm406, %v443, %v467
    %v487 = vsel %vm407, %v443, %v467
    %v488 = vsel %vm408, %v446, %v470
    %v489 = vsel %vm409, %v446, %v470
    %v490 = vsel %vm410, %v449, %v473
    %v491 = vsel %vm411, %v449, %v473
    %v492 = vsel %vm412, %v452, %v476
    %v493 = vsel %vm413, %v452, %v476
    %v494 = vsel %vm414, %v455, %v479
    %v495 = vsel %vm415, %v455, %v479
    %v496 = vsel %vm416, %v434, %v458
    %v497 = vsel %vm417, %v434, %v458
    %v498 = vsel %vm418, %v437, %v461
    %v499 = vsel %vm419, %v437, %v461
    %v500 = vsel %vm420, %v440, %v464
    %v501 = vsel %vm421, %v440, %v464
    %v502 = vsel %vm422, %v443, %v467
    %v503 = vsel %vm423, %v443, %v467
    %v504 = vsel %vm424, %v446, %v470
    %v505 = vsel %vm425, %v446, %v470
    %v506 = vsel %vm426, %v449, %v473
    %v507 = vsel %vm427, %v449, %v473
    %v508 = vsel %vm428, %v452, %v476
    %v509 = vsel %vm429, %v452, %v476
    %v510 = vsel %vm430, %v455, %v479
    %v511 = vsel %vm431, %v455, %v479
    %512 = vset.pattern.permute.xlu0 5
    %513 = vperm.xlu0 %512, %v72
    %v514 = vpop.permute.xlu0 %513
    %515 = vset.pattern.permute.xlu0 5
    %516 = vperm.xlu0 %515, %v73
    %v517 = vpop.permute.xlu0 %516
    %518 = vset.pattern.permute.xlu0 5
    %519 = vperm.xlu0 %518, %v74
    %v520 = vpop.permute.xlu0 %519
    %521 = vset.pattern.permute.xlu0 5
    %522 = vperm.xlu0 %521, %v75
    %v523 = vpop.permute.xlu0 %522
    %524 = vset.pattern.permute.xlu0 5
    %525 = vperm.xlu0 %524, %v76
    %v526 = vpop.permute.xlu0 %525
    %527 = vset.pattern.permute.xlu0 5
    %528 = vperm.xlu0 %527, %v77
    %v529 = vpop.permute.xlu0 %528
    %530 = vset.pattern.permute.xlu0 5
    %531 = vperm.xlu0 %530, %v78
    %v532 = vpop.permute.xlu0 %531
    %533 = vset.pattern.permute.xlu0 5
    %534 = vperm.xlu0 %533, %v79
    %v535 = vpop.permute.xlu0 %534
    %536 = vset.pattern.permute.xlu0 1
    %537 = vperm.xlu0 %536, %v72
    %v538 = vpop.permute.xlu0 %537
    %539 = vset.pattern.permute.xlu0 1
    %540 = vperm.xlu0 %539, %v73
    %v541 = vpop.permute.xlu0 %540
    %542 = vset.pattern.permute.xlu0 1
    %543 = vperm.xlu0 %542, %v74
    %v544 = vpop.permute.xlu0 %543
    %545 = vset.pattern.permute.xlu0 1
    %546 = vperm.xlu0 %545, %v75
    %v547 = vpop.permute.xlu0 %546
    %548 = vset.pattern.permute.xlu0 1
    %549 = vperm.xlu0 %548, %v76
    %v550 = vpop.permute.xlu0 %549
    %551 = vset.pattern.permute.xlu0 1
    %552 = vperm.xlu0 %551, %v77
    %v553 = vpop.permute.xlu0 %552
    %554 = vset.pattern.permute.xlu0 1
    %555 = vperm.xlu0 %554, %v78
    %v556 = vpop.permute.xlu0 %555
    %557 = vset.pattern.permute.xlu0 1
    %558 = vperm.xlu0 %557, %v79
    %v559 = vpop.permute.xlu0 %558
    %v560 = vsel %vm400, %v514, %v538
    %v561 = vsel %vm401, %v514, %v538
    %v562 = vsel %vm402, %v517, %v541
    %v563 = vsel %vm403, %v517, %v541
    %v564 = vsel %vm404, %v520, %v544
    %v565 = vsel %vm405, %v520, %v544
    %v566 = vsel %vm406, %v523, %v547
    %v567 = vsel %vm407, %v523, %v547
    %v568 = vsel %vm408, %v526, %v550
    %v569 = vsel %vm409, %v526, %v550
    %v570 = vsel %vm410, %v529, %v553
    %v571 = vsel %vm411, %v529, %v553
    %v572 = vsel %vm412, %v532, %v556
    %v573 = vsel %vm413, %v532, %v556
    %v574 = vsel %vm414, %v535, %v559
    %v575 = vsel %vm415, %v535, %v559
    %v576 = vsel %vm416, %v514, %v538
    %v577 = vsel %vm417, %v514, %v538
    %v578 = vsel %vm418, %v517, %v541
    %v579 = vsel %vm419, %v517, %v541
    %v580 = vsel %vm420, %v520, %v544
    %v581 = vsel %vm421, %v520, %v544
    %v582 = vsel %vm422, %v523, %v547
    %v583 = vsel %vm423, %v523, %v547
    %v584 = vsel %vm424, %v526, %v550
    %v585 = vsel %vm425, %v526, %v550
    %v586 = vsel %vm426, %v529, %v553
    %v587 = vsel %vm427, %v529, %v553
    %v588 = vsel %vm428, %v532, %v556
    %v589 = vsel %vm429, %v532, %v556
    %v590 = vsel %vm430, %v535, %v559
    %v591 = vsel %vm431, %v535, %v559
    %592 = vset.pattern.permute.xlu0 6
    %593 = vperm.xlu0 %592, %v72
    %v594 = vpop.permute.xlu0 %593
    %595 = vset.pattern.permute.xlu0 6
    %596 = vperm.xlu0 %595, %v73
    %v597 = vpop.permute.xlu0 %596
    %598 = vset.pattern.permute.xlu0 6
    %599 = vperm.xlu0 %598, %v74
    %v600 = vpop.permute.xlu0 %599
    %601 = vset.pattern.permute.xlu0 6
    %602 = vperm.xlu0 %601, %v75
    %v603 = vpop.permute.xlu0 %602
    %604 = vset.pattern.permute.xlu0 6
    %605 = vperm.xlu0 %604, %v76
    %v606 = vpop.permute.xlu0 %605
    %607 = vset.pattern.permute.xlu0 6
    %608 = vperm.xlu0 %607, %v77
    %v609 = vpop.permute.xlu0 %608
    %610 = vset.pattern.permute.xlu0 6
    %611 = vperm.xlu0 %610, %v78
    %v612 = vpop.permute.xlu0 %611
    %613 = vset.pattern.permute.xlu0 6
    %614 = vperm.xlu0 %613, %v79
    %v615 = vpop.permute.xlu0 %614
    %616 = vset.pattern.permute.xlu0 2
    %617 = vperm.xlu0 %616, %v72
    %v618 = vpop.permute.xlu0 %617
    %619 = vset.pattern.permute.xlu0 2
    %620 = vperm.xlu0 %619, %v73
    %v621 = vpop.permute.xlu0 %620
    %622 = vset.pattern.permute.xlu0 2
    %623 = vperm.xlu0 %622, %v74
    %v624 = vpop.permute.xlu0 %623
    %625 = vset.pattern.permute.xlu0 2
    %626 = vperm.xlu0 %625, %v75
    %v627 = vpop.permute.xlu0 %626
    %628 = vset.pattern.permute.xlu0 2
    %629 = vperm.xlu0 %628, %v76
    %v630 = vpop.permute.xlu0 %629
    %631 = vset.pattern.permute.xlu0 2
    %632 = vperm.xlu0 %631, %v77
    %v633 = vpop.permute.xlu0 %632
    %634 = vset.pattern.permute.xlu0 2
    %635 = vperm.xlu0 %634, %v78
    %v636 = vpop.permute.xlu0 %635
    %637 = vset.pattern.permute.xlu0 2
    %638 = vperm.xlu0 %637, %v79
    %v639 = vpop.permute.xlu0 %638
    %v640 = vsel %vm400, %v594, %v618
    %v641 = vsel %vm401, %v594, %v618
    %v642 = vsel %vm402, %v597, %v621
    %v643 = vsel %vm403, %v597, %v621
    %v644 = vsel %vm404, %v600, %v624
    %v645 = vsel %vm405, %v600, %v624
    %v646 = vsel %vm406, %v603, %v627
    %v647 = vsel %vm407, %v603, %v627
    %v648 = vsel %vm408, %v606, %v630
    %v649 = vsel %vm409, %v606, %v630
    %v650 = vsel %vm410, %v609, %v633
    %v651 = vsel %vm411, %v609, %v633
    %v652 = vsel %vm412, %v612, %v636
    %v653 = vsel %vm413, %v612, %v636
    %v654 = vsel %vm414, %v615, %v639
    %v655 = vsel %vm415, %v615, %v639
    %v656 = vsel %vm416, %v594, %v618
    %v657 = vsel %vm417, %v594, %v618
    %v658 = vsel %vm418, %v597, %v621
    %v659 = vsel %vm419, %v597, %v621
    %v660 = vsel %vm420, %v600, %v624
    %v661 = vsel %vm421, %v600, %v624
    %v662 = vsel %vm422, %v603, %v627
    %v663 = vsel %vm423, %v603, %v627
    %v664 = vsel %vm424, %v606, %v630
    %v665 = vsel %vm425, %v606, %v630
    %v666 = vsel %vm426, %v609, %v633
    %v667 = vsel %vm427, %v609, %v633
    %v668 = vsel %vm428, %v612, %v636
    %v669 = vsel %vm429, %v612, %v636
    %v670 = vsel %vm430, %v615, %v639
    %v671 = vsel %vm431, %v615, %v639
    %672 = vset.pattern.permute.xlu0 7
    %673 = vperm.xlu0 %672, %v72
    %v674 = vpop.permute.xlu0 %673
    %675 = vset.pattern.permute.xlu0 7
    %676 = vperm.xlu0 %675, %v73
    %v677 = vpop.permute.xlu0 %676
    %678 = vset.pattern.permute.xlu0 7
    %679 = vperm.xlu0 %678, %v74
    %v680 = vpop.permute.xlu0 %679
    %681 = vset.pattern.permute.xlu0 7
    %682 = vperm.xlu0 %681, %v75
    %v683 = vpop.permute.xlu0 %682
    %684 = vset.pattern.permute.xlu0 7
    %685 = vperm.xlu0 %684, %v76
    %v686 = vpop.permute.xlu0 %685
    %687 = vset.pattern.permute.xlu0 7
    %688 = vperm.xlu0 %687, %v77
    %v689 = vpop.permute.xlu0 %688
    %690 = vset.pattern.permute.xlu0 7
    %691 = vperm.xlu0 %690, %v78
    %v692 = vpop.permute.xlu0 %691
    %693 = vset.pattern.permute.xlu0 7
    %694 = vperm.xlu0 %693, %v79
    %v695 = vpop.permute.xlu0 %694
    %696 = vset.pattern.permute.xlu0 3
    %697 = vperm.xlu0 %696, %v72
    %v698 = vpop.permute.xlu0 %697
    %699 = vset.pattern.permute.xlu0 3
    %700 = vperm.xlu0 %699, %v73
    %v701 = vpop.permute.xlu0 %700
    %702 = vset.pattern.permute.xlu0 3
    %703 = vperm.xlu0 %702, %v74
    %v704 = vpop.permute.xlu0 %703
    %705 = vset.pattern.permute.xlu0 3
    %706 = vperm.xlu0 %705, %v75
    %v707 = vpop.permute.xlu0 %706
    %708 = vset.pattern.permute.xlu0 3
    %709 = vperm.xlu0 %708, %v76
    %v710 = vpop.permute.xlu0 %709
    %711 = vset.pattern.permute.xlu0 3
    %712 = vperm.xlu0 %711, %v77
    %v713 = vpop.permute.xlu0 %712
    %714 = vset.pattern.permute.xlu0 3
    %715 = vperm.xlu0 %714, %v78
    %v716 = vpop.permute.xlu0 %715
    %717 = vset.pattern.permute.xlu0 3
    %718 = vperm.xlu0 %717, %v79
    %v719 = vpop.permute.xlu0 %718
    %v720 = vsel %vm400, %v674, %v698
    %v721 = vsel %vm401, %v674, %v698
    %v722 = vsel %vm402, %v677, %v701
    %v723 = vsel %vm403, %v677, %v701
    %v724 = vsel %vm404, %v680, %v704
    %v725 = vsel %vm405, %v680, %v704
    %v726 = vsel %vm406, %v683, %v707
    %v727 = vsel %vm407, %v683, %v707
    %v728 = vsel %vm408, %v686, %v710
    %v729 = vsel %vm409, %v686, %v710
    %v730 = vsel %vm410, %v689, %v713
    %v731 = vsel %vm411, %v689, %v713
    %v732 = vsel %vm412, %v692, %v716
    %v733 = vsel %vm413, %v692, %v716
    %v734 = vsel %vm414, %v695, %v719
    %v735 = vsel %vm415, %v695, %v719
    %v736 = vsel %vm416, %v674, %v698
    %v737 = vsel %vm417, %v674, %v698
    %v738 = vsel %vm418, %v677, %v701
    %v739 = vsel %vm419, %v677, %v701
    %v740 = vsel %vm420, %v680, %v704
    %v741 = vsel %vm421, %v680, %v704
    %v742 = vsel %vm422, %v683, %v707
    %v743 = vsel %vm423, %v683, %v707
    %v744 = vsel %vm424, %v686, %v710
    %v745 = vsel %vm425, %v686, %v710
    %v746 = vsel %vm426, %v689, %v713
    %v747 = vsel %vm427, %v689, %v713
    %v748 = vsel %vm428, %v692, %v716
    %v749 = vsel %vm429, %v692, %v716
    %v750 = vsel %vm430, %v695, %v719
    %v751 = vsel %vm431, %v695, %v719
    %vm752 = vcmp.ge.f32.partialorder %v80, -53.0
    %vm753 = vcmp.ge.f32.partialorder %v81, -53.0
    %vm754 = vcmp.ge.f32.partialorder %v82, -53.0
    %vm755 = vcmp.ge.f32.partialorder %v83, -53.0
    %vm756 = vcmp.ge.f32.partialorder %v84, -53.0
    %vm757 = vcmp.ge.f32.partialorder %v85, -53.0
    %vm758 = vcmp.ge.f32.partialorder %v86, -53.0
    %vm759 = vcmp.ge.f32.partialorder %v87, -53.0
    %vm760 = vcmp.ge.f32.partialorder %v88, -53.0
    %vm761 = vcmp.ge.f32.partialorder %v89, -53.0
    %vm762 = vcmp.ge.f32.partialorder %v90, -53.0
    %vm763 = vcmp.ge.f32.partialorder %v91, -53.0
    %vm764 = vcmp.ge.f32.partialorder %v92, -53.0
    %vm765 = vcmp.ge.f32.partialorder %v93, -53.0
    %vm766 = vcmp.ge.f32.partialorder %v94, -53.0
    %vm767 = vcmp.ge.f32.partialorder %v95, -53.0
    %vm768 = vcmp.ge.f32.partialorder %v96, -53.0
    %vm769 = vcmp.ge.f32.partialorder %v97, -53.0
    %vm770 = vcmp.ge.f32.partialorder %v98, -53.0
    %vm771 = vcmp.ge.f32.partialorder %v99, -53.0
    %vm772 = vcmp.ge.f32.partialorder %v100, -53.0
    %vm773 = vcmp.ge.f32.partialorder %v101, -53.0
    %vm774 = vcmp.ge.f32.partialorder %v102, -53.0
    %vm775 = vcmp.ge.f32.partialorder %v103, -53.0
    %vm776 = vcmp.ge.f32.partialorder %v104, -53.0
    %vm777 = vcmp.ge.f32.partialorder %v105, -53.0
    %vm778 = vcmp.ge.f32.partialorder %v106, -53.0
    %vm779 = vcmp.ge.f32.partialorder %v107, -53.0
    %vm780 = vcmp.ge.f32.partialorder %v108, -53.0
    %vm781 = vcmp.ge.f32.partialorder %v109, -53.0
    %vm782 = vcmp.ge.f32.partialorder %v110, -53.0
    %vm783 = vcmp.ge.f32.partialorder %v111, -53.0
    %784 = vset.pattern.permute.xlu0 8
    %785 = vperm.xlu0 %784, %v72
    %v786 = vpop.permute.xlu0 %785
    %787 = vset.pattern.permute.xlu0 8
    %788 = vperm.xlu0 %787, %v73
    %v789 = vpop.permute.xlu0 %788
    %790 = vset.pattern.permute.xlu0 8
    %791 = vperm.xlu0 %790, %v74
    %v792 = vpop.permute.xlu0 %791
    %793 = vset.pattern.permute.xlu0 8
    %794 = vperm.xlu0 %793, %v75
    %v795 = vpop.permute.xlu0 %794
    %796 = vset.pattern.permute.xlu0 8
    %797 = vperm.xlu0 %796, %v76
    %v798 = vpop.permute.xlu0 %797
    %799 = vset.pattern.permute.xlu0 8
    %800 = vperm.xlu0 %799, %v77
    %v801 = vpop.permute.xlu0 %800
    %802 = vset.pattern.permute.xlu0 8
    %803 = vperm.xlu0 %802, %v78
    %v804 = vpop.permute.xlu0 %803
    %805 = vset.pattern.permute.xlu0 8
    %806 = vperm.xlu0 %805, %v79
    %v807 = vpop.permute.xlu0 %806
    %v808 = vsel %vm752, %v786, %v480
    %v809 = vsel %vm753, %v786, %v481
    %v810 = vsel %vm754, %v789, %v482
    %v811 = vsel %vm755, %v789, %v483
    %v812 = vsel %vm756, %v792, %v484
    %v813 = vsel %vm757, %v792, %v485
    %v814 = vsel %vm758, %v795, %v486
    %v815 = vsel %vm759, %v795, %v487
    %v816 = vsel %vm760, %v798, %v488
    %v817 = vsel %vm761, %v798, %v489
    %v818 = vsel %vm762, %v801, %v490
    %v819 = vsel %vm763, %v801, %v491
    %v820 = vsel %vm764, %v804, %v492
    %v821 = vsel %vm765, %v804, %v493
    %v822 = vsel %vm766, %v807, %v494
    %v823 = vsel %vm767, %v807, %v495
    %v824 = vsel %vm768, %v786, %v496
    %v825 = vsel %vm769, %v786, %v497
    %v826 = vsel %vm770, %v789, %v498
    %v827 = vsel %vm771, %v789, %v499
    %v828 = vsel %vm772, %v792, %v500
    %v829 = vsel %vm773, %v792, %v501
    %v830 = vsel %vm774, %v795, %v502
    %v831 = vsel %vm775, %v795, %v503
    %v832 = vsel %vm776, %v798, %v504
    %v833 = vsel %vm777, %v798, %v505
    %v834 = vsel %vm778, %v801, %v506
    %v835 = vsel %vm779, %v801, %v507
    %v836 = vsel %vm780, %v804, %v508
    %v837 = vsel %vm781, %v804, %v509
    %v838 = vsel %vm782, %v807, %v510
    %v839 = vsel %vm783, %v807, %v511
    %840 = vset.pattern.permute.xlu0 9
    %841 = vperm.xlu0 %840, %v72
    %v842 = vpop.permute.xlu0 %841
    %843 = vset.pattern.permute.xlu0 9
    %844 = vperm.xlu0 %843, %v73
    %v845 = vpop.permute.xlu0 %844
    %846 = vset.pattern.permute.xlu0 9
    %847 = vperm.xlu0 %846, %v74
    %v848 = vpop.permute.xlu0 %847
    %849 = vset.pattern.permute.xlu0 9
    %850 = vperm.xlu0 %849, %v75
    %v851 = vpop.permute.xlu0 %850
    %852 = vset.pattern.permute.xlu0 9
    %853 = vperm.xlu0 %852, %v76
    %v854 = vpop.permute.xlu0 %853
    %855 = vset.pattern.permute.xlu0 9
    %856 = vperm.xlu0 %855, %v77
    %v857 = vpop.permute.xlu0 %856
    %858 = vset.pattern.permute.xlu0 9
    %859 = vperm.xlu0 %858, %v78
    %v860 = vpop.permute.xlu0 %859
    %861 = vset.pattern.permute.xlu0 9
    %862 = vperm.xlu0 %861, %v79
    %v863 = vpop.permute.xlu0 %862
    %v864 = vsel %vm752, %v842, %v560
    %v865 = vsel %vm753, %v842, %v561
    %v866 = vsel %vm754, %v845, %v562
    %v867 = vsel %vm755, %v845, %v563
    %v868 = vsel %vm756, %v848, %v564
    %v869 = vsel %vm757, %v848, %v565
    %v870 = vsel %vm758, %v851, %v566
    %v871 = vsel %vm759, %v851, %v567
    %v872 = vsel %vm760, %v854, %v568
    %v873 = vsel %vm761, %v854, %v569
    %v874 = vsel %vm762, %v857, %v570
    %v875 = vsel %vm763, %v857, %v571
    %v876 = vsel %vm764, %v860, %v572
    %v877 = vsel %vm765, %v860, %v573
    %v878 = vsel %vm766, %v863, %v574
    %v879 = vsel %vm767, %v863, %v575
    %v880 = vsel %vm768, %v842, %v576
    %v881 = vsel %vm769, %v842, %v577
    %v882 = vsel %vm770, %v845, %v578
    %v883 = vsel %vm771, %v845, %v579
    %v884 = vsel %vm772, %v848, %v580
    %v885 = vsel %vm773, %v848, %v581
    %v886 = vsel %vm774, %v851, %v582
    %v887 = vsel %vm775, %v851, %v583
    %v888 = vsel %vm776, %v854, %v584
    %v889 = vsel %vm777, %v854, %v585
    %v890 = vsel %vm778, %v857, %v586
    %v891 = vsel %vm779, %v857, %v587
    %v892 = vsel %vm780, %v860, %v588
    %v893 = vsel %vm781, %v860, %v589
    %v894 = vsel %vm782, %v863, %v590
    %v895 = vsel %vm783, %v863, %v591
    %896 = vset.pattern.permute.xlu0 10
    %897 = vperm.xlu0 %896, %v72
    %v898 = vpop.permute.xlu0 %897
    %899 = vset.pattern.permute.xlu0 10
    %900 = vperm.xlu0 %899, %v73
    %v901 = vpop.permute.xlu0 %900
    %902 = vset.pattern.permute.xlu0 10
    %903 = vperm.xlu0 %902, %v74
    %v904 = vpop.permute.xlu0 %903
    %905 = vset.pattern.permute.xlu0 10
    %906 = vperm.xlu0 %905, %v75
    %v907 = vpop.permute.xlu0 %906
    %908 = vset.pattern.permute.xlu0 10
    %909 = vperm.xlu0 %908, %v76
    %v910 = vpop.permute.xlu0 %909
    %911 = vset.pattern.permute.xlu0 10
    %912 = vperm.xlu0 %911, %v77
    %v913 = vpop.permute.xlu0 %912
    %914 = vset.pattern.permute.xlu0 10
    %915 = vperm.xlu0 %914, %v78
    %v916 = vpop.permute.xlu0 %915
    %917 = vset.pattern.permute.xlu0 10
    %918 = vperm.xlu0 %917, %v79
    %v919 = vpop.permute.xlu0 %918
    %v920 = vsel %vm752, %v898, %v640
    %v921 = vsel %vm753, %v898, %v641
    %v922 = vsel %vm754, %v901, %v642
    %v923 = vsel %vm755, %v901, %v643
    %v924 = vsel %vm756, %v904, %v644
    %v925 = vsel %vm757, %v904, %v645
    %v926 = vsel %vm758, %v907, %v646
    %v927 = vsel %vm759, %v907, %v647
    %v928 = vsel %vm760, %v910, %v648
    %v929 = vsel %vm761, %v910, %v649
    %v930 = vsel %vm762, %v913, %v650
    %v931 = vsel %vm763, %v913, %v651
    %v932 = vsel %vm764, %v916, %v652
    %v933 = vsel %vm765, %v916, %v653
    %v934 = vsel %vm766, %v919, %v654
    %v935 = vsel %vm767, %v919, %v655
    %v936 = vsel %vm768, %v898, %v656
    %v937 = vsel %vm769, %v898, %v657
    %v938 = vsel %vm770, %v901, %v658
    %v939 = vsel %vm771, %v901, %v659
    %v940 = vsel %vm772, %v904, %v660
    %v941 = vsel %vm773, %v904, %v661
    %v942 = vsel %vm774, %v907, %v662
    %v943 = vsel %vm775, %v907, %v663
    %v944 = vsel %vm776, %v910, %v664
    %v945 = vsel %vm777, %v910, %v665
    %v946 = vsel %vm778, %v913, %v666
    %v947 = vsel %vm779, %v913, %v667
    %v948 = vsel %vm780, %v916, %v668
    %v949 = vsel %vm781, %v916, %v669
    %v950 = vsel %vm782, %v919, %v670
    %v951 = vsel %vm783, %v919, %v671
    %952 = vset.pattern.permute.xlu0 11
    %953 = vperm.xlu0 %952, %v72
    %v954 = vpop.permute.xlu0 %953
    %955 = vset.pattern.permute.xlu0 11
    %956 = vperm.xlu0 %955, %v73
    %v957 = vpop.permute.xlu0 %956
    %958 = vset.pattern.permute.xlu0 11
    %959 = vperm.xlu0 %958, %v74
    %v960 = vpop.permute.xlu0 %959
    %961 = vset.pattern.permute.xlu0 11
    %962 = vperm.xlu0 %961, %v75
    %v963 = vpop.permute.xlu0 %962
    %964 = vset.pattern.permute.xlu0 11
    %965 = vperm.xlu0 %964, %v76
    %v966 = vpop.permute.xlu0 %965
    %967 = vset.pattern.permute.xlu0 11
    %968 = vperm.xlu0 %967, %v77
    %v969 = vpop.permute.xlu0 %968
    %970 = vset.pattern.permute.xlu0 11
    %971 = vperm.xlu0 %970, %v78
    %v972 = vpop.permute.xlu0 %971
    %973 = vset.pattern.permute.xlu0 11
    %974 = vperm.xlu0 %973, %v79
    %v975 = vpop.permute.xlu0 %974
    %v976 = vsel %vm752, %v954, %v720
    %v977 = vsel %vm753, %v954, %v721
    %v978 = vsel %vm754, %v957, %v722
    %v979 = vsel %vm755, %v957, %v723
    %v980 = vsel %vm756, %v960, %v724
    %v981 = vsel %vm757, %v960, %v725
    %v982 = vsel %vm758, %v963, %v726
    %v983 = vsel %vm759, %v963, %v727
    %v984 = vsel %vm760, %v966, %v728
    %v985 = vsel %vm761, %v966, %v729
    %v986 = vsel %vm762, %v969, %v730
    %v987 = vsel %vm763, %v969, %v731
    %v988 = vsel %vm764, %v972, %v732
    %v989 = vsel %vm765, %v972, %v733
    %v990 = vsel %vm766, %v975, %v734
    %v991 = vsel %vm767, %v975, %v735
    %v992 = vsel %vm768, %v954, %v736
    %v993 = vsel %vm769, %v954, %v737
    %v994 = vsel %vm770, %v957, %v738
    %v995 = vsel %vm771, %v957, %v739
    %v996 = vsel %vm772, %v960, %v740
    %v997 = vsel %vm773, %v960, %v741
    %v998 = vsel %vm774, %v963, %v742
    %v999 = vsel %vm775, %v963, %v743
    %v1000 = vsel %vm776, %v966, %v744
    %v1001 = vsel %vm777, %v966, %v745
    %v1002 = vsel %vm778, %v969, %v746
    %v1003 = vsel %vm779, %v969, %v747
    %v1004 = vsel %vm780, %v972, %v748
    %v1005 = vsel %vm781, %v972, %v749
    %v1006 = vsel %vm782, %v975, %v750
    %v1007 = vsel %vm783, %v975, %v751
    %vm1008 = vcmp.ge.f32.partialorder %v80, -49.0
    %vm1009 = vcmp.ge.f32.partialorder %v81, -49.0
    %vm1010 = vcmp.ge.f32.partialorder %v82, -49.0
    %vm1011 = vcmp.ge.f32.partialorder %v83, -49.0
    %vm1012 = vcmp.ge.f32.partialorder %v84, -49.0
    %vm1013 = vcmp.ge.f32.partialorder %v85, -49.0
    %vm1014 = vcmp.ge.f32.partialorder %v86, -49.0
    %vm1015 = vcmp.ge.f32.partialorder %v87, -49.0
    %vm1016 = vcmp.ge.f32.partialorder %v88, -49.0
    %vm1017 = vcmp.ge.f32.partialorder %v89, -49.0
    %vm1018 = vcmp.ge.f32.partialorder %v90, -49.0
    %vm1019 = vcmp.ge.f32.partialorder %v91, -49.0
    %vm1020 = vcmp.ge.f32.partialorder %v92, -49.0
    %vm1021 = vcmp.ge.f32.partialorder %v93, -49.0
    %vm1022 = vcmp.ge.f32.partialorder %v94, -49.0
    %vm1023 = vcmp.ge.f32.partialorder %v95, -49.0
    %vm1024 = vcmp.ge.f32.partialorder %v96, -49.0
    %vm1025 = vcmp.ge.f32.partialorder %v97, -49.0
    %vm1026 = vcmp.ge.f32.partialorder %v98, -49.0
    %vm1027 = vcmp.ge.f32.partialorder %v99, -49.0
    %vm1028 = vcmp.ge.f32.partialorder %v100, -49.0
    %vm1029 = vcmp.ge.f32.partialorder %v101, -49.0
    %vm1030 = vcmp.ge.f32.partialorder %v102, -49.0
    %vm1031 = vcmp.ge.f32.partialorder %v103, -49.0
    %vm1032 = vcmp.ge.f32.partialorder %v104, -49.0
    %vm1033 = vcmp.ge.f32.partialorder %v105, -49.0
    %vm1034 = vcmp.ge.f32.partialorder %v106, -49.0
    %vm1035 = vcmp.ge.f32.partialorder %v107, -49.0
    %vm1036 = vcmp.ge.f32.partialorder %v108, -49.0
    %vm1037 = vcmp.ge.f32.partialorder %v109, -49.0
    %vm1038 = vcmp.ge.f32.partialorder %v110, -49.0
    %vm1039 = vcmp.ge.f32.partialorder %v111, -49.0
    %1040 = vset.pattern.permute.xlu0 12
    %1041 = vperm.xlu0 %1040, %v72
    %v1042 = vpop.permute.xlu0 %1041
    %1043 = vset.pattern.permute.xlu0 12
    %1044 = vperm.xlu0 %1043, %v73
    %v1045 = vpop.permute.xlu0 %1044
    %1046 = vset.pattern.permute.xlu0 12
    %1047 = vperm.xlu0 %1046, %v74
    %v1048 = vpop.permute.xlu0 %1047
    %1049 = vset.pattern.permute.xlu0 12
    %1050 = vperm.xlu0 %1049, %v75
    %v1051 = vpop.permute.xlu0 %1050
    %1052 = vset.pattern.permute.xlu0 12
    %1053 = vperm.xlu0 %1052, %v76
    %v1054 = vpop.permute.xlu0 %1053
    %1055 = vset.pattern.permute.xlu0 12
    %1056 = vperm.xlu0 %1055, %v77
    %v1057 = vpop.permute.xlu0 %1056
    %1058 = vset.pattern.permute.xlu0 12
    %1059 = vperm.xlu0 %1058, %v78
    %v1060 = vpop.permute.xlu0 %1059
    %1061 = vset.pattern.permute.xlu0 12
    %1062 = vperm.xlu0 %1061, %v79
    %v1063 = vpop.permute.xlu0 %1062
    %v1064 = vsel %vm1008, %v1042, %v808
    %v1065 = vsel %vm1009, %v1042, %v809
    %v1066 = vsel %vm1010, %v1045, %v810
    %v1067 = vsel %vm1011, %v1045, %v811
    %v1068 = vsel %vm1012, %v1048, %v812
    %v1069 = vsel %vm1013, %v1048, %v813
    %v1070 = vsel %vm1014, %v1051, %v814
    %v1071 = vsel %vm1015, %v1051, %v815
    %v1072 = vsel %vm1016, %v1054, %v816
    %v1073 = vsel %vm1017, %v1054, %v817
    %v1074 = vsel %vm1018, %v1057, %v818
    %v1075 = vsel %vm1019, %v1057, %v819
    %v1076 = vsel %vm1020, %v1060, %v820
    %v1077 = vsel %vm1021, %v1060, %v821
    %v1078 = vsel %vm1022, %v1063, %v822
    %v1079 = vsel %vm1023, %v1063, %v823
    %v1080 = vsel %vm1024, %v1042, %v824
    %v1081 = vsel %vm1025, %v1042, %v825
    %v1082 = vsel %vm1026, %v1045, %v826
    %v1083 = vsel %vm1027, %v1045, %v827
    %v1084 = vsel %vm1028, %v1048, %v828
    %v1085 = vsel %vm1029, %v1048, %v829
    %v1086 = vsel %vm1030, %v1051, %v830
    %v1087 = vsel %vm1031, %v1051, %v831
    %v1088 = vsel %vm1032, %v1054, %v832
    %v1089 = vsel %vm1033, %v1054, %v833
    %v1090 = vsel %vm1034, %v1057, %v834
    %v1091 = vsel %vm1035, %v1057, %v835
    %v1092 = vsel %vm1036, %v1060, %v836
    %v1093 = vsel %vm1037, %v1060, %v837
    %v1094 = vsel %vm1038, %v1063, %v838
    %v1095 = vsel %vm1039, %v1063, %v839
    %1096 = vset.pattern.permute.xlu0 13
    %1097 = vperm.xlu0 %1096, %v72
    %v1098 = vpop.permute.xlu0 %1097
    %1099 = vset.pattern.permute.xlu0 13
    %1100 = vperm.xlu0 %1099, %v73
    %v1101 = vpop.permute.xlu0 %1100
    %1102 = vset.pattern.permute.xlu0 13
    %1103 = vperm.xlu0 %1102, %v74
    %v1104 = vpop.permute.xlu0 %1103
    %1105 = vset.pattern.permute.xlu0 13
    %1106 = vperm.xlu0 %1105, %v75
    %v1107 = vpop.permute.xlu0 %1106
    %1108 = vset.pattern.permute.xlu0 13
    %1109 = vperm.xlu0 %1108, %v76
    %v1110 = vpop.permute.xlu0 %1109
    %1111 = vset.pattern.permute.xlu0 13
    %1112 = vperm.xlu0 %1111, %v77
    %v1113 = vpop.permute.xlu0 %1112
    %1114 = vset.pattern.permute.xlu0 13
    %1115 = vperm.xlu0 %1114, %v78
    %v1116 = vpop.permute.xlu0 %1115
    %1117 = vset.pattern.permute.xlu0 13
    %1118 = vperm.xlu0 %1117, %v79
    %v1119 = vpop.permute.xlu0 %1118
    %v1120 = vsel %vm1008, %v1098, %v864
    %v1121 = vsel %vm1009, %v1098, %v865
    %v1122 = vsel %vm1010, %v1101, %v866
    %v1123 = vsel %vm1011, %v1101, %v867
    %v1124 = vsel %vm1012, %v1104, %v868
    %v1125 = vsel %vm1013, %v1104, %v869
    %v1126 = vsel %vm1014, %v1107, %v870
    %v1127 = vsel %vm1015, %v1107, %v871
    %v1128 = vsel %vm1016, %v1110, %v872
    %v1129 = vsel %vm1017, %v1110, %v873
    %v1130 = vsel %vm1018, %v1113, %v874
    %v1131 = vsel %vm1019, %v1113, %v875
    %v1132 = vsel %vm1020, %v1116, %v876
    %v1133 = vsel %vm1021, %v1116, %v877
    %v1134 = vsel %vm1022, %v1119, %v878
    %v1135 = vsel %vm1023, %v1119, %v879
    %v1136 = vsel %vm1024, %v1098, %v880
    %v1137 = vsel %vm1025, %v1098, %v881
    %v1138 = vsel %vm1026, %v1101, %v882
    %v1139 = vsel %vm1027, %v1101, %v883
    %v1140 = vsel %vm1028, %v1104, %v884
    %v1141 = vsel %vm1029, %v1104, %v885
    %v1142 = vsel %vm1030, %v1107, %v886
    %v1143 = vsel %vm1031, %v1107, %v887
    %v1144 = vsel %vm1032, %v1110, %v888
    %v1145 = vsel %vm1033, %v1110, %v889
    %v1146 = vsel %vm1034, %v1113, %v890
    %v1147 = vsel %vm1035, %v1113, %v891
    %v1148 = vsel %vm1036, %v1116, %v892
    %v1149 = vsel %vm1037, %v1116, %v893
    %v1150 = vsel %vm1038, %v1119, %v894
    %v1151 = vsel %vm1039, %v1119, %v895
    %1152 = vset.pattern.permute.xlu0 14
    %1153 = vperm.xlu0 %1152, %v72
    %v1154 = vpop.permute.xlu0 %1153
    %1155 = vset.pattern.permute.xlu0 14
    %1156 = vperm.xlu0 %1155, %v73
    %v1157 = vpop.permute.xlu0 %1156
    %1158 = vset.pattern.permute.xlu0 14
    %1159 = vperm.xlu0 %1158, %v74
    %v1160 = vpop.permute.xlu0 %1159
    %1161 = vset.pattern.permute.xlu0 14
    %1162 = vperm.xlu0 %1161, %v75
    %v1163 = vpop.permute.xlu0 %1162
    %1164 = vset.pattern.permute.xlu0 14
    %1165 = vperm.xlu0 %1164, %v76
    %v1166 = vpop.permute.xlu0 %1165
    %1167 = vset.pattern.permute.xlu0 14
    %1168 = vperm.xlu0 %1167, %v77
    %v1169 = vpop.permute.xlu0 %1168
    %1170 = vset.pattern.permute.xlu0 14
    %1171 = vperm.xlu0 %1170, %v78
    %v1172 = vpop.permute.xlu0 %1171
    %1173 = vset.pattern.permute.xlu0 14
    %1174 = vperm.xlu0 %1173, %v79
    %v1175 = vpop.permute.xlu0 %1174
    %v1176 = vsel %vm1008, %v1154, %v920
    %v1177 = vsel %vm1009, %v1154, %v921
    %v1178 = vsel %vm1010, %v1157, %v922
    %v1179 = vsel %vm1011, %v1157, %v923
    %v1180 = vsel %vm1012, %v1160, %v924
    %v1181 = vsel %vm1013, %v1160, %v925
    %v1182 = vsel %vm1014, %v1163, %v926
    %v1183 = vsel %vm1015, %v1163, %v927
    %v1184 = vsel %vm1016, %v1166, %v928
    %v1185 = vsel %vm1017, %v1166, %v929
    %v1186 = vsel %vm1018, %v1169, %v930
    %v1187 = vsel %vm1019, %v1169, %v931
    %v1188 = vsel %vm1020, %v1172, %v932
    %v1189 = vsel %vm1021, %v1172, %v933
    %v1190 = vsel %vm1022, %v1175, %v934
    %v1191 = vsel %vm1023, %v1175, %v935
    %v1192 = vsel %vm1024, %v1154, %v936
    %v1193 = vsel %vm1025, %v1154, %v937
    %v1194 = vsel %vm1026, %v1157, %v938
    %v1195 = vsel %vm1027, %v1157, %v939
    %v1196 = vsel %vm1028, %v1160, %v940
    %v1197 = vsel %vm1029, %v1160, %v941
    %v1198 = vsel %vm1030, %v1163, %v942
    %v1199 = vsel %vm1031, %v1163, %v943
    %v1200 = vsel %vm1032, %v1166, %v944
    %v1201 = vsel %vm1033, %v1166, %v945
    %v1202 = vsel %vm1034, %v1169, %v946
    %v1203 = vsel %vm1035, %v1169, %v947
    %v1204 = vsel %vm1036, %v1172, %v948
    %v1205 = vsel %vm1037, %v1172, %v949
    %v1206 = vsel %vm1038, %v1175, %v950
    %v1207 = vsel %vm1039, %v1175, %v951
    %1208 = vset.pattern.permute.xlu0 15
    %1209 = vperm.xlu0 %1208, %v72
    %v1210 = vpop.permute.xlu0 %1209
    %1211 = vset.pattern.permute.xlu0 15
    %1212 = vperm.xlu0 %1211, %v73
    %v1213 = vpop.permute.xlu0 %1212
    %1214 = vset.pattern.permute.xlu0 15
    %1215 = vperm.xlu0 %1214, %v74
    %v1216 = vpop.permute.xlu0 %1215
    %1217 = vset.pattern.permute.xlu0 15
    %1218 = vperm.xlu0 %1217, %v75
    %v1219 = vpop.permute.xlu0 %1218
    %1220 = vset.pattern.permute.xlu0 15
    %1221 = vperm.xlu0 %1220, %v76
    %v1222 = vpop.permute.xlu0 %1221
    %1223 = vset.pattern.permute.xlu0 15
    %1224 = vperm.xlu0 %1223, %v77
    %v1225 = vpop.permute.xlu0 %1224
    %1226 = vset.pattern.permute.xlu0 15
    %1227 = vperm.xlu0 %1226, %v78
    %v1228 = vpop.permute.xlu0 %1227
    %1229 = vset.pattern.permute.xlu0 15
    %1230 = vperm.xlu0 %1229, %v79
    %v1231 = vpop.permute.xlu0 %1230
    %v1232 = vsel %vm1008, %v1210, %v976
    %v1233 = vsel %vm1009, %v1210, %v977
    %v1234 = vsel %vm1010, %v1213, %v978
    %v1235 = vsel %vm1011, %v1213, %v979
    %v1236 = vsel %vm1012, %v1216, %v980
    %v1237 = vsel %vm1013, %v1216, %v981
    %v1238 = vsel %vm1014, %v1219, %v982
    %v1239 = vsel %vm1015, %v1219, %v983
    %v1240 = vsel %vm1016, %v1222, %v984
    %v1241 = vsel %vm1017, %v1222, %v985
    %v1242 = vsel %vm1018, %v1225, %v986
    %v1243 = vsel %vm1019, %v1225, %v987
    %v1244 = vsel %vm1020, %v1228, %v988
    %v1245 = vsel %vm1021, %v1228, %v989
    %v1246 = vsel %vm1022, %v1231, %v990
    %v1247 = vsel %vm1023, %v1231, %v991
    %v1248 = vsel %vm1024, %v1210, %v992
    %v1249 = vsel %vm1025, %v1210, %v993
    %v1250 = vsel %vm1026, %v1213, %v994
    %v1251 = vsel %vm1027, %v1213, %v995
    %v1252 = vsel %vm1028, %v1216, %v996
    %v1253 = vsel %vm1029, %v1216, %v997
    %v1254 = vsel %vm1030, %v1219, %v998
    %v1255 = vsel %vm1031, %v1219, %v999
    %v1256 = vsel %vm1032, %v1222, %v1000
    %v1257 = vsel %vm1033, %v1222, %v1001
    %v1258 = vsel %vm1034, %v1225, %v1002
    %v1259 = vsel %vm1035, %v1225, %v1003
    %v1260 = vsel %vm1036, %v1228, %v1004
    %v1261 = vsel %vm1037, %v1228, %v1005
    %v1262 = vsel %vm1038, %v1231, %v1006
    %v1263 = vsel %vm1039, %v1231, %v1007
    %vm1264 = vcmp.ge.f32.partialorder %v80, -45.0
    %vm1265 = vcmp.ge.f32.partialorder %v81, -45.0
    %vm1266 = vcmp.ge.f32.partialorder %v82, -45.0
    %vm1267 = vcmp.ge.f32.partialorder %v83, -45.0
    %vm1268 = vcmp.ge.f32.partialorder %v84, -45.0
    %vm1269 = vcmp.ge.f32.partialorder %v85, -45.0
    %vm1270 = vcmp.ge.f32.partialorder %v86, -45.0
    %vm1271 = vcmp.ge.f32.partialorder %v87, -45.0
    %vm1272 = vcmp.ge.f32.partialorder %v88, -45.0
    %vm1273 = vcmp.ge.f32.partialorder %v89, -45.0
    %vm1274 = vcmp.ge.f32.partialorder %v90, -45.0
    %vm1275 = vcmp.ge.f32.partialorder %v91, -45.0
    %vm1276 = vcmp.ge.f32.partialorder %v92, -45.0
    %vm1277 = vcmp.ge.f32.partialorder %v93, -45.0
    %vm1278 = vcmp.ge.f32.partialorder %v94, -45.0
    %vm1279 = vcmp.ge.f32.partialorder %v95, -45.0
    %vm1280 = vcmp.ge.f32.partialorder %v96, -45.0
    %vm1281 = vcmp.ge.f32.partialorder %v97, -45.0
    %vm1282 = vcmp.ge.f32.partialorder %v98, -45.0
    %vm1283 = vcmp.ge.f32.partialorder %v99, -45.0
    %vm1284 = vcmp.ge.f32.partialorder %v100, -45.0
    %vm1285 = vcmp.ge.f32.partialorder %v101, -45.0
    %vm1286 = vcmp.ge.f32.partialorder %v102, -45.0
    %vm1287 = vcmp.ge.f32.partialorder %v103, -45.0
    %vm1288 = vcmp.ge.f32.partialorder %v104, -45.0
    %vm1289 = vcmp.ge.f32.partialorder %v105, -45.0
    %vm1290 = vcmp.ge.f32.partialorder %v106, -45.0
    %vm1291 = vcmp.ge.f32.partialorder %v107, -45.0
    %vm1292 = vcmp.ge.f32.partialorder %v108, -45.0
    %vm1293 = vcmp.ge.f32.partialorder %v109, -45.0
    %vm1294 = vcmp.ge.f32.partialorder %v110, -45.0
    %vm1295 = vcmp.ge.f32.partialorder %v111, -45.0
    %1296 = vset.pattern.permute.xlu0 16
    %1297 = vperm.xlu0 %1296, %v72
    %v1298 = vpop.permute.xlu0 %1297
    %1299 = vset.pattern.permute.xlu0 16
    %1300 = vperm.xlu0 %1299, %v73
    %v1301 = vpop.permute.xlu0 %1300
    %1302 = vset.pattern.permute.xlu0 16
    %1303 = vperm.xlu0 %1302, %v74
    %v1304 = vpop.permute.xlu0 %1303
    %1305 = vset.pattern.permute.xlu0 16
    %1306 = vperm.xlu0 %1305, %v75
    %v1307 = vpop.permute.xlu0 %1306
    %1308 = vset.pattern.permute.xlu0 16
    %1309 = vperm.xlu0 %1308, %v76
    %v1310 = vpop.permute.xlu0 %1309
    %1311 = vset.pattern.permute.xlu0 16
    %1312 = vperm.xlu0 %1311, %v77
    %v1313 = vpop.permute.xlu0 %1312
    %1314 = vset.pattern.permute.xlu0 16
    %1315 = vperm.xlu0 %1314, %v78
    %v1316 = vpop.permute.xlu0 %1315
    %1317 = vset.pattern.permute.xlu0 16
    %1318 = vperm.xlu0 %1317, %v79
    %v1319 = vpop.permute.xlu0 %1318
    %v1320 = vsel %vm1264, %v1298, %v1064
    %v1321 = vsel %vm1265, %v1298, %v1065
    %v1322 = vsel %vm1266, %v1301, %v1066
    %v1323 = vsel %vm1267, %v1301, %v1067
    %v1324 = vsel %vm1268, %v1304, %v1068
    %v1325 = vsel %vm1269, %v1304, %v1069
    %v1326 = vsel %vm1270, %v1307, %v1070
    %v1327 = vsel %vm1271, %v1307, %v1071
    %v1328 = vsel %vm1272, %v1310, %v1072
    %v1329 = vsel %vm1273, %v1310, %v1073
    %v1330 = vsel %vm1274, %v1313, %v1074
    %v1331 = vsel %vm1275, %v1313, %v1075
    %v1332 = vsel %vm1276, %v1316, %v1076
    %v1333 = vsel %vm1277, %v1316, %v1077
    %v1334 = vsel %vm1278, %v1319, %v1078
    %v1335 = vsel %vm1279, %v1319, %v1079
    %v1336 = vsel %vm1280, %v1298, %v1080
    %v1337 = vsel %vm1281, %v1298, %v1081
    %v1338 = vsel %vm1282, %v1301, %v1082
    %v1339 = vsel %vm1283, %v1301, %v1083
    %v1340 = vsel %vm1284, %v1304, %v1084
    %v1341 = vsel %vm1285, %v1304, %v1085
    %v1342 = vsel %vm1286, %v1307, %v1086
    %v1343 = vsel %vm1287, %v1307, %v1087
    %v1344 = vsel %vm1288, %v1310, %v1088
    %v1345 = vsel %vm1289, %v1310, %v1089
    %v1346 = vsel %vm1290, %v1313, %v1090
    %v1347 = vsel %vm1291, %v1313, %v1091
    %v1348 = vsel %vm1292, %v1316, %v1092
    %v1349 = vsel %vm1293, %v1316, %v1093
    %v1350 = vsel %vm1294, %v1319, %v1094
    %v1351 = vsel %vm1295, %v1319, %v1095
    %1352 = vset.pattern.permute.xlu0 17
    %1353 = vperm.xlu0 %1352, %v72
    %v1354 = vpop.permute.xlu0 %1353
    %1355 = vset.pattern.permute.xlu0 17
    %1356 = vperm.xlu0 %1355, %v73
    %v1357 = vpop.permute.xlu0 %1356
    %1358 = vset.pattern.permute.xlu0 17
    %1359 = vperm.xlu0 %1358, %v74
    %v1360 = vpop.permute.xlu0 %1359
    %1361 = vset.pattern.permute.xlu0 17
    %1362 = vperm.xlu0 %1361, %v75
    %v1363 = vpop.permute.xlu0 %1362
    %1364 = vset.pattern.permute.xlu0 17
    %1365 = vperm.xlu0 %1364, %v76
    %v1366 = vpop.permute.xlu0 %1365
    %1367 = vset.pattern.permute.xlu0 17
    %1368 = vperm.xlu0 %1367, %v77
    %v1369 = vpop.permute.xlu0 %1368
    %1370 = vset.pattern.permute.xlu0 17
    %1371 = vperm.xlu0 %1370, %v78
    %v1372 = vpop.permute.xlu0 %1371
    %1373 = vset.pattern.permute.xlu0 17
    %1374 = vperm.xlu0 %1373, %v79
    %v1375 = vpop.permute.xlu0 %1374
    %v1376 = vsel %vm1264, %v1354, %v1120
    %v1377 = vsel %vm1265, %v1354, %v1121
    %v1378 = vsel %vm1266, %v1357, %v1122
    %v1379 = vsel %vm1267, %v1357, %v1123
    %v1380 = vsel %vm1268, %v1360, %v1124
    %v1381 = vsel %vm1269, %v1360, %v1125
    %v1382 = vsel %vm1270, %v1363, %v1126
    %v1383 = vsel %vm1271, %v1363, %v1127
    %v1384 = vsel %vm1272, %v1366, %v1128
    %v1385 = vsel %vm1273, %v1366, %v1129
    %v1386 = vsel %vm1274, %v1369, %v1130
    %v1387 = vsel %vm1275, %v1369, %v1131
    %v1388 = vsel %vm1276, %v1372, %v1132
    %v1389 = vsel %vm1277, %v1372, %v1133
    %v1390 = vsel %vm1278, %v1375, %v1134
    %v1391 = vsel %vm1279, %v1375, %v1135
    %v1392 = vsel %vm1280, %v1354, %v1136
    %v1393 = vsel %vm1281, %v1354, %v1137
    %v1394 = vsel %vm1282, %v1357, %v1138
    %v1395 = vsel %vm1283, %v1357, %v1139
    %v1396 = vsel %vm1284, %v1360, %v1140
    %v1397 = vsel %vm1285, %v1360, %v1141
    %v1398 = vsel %vm1286, %v1363, %v1142
    %v1399 = vsel %vm1287, %v1363, %v1143
    %v1400 = vsel %vm1288, %v1366, %v1144
    %v1401 = vsel %vm1289, %v1366, %v1145
    %v1402 = vsel %vm1290, %v1369, %v1146
    %v1403 = vsel %vm1291, %v1369, %v1147
    %v1404 = vsel %vm1292, %v1372, %v1148
    %v1405 = vsel %vm1293, %v1372, %v1149
    %v1406 = vsel %vm1294, %v1375, %v1150
    %v1407 = vsel %vm1295, %v1375, %v1151
    %1408 = vset.pattern.permute.xlu0 18
    %1409 = vperm.xlu0 %1408, %v72
    %v1410 = vpop.permute.xlu0 %1409
    %1411 = vset.pattern.permute.xlu0 18
    %1412 = vperm.xlu0 %1411, %v73
    %v1413 = vpop.permute.xlu0 %1412
    %1414 = vset.pattern.permute.xlu0 18
    %1415 = vperm.xlu0 %1414, %v74
    %v1416 = vpop.permute.xlu0 %1415
    %1417 = vset.pattern.permute.xlu0 18
    %1418 = vperm.xlu0 %1417, %v75
    %v1419 = vpop.permute.xlu0 %1418
    %1420 = vset.pattern.permute.xlu0 18
    %1421 = vperm.xlu0 %1420, %v76
    %v1422 = vpop.permute.xlu0 %1421
    %1423 = vset.pattern.permute.xlu0 18
    %1424 = vperm.xlu0 %1423, %v77
    %v1425 = vpop.permute.xlu0 %1424
    %1426 = vset.pattern.permute.xlu0 18
    %1427 = vperm.xlu0 %1426, %v78
    %v1428 = vpop.permute.xlu0 %1427
    %1429 = vset.pattern.permute.xlu0 18
    %1430 = vperm.xlu0 %1429, %v79
    %v1431 = vpop.permute.xlu0 %1430
    %v1432 = vsel %vm1264, %v1410, %v1176
    %v1433 = vsel %vm1265, %v1410, %v1177
    %v1434 = vsel %vm1266, %v1413, %v1178
    %v1435 = vsel %vm1267, %v1413, %v1179
    %v1436 = vsel %vm1268, %v1416, %v1180
    %v1437 = vsel %vm1269, %v1416, %v1181
    %v1438 = vsel %vm1270, %v1419, %v1182
    %v1439 = vsel %vm1271, %v1419, %v1183
    %v1440 = vsel %vm1272, %v1422, %v1184
    %v1441 = vsel %vm1273, %v1422, %v1185
    %v1442 = vsel %vm1274, %v1425, %v1186
    %v1443 = vsel %vm1275, %v1425, %v1187
    %v1444 = vsel %vm1276, %v1428, %v1188
    %v1445 = vsel %vm1277, %v1428, %v1189
    %v1446 = vsel %vm1278, %v1431, %v1190
    %v1447 = vsel %vm1279, %v1431, %v1191
    %v1448 = vsel %vm1280, %v1410, %v1192
    %v1449 = vsel %vm1281, %v1410, %v1193
    %v1450 = vsel %vm1282, %v1413, %v1194
    %v1451 = vsel %vm1283, %v1413, %v1195
    %v1452 = vsel %vm1284, %v1416, %v1196
    %v1453 = vsel %vm1285, %v1416, %v1197
    %v1454 = vsel %vm1286, %v1419, %v1198
    %v1455 = vsel %vm1287, %v1419, %v1199
    %v1456 = vsel %vm1288, %v1422, %v1200
    %v1457 = vsel %vm1289, %v1422, %v1201
    %v1458 = vsel %vm1290, %v1425, %v1202
    %v1459 = vsel %vm1291, %v1425, %v1203
    %v1460 = vsel %vm1292, %v1428, %v1204
    %v1461 = vsel %vm1293, %v1428, %v1205
    %v1462 = vsel %vm1294, %v1431, %v1206
    %v1463 = vsel %vm1295, %v1431, %v1207
    %1464 = vset.pattern.permute.xlu0 19
    %1465 = vperm.xlu0 %1464, %v72
    %v1466 = vpop.permute.xlu0 %1465
    %1467 = vset.pattern.permute.xlu0 19
    %1468 = vperm.xlu0 %1467, %v73
    %v1469 = vpop.permute.xlu0 %1468
    %1470 = vset.pattern.permute.xlu0 19
    %1471 = vperm.xlu0 %1470, %v74
    %v1472 = vpop.permute.xlu0 %1471
    %1473 = vset.pattern.permute.xlu0 19
    %1474 = vperm.xlu0 %1473, %v75
    %v1475 = vpop.permute.xlu0 %1474
    %1476 = vset.pattern.permute.xlu0 19
    %1477 = vperm.xlu0 %1476, %v76
    %v1478 = vpop.permute.xlu0 %1477
    %1479 = vset.pattern.permute.xlu0 19
    %1480 = vperm.xlu0 %1479, %v77
    %v1481 = vpop.permute.xlu0 %1480
    %1482 = vset.pattern.permute.xlu0 19
    %1483 = vperm.xlu0 %1482, %v78
    %v1484 = vpop.permute.xlu0 %1483
    %1485 = vset.pattern.permute.xlu0 19
    %1486 = vperm.xlu0 %1485, %v79
    %v1487 = vpop.permute.xlu0 %1486
    %v1488 = vsel %vm1264, %v1466, %v1232
    %v1489 = vsel %vm1265, %v1466, %v1233
    %v1490 = vsel %vm1266, %v1469, %v1234
    %v1491 = vsel %vm1267, %v1469, %v1235
    %v1492 = vsel %vm1268, %v1472, %v1236
    %v1493 = vsel %vm1269, %v1472, %v1237
    %v1494 = vsel %vm1270, %v1475, %v1238
    %v1495 = vsel %vm1271, %v1475, %v1239
    %v1496 = vsel %vm1272, %v1478, %v1240
    %v1497 = vsel %vm1273, %v1478, %v1241
    %v1498 = vsel %vm1274, %v1481, %v1242
    %v1499 = vsel %vm1275, %v1481, %v1243
    %v1500 = vsel %vm1276, %v1484, %v1244
    %v1501 = vsel %vm1277, %v1484, %v1245
    %v1502 = vsel %vm1278, %v1487, %v1246
    %v1503 = vsel %vm1279, %v1487, %v1247
    %v1504 = vsel %vm1280, %v1466, %v1248
    %v1505 = vsel %vm1281, %v1466, %v1249
    %v1506 = vsel %vm1282, %v1469, %v1250
    %v1507 = vsel %vm1283, %v1469, %v1251
    %v1508 = vsel %vm1284, %v1472, %v1252
    %v1509 = vsel %vm1285, %v1472, %v1253
    %v1510 = vsel %vm1286, %v1475, %v1254
    %v1511 = vsel %vm1287, %v1475, %v1255
    %v1512 = vsel %vm1288, %v1478, %v1256
    %v1513 = vsel %vm1289, %v1478, %v1257
    %v1514 = vsel %vm1290, %v1481, %v1258
    %v1515 = vsel %vm1291, %v1481, %v1259
    %v1516 = vsel %vm1292, %v1484, %v1260
    %v1517 = vsel %vm1293, %v1484, %v1261
    %v1518 = vsel %vm1294, %v1487, %v1262
    %v1519 = vsel %vm1295, %v1487, %v1263
    %vm1520 = vcmp.ge.f32.partialorder %v80, -41.0
    %vm1521 = vcmp.ge.f32.partialorder %v81, -41.0
    %vm1522 = vcmp.ge.f32.partialorder %v82, -41.0
    %vm1523 = vcmp.ge.f32.partialorder %v83, -41.0
    %vm1524 = vcmp.ge.f32.partialorder %v84, -41.0
    %vm1525 = vcmp.ge.f32.partialorder %v85, -41.0
    %vm1526 = vcmp.ge.f32.partialorder %v86, -41.0
    %vm1527 = vcmp.ge.f32.partialorder %v87, -41.0
    %vm1528 = vcmp.ge.f32.partialorder %v88, -41.0
    %vm1529 = vcmp.ge.f32.partialorder %v89, -41.0
    %vm1530 = vcmp.ge.f32.partialorder %v90, -41.0
    %vm1531 = vcmp.ge.f32.partialorder %v91, -41.0
    %vm1532 = vcmp.ge.f32.partialorder %v92, -41.0
    %vm1533 = vcmp.ge.f32.partialorder %v93, -41.0
    %vm1534 = vcmp.ge.f32.partialorder %v94, -41.0
    %vm1535 = vcmp.ge.f32.partialorder %v95, -41.0
    %vm1536 = vcmp.ge.f32.partialorder %v96, -41.0
    %vm1537 = vcmp.ge.f32.partialorder %v97, -41.0
    %vm1538 = vcmp.ge.f32.partialorder %v98, -41.0
    %vm1539 = vcmp.ge.f32.partialorder %v99, -41.0
    %vm1540 = vcmp.ge.f32.partialorder %v100, -41.0
    %vm1541 = vcmp.ge.f32.partialorder %v101, -41.0
    %vm1542 = vcmp.ge.f32.partialorder %v102, -41.0
    %vm1543 = vcmp.ge.f32.partialorder %v103, -41.0
    %vm1544 = vcmp.ge.f32.partialorder %v104, -41.0
    %vm1545 = vcmp.ge.f32.partialorder %v105, -41.0
    %vm1546 = vcmp.ge.f32.partialorder %v106, -41.0
    %vm1547 = vcmp.ge.f32.partialorder %v107, -41.0
    %vm1548 = vcmp.ge.f32.partialorder %v108, -41.0
    %vm1549 = vcmp.ge.f32.partialorder %v109, -41.0
    %vm1550 = vcmp.ge.f32.partialorder %v110, -41.0
    %vm1551 = vcmp.ge.f32.partialorder %v111, -41.0
    %1552 = vset.pattern.permute.xlu0 20
    %1553 = vperm.xlu0 %1552, %v72
    %v1554 = vpop.permute.xlu0 %1553
    %1555 = vset.pattern.permute.xlu0 20
    %1556 = vperm.xlu0 %1555, %v73
    %v1557 = vpop.permute.xlu0 %1556
    %1558 = vset.pattern.permute.xlu0 20
    %1559 = vperm.xlu0 %1558, %v74
    %v1560 = vpop.permute.xlu0 %1559
    %1561 = vset.pattern.permute.xlu0 20
    %1562 = vperm.xlu0 %1561, %v75
    %v1563 = vpop.permute.xlu0 %1562
    %1564 = vset.pattern.permute.xlu0 20
    %1565 = vperm.xlu0 %1564, %v76
    %v1566 = vpop.permute.xlu0 %1565
    %1567 = vset.pattern.permute.xlu0 20
    %1568 = vperm.xlu0 %1567, %v77
    %v1569 = vpop.permute.xlu0 %1568
    %1570 = vset.pattern.permute.xlu0 20
    %1571 = vperm.xlu0 %1570, %v78
    %v1572 = vpop.permute.xlu0 %1571
    %1573 = vset.pattern.permute.xlu0 20
    %1574 = vperm.xlu0 %1573, %v79
    %v1575 = vpop.permute.xlu0 %1574
    %v1576 = vsel %vm1520, %v1554, %v1320
    %v1577 = vsel %vm1521, %v1554, %v1321
    %v1578 = vsel %vm1522, %v1557, %v1322
    %v1579 = vsel %vm1523, %v1557, %v1323
    %v1580 = vsel %vm1524, %v1560, %v1324
    %v1581 = vsel %vm1525, %v1560, %v1325
    %v1582 = vsel %vm1526, %v1563, %v1326
    %v1583 = vsel %vm1527, %v1563, %v1327
    %v1584 = vsel %vm1528, %v1566, %v1328
    %v1585 = vsel %vm1529, %v1566, %v1329
    %v1586 = vsel %vm1530, %v1569, %v1330
    %v1587 = vsel %vm1531, %v1569, %v1331
    %v1588 = vsel %vm1532, %v1572, %v1332
    %v1589 = vsel %vm1533, %v1572, %v1333
    %v1590 = vsel %vm1534, %v1575, %v1334
    %v1591 = vsel %vm1535, %v1575, %v1335
    %v1592 = vsel %vm1536, %v1554, %v1336
    %v1593 = vsel %vm1537, %v1554, %v1337
    %v1594 = vsel %vm1538, %v1557, %v1338
    %v1595 = vsel %vm1539, %v1557, %v1339
    %v1596 = vsel %vm1540, %v1560, %v1340
    %v1597 = vsel %vm1541, %v1560, %v1341
    %v1598 = vsel %vm1542, %v1563, %v1342
    %v1599 = vsel %vm1543, %v1563, %v1343
    %v1600 = vsel %vm1544, %v1566, %v1344
    %v1601 = vsel %vm1545, %v1566, %v1345
    %v1602 = vsel %vm1546, %v1569, %v1346
    %v1603 = vsel %vm1547, %v1569, %v1347
    %v1604 = vsel %vm1548, %v1572, %v1348
    %v1605 = vsel %vm1549, %v1572, %v1349
    %v1606 = vsel %vm1550, %v1575, %v1350
    %v1607 = vsel %vm1551, %v1575, %v1351
    %1608 = vset.pattern.permute.xlu0 21
    %1609 = vperm.xlu0 %1608, %v72
    %v1610 = vpop.permute.xlu0 %1609
    %1611 = vset.pattern.permute.xlu0 21
    %1612 = vperm.xlu0 %1611, %v73
    %v1613 = vpop.permute.xlu0 %1612
    %1614 = vset.pattern.permute.xlu0 21
    %1615 = vperm.xlu0 %1614, %v74
    %v1616 = vpop.permute.xlu0 %1615
    %1617 = vset.pattern.permute.xlu0 21
    %1618 = vperm.xlu0 %1617, %v75
    %v1619 = vpop.permute.xlu0 %1618
    %1620 = vset.pattern.permute.xlu0 21
    %1621 = vperm.xlu0 %1620, %v76
    %v1622 = vpop.permute.xlu0 %1621
    %1623 = vset.pattern.permute.xlu0 21
    %1624 = vperm.xlu0 %1623, %v77
    %v1625 = vpop.permute.xlu0 %1624
    %1626 = vset.pattern.permute.xlu0 21
    %1627 = vperm.xlu0 %1626, %v78
    %v1628 = vpop.permute.xlu0 %1627
    %1629 = vset.pattern.permute.xlu0 21
    %1630 = vperm.xlu0 %1629, %v79
    %v1631 = vpop.permute.xlu0 %1630
    %v1632 = vsel %vm1520, %v1610, %v1376
    %v1633 = vsel %vm1521, %v1610, %v1377
    %v1634 = vsel %vm1522, %v1613, %v1378
    %v1635 = vsel %vm1523, %v1613, %v1379
    %v1636 = vsel %vm1524, %v1616, %v1380
    %v1637 = vsel %vm1525, %v1616, %v1381
    %v1638 = vsel %vm1526, %v1619, %v1382
    %v1639 = vsel %vm1527, %v1619, %v1383
    %v1640 = vsel %vm1528, %v1622, %v1384
    %v1641 = vsel %vm1529, %v1622, %v1385
    %v1642 = vsel %vm1530, %v1625, %v1386
    %v1643 = vsel %vm1531, %v1625, %v1387
    %v1644 = vsel %vm1532, %v1628, %v1388
    %v1645 = vsel %vm1533, %v1628, %v1389
    %v1646 = vsel %vm1534, %v1631, %v1390
    %v1647 = vsel %vm1535, %v1631, %v1391
    %v1648 = vsel %vm1536, %v1610, %v1392
    %v1649 = vsel %vm1537, %v1610, %v1393
    %v1650 = vsel %vm1538, %v1613, %v1394
    %v1651 = vsel %vm1539, %v1613, %v1395
    %v1652 = vsel %vm1540, %v1616, %v1396
    %v1653 = vsel %vm1541, %v1616, %v1397
    %v1654 = vsel %vm1542, %v1619, %v1398
    %v1655 = vsel %vm1543, %v1619, %v1399
    %v1656 = vsel %vm1544, %v1622, %v1400
    %v1657 = vsel %vm1545, %v1622, %v1401
    %v1658 = vsel %vm1546, %v1625, %v1402
    %v1659 = vsel %vm1547, %v1625, %v1403
    %v1660 = vsel %vm1548, %v1628, %v1404
    %v1661 = vsel %vm1549, %v1628, %v1405
    %v1662 = vsel %vm1550, %v1631, %v1406
    %v1663 = vsel %vm1551, %v1631, %v1407
    %1664 = vset.pattern.permute.xlu0 22
    %1665 = vperm.xlu0 %1664, %v72
    %v1666 = vpop.permute.xlu0 %1665
    %1667 = vset.pattern.permute.xlu0 22
    %1668 = vperm.xlu0 %1667, %v73
    %v1669 = vpop.permute.xlu0 %1668
    %1670 = vset.pattern.permute.xlu0 22
    %1671 = vperm.xlu0 %1670, %v74
    %v1672 = vpop.permute.xlu0 %1671
    %1673 = vset.pattern.permute.xlu0 22
    %1674 = vperm.xlu0 %1673, %v75
    %v1675 = vpop.permute.xlu0 %1674
    %1676 = vset.pattern.permute.xlu0 22
    %1677 = vperm.xlu0 %1676, %v76
    %v1678 = vpop.permute.xlu0 %1677
    %1679 = vset.pattern.permute.xlu0 22
    %1680 = vperm.xlu0 %1679, %v77
    %v1681 = vpop.permute.xlu0 %1680
    %1682 = vset.pattern.permute.xlu0 22
    %1683 = vperm.xlu0 %1682, %v78
    %v1684 = vpop.permute.xlu0 %1683
    %1685 = vset.pattern.permute.xlu0 22
    %1686 = vperm.xlu0 %1685, %v79
    %v1687 = vpop.permute.xlu0 %1686
    %v1688 = vsel %vm1520, %v1666, %v1432
    %v1689 = vsel %vm1521, %v1666, %v1433
    %v1690 = vsel %vm1522, %v1669, %v1434
    %v1691 = vsel %vm1523, %v1669, %v1435
    %v1692 = vsel %vm1524, %v1672, %v1436
    %v1693 = vsel %vm1525, %v1672, %v1437
    %v1694 = vsel %vm1526, %v1675, %v1438
    %v1695 = vsel %vm1527, %v1675, %v1439
    %v1696 = vsel %vm1528, %v1678, %v1440
    %v1697 = vsel %vm1529, %v1678, %v1441
    %v1698 = vsel %vm1530, %v1681, %v1442
    %v1699 = vsel %vm1531, %v1681, %v1443
    %v1700 = vsel %vm1532, %v1684, %v1444
    %v1701 = vsel %vm1533, %v1684, %v1445
    %v1702 = vsel %vm1534, %v1687, %v1446
    %v1703 = vsel %vm1535, %v1687, %v1447
    %v1704 = vsel %vm1536, %v1666, %v1448
    %v1705 = vsel %vm1537, %v1666, %v1449
    %v1706 = vsel %vm1538, %v1669, %v1450
    %v1707 = vsel %vm1539, %v1669, %v1451
    %v1708 = vsel %vm1540, %v1672, %v1452
    %v1709 = vsel %vm1541, %v1672, %v1453
    %v1710 = vsel %vm1542, %v1675, %v1454
    %v1711 = vsel %vm1543, %v1675, %v1455
    %v1712 = vsel %vm1544, %v1678, %v1456
    %v1713 = vsel %vm1545, %v1678, %v1457
    %v1714 = vsel %vm1546, %v1681, %v1458
    %v1715 = vsel %vm1547, %v1681, %v1459
    %v1716 = vsel %vm1548, %v1684, %v1460
    %v1717 = vsel %vm1549, %v1684, %v1461
    %v1718 = vsel %vm1550, %v1687, %v1462
    %v1719 = vsel %vm1551, %v1687, %v1463
    %1720 = vset.pattern.permute.xlu0 23
    %1721 = vperm.xlu0 %1720, %v72
    %v1722 = vpop.permute.xlu0 %1721
    %1723 = vset.pattern.permute.xlu0 23
    %1724 = vperm.xlu0 %1723, %v73
    %v1725 = vpop.permute.xlu0 %1724
    %1726 = vset.pattern.permute.xlu0 23
    %1727 = vperm.xlu0 %1726, %v74
    %v1728 = vpop.permute.xlu0 %1727
    %1729 = vset.pattern.permute.xlu0 23
    %1730 = vperm.xlu0 %1729, %v75
    %v1731 = vpop.permute.xlu0 %1730
    %1732 = vset.pattern.permute.xlu0 23
    %1733 = vperm.xlu0 %1732, %v76
    %v1734 = vpop.permute.xlu0 %1733
    %1735 = vset.pattern.permute.xlu0 23
    %1736 = vperm.xlu0 %1735, %v77
    %v1737 = vpop.permute.xlu0 %1736
    %1738 = vset.pattern.permute.xlu0 23
    %1739 = vperm.xlu0 %1738, %v78
    %v1740 = vpop.permute.xlu0 %1739
    %1741 = vset.pattern.permute.xlu0 23
    %1742 = vperm.xlu0 %1741, %v79
    %v1743 = vpop.permute.xlu0 %1742
    %v1744 = vsel %vm1520, %v1722, %v1488
    %v1745 = vsel %vm1521, %v1722, %v1489
    %v1746 = vsel %vm1522, %v1725, %v1490
    %v1747 = vsel %vm1523, %v1725, %v1491
    %v1748 = vsel %vm1524, %v1728, %v1492
    %v1749 = vsel %vm1525, %v1728, %v1493
    %v1750 = vsel %vm1526, %v1731, %v1494
    %v1751 = vsel %vm1527, %v1731, %v1495
    %v1752 = vsel %vm1528, %v1734, %v1496
    %v1753 = vsel %vm1529, %v1734, %v1497
    %v1754 = vsel %vm1530, %v1737, %v1498
    %v1755 = vsel %vm1531, %v1737, %v1499
    %v1756 = vsel %vm1532, %v1740, %v1500
    %v1757 = vsel %vm1533, %v1740, %v1501
    %v1758 = vsel %vm1534, %v1743, %v1502
    %v1759 = vsel %vm1535, %v1743, %v1503
    %v1760 = vsel %vm1536, %v1722, %v1504
    %v1761 = vsel %vm1537, %v1722, %v1505
    %v1762 = vsel %vm1538, %v1725, %v1506
    %v1763 = vsel %vm1539, %v1725, %v1507
    %v1764 = vsel %vm1540, %v1728, %v1508
    %v1765 = vsel %vm1541, %v1728, %v1509
    %v1766 = vsel %vm1542, %v1731, %v1510
    %v1767 = vsel %vm1543, %v1731, %v1511
    %v1768 = vsel %vm1544, %v1734, %v1512
    %v1769 = vsel %vm1545, %v1734, %v1513
    %v1770 = vsel %vm1546, %v1737, %v1514
    %v1771 = vsel %vm1547, %v1737, %v1515
    %v1772 = vsel %vm1548, %v1740, %v1516
    %v1773 = vsel %vm1549, %v1740, %v1517
    %v1774 = vsel %vm1550, %v1743, %v1518
    %v1775 = vsel %vm1551, %v1743, %v1519
    %vm1776 = vcmp.ge.f32.partialorder %v80, -37.0
    %vm1777 = vcmp.ge.f32.partialorder %v81, -37.0
    %vm1778 = vcmp.ge.f32.partialorder %v82, -37.0
    %vm1779 = vcmp.ge.f32.partialorder %v83, -37.0
    %vm1780 = vcmp.ge.f32.partialorder %v84, -37.0
    %vm1781 = vcmp.ge.f32.partialorder %v85, -37.0
    %vm1782 = vcmp.ge.f32.partialorder %v86, -37.0
    %vm1783 = vcmp.ge.f32.partialorder %v87, -37.0
    %vm1784 = vcmp.ge.f32.partialorder %v88, -37.0
    %vm1785 = vcmp.ge.f32.partialorder %v89, -37.0
    %vm1786 = vcmp.ge.f32.partialorder %v90, -37.0
    %vm1787 = vcmp.ge.f32.partialorder %v91, -37.0
    %vm1788 = vcmp.ge.f32.partialorder %v92, -37.0
    %vm1789 = vcmp.ge.f32.partialorder %v93, -37.0
    %vm1790 = vcmp.ge.f32.partialorder %v94, -37.0
    %vm1791 = vcmp.ge.f32.partialorder %v95, -37.0
    %vm1792 = vcmp.ge.f32.partialorder %v96, -37.0
    %vm1793 = vcmp.ge.f32.partialorder %v97, -37.0
    %vm1794 = vcmp.ge.f32.partialorder %v98, -37.0
    %vm1795 = vcmp.ge.f32.partialorder %v99, -37.0
    %vm1796 = vcmp.ge.f32.partialorder %v100, -37.0
    %vm1797 = vcmp.ge.f32.partialorder %v101, -37.0
    %vm1798 = vcmp.ge.f32.partialorder %v102, -37.0
    %vm1799 = vcmp.ge.f32.partialorder %v103, -37.0
    %vm1800 = vcmp.ge.f32.partialorder %v104, -37.0
    %vm1801 = vcmp.ge.f32.partialorder %v105, -37.0
    %vm1802 = vcmp.ge.f32.partialorder %v106, -37.0
    %vm1803 = vcmp.ge.f32.partialorder %v107, -37.0
    %vm1804 = vcmp.ge.f32.partialorder %v108, -37.0
    %vm1805 = vcmp.ge.f32.partialorder %v109, -37.0
    %vm1806 = vcmp.ge.f32.partialorder %v110, -37.0
    %vm1807 = vcmp.ge.f32.partialorder %v111, -37.0
    %1808 = vset.pattern.permute.xlu0 24
    %1809 = vperm.xlu0 %1808, %v72
    %v1810 = vpop.permute.xlu0 %1809
    %1811 = vset.pattern.permute.xlu0 24
    %1812 = vperm.xlu0 %1811, %v73
    %v1813 = vpop.permute.xlu0 %1812
    %1814 = vset.pattern.permute.xlu0 24
    %1815 = vperm.xlu0 %1814, %v74
    %v1816 = vpop.permute.xlu0 %1815
    %1817 = vset.pattern.permute.xlu0 24
    %1818 = vperm.xlu0 %1817, %v75
    %v1819 = vpop.permute.xlu0 %1818
    %1820 = vset.pattern.permute.xlu0 24
    %1821 = vperm.xlu0 %1820, %v76
    %v1822 = vpop.permute.xlu0 %1821
    %1823 = vset.pattern.permute.xlu0 24
    %1824 = vperm.xlu0 %1823, %v77
    %v1825 = vpop.permute.xlu0 %1824
    %1826 = vset.pattern.permute.xlu0 24
    %1827 = vperm.xlu0 %1826, %v78
    %v1828 = vpop.permute.xlu0 %1827
    %1829 = vset.pattern.permute.xlu0 24
    %1830 = vperm.xlu0 %1829, %v79
    %v1831 = vpop.permute.xlu0 %1830
    %v1832 = vsel %vm1776, %v1810, %v1576
    %v1833 = vsel %vm1777, %v1810, %v1577
    %v1834 = vsel %vm1778, %v1813, %v1578
    %v1835 = vsel %vm1779, %v1813, %v1579
    %v1836 = vsel %vm1780, %v1816, %v1580
    %v1837 = vsel %vm1781, %v1816, %v1581
    %v1838 = vsel %vm1782, %v1819, %v1582
    %v1839 = vsel %vm1783, %v1819, %v1583
    %v1840 = vsel %vm1784, %v1822, %v1584
    %v1841 = vsel %vm1785, %v1822, %v1585
    %v1842 = vsel %vm1786, %v1825, %v1586
    %v1843 = vsel %vm1787, %v1825, %v1587
    %v1844 = vsel %vm1788, %v1828, %v1588
    %v1845 = vsel %vm1789, %v1828, %v1589
    %v1846 = vsel %vm1790, %v1831, %v1590
    %v1847 = vsel %vm1791, %v1831, %v1591
    %v1848 = vsel %vm1792, %v1810, %v1592
    %v1849 = vsel %vm1793, %v1810, %v1593
    %v1850 = vsel %vm1794, %v1813, %v1594
    %v1851 = vsel %vm1795, %v1813, %v1595
    %v1852 = vsel %vm1796, %v1816, %v1596
    %v1853 = vsel %vm1797, %v1816, %v1597
    %v1854 = vsel %vm1798, %v1819, %v1598
    %v1855 = vsel %vm1799, %v1819, %v1599
    %v1856 = vsel %vm1800, %v1822, %v1600
    %v1857 = vsel %vm1801, %v1822, %v1601
    %v1858 = vsel %vm1802, %v1825, %v1602
    %v1859 = vsel %vm1803, %v1825, %v1603
    %v1860 = vsel %vm1804, %v1828, %v1604
    %v1861 = vsel %vm1805, %v1828, %v1605
    %v1862 = vsel %vm1806, %v1831, %v1606
    %v1863 = vsel %vm1807, %v1831, %v1607
    %1864 = vset.pattern.permute.xlu0 25
    %1865 = vperm.xlu0 %1864, %v72
    %v1866 = vpop.permute.xlu0 %1865
    %1867 = vset.pattern.permute.xlu0 25
    %1868 = vperm.xlu0 %1867, %v73
    %v1869 = vpop.permute.xlu0 %1868
    %1870 = vset.pattern.permute.xlu0 25
    %1871 = vperm.xlu0 %1870, %v74
    %v1872 = vpop.permute.xlu0 %1871
    %1873 = vset.pattern.permute.xlu0 25
    %1874 = vperm.xlu0 %1873, %v75
    %v1875 = vpop.permute.xlu0 %1874
    %1876 = vset.pattern.permute.xlu0 25
    %1877 = vperm.xlu0 %1876, %v76
    %v1878 = vpop.permute.xlu0 %1877
    %1879 = vset.pattern.permute.xlu0 25
    %1880 = vperm.xlu0 %1879, %v77
    %v1881 = vpop.permute.xlu0 %1880
    %1882 = vset.pattern.permute.xlu0 25
    %1883 = vperm.xlu0 %1882, %v78
    %v1884 = vpop.permute.xlu0 %1883
    %1885 = vset.pattern.permute.xlu0 25
    %1886 = vperm.xlu0 %1885, %v79
    %v1887 = vpop.permute.xlu0 %1886
    %v1888 = vsel %vm1776, %v1866, %v1632
    %v1889 = vsel %vm1777, %v1866, %v1633
    %v1890 = vsel %vm1778, %v1869, %v1634
    %v1891 = vsel %vm1779, %v1869, %v1635
    %v1892 = vsel %vm1780, %v1872, %v1636
    %v1893 = vsel %vm1781, %v1872, %v1637
    %v1894 = vsel %vm1782, %v1875, %v1638
    %v1895 = vsel %vm1783, %v1875, %v1639
    %v1896 = vsel %vm1784, %v1878, %v1640
    %v1897 = vsel %vm1785, %v1878, %v1641
    %v1898 = vsel %vm1786, %v1881, %v1642
    %v1899 = vsel %vm1787, %v1881, %v1643
    %v1900 = vsel %vm1788, %v1884, %v1644
    %v1901 = vsel %vm1789, %v1884, %v1645
    %v1902 = vsel %vm1790, %v1887, %v1646
    %v1903 = vsel %vm1791, %v1887, %v1647
    %v1904 = vsel %vm1792, %v1866, %v1648
    %v1905 = vsel %vm1793, %v1866, %v1649
    %v1906 = vsel %vm1794, %v1869, %v1650
    %v1907 = vsel %vm1795, %v1869, %v1651
    %v1908 = vsel %vm1796, %v1872, %v1652
    %v1909 = vsel %vm1797, %v1872, %v1653
    %v1910 = vsel %vm1798, %v1875, %v1654
    %v1911 = vsel %vm1799, %v1875, %v1655
    %v1912 = vsel %vm1800, %v1878, %v1656
    %v1913 = vsel %vm1801, %v1878, %v1657
    %v1914 = vsel %vm1802, %v1881, %v1658
    %v1915 = vsel %vm1803, %v1881, %v1659
    %v1916 = vsel %vm1804, %v1884, %v1660
    %v1917 = vsel %vm1805, %v1884, %v1661
    %v1918 = vsel %vm1806, %v1887, %v1662
    %v1919 = vsel %vm1807, %v1887, %v1663
    %1920 = vset.pattern.permute.xlu0 26
    %1921 = vperm.xlu0 %1920, %v72
    %v1922 = vpop.permute.xlu0 %1921
    %1923 = vset.pattern.permute.xlu0 26
    %1924 = vperm.xlu0 %1923, %v73
    %v1925 = vpop.permute.xlu0 %1924
    %1926 = vset.pattern.permute.xlu0 26
    %1927 = vperm.xlu0 %1926, %v74
    %v1928 = vpop.permute.xlu0 %1927
    %1929 = vset.pattern.permute.xlu0 26
    %1930 = vperm.xlu0 %1929, %v75
    %v1931 = vpop.permute.xlu0 %1930
    %1932 = vset.pattern.permute.xlu0 26
    %1933 = vperm.xlu0 %1932, %v76
    %v1934 = vpop.permute.xlu0 %1933
    %1935 = vset.pattern.permute.xlu0 26
    %1936 = vperm.xlu0 %1935, %v77
    %v1937 = vpop.permute.xlu0 %1936
    %1938 = vset.pattern.permute.xlu0 26
    %1939 = vperm.xlu0 %1938, %v78
    %v1940 = vpop.permute.xlu0 %1939
    %1941 = vset.pattern.permute.xlu0 26
    %1942 = vperm.xlu0 %1941, %v79
    %v1943 = vpop.permute.xlu0 %1942
    %v1944 = vsel %vm1776, %v1922, %v1688
    %v1945 = vsel %vm1777, %v1922, %v1689
    %v1946 = vsel %vm1778, %v1925, %v1690
    %v1947 = vsel %vm1779, %v1925, %v1691
    %v1948 = vsel %vm1780, %v1928, %v1692
    %v1949 = vsel %vm1781, %v1928, %v1693
    %v1950 = vsel %vm1782, %v1931, %v1694
    %v1951 = vsel %vm1783, %v1931, %v1695
    %v1952 = vsel %vm1784, %v1934, %v1696
    %v1953 = vsel %vm1785, %v1934, %v1697
    %v1954 = vsel %vm1786, %v1937, %v1698
    %v1955 = vsel %vm1787, %v1937, %v1699
    %v1956 = vsel %vm1788, %v1940, %v1700
    %v1957 = vsel %vm1789, %v1940, %v1701
    %v1958 = vsel %vm1790, %v1943, %v1702
    %v1959 = vsel %vm1791, %v1943, %v1703
    %v1960 = vsel %vm1792, %v1922, %v1704
    %v1961 = vsel %vm1793, %v1922, %v1705
    %v1962 = vsel %vm1794, %v1925, %v1706
    %v1963 = vsel %vm1795, %v1925, %v1707
    %v1964 = vsel %vm1796, %v1928, %v1708
    %v1965 = vsel %vm1797, %v1928, %v1709
    %v1966 = vsel %vm1798, %v1931, %v1710
    %v1967 = vsel %vm1799, %v1931, %v1711
    %v1968 = vsel %vm1800, %v1934, %v1712
    %v1969 = vsel %vm1801, %v1934, %v1713
    %v1970 = vsel %vm1802, %v1937, %v1714
    %v1971 = vsel %vm1803, %v1937, %v1715
    %v1972 = vsel %vm1804, %v1940, %v1716
    %v1973 = vsel %vm1805, %v1940, %v1717
    %v1974 = vsel %vm1806, %v1943, %v1718
    %v1975 = vsel %vm1807, %v1943, %v1719
    %1976 = vset.pattern.permute.xlu0 27
    %1977 = vperm.xlu0 %1976, %v72
    %v1978 = vpop.permute.xlu0 %1977
    %1979 = vset.pattern.permute.xlu0 27
    %1980 = vperm.xlu0 %1979, %v73
    %v1981 = vpop.permute.xlu0 %1980
    %1982 = vset.pattern.permute.xlu0 27
    %1983 = vperm.xlu0 %1982, %v74
    %v1984 = vpop.permute.xlu0 %1983
    %1985 = vset.pattern.permute.xlu0 27
    %1986 = vperm.xlu0 %1985, %v75
    %v1987 = vpop.permute.xlu0 %1986
    %1988 = vset.pattern.permute.xlu0 27
    %1989 = vperm.xlu0 %1988, %v76
    %v1990 = vpop.permute.xlu0 %1989
    %1991 = vset.pattern.permute.xlu0 27
    %1992 = vperm.xlu0 %1991, %v77
    %v1993 = vpop.permute.xlu0 %1992
    %1994 = vset.pattern.permute.xlu0 27
    %1995 = vperm.xlu0 %1994, %v78
    %v1996 = vpop.permute.xlu0 %1995
    %1997 = vset.pattern.permute.xlu0 27
    %1998 = vperm.xlu0 %1997, %v79
    %v1999 = vpop.permute.xlu0 %1998
    %v2000 = vsel %vm1776, %v1978, %v1744
    %v2001 = vsel %vm1777, %v1978, %v1745
    %v2002 = vsel %vm1778, %v1981, %v1746
    %v2003 = vsel %vm1779, %v1981, %v1747
    %v2004 = vsel %vm1780, %v1984, %v1748
    %v2005 = vsel %vm1781, %v1984, %v1749
    %v2006 = vsel %vm1782, %v1987, %v1750
    %v2007 = vsel %vm1783, %v1987, %v1751
    %v2008 = vsel %vm1784, %v1990, %v1752
    %v2009 = vsel %vm1785, %v1990, %v1753
    %v2010 = vsel %vm1786, %v1993, %v1754
    %v2011 = vsel %vm1787, %v1993, %v1755
    %v2012 = vsel %vm1788, %v1996, %v1756
    %v2013 = vsel %vm1789, %v1996, %v1757
    %v2014 = vsel %vm1790, %v1999, %v1758
    %v2015 = vsel %vm1791, %v1999, %v1759
    %v2016 = vsel %vm1792, %v1978, %v1760
    %v2017 = vsel %vm1793, %v1978, %v1761
    %v2018 = vsel %vm1794, %v1981, %v1762
    %v2019 = vsel %vm1795, %v1981, %v1763
    %v2020 = vsel %vm1796, %v1984, %v1764
    %v2021 = vsel %vm1797, %v1984, %v1765
    %v2022 = vsel %vm1798, %v1987, %v1766
    %v2023 = vsel %vm1799, %v1987, %v1767
    %v2024 = vsel %vm1800, %v1990, %v1768
    %v2025 = vsel %vm1801, %v1990, %v1769
    %v2026 = vsel %vm1802, %v1993, %v1770
    %v2027 = vsel %vm1803, %v1993, %v1771
    %v2028 = vsel %vm1804, %v1996, %v1772
    %v2029 = vsel %vm1805, %v1996, %v1773
    %v2030 = vsel %vm1806, %v1999, %v1774
    %v2031 = vsel %vm1807, %v1999, %v1775
    %vm2032 = vcmp.ge.f32.partialorder %v80, -33.0
    %vm2033 = vcmp.ge.f32.partialorder %v81, -33.0
    %vm2034 = vcmp.ge.f32.partialorder %v82, -33.0
    %vm2035 = vcmp.ge.f32.partialorder %v83, -33.0
    %vm2036 = vcmp.ge.f32.partialorder %v84, -33.0
    %vm2037 = vcmp.ge.f32.partialorder %v85, -33.0
    %vm2038 = vcmp.ge.f32.partialorder %v86, -33.0
    %vm2039 = vcmp.ge.f32.partialorder %v87, -33.0
    %vm2040 = vcmp.ge.f32.partialorder %v88, -33.0
    %vm2041 = vcmp.ge.f32.partialorder %v89, -33.0
    %vm2042 = vcmp.ge.f32.partialorder %v90, -33.0
    %vm2043 = vcmp.ge.f32.partialorder %v91, -33.0
    %vm2044 = vcmp.ge.f32.partialorder %v92, -33.0
    %vm2045 = vcmp.ge.f32.partialorder %v93, -33.0
    %vm2046 = vcmp.ge.f32.partialorder %v94, -33.0
    %vm2047 = vcmp.ge.f32.partialorder %v95, -33.0
    %vm2048 = vcmp.ge.f32.partialorder %v96, -33.0
    %vm2049 = vcmp.ge.f32.partialorder %v97, -33.0
    %vm2050 = vcmp.ge.f32.partialorder %v98, -33.0
    %vm2051 = vcmp.ge.f32.partialorder %v99, -33.0
    %vm2052 = vcmp.ge.f32.partialorder %v100, -33.0
    %vm2053 = vcmp.ge.f32.partialorder %v101, -33.0
    %vm2054 = vcmp.ge.f32.partialorder %v102, -33.0
    %vm2055 = vcmp.ge.f32.partialorder %v103, -33.0
    %vm2056 = vcmp.ge.f32.partialorder %v104, -33.0
    %vm2057 = vcmp.ge.f32.partialorder %v105, -33.0
    %vm2058 = vcmp.ge.f32.partialorder %v106, -33.0
    %vm2059 = vcmp.ge.f32.partialorder %v107, -33.0
    %vm2060 = vcmp.ge.f32.partialorder %v108, -33.0
    %vm2061 = vcmp.ge.f32.partialorder %v109, -33.0
    %vm2062 = vcmp.ge.f32.partialorder %v110, -33.0
    %vm2063 = vcmp.ge.f32.partialorder %v111, -33.0
    %2064 = vset.pattern.permute.xlu0 28
    %2065 = vperm.xlu0 %2064, %v72
    %v2066 = vpop.permute.xlu0 %2065
    %2067 = vset.pattern.permute.xlu0 28
    %2068 = vperm.xlu0 %2067, %v73
    %v2069 = vpop.permute.xlu0 %2068
    %2070 = vset.pattern.permute.xlu0 28
    %2071 = vperm.xlu0 %2070, %v74
    %v2072 = vpop.permute.xlu0 %2071
    %2073 = vset.pattern.permute.xlu0 28
    %2074 = vperm.xlu0 %2073, %v75
    %v2075 = vpop.permute.xlu0 %2074
    %2076 = vset.pattern.permute.xlu0 28
    %2077 = vperm.xlu0 %2076, %v76
    %v2078 = vpop.permute.xlu0 %2077
    %2079 = vset.pattern.permute.xlu0 28
    %2080 = vperm.xlu0 %2079, %v77
    %v2081 = vpop.permute.xlu0 %2080
    %2082 = vset.pattern.permute.xlu0 28
    %2083 = vperm.xlu0 %2082, %v78
    %v2084 = vpop.permute.xlu0 %2083
    %2085 = vset.pattern.permute.xlu0 28
    %2086 = vperm.xlu0 %2085, %v79
    %v2087 = vpop.permute.xlu0 %2086
    %v2088 = vsel %vm2032, %v2066, %v1832
    %v2089 = vsel %vm2033, %v2066, %v1833
    %v2090 = vsel %vm2034, %v2069, %v1834
    %v2091 = vsel %vm2035, %v2069, %v1835
    %v2092 = vsel %vm2036, %v2072, %v1836
    %v2093 = vsel %vm2037, %v2072, %v1837
    %v2094 = vsel %vm2038, %v2075, %v1838
    %v2095 = vsel %vm2039, %v2075, %v1839
    %v2096 = vsel %vm2040, %v2078, %v1840
    %v2097 = vsel %vm2041, %v2078, %v1841
    %v2098 = vsel %vm2042, %v2081, %v1842
    %v2099 = vsel %vm2043, %v2081, %v1843
    %v2100 = vsel %vm2044, %v2084, %v1844
    %v2101 = vsel %vm2045, %v2084, %v1845
    %v2102 = vsel %vm2046, %v2087, %v1846
    %v2103 = vsel %vm2047, %v2087, %v1847
    %v2104 = vsel %vm2048, %v2066, %v1848
    %v2105 = vsel %vm2049, %v2066, %v1849
    %v2106 = vsel %vm2050, %v2069, %v1850
    %v2107 = vsel %vm2051, %v2069, %v1851
    %v2108 = vsel %vm2052, %v2072, %v1852
    %v2109 = vsel %vm2053, %v2072, %v1853
    %v2110 = vsel %vm2054, %v2075, %v1854
    %v2111 = vsel %vm2055, %v2075, %v1855
    %v2112 = vsel %vm2056, %v2078, %v1856
    %v2113 = vsel %vm2057, %v2078, %v1857
    %v2114 = vsel %vm2058, %v2081, %v1858
    %v2115 = vsel %vm2059, %v2081, %v1859
    %v2116 = vsel %vm2060, %v2084, %v1860
    %v2117 = vsel %vm2061, %v2084, %v1861
    %v2118 = vsel %vm2062, %v2087, %v1862
    %v2119 = vsel %vm2063, %v2087, %v1863
    %2120 = vset.pattern.permute.xlu0 29
    %2121 = vperm.xlu0 %2120, %v72
    %v2122 = vpop.permute.xlu0 %2121
    %2123 = vset.pattern.permute.xlu0 29
    %2124 = vperm.xlu0 %2123, %v73
    %v2125 = vpop.permute.xlu0 %2124
    %2126 = vset.pattern.permute.xlu0 29
    %2127 = vperm.xlu0 %2126, %v74
    %v2128 = vpop.permute.xlu0 %2127
    %2129 = vset.pattern.permute.xlu0 29
    %2130 = vperm.xlu0 %2129, %v75
    %v2131 = vpop.permute.xlu0 %2130
    %2132 = vset.pattern.permute.xlu0 29
    %2133 = vperm.xlu0 %2132, %v76
    %v2134 = vpop.permute.xlu0 %2133
    %2135 = vset.pattern.permute.xlu0 29
    %2136 = vperm.xlu0 %2135, %v77
    %v2137 = vpop.permute.xlu0 %2136
    %2138 = vset.pattern.permute.xlu0 29
    %2139 = vperm.xlu0 %2138, %v78
    %v2140 = vpop.permute.xlu0 %2139
    %2141 = vset.pattern.permute.xlu0 29
    %2142 = vperm.xlu0 %2141, %v79
    %v2143 = vpop.permute.xlu0 %2142
    %v2144 = vsel %vm2032, %v2122, %v1888
    %v2145 = vsel %vm2033, %v2122, %v1889
    %v2146 = vsel %vm2034, %v2125, %v1890
    %v2147 = vsel %vm2035, %v2125, %v1891
    %v2148 = vsel %vm2036, %v2128, %v1892
    %v2149 = vsel %vm2037, %v2128, %v1893
    %v2150 = vsel %vm2038, %v2131, %v1894
    %v2151 = vsel %vm2039, %v2131, %v1895
    %v2152 = vsel %vm2040, %v2134, %v1896
    %v2153 = vsel %vm2041, %v2134, %v1897
    %v2154 = vsel %vm2042, %v2137, %v1898
    %v2155 = vsel %vm2043, %v2137, %v1899
    %v2156 = vsel %vm2044, %v2140, %v1900
    %v2157 = vsel %vm2045, %v2140, %v1901
    %v2158 = vsel %vm2046, %v2143, %v1902
    %v2159 = vsel %vm2047, %v2143, %v1903
    %v2160 = vsel %vm2048, %v2122, %v1904
    %v2161 = vsel %vm2049, %v2122, %v1905
    %v2162 = vsel %vm2050, %v2125, %v1906
    %v2163 = vsel %vm2051, %v2125, %v1907
    %v2164 = vsel %vm2052, %v2128, %v1908
    %v2165 = vsel %vm2053, %v2128, %v1909
    %v2166 = vsel %vm2054, %v2131, %v1910
    %v2167 = vsel %vm2055, %v2131, %v1911
    %v2168 = vsel %vm2056, %v2134, %v1912
    %v2169 = vsel %vm2057, %v2134, %v1913
    %v2170 = vsel %vm2058, %v2137, %v1914
    %v2171 = vsel %vm2059, %v2137, %v1915
    %v2172 = vsel %vm2060, %v2140, %v1916
    %v2173 = vsel %vm2061, %v2140, %v1917
    %v2174 = vsel %vm2062, %v2143, %v1918
    %v2175 = vsel %vm2063, %v2143, %v1919
    %2176 = vset.pattern.permute.xlu0 30
    %2177 = vperm.xlu0 %2176, %v72
    %v2178 = vpop.permute.xlu0 %2177
    %2179 = vset.pattern.permute.xlu0 30
    %2180 = vperm.xlu0 %2179, %v73
    %v2181 = vpop.permute.xlu0 %2180
    %2182 = vset.pattern.permute.xlu0 30
    %2183 = vperm.xlu0 %2182, %v74
    %v2184 = vpop.permute.xlu0 %2183
    %2185 = vset.pattern.permute.xlu0 30
    %2186 = vperm.xlu0 %2185, %v75
    %v2187 = vpop.permute.xlu0 %2186
    %2188 = vset.pattern.permute.xlu0 30
    %2189 = vperm.xlu0 %2188, %v76
    %v2190 = vpop.permute.xlu0 %2189
    %2191 = vset.pattern.permute.xlu0 30
    %2192 = vperm.xlu0 %2191, %v77
    %v2193 = vpop.permute.xlu0 %2192
    %2194 = vset.pattern.permute.xlu0 30
    %2195 = vperm.xlu0 %2194, %v78
    %v2196 = vpop.permute.xlu0 %2195
    %2197 = vset.pattern.permute.xlu0 30
    %2198 = vperm.xlu0 %2197, %v79
    %v2199 = vpop.permute.xlu0 %2198
    %v2200 = vsel %vm2032, %v2178, %v1944
    %v2201 = vsel %vm2033, %v2178, %v1945
    %v2202 = vsel %vm2034, %v2181, %v1946
    %v2203 = vsel %vm2035, %v2181, %v1947
    %v2204 = vsel %vm2036, %v2184, %v1948
    %v2205 = vsel %vm2037, %v2184, %v1949
    %v2206 = vsel %vm2038, %v2187, %v1950
    %v2207 = vsel %vm2039, %v2187, %v1951
    %v2208 = vsel %vm2040, %v2190, %v1952
    %v2209 = vsel %vm2041, %v2190, %v1953
    %v2210 = vsel %vm2042, %v2193, %v1954
    %v2211 = vsel %vm2043, %v2193, %v1955
    %v2212 = vsel %vm2044, %v2196, %v1956
    %v2213 = vsel %vm2045, %v2196, %v1957
    %v2214 = vsel %vm2046, %v2199, %v1958
    %v2215 = vsel %vm2047, %v2199, %v1959
    %v2216 = vsel %vm2048, %v2178, %v1960
    %v2217 = vsel %vm2049, %v2178, %v1961
    %v2218 = vsel %vm2050, %v2181, %v1962
    %v2219 = vsel %vm2051, %v2181, %v1963
    %v2220 = vsel %vm2052, %v2184, %v1964
    %v2221 = vsel %vm2053, %v2184, %v1965
    %v2222 = vsel %vm2054, %v2187, %v1966
    %v2223 = vsel %vm2055, %v2187, %v1967
    %v2224 = vsel %vm2056, %v2190, %v1968
    %v2225 = vsel %vm2057, %v2190, %v1969
    %v2226 = vsel %vm2058, %v2193, %v1970
    %v2227 = vsel %vm2059, %v2193, %v1971
    %v2228 = vsel %vm2060, %v2196, %v1972
    %v2229 = vsel %vm2061, %v2196, %v1973
    %v2230 = vsel %vm2062, %v2199, %v1974
    %v2231 = vsel %vm2063, %v2199, %v1975
    %2232 = vset.pattern.permute.xlu0 31
    %2233 = vperm.xlu0 %2232, %v72
    %v2234 = vpop.permute.xlu0 %2233
    %2235 = vset.pattern.permute.xlu0 31
    %2236 = vperm.xlu0 %2235, %v73
    %v2237 = vpop.permute.xlu0 %2236
    %2238 = vset.pattern.permute.xlu0 31
    %2239 = vperm.xlu0 %2238, %v74
    %v2240 = vpop.permute.xlu0 %2239
    %2241 = vset.pattern.permute.xlu0 31
    %2242 = vperm.xlu0 %2241, %v75
    %v2243 = vpop.permute.xlu0 %2242
    %2244 = vset.pattern.permute.xlu0 31
    %2245 = vperm.xlu0 %2244, %v76
    %v2246 = vpop.permute.xlu0 %2245
    %2247 = vset.pattern.permute.xlu0 31
    %2248 = vperm.xlu0 %2247, %v77
    %v2249 = vpop.permute.xlu0 %2248
    %2250 = vset.pattern.permute.xlu0 31
    %2251 = vperm.xlu0 %2250, %v78
    %v2252 = vpop.permute.xlu0 %2251
    %2253 = vset.pattern.permute.xlu0 31
    %2254 = vperm.xlu0 %2253, %v79
    %v2255 = vpop.permute.xlu0 %2254
    %v2256 = vsel %vm2032, %v2234, %v2000
    %v2257 = vsel %vm2033, %v2234, %v2001
    %v2258 = vsel %vm2034, %v2237, %v2002
    %v2259 = vsel %vm2035, %v2237, %v2003
    %v2260 = vsel %vm2036, %v2240, %v2004
    %v2261 = vsel %vm2037, %v2240, %v2005
    %v2262 = vsel %vm2038, %v2243, %v2006
    %v2263 = vsel %vm2039, %v2243, %v2007
    %v2264 = vsel %vm2040, %v2246, %v2008
    %v2265 = vsel %vm2041, %v2246, %v2009
    %v2266 = vsel %vm2042, %v2249, %v2010
    %v2267 = vsel %vm2043, %v2249, %v2011
    %v2268 = vsel %vm2044, %v2252, %v2012
    %v2269 = vsel %vm2045, %v2252, %v2013
    %v2270 = vsel %vm2046, %v2255, %v2014
    %v2271 = vsel %vm2047, %v2255, %v2015
    %v2272 = vsel %vm2048, %v2234, %v2016
    %v2273 = vsel %vm2049, %v2234, %v2017
    %v2274 = vsel %vm2050, %v2237, %v2018
    %v2275 = vsel %vm2051, %v2237, %v2019
    %v2276 = vsel %vm2052, %v2240, %v2020
    %v2277 = vsel %vm2053, %v2240, %v2021
    %v2278 = vsel %vm2054, %v2243, %v2022
    %v2279 = vsel %vm2055, %v2243, %v2023
    %v2280 = vsel %vm2056, %v2246, %v2024
    %v2281 = vsel %vm2057, %v2246, %v2025
    %v2282 = vsel %vm2058, %v2249, %v2026
    %v2283 = vsel %vm2059, %v2249, %v2027
    %v2284 = vsel %vm2060, %v2252, %v2028
    %v2285 = vsel %vm2061, %v2252, %v2029
    %v2286 = vsel %vm2062, %v2255, %v2030
    %v2287 = vsel %vm2063, %v2255, %v2031
    %vm2288 = vcmp.ge.f32.partialorder %v80, -29.0
    %vm2289 = vcmp.ge.f32.partialorder %v81, -29.0
    %vm2290 = vcmp.ge.f32.partialorder %v82, -29.0
    %vm2291 = vcmp.ge.f32.partialorder %v83, -29.0
    %vm2292 = vcmp.ge.f32.partialorder %v84, -29.0
    %vm2293 = vcmp.ge.f32.partialorder %v85, -29.0
    %vm2294 = vcmp.ge.f32.partialorder %v86, -29.0
    %vm2295 = vcmp.ge.f32.partialorder %v87, -29.0
    %vm2296 = vcmp.ge.f32.partialorder %v88, -29.0
    %vm2297 = vcmp.ge.f32.partialorder %v89, -29.0
    %vm2298 = vcmp.ge.f32.partialorder %v90, -29.0
    %vm2299 = vcmp.ge.f32.partialorder %v91, -29.0
    %vm2300 = vcmp.ge.f32.partialorder %v92, -29.0
    %vm2301 = vcmp.ge.f32.partialorder %v93, -29.0
    %vm2302 = vcmp.ge.f32.partialorder %v94, -29.0
    %vm2303 = vcmp.ge.f32.partialorder %v95, -29.0
    %vm2304 = vcmp.ge.f32.partialorder %v96, -29.0
    %vm2305 = vcmp.ge.f32.partialorder %v97, -29.0
    %vm2306 = vcmp.ge.f32.partialorder %v98, -29.0
    %vm2307 = vcmp.ge.f32.partialorder %v99, -29.0
    %vm2308 = vcmp.ge.f32.partialorder %v100, -29.0
    %vm2309 = vcmp.ge.f32.partialorder %v101, -29.0
    %vm2310 = vcmp.ge.f32.partialorder %v102, -29.0
    %vm2311 = vcmp.ge.f32.partialorder %v103, -29.0
    %vm2312 = vcmp.ge.f32.partialorder %v104, -29.0
    %vm2313 = vcmp.ge.f32.partialorder %v105, -29.0
    %vm2314 = vcmp.ge.f32.partialorder %v106, -29.0
    %vm2315 = vcmp.ge.f32.partialorder %v107, -29.0
    %vm2316 = vcmp.ge.f32.partialorder %v108, -29.0
    %vm2317 = vcmp.ge.f32.partialorder %v109, -29.0
    %vm2318 = vcmp.ge.f32.partialorder %v110, -29.0
    %vm2319 = vcmp.ge.f32.partialorder %v111, -29.0
    %2320 = vset.pattern.permute.xlu0 32
    %2321 = vperm.xlu0 %2320, %v72
    %v2322 = vpop.permute.xlu0 %2321
    %2323 = vset.pattern.permute.xlu0 32
    %2324 = vperm.xlu0 %2323, %v73
    %v2325 = vpop.permute.xlu0 %2324
    %2326 = vset.pattern.permute.xlu0 32
    %2327 = vperm.xlu0 %2326, %v74
    %v2328 = vpop.permute.xlu0 %2327
    %2329 = vset.pattern.permute.xlu0 32
    %2330 = vperm.xlu0 %2329, %v75
    %v2331 = vpop.permute.xlu0 %2330
    %2332 = vset.pattern.permute.xlu0 32
    %2333 = vperm.xlu0 %2332, %v76
    %v2334 = vpop.permute.xlu0 %2333
    %2335 = vset.pattern.permute.xlu0 32
    %2336 = vperm.xlu0 %2335, %v77
    %v2337 = vpop.permute.xlu0 %2336
    %2338 = vset.pattern.permute.xlu0 32
    %2339 = vperm.xlu0 %2338, %v78
    %v2340 = vpop.permute.xlu0 %2339
    %2341 = vset.pattern.permute.xlu0 32
    %2342 = vperm.xlu0 %2341, %v79
    %v2343 = vpop.permute.xlu0 %2342
    %v2344 = vsel %vm2288, %v2322, %v2088
    %v2345 = vsel %vm2289, %v2322, %v2089
    %v2346 = vsel %vm2290, %v2325, %v2090
    %v2347 = vsel %vm2291, %v2325, %v2091
    %v2348 = vsel %vm2292, %v2328, %v2092
    %v2349 = vsel %vm2293, %v2328, %v2093
    %v2350 = vsel %vm2294, %v2331, %v2094
    %v2351 = vsel %vm2295, %v2331, %v2095
    %v2352 = vsel %vm2296, %v2334, %v2096
    %v2353 = vsel %vm2297, %v2334, %v2097
    %v2354 = vsel %vm2298, %v2337, %v2098
    %v2355 = vsel %vm2299, %v2337, %v2099
    %v2356 = vsel %vm2300, %v2340, %v2100
    %v2357 = vsel %vm2301, %v2340, %v2101
    %v2358 = vsel %vm2302, %v2343, %v2102
    %v2359 = vsel %vm2303, %v2343, %v2103
    %v2360 = vsel %vm2304, %v2322, %v2104
    %v2361 = vsel %vm2305, %v2322, %v2105
    %v2362 = vsel %vm2306, %v2325, %v2106
    %v2363 = vsel %vm2307, %v2325, %v2107
    %v2364 = vsel %vm2308, %v2328, %v2108
    %v2365 = vsel %vm2309, %v2328, %v2109
    %v2366 = vsel %vm2310, %v2331, %v2110
    %v2367 = vsel %vm2311, %v2331, %v2111
    %v2368 = vsel %vm2312, %v2334, %v2112
    %v2369 = vsel %vm2313, %v2334, %v2113
    %v2370 = vsel %vm2314, %v2337, %v2114
    %v2371 = vsel %vm2315, %v2337, %v2115
    %v2372 = vsel %vm2316, %v2340, %v2116
    %v2373 = vsel %vm2317, %v2340, %v2117
    %v2374 = vsel %vm2318, %v2343, %v2118
    %v2375 = vsel %vm2319, %v2343, %v2119
    %2376 = vset.pattern.permute.xlu0 33
    %2377 = vperm.xlu0 %2376, %v72
    %v2378 = vpop.permute.xlu0 %2377
    %2379 = vset.pattern.permute.xlu0 33
    %2380 = vperm.xlu0 %2379, %v73
    %v2381 = vpop.permute.xlu0 %2380
    %2382 = vset.pattern.permute.xlu0 33
    %2383 = vperm.xlu0 %2382, %v74
    %v2384 = vpop.permute.xlu0 %2383
    %2385 = vset.pattern.permute.xlu0 33
    %2386 = vperm.xlu0 %2385, %v75
    %v2387 = vpop.permute.xlu0 %2386
    %2388 = vset.pattern.permute.xlu0 33
    %2389 = vperm.xlu0 %2388, %v76
    %v2390 = vpop.permute.xlu0 %2389
    %2391 = vset.pattern.permute.xlu0 33
    %2392 = vperm.xlu0 %2391, %v77
    %v2393 = vpop.permute.xlu0 %2392
    %2394 = vset.pattern.permute.xlu0 33
    %2395 = vperm.xlu0 %2394, %v78
    %v2396 = vpop.permute.xlu0 %2395
    %2397 = vset.pattern.permute.xlu0 33
    %2398 = vperm.xlu0 %2397, %v79
    %v2399 = vpop.permute.xlu0 %2398
    %v2400 = vsel %vm2288, %v2378, %v2144
    %v2401 = vsel %vm2289, %v2378, %v2145
    %v2402 = vsel %vm2290, %v2381, %v2146
    %v2403 = vsel %vm2291, %v2381, %v2147
    %v2404 = vsel %vm2292, %v2384, %v2148
    %v2405 = vsel %vm2293, %v2384, %v2149
    %v2406 = vsel %vm2294, %v2387, %v2150
    %v2407 = vsel %vm2295, %v2387, %v2151
    %v2408 = vsel %vm2296, %v2390, %v2152
    %v2409 = vsel %vm2297, %v2390, %v2153
    %v2410 = vsel %vm2298, %v2393, %v2154
    %v2411 = vsel %vm2299, %v2393, %v2155
    %v2412 = vsel %vm2300, %v2396, %v2156
    %v2413 = vsel %vm2301, %v2396, %v2157
    %v2414 = vsel %vm2302, %v2399, %v2158
    %v2415 = vsel %vm2303, %v2399, %v2159
    %v2416 = vsel %vm2304, %v2378, %v2160
    %v2417 = vsel %vm2305, %v2378, %v2161
    %v2418 = vsel %vm2306, %v2381, %v2162
    %v2419 = vsel %vm2307, %v2381, %v2163
    %v2420 = vsel %vm2308, %v2384, %v2164
    %v2421 = vsel %vm2309, %v2384, %v2165
    %v2422 = vsel %vm2310, %v2387, %v2166
    %v2423 = vsel %vm2311, %v2387, %v2167
    %v2424 = vsel %vm2312, %v2390, %v2168
    %v2425 = vsel %vm2313, %v2390, %v2169
    %v2426 = vsel %vm2314, %v2393, %v2170
    %v2427 = vsel %vm2315, %v2393, %v2171
    %v2428 = vsel %vm2316, %v2396, %v2172
    %v2429 = vsel %vm2317, %v2396, %v2173
    %v2430 = vsel %vm2318, %v2399, %v2174
    %v2431 = vsel %vm2319, %v2399, %v2175
    %2432 = vset.pattern.permute.xlu0 34
    %2433 = vperm.xlu0 %2432, %v72
    %v2434 = vpop.permute.xlu0 %2433
    %2435 = vset.pattern.permute.xlu0 34
    %2436 = vperm.xlu0 %2435, %v73
    %v2437 = vpop.permute.xlu0 %2436
    %2438 = vset.pattern.permute.xlu0 34
    %2439 = vperm.xlu0 %2438, %v74
    %v2440 = vpop.permute.xlu0 %2439
    %2441 = vset.pattern.permute.xlu0 34
    %2442 = vperm.xlu0 %2441, %v75
    %v2443 = vpop.permute.xlu0 %2442
    %2444 = vset.pattern.permute.xlu0 34
    %2445 = vperm.xlu0 %2444, %v76
    %v2446 = vpop.permute.xlu0 %2445
    %2447 = vset.pattern.permute.xlu0 34
    %2448 = vperm.xlu0 %2447, %v77
    %v2449 = vpop.permute.xlu0 %2448
    %2450 = vset.pattern.permute.xlu0 34
    %2451 = vperm.xlu0 %2450, %v78
    %v2452 = vpop.permute.xlu0 %2451
    %2453 = vset.pattern.permute.xlu0 34
    %2454 = vperm.xlu0 %2453, %v79
    %v2455 = vpop.permute.xlu0 %2454
    %v2456 = vsel %vm2288, %v2434, %v2200
    %v2457 = vsel %vm2289, %v2434, %v2201
    %v2458 = vsel %vm2290, %v2437, %v2202
    %v2459 = vsel %vm2291, %v2437, %v2203
    %v2460 = vsel %vm2292, %v2440, %v2204
    %v2461 = vsel %vm2293, %v2440, %v2205
    %v2462 = vsel %vm2294, %v2443, %v2206
    %v2463 = vsel %vm2295, %v2443, %v2207
    %v2464 = vsel %vm2296, %v2446, %v2208
    %v2465 = vsel %vm2297, %v2446, %v2209
    %v2466 = vsel %vm2298, %v2449, %v2210
    %v2467 = vsel %vm2299, %v2449, %v2211
    %v2468 = vsel %vm2300, %v2452, %v2212
    %v2469 = vsel %vm2301, %v2452, %v2213
    %v2470 = vsel %vm2302, %v2455, %v2214
    %v2471 = vsel %vm2303, %v2455, %v2215
    %v2472 = vsel %vm2304, %v2434, %v2216
    %v2473 = vsel %vm2305, %v2434, %v2217
    %v2474 = vsel %vm2306, %v2437, %v2218
    %v2475 = vsel %vm2307, %v2437, %v2219
    %v2476 = vsel %vm2308, %v2440, %v2220
    %v2477 = vsel %vm2309, %v2440, %v2221
    %v2478 = vsel %vm2310, %v2443, %v2222
    %v2479 = vsel %vm2311, %v2443, %v2223
    %v2480 = vsel %vm2312, %v2446, %v2224
    %v2481 = vsel %vm2313, %v2446, %v2225
    %v2482 = vsel %vm2314, %v2449, %v2226
    %v2483 = vsel %vm2315, %v2449, %v2227
    %v2484 = vsel %vm2316, %v2452, %v2228
    %v2485 = vsel %vm2317, %v2452, %v2229
    %v2486 = vsel %vm2318, %v2455, %v2230
    %v2487 = vsel %vm2319, %v2455, %v2231
    %2488 = vset.pattern.permute.xlu0 35
    %2489 = vperm.xlu0 %2488, %v72
    %v2490 = vpop.permute.xlu0 %2489
    %2491 = vset.pattern.permute.xlu0 35
    %2492 = vperm.xlu0 %2491, %v73
    %v2493 = vpop.permute.xlu0 %2492
    %2494 = vset.pattern.permute.xlu0 35
    %2495 = vperm.xlu0 %2494, %v74
    %v2496 = vpop.permute.xlu0 %2495
    %2497 = vset.pattern.permute.xlu0 35
    %2498 = vperm.xlu0 %2497, %v75
    %v2499 = vpop.permute.xlu0 %2498
    %2500 = vset.pattern.permute.xlu0 35
    %2501 = vperm.xlu0 %2500, %v76
    %v2502 = vpop.permute.xlu0 %2501
    %2503 = vset.pattern.permute.xlu0 35
    %2504 = vperm.xlu0 %2503, %v77
    %v2505 = vpop.permute.xlu0 %2504
    %2506 = vset.pattern.permute.xlu0 35
    %2507 = vperm.xlu0 %2506, %v78
    %v2508 = vpop.permute.xlu0 %2507
    %2509 = vset.pattern.permute.xlu0 35
    %2510 = vperm.xlu0 %2509, %v79
    %v2511 = vpop.permute.xlu0 %2510
    %v2512 = vsel %vm2288, %v2490, %v2256
    %v2513 = vsel %vm2289, %v2490, %v2257
    %v2514 = vsel %vm2290, %v2493, %v2258
    %v2515 = vsel %vm2291, %v2493, %v2259
    %v2516 = vsel %vm2292, %v2496, %v2260
    %v2517 = vsel %vm2293, %v2496, %v2261
    %v2518 = vsel %vm2294, %v2499, %v2262
    %v2519 = vsel %vm2295, %v2499, %v2263
    %v2520 = vsel %vm2296, %v2502, %v2264
    %v2521 = vsel %vm2297, %v2502, %v2265
    %v2522 = vsel %vm2298, %v2505, %v2266
    %v2523 = vsel %vm2299, %v2505, %v2267
    %v2524 = vsel %vm2300, %v2508, %v2268
    %v2525 = vsel %vm2301, %v2508, %v2269
    %v2526 = vsel %vm2302, %v2511, %v2270
    %v2527 = vsel %vm2303, %v2511, %v2271
    %v2528 = vsel %vm2304, %v2490, %v2272
    %v2529 = vsel %vm2305, %v2490, %v2273
    %v2530 = vsel %vm2306, %v2493, %v2274
    %v2531 = vsel %vm2307, %v2493, %v2275
    %v2532 = vsel %vm2308, %v2496, %v2276
    %v2533 = vsel %vm2309, %v2496, %v2277
    %v2534 = vsel %vm2310, %v2499, %v2278
    %v2535 = vsel %vm2311, %v2499, %v2279
    %v2536 = vsel %vm2312, %v2502, %v2280
    %v2537 = vsel %vm2313, %v2502, %v2281
    %v2538 = vsel %vm2314, %v2505, %v2282
    %v2539 = vsel %vm2315, %v2505, %v2283
    %v2540 = vsel %vm2316, %v2508, %v2284
    %v2541 = vsel %vm2317, %v2508, %v2285
    %v2542 = vsel %vm2318, %v2511, %v2286
    %v2543 = vsel %vm2319, %v2511, %v2287
    %vm2544 = vcmp.ge.f32.partialorder %v80, -25.0
    %vm2545 = vcmp.ge.f32.partialorder %v81, -25.0
    %vm2546 = vcmp.ge.f32.partialorder %v82, -25.0
    %vm2547 = vcmp.ge.f32.partialorder %v83, -25.0
    %vm2548 = vcmp.ge.f32.partialorder %v84, -25.0
    %vm2549 = vcmp.ge.f32.partialorder %v85, -25.0
    %vm2550 = vcmp.ge.f32.partialorder %v86, -25.0
    %vm2551 = vcmp.ge.f32.partialorder %v87, -25.0
    %vm2552 = vcmp.ge.f32.partialorder %v88, -25.0
    %vm2553 = vcmp.ge.f32.partialorder %v89, -25.0
    %vm2554 = vcmp.ge.f32.partialorder %v90, -25.0
    %vm2555 = vcmp.ge.f32.partialorder %v91, -25.0
    %vm2556 = vcmp.ge.f32.partialorder %v92, -25.0
    %vm2557 = vcmp.ge.f32.partialorder %v93, -25.0
    %vm2558 = vcmp.ge.f32.partialorder %v94, -25.0
    %vm2559 = vcmp.ge.f32.partialorder %v95, -25.0
    %vm2560 = vcmp.ge.f32.partialorder %v96, -25.0
    %vm2561 = vcmp.ge.f32.partialorder %v97, -25.0
    %vm2562 = vcmp.ge.f32.partialorder %v98, -25.0
    %vm2563 = vcmp.ge.f32.partialorder %v99, -25.0
    %vm2564 = vcmp.ge.f32.partialorder %v100, -25.0
    %vm2565 = vcmp.ge.f32.partialorder %v101, -25.0
    %vm2566 = vcmp.ge.f32.partialorder %v102, -25.0
    %vm2567 = vcmp.ge.f32.partialorder %v103, -25.0
    %vm2568 = vcmp.ge.f32.partialorder %v104, -25.0
    %vm2569 = vcmp.ge.f32.partialorder %v105, -25.0
    %vm2570 = vcmp.ge.f32.partialorder %v106, -25.0
    %vm2571 = vcmp.ge.f32.partialorder %v107, -25.0
    %vm2572 = vcmp.ge.f32.partialorder %v108, -25.0
    %vm2573 = vcmp.ge.f32.partialorder %v109, -25.0
    %vm2574 = vcmp.ge.f32.partialorder %v110, -25.0
    %vm2575 = vcmp.ge.f32.partialorder %v111, -25.0
    %2576 = vset.pattern.permute.xlu0 36
    %2577 = vperm.xlu0 %2576, %v72
    %v2578 = vpop.permute.xlu0 %2577
    %2579 = vset.pattern.permute.xlu0 36
    %2580 = vperm.xlu0 %2579, %v73
    %v2581 = vpop.permute.xlu0 %2580
    %2582 = vset.pattern.permute.xlu0 36
    %2583 = vperm.xlu0 %2582, %v74
    %v2584 = vpop.permute.xlu0 %2583
    %2585 = vset.pattern.permute.xlu0 36
    %2586 = vperm.xlu0 %2585, %v75
    %v2587 = vpop.permute.xlu0 %2586
    %2588 = vset.pattern.permute.xlu0 36
    %2589 = vperm.xlu0 %2588, %v76
    %v2590 = vpop.permute.xlu0 %2589
    %2591 = vset.pattern.permute.xlu0 36
    %2592 = vperm.xlu0 %2591, %v77
    %v2593 = vpop.permute.xlu0 %2592
    %2594 = vset.pattern.permute.xlu0 36
    %2595 = vperm.xlu0 %2594, %v78
    %v2596 = vpop.permute.xlu0 %2595
    %2597 = vset.pattern.permute.xlu0 36
    %2598 = vperm.xlu0 %2597, %v79
    %v2599 = vpop.permute.xlu0 %2598
    %v2600 = vsel %vm2544, %v2578, %v2344
    %v2601 = vsel %vm2545, %v2578, %v2345
    %v2602 = vsel %vm2546, %v2581, %v2346
    %v2603 = vsel %vm2547, %v2581, %v2347
    %v2604 = vsel %vm2548, %v2584, %v2348
    %v2605 = vsel %vm2549, %v2584, %v2349
    %v2606 = vsel %vm2550, %v2587, %v2350
    %v2607 = vsel %vm2551, %v2587, %v2351
    %v2608 = vsel %vm2552, %v2590, %v2352
    %v2609 = vsel %vm2553, %v2590, %v2353
    %v2610 = vsel %vm2554, %v2593, %v2354
    %v2611 = vsel %vm2555, %v2593, %v2355
    %v2612 = vsel %vm2556, %v2596, %v2356
    %v2613 = vsel %vm2557, %v2596, %v2357
    %v2614 = vsel %vm2558, %v2599, %v2358
    %v2615 = vsel %vm2559, %v2599, %v2359
    %v2616 = vsel %vm2560, %v2578, %v2360
    %v2617 = vsel %vm2561, %v2578, %v2361
    %v2618 = vsel %vm2562, %v2581, %v2362
    %v2619 = vsel %vm2563, %v2581, %v2363
    %v2620 = vsel %vm2564, %v2584, %v2364
    %v2621 = vsel %vm2565, %v2584, %v2365
    %v2622 = vsel %vm2566, %v2587, %v2366
    %v2623 = vsel %vm2567, %v2587, %v2367
    %v2624 = vsel %vm2568, %v2590, %v2368
    %v2625 = vsel %vm2569, %v2590, %v2369
    %v2626 = vsel %vm2570, %v2593, %v2370
    %v2627 = vsel %vm2571, %v2593, %v2371
    %v2628 = vsel %vm2572, %v2596, %v2372
    %v2629 = vsel %vm2573, %v2596, %v2373
    %v2630 = vsel %vm2574, %v2599, %v2374
    %v2631 = vsel %vm2575, %v2599, %v2375
    %2632 = vset.pattern.permute.xlu0 37
    %2633 = vperm.xlu0 %2632, %v72
    %v2634 = vpop.permute.xlu0 %2633
    %2635 = vset.pattern.permute.xlu0 37
    %2636 = vperm.xlu0 %2635, %v73
    %v2637 = vpop.permute.xlu0 %2636
    %2638 = vset.pattern.permute.xlu0 37
    %2639 = vperm.xlu0 %2638, %v74
    %v2640 = vpop.permute.xlu0 %2639
    %2641 = vset.pattern.permute.xlu0 37
    %2642 = vperm.xlu0 %2641, %v75
    %v2643 = vpop.permute.xlu0 %2642
    %2644 = vset.pattern.permute.xlu0 37
    %2645 = vperm.xlu0 %2644, %v76
    %v2646 = vpop.permute.xlu0 %2645
    %2647 = vset.pattern.permute.xlu0 37
    %2648 = vperm.xlu0 %2647, %v77
    %v2649 = vpop.permute.xlu0 %2648
    %2650 = vset.pattern.permute.xlu0 37
    %2651 = vperm.xlu0 %2650, %v78
    %v2652 = vpop.permute.xlu0 %2651
    %2653 = vset.pattern.permute.xlu0 37
    %2654 = vperm.xlu0 %2653, %v79
    %v2655 = vpop.permute.xlu0 %2654
    %v2656 = vsel %vm2544, %v2634, %v2400
    %v2657 = vsel %vm2545, %v2634, %v2401
    %v2658 = vsel %vm2546, %v2637, %v2402
    %v2659 = vsel %vm2547, %v2637, %v2403
    %v2660 = vsel %vm2548, %v2640, %v2404
    %v2661 = vsel %vm2549, %v2640, %v2405
    %v2662 = vsel %vm2550, %v2643, %v2406
    %v2663 = vsel %vm2551, %v2643, %v2407
    %v2664 = vsel %vm2552, %v2646, %v2408
    %v2665 = vsel %vm2553, %v2646, %v2409
    %v2666 = vsel %vm2554, %v2649, %v2410
    %v2667 = vsel %vm2555, %v2649, %v2411
    %v2668 = vsel %vm2556, %v2652, %v2412
    %v2669 = vsel %vm2557, %v2652, %v2413
    %v2670 = vsel %vm2558, %v2655, %v2414
    %v2671 = vsel %vm2559, %v2655, %v2415
    %v2672 = vsel %vm2560, %v2634, %v2416
    %v2673 = vsel %vm2561, %v2634, %v2417
    %v2674 = vsel %vm2562, %v2637, %v2418
    %v2675 = vsel %vm2563, %v2637, %v2419
    %v2676 = vsel %vm2564, %v2640, %v2420
    %v2677 = vsel %vm2565, %v2640, %v2421
    %v2678 = vsel %vm2566, %v2643, %v2422
    %v2679 = vsel %vm2567, %v2643, %v2423
    %v2680 = vsel %vm2568, %v2646, %v2424
    %v2681 = vsel %vm2569, %v2646, %v2425
    %v2682 = vsel %vm2570, %v2649, %v2426
    %v2683 = vsel %vm2571, %v2649, %v2427
    %v2684 = vsel %vm2572, %v2652, %v2428
    %v2685 = vsel %vm2573, %v2652, %v2429
    %v2686 = vsel %vm2574, %v2655, %v2430
    %v2687 = vsel %vm2575, %v2655, %v2431
    %2688 = vset.pattern.permute.xlu0 38
    %2689 = vperm.xlu0 %2688, %v72
    %v2690 = vpop.permute.xlu0 %2689
    %2691 = vset.pattern.permute.xlu0 38
    %2692 = vperm.xlu0 %2691, %v73
    %v2693 = vpop.permute.xlu0 %2692
    %2694 = vset.pattern.permute.xlu0 38
    %2695 = vperm.xlu0 %2694, %v74
    %v2696 = vpop.permute.xlu0 %2695
    %2697 = vset.pattern.permute.xlu0 38
    %2698 = vperm.xlu0 %2697, %v75
    %v2699 = vpop.permute.xlu0 %2698
    %2700 = vset.pattern.permute.xlu0 38
    %2701 = vperm.xlu0 %2700, %v76
    %v2702 = vpop.permute.xlu0 %2701
    %2703 = vset.pattern.permute.xlu0 38
    %2704 = vperm.xlu0 %2703, %v77
    %v2705 = vpop.permute.xlu0 %2704
    %2706 = vset.pattern.permute.xlu0 38
    %2707 = vperm.xlu0 %2706, %v78
    %v2708 = vpop.permute.xlu0 %2707
    %2709 = vset.pattern.permute.xlu0 38
    %2710 = vperm.xlu0 %2709, %v79
    %v2711 = vpop.permute.xlu0 %2710
    %v2712 = vsel %vm2544, %v2690, %v2456
    %v2713 = vsel %vm2545, %v2690, %v2457
    %v2714 = vsel %vm2546, %v2693, %v2458
    %v2715 = vsel %vm2547, %v2693, %v2459
    %v2716 = vsel %vm2548, %v2696, %v2460
    %v2717 = vsel %vm2549, %v2696, %v2461
    %v2718 = vsel %vm2550, %v2699, %v2462
    %v2719 = vsel %vm2551, %v2699, %v2463
    %v2720 = vsel %vm2552, %v2702, %v2464
    %v2721 = vsel %vm2553, %v2702, %v2465
    %v2722 = vsel %vm2554, %v2705, %v2466
    %v2723 = vsel %vm2555, %v2705, %v2467
    %v2724 = vsel %vm2556, %v2708, %v2468
    %v2725 = vsel %vm2557, %v2708, %v2469
    %v2726 = vsel %vm2558, %v2711, %v2470
    %v2727 = vsel %vm2559, %v2711, %v2471
    %v2728 = vsel %vm2560, %v2690, %v2472
    %v2729 = vsel %vm2561, %v2690, %v2473
    %v2730 = vsel %vm2562, %v2693, %v2474
    %v2731 = vsel %vm2563, %v2693, %v2475
    %v2732 = vsel %vm2564, %v2696, %v2476
    %v2733 = vsel %vm2565, %v2696, %v2477
    %v2734 = vsel %vm2566, %v2699, %v2478
    %v2735 = vsel %vm2567, %v2699, %v2479
    %v2736 = vsel %vm2568, %v2702, %v2480
    %v2737 = vsel %vm2569, %v2702, %v2481
    %v2738 = vsel %vm2570, %v2705, %v2482
    %v2739 = vsel %vm2571, %v2705, %v2483
    %v2740 = vsel %vm2572, %v2708, %v2484
    %v2741 = vsel %vm2573, %v2708, %v2485
    %v2742 = vsel %vm2574, %v2711, %v2486
    %v2743 = vsel %vm2575, %v2711, %v2487
    %2744 = vset.pattern.permute.xlu0 39
    %2745 = vperm.xlu0 %2744, %v72
    %v2746 = vpop.permute.xlu0 %2745
    %2747 = vset.pattern.permute.xlu0 39
    %2748 = vperm.xlu0 %2747, %v73
    %v2749 = vpop.permute.xlu0 %2748
    %2750 = vset.pattern.permute.xlu0 39
    %2751 = vperm.xlu0 %2750, %v74
    %v2752 = vpop.permute.xlu0 %2751
    %2753 = vset.pattern.permute.xlu0 39
    %2754 = vperm.xlu0 %2753, %v75
    %v2755 = vpop.permute.xlu0 %2754
    %2756 = vset.pattern.permute.xlu0 39
    %2757 = vperm.xlu0 %2756, %v76
    %v2758 = vpop.permute.xlu0 %2757
    %2759 = vset.pattern.permute.xlu0 39
    %2760 = vperm.xlu0 %2759, %v77
    %v2761 = vpop.permute.xlu0 %2760
    %2762 = vset.pattern.permute.xlu0 39
    %2763 = vperm.xlu0 %2762, %v78
    %v2764 = vpop.permute.xlu0 %2763
    %2765 = vset.pattern.permute.xlu0 39
    %2766 = vperm.xlu0 %2765, %v79
    %v2767 = vpop.permute.xlu0 %2766
    %v2768 = vsel %vm2544, %v2746, %v2512
    %v2769 = vsel %vm2545, %v2746, %v2513
    %v2770 = vsel %vm2546, %v2749, %v2514
    %v2771 = vsel %vm2547, %v2749, %v2515
    %v2772 = vsel %vm2548, %v2752, %v2516
    %v2773 = vsel %vm2549, %v2752, %v2517
    %v2774 = vsel %vm2550, %v2755, %v2518
    %v2775 = vsel %vm2551, %v2755, %v2519
    %v2776 = vsel %vm2552, %v2758, %v2520
    %v2777 = vsel %vm2553, %v2758, %v2521
    %v2778 = vsel %vm2554, %v2761, %v2522
    %v2779 = vsel %vm2555, %v2761, %v2523
    %v2780 = vsel %vm2556, %v2764, %v2524
    %v2781 = vsel %vm2557, %v2764, %v2525
    %v2782 = vsel %vm2558, %v2767, %v2526
    %v2783 = vsel %vm2559, %v2767, %v2527
    %v2784 = vsel %vm2560, %v2746, %v2528
    %v2785 = vsel %vm2561, %v2746, %v2529
    %v2786 = vsel %vm2562, %v2749, %v2530
    %v2787 = vsel %vm2563, %v2749, %v2531
    %v2788 = vsel %vm2564, %v2752, %v2532
    %v2789 = vsel %vm2565, %v2752, %v2533
    %v2790 = vsel %vm2566, %v2755, %v2534
    %v2791 = vsel %vm2567, %v2755, %v2535
    %v2792 = vsel %vm2568, %v2758, %v2536
    %v2793 = vsel %vm2569, %v2758, %v2537
    %v2794 = vsel %vm2570, %v2761, %v2538
    %v2795 = vsel %vm2571, %v2761, %v2539
    %v2796 = vsel %vm2572, %v2764, %v2540
    %v2797 = vsel %vm2573, %v2764, %v2541
    %v2798 = vsel %vm2574, %v2767, %v2542
    %v2799 = vsel %vm2575, %v2767, %v2543
    %vm2800 = vcmp.ge.f32.partialorder %v80, -21.0
    %vm2801 = vcmp.ge.f32.partialorder %v81, -21.0
    %vm2802 = vcmp.ge.f32.partialorder %v82, -21.0
    %vm2803 = vcmp.ge.f32.partialorder %v83, -21.0
    %vm2804 = vcmp.ge.f32.partialorder %v84, -21.0
    %vm2805 = vcmp.ge.f32.partialorder %v85, -21.0
    %vm2806 = vcmp.ge.f32.partialorder %v86, -21.0
    %vm2807 = vcmp.ge.f32.partialorder %v87, -21.0
    %vm2808 = vcmp.ge.f32.partialorder %v88, -21.0
    %vm2809 = vcmp.ge.f32.partialorder %v89, -21.0
    %vm2810 = vcmp.ge.f32.partialorder %v90, -21.0
    %vm2811 = vcmp.ge.f32.partialorder %v91, -21.0
    %vm2812 = vcmp.ge.f32.partialorder %v92, -21.0
    %vm2813 = vcmp.ge.f32.partialorder %v93, -21.0
    %vm2814 = vcmp.ge.f32.partialorder %v94, -21.0
    %vm2815 = vcmp.ge.f32.partialorder %v95, -21.0
    %vm2816 = vcmp.ge.f32.partialorder %v96, -21.0
    %vm2817 = vcmp.ge.f32.partialorder %v97, -21.0
    %vm2818 = vcmp.ge.f32.partialorder %v98, -21.0
    %vm2819 = vcmp.ge.f32.partialorder %v99, -21.0
    %vm2820 = vcmp.ge.f32.partialorder %v100, -21.0
    %vm2821 = vcmp.ge.f32.partialorder %v101, -21.0
    %vm2822 = vcmp.ge.f32.partialorder %v102, -21.0
    %vm2823 = vcmp.ge.f32.partialorder %v103, -21.0
    %vm2824 = vcmp.ge.f32.partialorder %v104, -21.0
    %vm2825 = vcmp.ge.f32.partialorder %v105, -21.0
    %vm2826 = vcmp.ge.f32.partialorder %v106, -21.0
    %vm2827 = vcmp.ge.f32.partialorder %v107, -21.0
    %vm2828 = vcmp.ge.f32.partialorder %v108, -21.0
    %vm2829 = vcmp.ge.f32.partialorder %v109, -21.0
    %vm2830 = vcmp.ge.f32.partialorder %v110, -21.0
    %vm2831 = vcmp.ge.f32.partialorder %v111, -21.0
    %2832 = vset.pattern.permute.xlu0 40
    %2833 = vperm.xlu0 %2832, %v72
    %v2834 = vpop.permute.xlu0 %2833
    %2835 = vset.pattern.permute.xlu0 40
    %2836 = vperm.xlu0 %2835, %v73
    %v2837 = vpop.permute.xlu0 %2836
    %2838 = vset.pattern.permute.xlu0 40
    %2839 = vperm.xlu0 %2838, %v74
    %v2840 = vpop.permute.xlu0 %2839
    %2841 = vset.pattern.permute.xlu0 40
    %2842 = vperm.xlu0 %2841, %v75
    %v2843 = vpop.permute.xlu0 %2842
    %2844 = vset.pattern.permute.xlu0 40
    %2845 = vperm.xlu0 %2844, %v76
    %v2846 = vpop.permute.xlu0 %2845
    %2847 = vset.pattern.permute.xlu0 40
    %2848 = vperm.xlu0 %2847, %v77
    %v2849 = vpop.permute.xlu0 %2848
    %2850 = vset.pattern.permute.xlu0 40
    %2851 = vperm.xlu0 %2850, %v78
    %v2852 = vpop.permute.xlu0 %2851
    %2853 = vset.pattern.permute.xlu0 40
    %2854 = vperm.xlu0 %2853, %v79
    %v2855 = vpop.permute.xlu0 %2854
    %v2856 = vsel %vm2800, %v2834, %v2600
    %v2857 = vsel %vm2801, %v2834, %v2601
    %v2858 = vsel %vm2802, %v2837, %v2602
    %v2859 = vsel %vm2803, %v2837, %v2603
    %v2860 = vsel %vm2804, %v2840, %v2604
    %v2861 = vsel %vm2805, %v2840, %v2605
    %v2862 = vsel %vm2806, %v2843, %v2606
    %v2863 = vsel %vm2807, %v2843, %v2607
    %v2864 = vsel %vm2808, %v2846, %v2608
    %v2865 = vsel %vm2809, %v2846, %v2609
    %v2866 = vsel %vm2810, %v2849, %v2610
    %v2867 = vsel %vm2811, %v2849, %v2611
    %v2868 = vsel %vm2812, %v2852, %v2612
    %v2869 = vsel %vm2813, %v2852, %v2613
    %v2870 = vsel %vm2814, %v2855, %v2614
    %v2871 = vsel %vm2815, %v2855, %v2615
    %v2872 = vsel %vm2816, %v2834, %v2616
    %v2873 = vsel %vm2817, %v2834, %v2617
    %v2874 = vsel %vm2818, %v2837, %v2618
    %v2875 = vsel %vm2819, %v2837, %v2619
    %v2876 = vsel %vm2820, %v2840, %v2620
    %v2877 = vsel %vm2821, %v2840, %v2621
    %v2878 = vsel %vm2822, %v2843, %v2622
    %v2879 = vsel %vm2823, %v2843, %v2623
    %v2880 = vsel %vm2824, %v2846, %v2624
    %v2881 = vsel %vm2825, %v2846, %v2625
    %v2882 = vsel %vm2826, %v2849, %v2626
    %v2883 = vsel %vm2827, %v2849, %v2627
    %v2884 = vsel %vm2828, %v2852, %v2628
    %v2885 = vsel %vm2829, %v2852, %v2629
    %v2886 = vsel %vm2830, %v2855, %v2630
    %v2887 = vsel %vm2831, %v2855, %v2631
    %2888 = vset.pattern.permute.xlu0 41
    %2889 = vperm.xlu0 %2888, %v72
    %v2890 = vpop.permute.xlu0 %2889
    %2891 = vset.pattern.permute.xlu0 41
    %2892 = vperm.xlu0 %2891, %v73
    %v2893 = vpop.permute.xlu0 %2892
    %2894 = vset.pattern.permute.xlu0 41
    %2895 = vperm.xlu0 %2894, %v74
    %v2896 = vpop.permute.xlu0 %2895
    %2897 = vset.pattern.permute.xlu0 41
    %2898 = vperm.xlu0 %2897, %v75
    %v2899 = vpop.permute.xlu0 %2898
    %2900 = vset.pattern.permute.xlu0 41
    %2901 = vperm.xlu0 %2900, %v76
    %v2902 = vpop.permute.xlu0 %2901
    %2903 = vset.pattern.permute.xlu0 41
    %2904 = vperm.xlu0 %2903, %v77
    %v2905 = vpop.permute.xlu0 %2904
    %2906 = vset.pattern.permute.xlu0 41
    %2907 = vperm.xlu0 %2906, %v78
    %v2908 = vpop.permute.xlu0 %2907
    %2909 = vset.pattern.permute.xlu0 41
    %2910 = vperm.xlu0 %2909, %v79
    %v2911 = vpop.permute.xlu0 %2910
    %v2912 = vsel %vm2800, %v2890, %v2656
    %v2913 = vsel %vm2801, %v2890, %v2657
    %v2914 = vsel %vm2802, %v2893, %v2658
    %v2915 = vsel %vm2803, %v2893, %v2659
    %v2916 = vsel %vm2804, %v2896, %v2660
    %v2917 = vsel %vm2805, %v2896, %v2661
    %v2918 = vsel %vm2806, %v2899, %v2662
    %v2919 = vsel %vm2807, %v2899, %v2663
    %v2920 = vsel %vm2808, %v2902, %v2664
    %v2921 = vsel %vm2809, %v2902, %v2665
    %v2922 = vsel %vm2810, %v2905, %v2666
    %v2923 = vsel %vm2811, %v2905, %v2667
    %v2924 = vsel %vm2812, %v2908, %v2668
    %v2925 = vsel %vm2813, %v2908, %v2669
    %v2926 = vsel %vm2814, %v2911, %v2670
    %v2927 = vsel %vm2815, %v2911, %v2671
    %v2928 = vsel %vm2816, %v2890, %v2672
    %v2929 = vsel %vm2817, %v2890, %v2673
    %v2930 = vsel %vm2818, %v2893, %v2674
    %v2931 = vsel %vm2819, %v2893, %v2675
    %v2932 = vsel %vm2820, %v2896, %v2676
    %v2933 = vsel %vm2821, %v2896, %v2677
    %v2934 = vsel %vm2822, %v2899, %v2678
    %v2935 = vsel %vm2823, %v2899, %v2679
    %v2936 = vsel %vm2824, %v2902, %v2680
    %v2937 = vsel %vm2825, %v2902, %v2681
    %v2938 = vsel %vm2826, %v2905, %v2682
    %v2939 = vsel %vm2827, %v2905, %v2683
    %v2940 = vsel %vm2828, %v2908, %v2684
    %v2941 = vsel %vm2829, %v2908, %v2685
    %v2942 = vsel %vm2830, %v2911, %v2686
    %v2943 = vsel %vm2831, %v2911, %v2687
    %2944 = vset.pattern.permute.xlu0 42
    %2945 = vperm.xlu0 %2944, %v72
    %v2946 = vpop.permute.xlu0 %2945
    %2947 = vset.pattern.permute.xlu0 42
    %2948 = vperm.xlu0 %2947, %v73
    %v2949 = vpop.permute.xlu0 %2948
    %2950 = vset.pattern.permute.xlu0 42
    %2951 = vperm.xlu0 %2950, %v74
    %v2952 = vpop.permute.xlu0 %2951
    %2953 = vset.pattern.permute.xlu0 42
    %2954 = vperm.xlu0 %2953, %v75
    %v2955 = vpop.permute.xlu0 %2954
    %2956 = vset.pattern.permute.xlu0 42
    %2957 = vperm.xlu0 %2956, %v76
    %v2958 = vpop.permute.xlu0 %2957
    %2959 = vset.pattern.permute.xlu0 42
    %2960 = vperm.xlu0 %2959, %v77
    %v2961 = vpop.permute.xlu0 %2960
    %2962 = vset.pattern.permute.xlu0 42
    %2963 = vperm.xlu0 %2962, %v78
    %v2964 = vpop.permute.xlu0 %2963
    %2965 = vset.pattern.permute.xlu0 42
    %2966 = vperm.xlu0 %2965, %v79
    %v2967 = vpop.permute.xlu0 %2966
    %v2968 = vsel %vm2800, %v2946, %v2712
    %v2969 = vsel %vm2801, %v2946, %v2713
    %v2970 = vsel %vm2802, %v2949, %v2714
    %v2971 = vsel %vm2803, %v2949, %v2715
    %v2972 = vsel %vm2804, %v2952, %v2716
    %v2973 = vsel %vm2805, %v2952, %v2717
    %v2974 = vsel %vm2806, %v2955, %v2718
    %v2975 = vsel %vm2807, %v2955, %v2719
    %v2976 = vsel %vm2808, %v2958, %v2720
    %v2977 = vsel %vm2809, %v2958, %v2721
    %v2978 = vsel %vm2810, %v2961, %v2722
    %v2979 = vsel %vm2811, %v2961, %v2723
    %v2980 = vsel %vm2812, %v2964, %v2724
    %v2981 = vsel %vm2813, %v2964, %v2725
    %v2982 = vsel %vm2814, %v2967, %v2726
    %v2983 = vsel %vm2815, %v2967, %v2727
    %v2984 = vsel %vm2816, %v2946, %v2728
    %v2985 = vsel %vm2817, %v2946, %v2729
    %v2986 = vsel %vm2818, %v2949, %v2730
    %v2987 = vsel %vm2819, %v2949, %v2731
    %v2988 = vsel %vm2820, %v2952, %v2732
    %v2989 = vsel %vm2821, %v2952, %v2733
    %v2990 = vsel %vm2822, %v2955, %v2734
    %v2991 = vsel %vm2823, %v2955, %v2735
    %v2992 = vsel %vm2824, %v2958, %v2736
    %v2993 = vsel %vm2825, %v2958, %v2737
    %v2994 = vsel %vm2826, %v2961, %v2738
    %v2995 = vsel %vm2827, %v2961, %v2739
    %v2996 = vsel %vm2828, %v2964, %v2740
    %v2997 = vsel %vm2829, %v2964, %v2741
    %v2998 = vsel %vm2830, %v2967, %v2742
    %v2999 = vsel %vm2831, %v2967, %v2743
    %3000 = vset.pattern.permute.xlu0 43
    %3001 = vperm.xlu0 %3000, %v72
    %v3002 = vpop.permute.xlu0 %3001
    %3003 = vset.pattern.permute.xlu0 43
    %3004 = vperm.xlu0 %3003, %v73
    %v3005 = vpop.permute.xlu0 %3004
    %3006 = vset.pattern.permute.xlu0 43
    %3007 = vperm.xlu0 %3006, %v74
    %v3008 = vpop.permute.xlu0 %3007
    %3009 = vset.pattern.permute.xlu0 43
    %3010 = vperm.xlu0 %3009, %v75
    %v3011 = vpop.permute.xlu0 %3010
    %3012 = vset.pattern.permute.xlu0 43
    %3013 = vperm.xlu0 %3012, %v76
    %v3014 = vpop.permute.xlu0 %3013
    %3015 = vset.pattern.permute.xlu0 43
    %3016 = vperm.xlu0 %3015, %v77
    %v3017 = vpop.permute.xlu0 %3016
    %3018 = vset.pattern.permute.xlu0 43
    %3019 = vperm.xlu0 %3018, %v78
    %v3020 = vpop.permute.xlu0 %3019
    %3021 = vset.pattern.permute.xlu0 43
    %3022 = vperm.xlu0 %3021, %v79
    %v3023 = vpop.permute.xlu0 %3022
    %v3024 = vsel %vm2800, %v3002, %v2768
    %v3025 = vsel %vm2801, %v3002, %v2769
    %v3026 = vsel %vm2802, %v3005, %v2770
    %v3027 = vsel %vm2803, %v3005, %v2771
    %v3028 = vsel %vm2804, %v3008, %v2772
    %v3029 = vsel %vm2805, %v3008, %v2773
    %v3030 = vsel %vm2806, %v3011, %v2774
    %v3031 = vsel %vm2807, %v3011, %v2775
    %v3032 = vsel %vm2808, %v3014, %v2776
    %v3033 = vsel %vm2809, %v3014, %v2777
    %v3034 = vsel %vm2810, %v3017, %v2778
    %v3035 = vsel %vm2811, %v3017, %v2779
    %v3036 = vsel %vm2812, %v3020, %v2780
    %v3037 = vsel %vm2813, %v3020, %v2781
    %v3038 = vsel %vm2814, %v3023, %v2782
    %v3039 = vsel %vm2815, %v3023, %v2783
    %v3040 = vsel %vm2816, %v3002, %v2784
    %v3041 = vsel %vm2817, %v3002, %v2785
    %v3042 = vsel %vm2818, %v3005, %v2786
    %v3043 = vsel %vm2819, %v3005, %v2787
    %v3044 = vsel %vm2820, %v3008, %v2788
    %v3045 = vsel %vm2821, %v3008, %v2789
    %v3046 = vsel %vm2822, %v3011, %v2790
    %v3047 = vsel %vm2823, %v3011, %v2791
    %v3048 = vsel %vm2824, %v3014, %v2792
    %v3049 = vsel %vm2825, %v3014, %v2793
    %v3050 = vsel %vm2826, %v3017, %v2794
    %v3051 = vsel %vm2827, %v3017, %v2795
    %v3052 = vsel %vm2828, %v3020, %v2796
    %v3053 = vsel %vm2829, %v3020, %v2797
    %v3054 = vsel %vm2830, %v3023, %v2798
    %v3055 = vsel %vm2831, %v3023, %v2799
    %vm3056 = vcmp.ge.f32.partialorder %v80, -17.0
    %vm3057 = vcmp.ge.f32.partialorder %v81, -17.0
    %vm3058 = vcmp.ge.f32.partialorder %v82, -17.0
    %vm3059 = vcmp.ge.f32.partialorder %v83, -17.0
    %vm3060 = vcmp.ge.f32.partialorder %v84, -17.0
    %vm3061 = vcmp.ge.f32.partialorder %v85, -17.0
    %vm3062 = vcmp.ge.f32.partialorder %v86, -17.0
    %vm3063 = vcmp.ge.f32.partialorder %v87, -17.0
    %vm3064 = vcmp.ge.f32.partialorder %v88, -17.0
    %vm3065 = vcmp.ge.f32.partialorder %v89, -17.0
    %vm3066 = vcmp.ge.f32.partialorder %v90, -17.0
    %vm3067 = vcmp.ge.f32.partialorder %v91, -17.0
    %vm3068 = vcmp.ge.f32.partialorder %v92, -17.0
    %vm3069 = vcmp.ge.f32.partialorder %v93, -17.0
    %vm3070 = vcmp.ge.f32.partialorder %v94, -17.0
    %vm3071 = vcmp.ge.f32.partialorder %v95, -17.0
    %vm3072 = vcmp.ge.f32.partialorder %v96, -17.0
    %vm3073 = vcmp.ge.f32.partialorder %v97, -17.0
    %vm3074 = vcmp.ge.f32.partialorder %v98, -17.0
    %vm3075 = vcmp.ge.f32.partialorder %v99, -17.0
    %vm3076 = vcmp.ge.f32.partialorder %v100, -17.0
    %vm3077 = vcmp.ge.f32.partialorder %v101, -17.0
    %vm3078 = vcmp.ge.f32.partialorder %v102, -17.0
    %vm3079 = vcmp.ge.f32.partialorder %v103, -17.0
    %vm3080 = vcmp.ge.f32.partialorder %v104, -17.0
    %vm3081 = vcmp.ge.f32.partialorder %v105, -17.0
    %vm3082 = vcmp.ge.f32.partialorder %v106, -17.0
    %vm3083 = vcmp.ge.f32.partialorder %v107, -17.0
    %vm3084 = vcmp.ge.f32.partialorder %v108, -17.0
    %vm3085 = vcmp.ge.f32.partialorder %v109, -17.0
    %vm3086 = vcmp.ge.f32.partialorder %v110, -17.0
    %vm3087 = vcmp.ge.f32.partialorder %v111, -17.0
    %3088 = vset.pattern.permute.xlu0 44
    %3089 = vperm.xlu0 %3088, %v72
    %v3090 = vpop.permute.xlu0 %3089
    %3091 = vset.pattern.permute.xlu0 44
    %3092 = vperm.xlu0 %3091, %v73
    %v3093 = vpop.permute.xlu0 %3092
    %3094 = vset.pattern.permute.xlu0 44
    %3095 = vperm.xlu0 %3094, %v74
    %v3096 = vpop.permute.xlu0 %3095
    %3097 = vset.pattern.permute.xlu0 44
    %3098 = vperm.xlu0 %3097, %v75
    %v3099 = vpop.permute.xlu0 %3098
    %3100 = vset.pattern.permute.xlu0 44
    %3101 = vperm.xlu0 %3100, %v76
    %v3102 = vpop.permute.xlu0 %3101
    %3103 = vset.pattern.permute.xlu0 44
    %3104 = vperm.xlu0 %3103, %v77
    %v3105 = vpop.permute.xlu0 %3104
    %3106 = vset.pattern.permute.xlu0 44
    %3107 = vperm.xlu0 %3106, %v78
    %v3108 = vpop.permute.xlu0 %3107
    %3109 = vset.pattern.permute.xlu0 44
    %3110 = vperm.xlu0 %3109, %v79
    %v3111 = vpop.permute.xlu0 %3110
    %v3112 = vsel %vm3056, %v3090, %v2856
    %v3113 = vsel %vm3057, %v3090, %v2857
    %v3114 = vsel %vm3058, %v3093, %v2858
    %v3115 = vsel %vm3059, %v3093, %v2859
    %v3116 = vsel %vm3060, %v3096, %v2860
    %v3117 = vsel %vm3061, %v3096, %v2861
    %v3118 = vsel %vm3062, %v3099, %v2862
    %v3119 = vsel %vm3063, %v3099, %v2863
    %v3120 = vsel %vm3064, %v3102, %v2864
    %v3121 = vsel %vm3065, %v3102, %v2865
    %v3122 = vsel %vm3066, %v3105, %v2866
    %v3123 = vsel %vm3067, %v3105, %v2867
    %v3124 = vsel %vm3068, %v3108, %v2868
    %v3125 = vsel %vm3069, %v3108, %v2869
    %v3126 = vsel %vm3070, %v3111, %v2870
    %v3127 = vsel %vm3071, %v3111, %v2871
    %v3128 = vsel %vm3072, %v3090, %v2872
    %v3129 = vsel %vm3073, %v3090, %v2873
    %v3130 = vsel %vm3074, %v3093, %v2874
    %v3131 = vsel %vm3075, %v3093, %v2875
    %v3132 = vsel %vm3076, %v3096, %v2876
    %v3133 = vsel %vm3077, %v3096, %v2877
    %v3134 = vsel %vm3078, %v3099, %v2878
    %v3135 = vsel %vm3079, %v3099, %v2879
    %v3136 = vsel %vm3080, %v3102, %v2880
    %v3137 = vsel %vm3081, %v3102, %v2881
    %v3138 = vsel %vm3082, %v3105, %v2882
    %v3139 = vsel %vm3083, %v3105, %v2883
    %v3140 = vsel %vm3084, %v3108, %v2884
    %v3141 = vsel %vm3085, %v3108, %v2885
    %v3142 = vsel %vm3086, %v3111, %v2886
    %v3143 = vsel %vm3087, %v3111, %v2887
    %3144 = vset.pattern.permute.xlu0 45
    %3145 = vperm.xlu0 %3144, %v72
    %v3146 = vpop.permute.xlu0 %3145
    %3147 = vset.pattern.permute.xlu0 45
    %3148 = vperm.xlu0 %3147, %v73
    %v3149 = vpop.permute.xlu0 %3148
    %3150 = vset.pattern.permute.xlu0 45
    %3151 = vperm.xlu0 %3150, %v74
    %v3152 = vpop.permute.xlu0 %3151
    %3153 = vset.pattern.permute.xlu0 45
    %3154 = vperm.xlu0 %3153, %v75
    %v3155 = vpop.permute.xlu0 %3154
    %3156 = vset.pattern.permute.xlu0 45
    %3157 = vperm.xlu0 %3156, %v76
    %v3158 = vpop.permute.xlu0 %3157
    %3159 = vset.pattern.permute.xlu0 45
    %3160 = vperm.xlu0 %3159, %v77
    %v3161 = vpop.permute.xlu0 %3160
    %3162 = vset.pattern.permute.xlu0 45
    %3163 = vperm.xlu0 %3162, %v78
    %v3164 = vpop.permute.xlu0 %3163
    %3165 = vset.pattern.permute.xlu0 45
    %3166 = vperm.xlu0 %3165, %v79
    %v3167 = vpop.permute.xlu0 %3166
    %v3168 = vsel %vm3056, %v3146, %v2912
    %v3169 = vsel %vm3057, %v3146, %v2913
    %v3170 = vsel %vm3058, %v3149, %v2914
    %v3171 = vsel %vm3059, %v3149, %v2915
    %v3172 = vsel %vm3060, %v3152, %v2916
    %v3173 = vsel %vm3061, %v3152, %v2917
    %v3174 = vsel %vm3062, %v3155, %v2918
    %v3175 = vsel %vm3063, %v3155, %v2919
    %v3176 = vsel %vm3064, %v3158, %v2920
    %v3177 = vsel %vm3065, %v3158, %v2921
    %v3178 = vsel %vm3066, %v3161, %v2922
    %v3179 = vsel %vm3067, %v3161, %v2923
    %v3180 = vsel %vm3068, %v3164, %v2924
    %v3181 = vsel %vm3069, %v3164, %v2925
    %v3182 = vsel %vm3070, %v3167, %v2926
    %v3183 = vsel %vm3071, %v3167, %v2927
    %v3184 = vsel %vm3072, %v3146, %v2928
    %v3185 = vsel %vm3073, %v3146, %v2929
    %v3186 = vsel %vm3074, %v3149, %v2930
    %v3187 = vsel %vm3075, %v3149, %v2931
    %v3188 = vsel %vm3076, %v3152, %v2932
    %v3189 = vsel %vm3077, %v3152, %v2933
    %v3190 = vsel %vm3078, %v3155, %v2934
    %v3191 = vsel %vm3079, %v3155, %v2935
    %v3192 = vsel %vm3080, %v3158, %v2936
    %v3193 = vsel %vm3081, %v3158, %v2937
    %v3194 = vsel %vm3082, %v3161, %v2938
    %v3195 = vsel %vm3083, %v3161, %v2939
    %v3196 = vsel %vm3084, %v3164, %v2940
    %v3197 = vsel %vm3085, %v3164, %v2941
    %v3198 = vsel %vm3086, %v3167, %v2942
    %v3199 = vsel %vm3087, %v3167, %v2943
    %3200 = vset.pattern.permute.xlu0 46
    %3201 = vperm.xlu0 %3200, %v72
    %v3202 = vpop.permute.xlu0 %3201
    %3203 = vset.pattern.permute.xlu0 46
    %3204 = vperm.xlu0 %3203, %v73
    %v3205 = vpop.permute.xlu0 %3204
    %3206 = vset.pattern.permute.xlu0 46
    %3207 = vperm.xlu0 %3206, %v74
    %v3208 = vpop.permute.xlu0 %3207
    %3209 = vset.pattern.permute.xlu0 46
    %3210 = vperm.xlu0 %3209, %v75
    %v3211 = vpop.permute.xlu0 %3210
    %3212 = vset.pattern.permute.xlu0 46
    %3213 = vperm.xlu0 %3212, %v76
    %v3214 = vpop.permute.xlu0 %3213
    %3215 = vset.pattern.permute.xlu0 46
    %3216 = vperm.xlu0 %3215, %v77
    %v3217 = vpop.permute.xlu0 %3216
    %3218 = vset.pattern.permute.xlu0 46
    %3219 = vperm.xlu0 %3218, %v78
    %v3220 = vpop.permute.xlu0 %3219
    %3221 = vset.pattern.permute.xlu0 46
    %3222 = vperm.xlu0 %3221, %v79
    %v3223 = vpop.permute.xlu0 %3222
    %v3224 = vsel %vm3056, %v3202, %v2968
    %v3225 = vsel %vm3057, %v3202, %v2969
    %v3226 = vsel %vm3058, %v3205, %v2970
    %v3227 = vsel %vm3059, %v3205, %v2971
    %v3228 = vsel %vm3060, %v3208, %v2972
    %v3229 = vsel %vm3061, %v3208, %v2973
    %v3230 = vsel %vm3062, %v3211, %v2974
    %v3231 = vsel %vm3063, %v3211, %v2975
    %v3232 = vsel %vm3064, %v3214, %v2976
    %v3233 = vsel %vm3065, %v3214, %v2977
    %v3234 = vsel %vm3066, %v3217, %v2978
    %v3235 = vsel %vm3067, %v3217, %v2979
    %v3236 = vsel %vm3068, %v3220, %v2980
    %v3237 = vsel %vm3069, %v3220, %v2981
    %v3238 = vsel %vm3070, %v3223, %v2982
    %v3239 = vsel %vm3071, %v3223, %v2983
    %v3240 = vsel %vm3072, %v3202, %v2984
    %v3241 = vsel %vm3073, %v3202, %v2985
    %v3242 = vsel %vm3074, %v3205, %v2986
    %v3243 = vsel %vm3075, %v3205, %v2987
    %v3244 = vsel %vm3076, %v3208, %v2988
    %v3245 = vsel %vm3077, %v3208, %v2989
    %v3246 = vsel %vm3078, %v3211, %v2990
    %v3247 = vsel %vm3079, %v3211, %v2991
    %v3248 = vsel %vm3080, %v3214, %v2992
    %v3249 = vsel %vm3081, %v3214, %v2993
    %v3250 = vsel %vm3082, %v3217, %v2994
    %v3251 = vsel %vm3083, %v3217, %v2995
    %v3252 = vsel %vm3084, %v3220, %v2996
    %v3253 = vsel %vm3085, %v3220, %v2997
    %v3254 = vsel %vm3086, %v3223, %v2998
    %v3255 = vsel %vm3087, %v3223, %v2999
    %3256 = vset.pattern.permute.xlu0 47
    %3257 = vperm.xlu0 %3256, %v72
    %v3258 = vpop.permute.xlu0 %3257
    %3259 = vset.pattern.permute.xlu0 47
    %3260 = vperm.xlu0 %3259, %v73
    %v3261 = vpop.permute.xlu0 %3260
    %3262 = vset.pattern.permute.xlu0 47
    %3263 = vperm.xlu0 %3262, %v74
    %v3264 = vpop.permute.xlu0 %3263
    %3265 = vset.pattern.permute.xlu0 47
    %3266 = vperm.xlu0 %3265, %v75
    %v3267 = vpop.permute.xlu0 %3266
    %3268 = vset.pattern.permute.xlu0 47
    %3269 = vperm.xlu0 %3268, %v76
    %v3270 = vpop.permute.xlu0 %3269
    %3271 = vset.pattern.permute.xlu0 47
    %3272 = vperm.xlu0 %3271, %v77
    %v3273 = vpop.permute.xlu0 %3272
    %3274 = vset.pattern.permute.xlu0 47
    %3275 = vperm.xlu0 %3274, %v78
    %v3276 = vpop.permute.xlu0 %3275
    %3277 = vset.pattern.permute.xlu0 47
    %3278 = vperm.xlu0 %3277, %v79
    %v3279 = vpop.permute.xlu0 %3278
    %v3280 = vsel %vm3056, %v3258, %v3024
    %v3281 = vsel %vm3057, %v3258, %v3025
    %v3282 = vsel %vm3058, %v3261, %v3026
    %v3283 = vsel %vm3059, %v3261, %v3027
    %v3284 = vsel %vm3060, %v3264, %v3028
    %v3285 = vsel %vm3061, %v3264, %v3029
    %v3286 = vsel %vm3062, %v3267, %v3030
    %v3287 = vsel %vm3063, %v3267, %v3031
    %v3288 = vsel %vm3064, %v3270, %v3032
    %v3289 = vsel %vm3065, %v3270, %v3033
    %v3290 = vsel %vm3066, %v3273, %v3034
    %v3291 = vsel %vm3067, %v3273, %v3035
    %v3292 = vsel %vm3068, %v3276, %v3036
    %v3293 = vsel %vm3069, %v3276, %v3037
    %v3294 = vsel %vm3070, %v3279, %v3038
    %v3295 = vsel %vm3071, %v3279, %v3039
    %v3296 = vsel %vm3072, %v3258, %v3040
    %v3297 = vsel %vm3073, %v3258, %v3041
    %v3298 = vsel %vm3074, %v3261, %v3042
    %v3299 = vsel %vm3075, %v3261, %v3043
    %v3300 = vsel %vm3076, %v3264, %v3044
    %v3301 = vsel %vm3077, %v3264, %v3045
    %v3302 = vsel %vm3078, %v3267, %v3046
    %v3303 = vsel %vm3079, %v3267, %v3047
    %v3304 = vsel %vm3080, %v3270, %v3048
    %v3305 = vsel %vm3081, %v3270, %v3049
    %v3306 = vsel %vm3082, %v3273, %v3050
    %v3307 = vsel %vm3083, %v3273, %v3051
    %v3308 = vsel %vm3084, %v3276, %v3052
    %v3309 = vsel %vm3085, %v3276, %v3053
    %v3310 = vsel %vm3086, %v3279, %v3054
    %v3311 = vsel %vm3087, %v3279, %v3055
    %vm3312 = vcmp.ge.f32.partialorder %v80, -13.0
    %vm3313 = vcmp.ge.f32.partialorder %v81, -13.0
    %vm3314 = vcmp.ge.f32.partialorder %v82, -13.0
    %vm3315 = vcmp.ge.f32.partialorder %v83, -13.0
    %vm3316 = vcmp.ge.f32.partialorder %v84, -13.0
    %vm3317 = vcmp.ge.f32.partialorder %v85, -13.0
    %vm3318 = vcmp.ge.f32.partialorder %v86, -13.0
    %vm3319 = vcmp.ge.f32.partialorder %v87, -13.0
    %vm3320 = vcmp.ge.f32.partialorder %v88, -13.0
    %vm3321 = vcmp.ge.f32.partialorder %v89, -13.0
    %vm3322 = vcmp.ge.f32.partialorder %v90, -13.0
    %vm3323 = vcmp.ge.f32.partialorder %v91, -13.0
    %vm3324 = vcmp.ge.f32.partialorder %v92, -13.0
    %vm3325 = vcmp.ge.f32.partialorder %v93, -13.0
    %vm3326 = vcmp.ge.f32.partialorder %v94, -13.0
    %vm3327 = vcmp.ge.f32.partialorder %v95, -13.0
    %vm3328 = vcmp.ge.f32.partialorder %v96, -13.0
    %vm3329 = vcmp.ge.f32.partialorder %v97, -13.0
    %vm3330 = vcmp.ge.f32.partialorder %v98, -13.0
    %vm3331 = vcmp.ge.f32.partialorder %v99, -13.0
    %vm3332 = vcmp.ge.f32.partialorder %v100, -13.0
    %vm3333 = vcmp.ge.f32.partialorder %v101, -13.0
    %vm3334 = vcmp.ge.f32.partialorder %v102, -13.0
    %vm3335 = vcmp.ge.f32.partialorder %v103, -13.0
    %vm3336 = vcmp.ge.f32.partialorder %v104, -13.0
    %vm3337 = vcmp.ge.f32.partialorder %v105, -13.0
    %vm3338 = vcmp.ge.f32.partialorder %v106, -13.0
    %vm3339 = vcmp.ge.f32.partialorder %v107, -13.0
    %vm3340 = vcmp.ge.f32.partialorder %v108, -13.0
    %vm3341 = vcmp.ge.f32.partialorder %v109, -13.0
    %vm3342 = vcmp.ge.f32.partialorder %v110, -13.0
    %vm3343 = vcmp.ge.f32.partialorder %v111, -13.0
    %3344 = vset.pattern.permute.xlu0 48
    %3345 = vperm.xlu0 %3344, %v72
    %v3346 = vpop.permute.xlu0 %3345
    %3347 = vset.pattern.permute.xlu0 48
    %3348 = vperm.xlu0 %3347, %v73
    %v3349 = vpop.permute.xlu0 %3348
    %3350 = vset.pattern.permute.xlu0 48
    %3351 = vperm.xlu0 %3350, %v74
    %v3352 = vpop.permute.xlu0 %3351
    %3353 = vset.pattern.permute.xlu0 48
    %3354 = vperm.xlu0 %3353, %v75
    %v3355 = vpop.permute.xlu0 %3354
    %3356 = vset.pattern.permute.xlu0 48
    %3357 = vperm.xlu0 %3356, %v76
    %v3358 = vpop.permute.xlu0 %3357
    %3359 = vset.pattern.permute.xlu0 48
    %3360 = vperm.xlu0 %3359, %v77
    %v3361 = vpop.permute.xlu0 %3360
    %3362 = vset.pattern.permute.xlu0 48
    %3363 = vperm.xlu0 %3362, %v78
    %v3364 = vpop.permute.xlu0 %3363
    %3365 = vset.pattern.permute.xlu0 48
    %3366 = vperm.xlu0 %3365, %v79
    %v3367 = vpop.permute.xlu0 %3366
    %v3368 = vsel %vm3312, %v3346, %v3112
    %v3369 = vsel %vm3313, %v3346, %v3113
    %v3370 = vsel %vm3314, %v3349, %v3114
    %v3371 = vsel %vm3315, %v3349, %v3115
    %v3372 = vsel %vm3316, %v3352, %v3116
    %v3373 = vsel %vm3317, %v3352, %v3117
    %v3374 = vsel %vm3318, %v3355, %v3118
    %v3375 = vsel %vm3319, %v3355, %v3119
    %v3376 = vsel %vm3320, %v3358, %v3120
    %v3377 = vsel %vm3321, %v3358, %v3121
    %v3378 = vsel %vm3322, %v3361, %v3122
    %v3379 = vsel %vm3323, %v3361, %v3123
    %v3380 = vsel %vm3324, %v3364, %v3124
    %v3381 = vsel %vm3325, %v3364, %v3125
    %v3382 = vsel %vm3326, %v3367, %v3126
    %v3383 = vsel %vm3327, %v3367, %v3127
    %v3384 = vsel %vm3328, %v3346, %v3128
    %v3385 = vsel %vm3329, %v3346, %v3129
    %v3386 = vsel %vm3330, %v3349, %v3130
    %v3387 = vsel %vm3331, %v3349, %v3131
    %v3388 = vsel %vm3332, %v3352, %v3132
    %v3389 = vsel %vm3333, %v3352, %v3133
    %v3390 = vsel %vm3334, %v3355, %v3134
    %v3391 = vsel %vm3335, %v3355, %v3135
    %v3392 = vsel %vm3336, %v3358, %v3136
    %v3393 = vsel %vm3337, %v3358, %v3137
    %v3394 = vsel %vm3338, %v3361, %v3138
    %v3395 = vsel %vm3339, %v3361, %v3139
    %v3396 = vsel %vm3340, %v3364, %v3140
    %v3397 = vsel %vm3341, %v3364, %v3141
    %v3398 = vsel %vm3342, %v3367, %v3142
    %v3399 = vsel %vm3343, %v3367, %v3143
    %3400 = vset.pattern.permute.xlu0 49
    %3401 = vperm.xlu0 %3400, %v72
    %v3402 = vpop.permute.xlu0 %3401
    %3403 = vset.pattern.permute.xlu0 49
    %3404 = vperm.xlu0 %3403, %v73
    %v3405 = vpop.permute.xlu0 %3404
    %3406 = vset.pattern.permute.xlu0 49
    %3407 = vperm.xlu0 %3406, %v74
    %v3408 = vpop.permute.xlu0 %3407
    %3409 = vset.pattern.permute.xlu0 49
    %3410 = vperm.xlu0 %3409, %v75
    %v3411 = vpop.permute.xlu0 %3410
    %3412 = vset.pattern.permute.xlu0 49
    %3413 = vperm.xlu0 %3412, %v76
    %v3414 = vpop.permute.xlu0 %3413
    %3415 = vset.pattern.permute.xlu0 49
    %3416 = vperm.xlu0 %3415, %v77
    %v3417 = vpop.permute.xlu0 %3416
    %3418 = vset.pattern.permute.xlu0 49
    %3419 = vperm.xlu0 %3418, %v78
    %v3420 = vpop.permute.xlu0 %3419
    %3421 = vset.pattern.permute.xlu0 49
    %3422 = vperm.xlu0 %3421, %v79
    %v3423 = vpop.permute.xlu0 %3422
    %v3424 = vsel %vm3312, %v3402, %v3168
    %v3425 = vsel %vm3313, %v3402, %v3169
    %v3426 = vsel %vm3314, %v3405, %v3170
    %v3427 = vsel %vm3315, %v3405, %v3171
    %v3428 = vsel %vm3316, %v3408, %v3172
    %v3429 = vsel %vm3317, %v3408, %v3173
    %v3430 = vsel %vm3318, %v3411, %v3174
    %v3431 = vsel %vm3319, %v3411, %v3175
    %v3432 = vsel %vm3320, %v3414, %v3176
    %v3433 = vsel %vm3321, %v3414, %v3177
    %v3434 = vsel %vm3322, %v3417, %v3178
    %v3435 = vsel %vm3323, %v3417, %v3179
    %v3436 = vsel %vm3324, %v3420, %v3180
    %v3437 = vsel %vm3325, %v3420, %v3181
    %v3438 = vsel %vm3326, %v3423, %v3182
    %v3439 = vsel %vm3327, %v3423, %v3183
    %v3440 = vsel %vm3328, %v3402, %v3184
    %v3441 = vsel %vm3329, %v3402, %v3185
    %v3442 = vsel %vm3330, %v3405, %v3186
    %v3443 = vsel %vm3331, %v3405, %v3187
    %v3444 = vsel %vm3332, %v3408, %v3188
    %v3445 = vsel %vm3333, %v3408, %v3189
    %v3446 = vsel %vm3334, %v3411, %v3190
    %v3447 = vsel %vm3335, %v3411, %v3191
    %v3448 = vsel %vm3336, %v3414, %v3192
    %v3449 = vsel %vm3337, %v3414, %v3193
    %v3450 = vsel %vm3338, %v3417, %v3194
    %v3451 = vsel %vm3339, %v3417, %v3195
    %v3452 = vsel %vm3340, %v3420, %v3196
    %v3453 = vsel %vm3341, %v3420, %v3197
    %v3454 = vsel %vm3342, %v3423, %v3198
    %v3455 = vsel %vm3343, %v3423, %v3199
    %3456 = vset.pattern.permute.xlu0 50
    %3457 = vperm.xlu0 %3456, %v72
    %v3458 = vpop.permute.xlu0 %3457
    %3459 = vset.pattern.permute.xlu0 50
    %3460 = vperm.xlu0 %3459, %v73
    %v3461 = vpop.permute.xlu0 %3460
    %3462 = vset.pattern.permute.xlu0 50
    %3463 = vperm.xlu0 %3462, %v74
    %v3464 = vpop.permute.xlu0 %3463
    %3465 = vset.pattern.permute.xlu0 50
    %3466 = vperm.xlu0 %3465, %v75
    %v3467 = vpop.permute.xlu0 %3466
    %3468 = vset.pattern.permute.xlu0 50
    %3469 = vperm.xlu0 %3468, %v76
    %v3470 = vpop.permute.xlu0 %3469
    %3471 = vset.pattern.permute.xlu0 50
    %3472 = vperm.xlu0 %3471, %v77
    %v3473 = vpop.permute.xlu0 %3472
    %3474 = vset.pattern.permute.xlu0 50
    %3475 = vperm.xlu0 %3474, %v78
    %v3476 = vpop.permute.xlu0 %3475
    %3477 = vset.pattern.permute.xlu0 50
    %3478 = vperm.xlu0 %3477, %v79
    %v3479 = vpop.permute.xlu0 %3478
    %v3480 = vsel %vm3312, %v3458, %v3224
    %v3481 = vsel %vm3313, %v3458, %v3225
    %v3482 = vsel %vm3314, %v3461, %v3226
    %v3483 = vsel %vm3315, %v3461, %v3227
    %v3484 = vsel %vm3316, %v3464, %v3228
    %v3485 = vsel %vm3317, %v3464, %v3229
    %v3486 = vsel %vm3318, %v3467, %v3230
    %v3487 = vsel %vm3319, %v3467, %v3231
    %v3488 = vsel %vm3320, %v3470, %v3232
    %v3489 = vsel %vm3321, %v3470, %v3233
    %v3490 = vsel %vm3322, %v3473, %v3234
    %v3491 = vsel %vm3323, %v3473, %v3235
    %v3492 = vsel %vm3324, %v3476, %v3236
    %v3493 = vsel %vm3325, %v3476, %v3237
    %v3494 = vsel %vm3326, %v3479, %v3238
    %v3495 = vsel %vm3327, %v3479, %v3239
    %v3496 = vsel %vm3328, %v3458, %v3240
    %v3497 = vsel %vm3329, %v3458, %v3241
    %v3498 = vsel %vm3330, %v3461, %v3242
    %v3499 = vsel %vm3331, %v3461, %v3243
    %v3500 = vsel %vm3332, %v3464, %v3244
    %v3501 = vsel %vm3333, %v3464, %v3245
    %v3502 = vsel %vm3334, %v3467, %v3246
    %v3503 = vsel %vm3335, %v3467, %v3247
    %v3504 = vsel %vm3336, %v3470, %v3248
    %v3505 = vsel %vm3337, %v3470, %v3249
    %v3506 = vsel %vm3338, %v3473, %v3250
    %v3507 = vsel %vm3339, %v3473, %v3251
    %v3508 = vsel %vm3340, %v3476, %v3252
    %v3509 = vsel %vm3341, %v3476, %v3253
    %v3510 = vsel %vm3342, %v3479, %v3254
    %v3511 = vsel %vm3343, %v3479, %v3255
    %3512 = vset.pattern.permute.xlu0 51
    %3513 = vperm.xlu0 %3512, %v72
    %v3514 = vpop.permute.xlu0 %3513
    %3515 = vset.pattern.permute.xlu0 51
    %3516 = vperm.xlu0 %3515, %v73
    %v3517 = vpop.permute.xlu0 %3516
    %3518 = vset.pattern.permute.xlu0 51
    %3519 = vperm.xlu0 %3518, %v74
    %v3520 = vpop.permute.xlu0 %3519
    %3521 = vset.pattern.permute.xlu0 51
    %3522 = vperm.xlu0 %3521, %v75
    %v3523 = vpop.permute.xlu0 %3522
    %3524 = vset.pattern.permute.xlu0 51
    %3525 = vperm.xlu0 %3524, %v76
    %v3526 = vpop.permute.xlu0 %3525
    %3527 = vset.pattern.permute.xlu0 51
    %3528 = vperm.xlu0 %3527, %v77
    %v3529 = vpop.permute.xlu0 %3528
    %3530 = vset.pattern.permute.xlu0 51
    %3531 = vperm.xlu0 %3530, %v78
    %v3532 = vpop.permute.xlu0 %3531
    %3533 = vset.pattern.permute.xlu0 51
    %3534 = vperm.xlu0 %3533, %v79
    %v3535 = vpop.permute.xlu0 %3534
    %v3536 = vsel %vm3312, %v3514, %v3280
    %v3537 = vsel %vm3313, %v3514, %v3281
    %v3538 = vsel %vm3314, %v3517, %v3282
    %v3539 = vsel %vm3315, %v3517, %v3283
    %v3540 = vsel %vm3316, %v3520, %v3284
    %v3541 = vsel %vm3317, %v3520, %v3285
    %v3542 = vsel %vm3318, %v3523, %v3286
    %v3543 = vsel %vm3319, %v3523, %v3287
    %v3544 = vsel %vm3320, %v3526, %v3288
    %v3545 = vsel %vm3321, %v3526, %v3289
    %v3546 = vsel %vm3322, %v3529, %v3290
    %v3547 = vsel %vm3323, %v3529, %v3291
    %v3548 = vsel %vm3324, %v3532, %v3292
    %v3549 = vsel %vm3325, %v3532, %v3293
    %v3550 = vsel %vm3326, %v3535, %v3294
    %v3551 = vsel %vm3327, %v3535, %v3295
    %v3552 = vsel %vm3328, %v3514, %v3296
    %v3553 = vsel %vm3329, %v3514, %v3297
    %v3554 = vsel %vm3330, %v3517, %v3298
    %v3555 = vsel %vm3331, %v3517, %v3299
    %v3556 = vsel %vm3332, %v3520, %v3300
    %v3557 = vsel %vm3333, %v3520, %v3301
    %v3558 = vsel %vm3334, %v3523, %v3302
    %v3559 = vsel %vm3335, %v3523, %v3303
    %v3560 = vsel %vm3336, %v3526, %v3304
    %v3561 = vsel %vm3337, %v3526, %v3305
    %v3562 = vsel %vm3338, %v3529, %v3306
    %v3563 = vsel %vm3339, %v3529, %v3307
    %v3564 = vsel %vm3340, %v3532, %v3308
    %v3565 = vsel %vm3341, %v3532, %v3309
    %v3566 = vsel %vm3342, %v3535, %v3310
    %v3567 = vsel %vm3343, %v3535, %v3311
    %vm3568 = vcmp.ge.f32.partialorder %v80, -9.0
    %vm3569 = vcmp.ge.f32.partialorder %v81, -9.0
    %vm3570 = vcmp.ge.f32.partialorder %v82, -9.0
    %vm3571 = vcmp.ge.f32.partialorder %v83, -9.0
    %vm3572 = vcmp.ge.f32.partialorder %v84, -9.0
    %vm3573 = vcmp.ge.f32.partialorder %v85, -9.0
    %vm3574 = vcmp.ge.f32.partialorder %v86, -9.0
    %vm3575 = vcmp.ge.f32.partialorder %v87, -9.0
    %vm3576 = vcmp.ge.f32.partialorder %v88, -9.0
    %vm3577 = vcmp.ge.f32.partialorder %v89, -9.0
    %vm3578 = vcmp.ge.f32.partialorder %v90, -9.0
    %vm3579 = vcmp.ge.f32.partialorder %v91, -9.0
    %vm3580 = vcmp.ge.f32.partialorder %v92, -9.0
    %vm3581 = vcmp.ge.f32.partialorder %v93, -9.0
    %vm3582 = vcmp.ge.f32.partialorder %v94, -9.0
    %vm3583 = vcmp.ge.f32.partialorder %v95, -9.0
    %vm3584 = vcmp.ge.f32.partialorder %v96, -9.0
    %vm3585 = vcmp.ge.f32.partialorder %v97, -9.0
    %vm3586 = vcmp.ge.f32.partialorder %v98, -9.0
    %vm3587 = vcmp.ge.f32.partialorder %v99, -9.0
    %vm3588 = vcmp.ge.f32.partialorder %v100, -9.0
    %vm3589 = vcmp.ge.f32.partialorder %v101, -9.0
    %vm3590 = vcmp.ge.f32.partialorder %v102, -9.0
    %vm3591 = vcmp.ge.f32.partialorder %v103, -9.0
    %vm3592 = vcmp.ge.f32.partialorder %v104, -9.0
    %vm3593 = vcmp.ge.f32.partialorder %v105, -9.0
    %vm3594 = vcmp.ge.f32.partialorder %v106, -9.0
    %vm3595 = vcmp.ge.f32.partialorder %v107, -9.0
    %vm3596 = vcmp.ge.f32.partialorder %v108, -9.0
    %vm3597 = vcmp.ge.f32.partialorder %v109, -9.0
    %vm3598 = vcmp.ge.f32.partialorder %v110, -9.0
    %vm3599 = vcmp.ge.f32.partialorder %v111, -9.0
    %3600 = vset.pattern.permute.xlu0 52
    %3601 = vperm.xlu0 %3600, %v72
    %v3602 = vpop.permute.xlu0 %3601
    %3603 = vset.pattern.permute.xlu0 52
    %3604 = vperm.xlu0 %3603, %v73
    %v3605 = vpop.permute.xlu0 %3604
    %3606 = vset.pattern.permute.xlu0 52
    %3607 = vperm.xlu0 %3606, %v74
    %v3608 = vpop.permute.xlu0 %3607
    %3609 = vset.pattern.permute.xlu0 52
    %3610 = vperm.xlu0 %3609, %v75
    %v3611 = vpop.permute.xlu0 %3610
    %3612 = vset.pattern.permute.xlu0 52
    %3613 = vperm.xlu0 %3612, %v76
    %v3614 = vpop.permute.xlu0 %3613
    %3615 = vset.pattern.permute.xlu0 52
    %3616 = vperm.xlu0 %3615, %v77
    %v3617 = vpop.permute.xlu0 %3616
    %3618 = vset.pattern.permute.xlu0 52
    %3619 = vperm.xlu0 %3618, %v78
    %v3620 = vpop.permute.xlu0 %3619
    %3621 = vset.pattern.permute.xlu0 52
    %3622 = vperm.xlu0 %3621, %v79
    %v3623 = vpop.permute.xlu0 %3622
    %v3624 = vsel %vm3568, %v3602, %v3368
    %v3625 = vsel %vm3569, %v3602, %v3369
    %v3626 = vsel %vm3570, %v3605, %v3370
    %v3627 = vsel %vm3571, %v3605, %v3371
    %v3628 = vsel %vm3572, %v3608, %v3372
    %v3629 = vsel %vm3573, %v3608, %v3373
    %v3630 = vsel %vm3574, %v3611, %v3374
    %v3631 = vsel %vm3575, %v3611, %v3375
    %v3632 = vsel %vm3576, %v3614, %v3376
    %v3633 = vsel %vm3577, %v3614, %v3377
    %v3634 = vsel %vm3578, %v3617, %v3378
    %v3635 = vsel %vm3579, %v3617, %v3379
    %v3636 = vsel %vm3580, %v3620, %v3380
    %v3637 = vsel %vm3581, %v3620, %v3381
    %v3638 = vsel %vm3582, %v3623, %v3382
    %v3639 = vsel %vm3583, %v3623, %v3383
    %v3640 = vsel %vm3584, %v3602, %v3384
    %v3641 = vsel %vm3585, %v3602, %v3385
    %v3642 = vsel %vm3586, %v3605, %v3386
    %v3643 = vsel %vm3587, %v3605, %v3387
    %v3644 = vsel %vm3588, %v3608, %v3388
    %v3645 = vsel %vm3589, %v3608, %v3389
    %v3646 = vsel %vm3590, %v3611, %v3390
    %v3647 = vsel %vm3591, %v3611, %v3391
    %v3648 = vsel %vm3592, %v3614, %v3392
    %v3649 = vsel %vm3593, %v3614, %v3393
    %v3650 = vsel %vm3594, %v3617, %v3394
    %v3651 = vsel %vm3595, %v3617, %v3395
    %v3652 = vsel %vm3596, %v3620, %v3396
    %v3653 = vsel %vm3597, %v3620, %v3397
    %v3654 = vsel %vm3598, %v3623, %v3398
    %v3655 = vsel %vm3599, %v3623, %v3399
    %3656 = vset.pattern.permute.xlu0 53
    %3657 = vperm.xlu0 %3656, %v72
    %v3658 = vpop.permute.xlu0 %3657
    %3659 = vset.pattern.permute.xlu0 53
    %3660 = vperm.xlu0 %3659, %v73
    %v3661 = vpop.permute.xlu0 %3660
    %3662 = vset.pattern.permute.xlu0 53
    %3663 = vperm.xlu0 %3662, %v74
    %v3664 = vpop.permute.xlu0 %3663
    %3665 = vset.pattern.permute.xlu0 53
    %3666 = vperm.xlu0 %3665, %v75
    %v3667 = vpop.permute.xlu0 %3666
    %3668 = vset.pattern.permute.xlu0 53
    %3669 = vperm.xlu0 %3668, %v76
    %v3670 = vpop.permute.xlu0 %3669
    %3671 = vset.pattern.permute.xlu0 53
    %3672 = vperm.xlu0 %3671, %v77
    %v3673 = vpop.permute.xlu0 %3672
    %3674 = vset.pattern.permute.xlu0 53
    %3675 = vperm.xlu0 %3674, %v78
    %v3676 = vpop.permute.xlu0 %3675
    %3677 = vset.pattern.permute.xlu0 53
    %3678 = vperm.xlu0 %3677, %v79
    %v3679 = vpop.permute.xlu0 %3678
    %v3680 = vsel %vm3568, %v3658, %v3424
    %v3681 = vsel %vm3569, %v3658, %v3425
    %v3682 = vsel %vm3570, %v3661, %v3426
    %v3683 = vsel %vm3571, %v3661, %v3427
    %v3684 = vsel %vm3572, %v3664, %v3428
    %v3685 = vsel %vm3573, %v3664, %v3429
    %v3686 = vsel %vm3574, %v3667, %v3430
    %v3687 = vsel %vm3575, %v3667, %v3431
    %v3688 = vsel %vm3576, %v3670, %v3432
    %v3689 = vsel %vm3577, %v3670, %v3433
    %v3690 = vsel %vm3578, %v3673, %v3434
    %v3691 = vsel %vm3579, %v3673, %v3435
    %v3692 = vsel %vm3580, %v3676, %v3436
    %v3693 = vsel %vm3581, %v3676, %v3437
    %v3694 = vsel %vm3582, %v3679, %v3438
    %v3695 = vsel %vm3583, %v3679, %v3439
    %v3696 = vsel %vm3584, %v3658, %v3440
    %v3697 = vsel %vm3585, %v3658, %v3441
    %v3698 = vsel %vm3586, %v3661, %v3442
    %v3699 = vsel %vm3587, %v3661, %v3443
    %v3700 = vsel %vm3588, %v3664, %v3444
    %v3701 = vsel %vm3589, %v3664, %v3445
    %v3702 = vsel %vm3590, %v3667, %v3446
    %v3703 = vsel %vm3591, %v3667, %v3447
    %v3704 = vsel %vm3592, %v3670, %v3448
    %v3705 = vsel %vm3593, %v3670, %v3449
    %v3706 = vsel %vm3594, %v3673, %v3450
    %v3707 = vsel %vm3595, %v3673, %v3451
    %v3708 = vsel %vm3596, %v3676, %v3452
    %v3709 = vsel %vm3597, %v3676, %v3453
    %v3710 = vsel %vm3598, %v3679, %v3454
    %v3711 = vsel %vm3599, %v3679, %v3455
    %3712 = vset.pattern.permute.xlu0 54
    %3713 = vperm.xlu0 %3712, %v72
    %v3714 = vpop.permute.xlu0 %3713
    %3715 = vset.pattern.permute.xlu0 54
    %3716 = vperm.xlu0 %3715, %v73
    %v3717 = vpop.permute.xlu0 %3716
    %3718 = vset.pattern.permute.xlu0 54
    %3719 = vperm.xlu0 %3718, %v74
    %v3720 = vpop.permute.xlu0 %3719
    %3721 = vset.pattern.permute.xlu0 54
    %3722 = vperm.xlu0 %3721, %v75
    %v3723 = vpop.permute.xlu0 %3722
    %3724 = vset.pattern.permute.xlu0 54
    %3725 = vperm.xlu0 %3724, %v76
    %v3726 = vpop.permute.xlu0 %3725
    %3727 = vset.pattern.permute.xlu0 54
    %3728 = vperm.xlu0 %3727, %v77
    %v3729 = vpop.permute.xlu0 %3728
    %3730 = vset.pattern.permute.xlu0 54
    %3731 = vperm.xlu0 %3730, %v78
    %v3732 = vpop.permute.xlu0 %3731
    %3733 = vset.pattern.permute.xlu0 54
    %3734 = vperm.xlu0 %3733, %v79
    %v3735 = vpop.permute.xlu0 %3734
    %v3736 = vsel %vm3568, %v3714, %v3480
    %v3737 = vsel %vm3569, %v3714, %v3481
    %v3738 = vsel %vm3570, %v3717, %v3482
    %v3739 = vsel %vm3571, %v3717, %v3483
    %v3740 = vsel %vm3572, %v3720, %v3484
    %v3741 = vsel %vm3573, %v3720, %v3485
    %v3742 = vsel %vm3574, %v3723, %v3486
    %v3743 = vsel %vm3575, %v3723, %v3487
    %v3744 = vsel %vm3576, %v3726, %v3488
    %v3745 = vsel %vm3577, %v3726, %v3489
    %v3746 = vsel %vm3578, %v3729, %v3490
    %v3747 = vsel %vm3579, %v3729, %v3491
    %v3748 = vsel %vm3580, %v3732, %v3492
    %v3749 = vsel %vm3581, %v3732, %v3493
    %v3750 = vsel %vm3582, %v3735, %v3494
    %v3751 = vsel %vm3583, %v3735, %v3495
    %v3752 = vsel %vm3584, %v3714, %v3496
    %v3753 = vsel %vm3585, %v3714, %v3497
    %v3754 = vsel %vm3586, %v3717, %v3498
    %v3755 = vsel %vm3587, %v3717, %v3499
    %v3756 = vsel %vm3588, %v3720, %v3500
    %v3757 = vsel %vm3589, %v3720, %v3501
    %v3758 = vsel %vm3590, %v3723, %v3502
    %v3759 = vsel %vm3591, %v3723, %v3503
    %v3760 = vsel %vm3592, %v3726, %v3504
    %v3761 = vsel %vm3593, %v3726, %v3505
    %v3762 = vsel %vm3594, %v3729, %v3506
    %v3763 = vsel %vm3595, %v3729, %v3507
    %v3764 = vsel %vm3596, %v3732, %v3508
    %v3765 = vsel %vm3597, %v3732, %v3509
    %v3766 = vsel %vm3598, %v3735, %v3510
    %v3767 = vsel %vm3599, %v3735, %v3511
    %3768 = vset.pattern.permute.xlu0 55
    %3769 = vperm.xlu0 %3768, %v72
    %v3770 = vpop.permute.xlu0 %3769
    %3771 = vset.pattern.permute.xlu0 55
    %3772 = vperm.xlu0 %3771, %v73
    %v3773 = vpop.permute.xlu0 %3772
    %3774 = vset.pattern.permute.xlu0 55
    %3775 = vperm.xlu0 %3774, %v74
    %v3776 = vpop.permute.xlu0 %3775
    %3777 = vset.pattern.permute.xlu0 55
    %3778 = vperm.xlu0 %3777, %v75
    %v3779 = vpop.permute.xlu0 %3778
    %3780 = vset.pattern.permute.xlu0 55
    %3781 = vperm.xlu0 %3780, %v76
    %v3782 = vpop.permute.xlu0 %3781
    %3783 = vset.pattern.permute.xlu0 55
    %3784 = vperm.xlu0 %3783, %v77
    %v3785 = vpop.permute.xlu0 %3784
    %3786 = vset.pattern.permute.xlu0 55
    %3787 = vperm.xlu0 %3786, %v78
    %v3788 = vpop.permute.xlu0 %3787
    %3789 = vset.pattern.permute.xlu0 55
    %3790 = vperm.xlu0 %3789, %v79
    %v3791 = vpop.permute.xlu0 %3790
    %v3792 = vsel %vm3568, %v3770, %v3536
    %v3793 = vsel %vm3569, %v3770, %v3537
    %v3794 = vsel %vm3570, %v3773, %v3538
    %v3795 = vsel %vm3571, %v3773, %v3539
    %v3796 = vsel %vm3572, %v3776, %v3540
    %v3797 = vsel %vm3573, %v3776, %v3541
    %v3798 = vsel %vm3574, %v3779, %v3542
    %v3799 = vsel %vm3575, %v3779, %v3543
    %v3800 = vsel %vm3576, %v3782, %v3544
    %v3801 = vsel %vm3577, %v3782, %v3545
    %v3802 = vsel %vm3578, %v3785, %v3546
    %v3803 = vsel %vm3579, %v3785, %v3547
    %v3804 = vsel %vm3580, %v3788, %v3548
    %v3805 = vsel %vm3581, %v3788, %v3549
    %v3806 = vsel %vm3582, %v3791, %v3550
    %v3807 = vsel %vm3583, %v3791, %v3551
    %v3808 = vsel %vm3584, %v3770, %v3552
    %v3809 = vsel %vm3585, %v3770, %v3553
    %v3810 = vsel %vm3586, %v3773, %v3554
    %v3811 = vsel %vm3587, %v3773, %v3555
    %v3812 = vsel %vm3588, %v3776, %v3556
    %v3813 = vsel %vm3589, %v3776, %v3557
    %v3814 = vsel %vm3590, %v3779, %v3558
    %v3815 = vsel %vm3591, %v3779, %v3559
    %v3816 = vsel %vm3592, %v3782, %v3560
    %v3817 = vsel %vm3593, %v3782, %v3561
    %v3818 = vsel %vm3594, %v3785, %v3562
    %v3819 = vsel %vm3595, %v3785, %v3563
    %v3820 = vsel %vm3596, %v3788, %v3564
    %v3821 = vsel %vm3597, %v3788, %v3565
    %v3822 = vsel %vm3598, %v3791, %v3566
    %v3823 = vsel %vm3599, %v3791, %v3567
    %vm3824 = vcmp.ge.f32.partialorder %v80, -5.0
    %vm3825 = vcmp.ge.f32.partialorder %v81, -5.0
    %vm3826 = vcmp.ge.f32.partialorder %v82, -5.0
    %vm3827 = vcmp.ge.f32.partialorder %v83, -5.0
    %vm3828 = vcmp.ge.f32.partialorder %v84, -5.0
    %vm3829 = vcmp.ge.f32.partialorder %v85, -5.0
    %vm3830 = vcmp.ge.f32.partialorder %v86, -5.0
    %vm3831 = vcmp.ge.f32.partialorder %v87, -5.0
    %vm3832 = vcmp.ge.f32.partialorder %v88, -5.0
    %vm3833 = vcmp.ge.f32.partialorder %v89, -5.0
    %vm3834 = vcmp.ge.f32.partialorder %v90, -5.0
    %vm3835 = vcmp.ge.f32.partialorder %v91, -5.0
    %vm3836 = vcmp.ge.f32.partialorder %v92, -5.0
    %vm3837 = vcmp.ge.f32.partialorder %v93, -5.0
    %vm3838 = vcmp.ge.f32.partialorder %v94, -5.0
    %vm3839 = vcmp.ge.f32.partialorder %v95, -5.0
    %vm3840 = vcmp.ge.f32.partialorder %v96, -5.0
    %vm3841 = vcmp.ge.f32.partialorder %v97, -5.0
    %vm3842 = vcmp.ge.f32.partialorder %v98, -5.0
    %vm3843 = vcmp.ge.f32.partialorder %v99, -5.0
    %vm3844 = vcmp.ge.f32.partialorder %v100, -5.0
    %vm3845 = vcmp.ge.f32.partialorder %v101, -5.0
    %vm3846 = vcmp.ge.f32.partialorder %v102, -5.0
    %vm3847 = vcmp.ge.f32.partialorder %v103, -5.0
    %vm3848 = vcmp.ge.f32.partialorder %v104, -5.0
    %vm3849 = vcmp.ge.f32.partialorder %v105, -5.0
    %vm3850 = vcmp.ge.f32.partialorder %v106, -5.0
    %vm3851 = vcmp.ge.f32.partialorder %v107, -5.0
    %vm3852 = vcmp.ge.f32.partialorder %v108, -5.0
    %vm3853 = vcmp.ge.f32.partialorder %v109, -5.0
    %vm3854 = vcmp.ge.f32.partialorder %v110, -5.0
    %vm3855 = vcmp.ge.f32.partialorder %v111, -5.0
    %3856 = vset.pattern.permute.xlu0 56
    %3857 = vperm.xlu0 %3856, %v72
    %v3858 = vpop.permute.xlu0 %3857
    %3859 = vset.pattern.permute.xlu0 56
    %3860 = vperm.xlu0 %3859, %v73
    %v3861 = vpop.permute.xlu0 %3860
    %3862 = vset.pattern.permute.xlu0 56
    %3863 = vperm.xlu0 %3862, %v74
    %v3864 = vpop.permute.xlu0 %3863
    %3865 = vset.pattern.permute.xlu0 56
    %3866 = vperm.xlu0 %3865, %v75
    %v3867 = vpop.permute.xlu0 %3866
    %3868 = vset.pattern.permute.xlu0 56
    %3869 = vperm.xlu0 %3868, %v76
    %v3870 = vpop.permute.xlu0 %3869
    %3871 = vset.pattern.permute.xlu0 56
    %3872 = vperm.xlu0 %3871, %v77
    %v3873 = vpop.permute.xlu0 %3872
    %3874 = vset.pattern.permute.xlu0 56
    %3875 = vperm.xlu0 %3874, %v78
    %v3876 = vpop.permute.xlu0 %3875
    %3877 = vset.pattern.permute.xlu0 56
    %3878 = vperm.xlu0 %3877, %v79
    %v3879 = vpop.permute.xlu0 %3878
    %v3880 = vsel %vm3824, %v3858, %v3624
    %v3881 = vsel %vm3825, %v3858, %v3625
    %v3882 = vsel %vm3826, %v3861, %v3626
    %v3883 = vsel %vm3827, %v3861, %v3627
    %v3884 = vsel %vm3828, %v3864, %v3628
    %v3885 = vsel %vm3829, %v3864, %v3629
    %v3886 = vsel %vm3830, %v3867, %v3630
    %v3887 = vsel %vm3831, %v3867, %v3631
    %v3888 = vsel %vm3832, %v3870, %v3632
    %v3889 = vsel %vm3833, %v3870, %v3633
    %v3890 = vsel %vm3834, %v3873, %v3634
    %v3891 = vsel %vm3835, %v3873, %v3635
    %v3892 = vsel %vm3836, %v3876, %v3636
    %v3893 = vsel %vm3837, %v3876, %v3637
    %v3894 = vsel %vm3838, %v3879, %v3638
    %v3895 = vsel %vm3839, %v3879, %v3639
    %v3896 = vsel %vm3840, %v3858, %v3640
    %v3897 = vsel %vm3841, %v3858, %v3641
    %v3898 = vsel %vm3842, %v3861, %v3642
    %v3899 = vsel %vm3843, %v3861, %v3643
    %v3900 = vsel %vm3844, %v3864, %v3644
    %v3901 = vsel %vm3845, %v3864, %v3645
    %v3902 = vsel %vm3846, %v3867, %v3646
    %v3903 = vsel %vm3847, %v3867, %v3647
    %v3904 = vsel %vm3848, %v3870, %v3648
    %v3905 = vsel %vm3849, %v3870, %v3649
    %v3906 = vsel %vm3850, %v3873, %v3650
    %v3907 = vsel %vm3851, %v3873, %v3651
    %v3908 = vsel %vm3852, %v3876, %v3652
    %v3909 = vsel %vm3853, %v3876, %v3653
    %v3910 = vsel %vm3854, %v3879, %v3654
    %v3911 = vsel %vm3855, %v3879, %v3655
    %3912 = vset.pattern.permute.xlu0 57
    %3913 = vperm.xlu0 %3912, %v72
    %v3914 = vpop.permute.xlu0 %3913
    %3915 = vset.pattern.permute.xlu0 57
    %3916 = vperm.xlu0 %3915, %v73
    %v3917 = vpop.permute.xlu0 %3916
    %3918 = vset.pattern.permute.xlu0 57
    %3919 = vperm.xlu0 %3918, %v74
    %v3920 = vpop.permute.xlu0 %3919
    %3921 = vset.pattern.permute.xlu0 57
    %3922 = vperm.xlu0 %3921, %v75
    %v3923 = vpop.permute.xlu0 %3922
    %3924 = vset.pattern.permute.xlu0 57
    %3925 = vperm.xlu0 %3924, %v76
    %v3926 = vpop.permute.xlu0 %3925
    %3927 = vset.pattern.permute.xlu0 57
    %3928 = vperm.xlu0 %3927, %v77
    %v3929 = vpop.permute.xlu0 %3928
    %3930 = vset.pattern.permute.xlu0 57
    %3931 = vperm.xlu0 %3930, %v78
    %v3932 = vpop.permute.xlu0 %3931
    %3933 = vset.pattern.permute.xlu0 57
    %3934 = vperm.xlu0 %3933, %v79
    %v3935 = vpop.permute.xlu0 %3934
    %v3936 = vsel %vm3824, %v3914, %v3680
    %v3937 = vsel %vm3825, %v3914, %v3681
    %v3938 = vsel %vm3826, %v3917, %v3682
    %v3939 = vsel %vm3827, %v3917, %v3683
    %v3940 = vsel %vm3828, %v3920, %v3684
    %v3941 = vsel %vm3829, %v3920, %v3685
    %v3942 = vsel %vm3830, %v3923, %v3686
    %v3943 = vsel %vm3831, %v3923, %v3687
    %v3944 = vsel %vm3832, %v3926, %v3688
    %v3945 = vsel %vm3833, %v3926, %v3689
    %v3946 = vsel %vm3834, %v3929, %v3690
    %v3947 = vsel %vm3835, %v3929, %v3691
    %v3948 = vsel %vm3836, %v3932, %v3692
    %v3949 = vsel %vm3837, %v3932, %v3693
    %v3950 = vsel %vm3838, %v3935, %v3694
    %v3951 = vsel %vm3839, %v3935, %v3695
    %v3952 = vsel %vm3840, %v3914, %v3696
    %v3953 = vsel %vm3841, %v3914, %v3697
    %v3954 = vsel %vm3842, %v3917, %v3698
    %v3955 = vsel %vm3843, %v3917, %v3699
    %v3956 = vsel %vm3844, %v3920, %v3700
    %v3957 = vsel %vm3845, %v3920, %v3701
    %v3958 = vsel %vm3846, %v3923, %v3702
    %v3959 = vsel %vm3847, %v3923, %v3703
    %v3960 = vsel %vm3848, %v3926, %v3704
    %v3961 = vsel %vm3849, %v3926, %v3705
    %v3962 = vsel %vm3850, %v3929, %v3706
    %v3963 = vsel %vm3851, %v3929, %v3707
    %v3964 = vsel %vm3852, %v3932, %v3708
    %v3965 = vsel %vm3853, %v3932, %v3709
    %v3966 = vsel %vm3854, %v3935, %v3710
    %v3967 = vsel %vm3855, %v3935, %v3711
    %3968 = vset.pattern.permute.xlu0 58
    %3969 = vperm.xlu0 %3968, %v72
    %v3970 = vpop.permute.xlu0 %3969
    %3971 = vset.pattern.permute.xlu0 58
    %3972 = vperm.xlu0 %3971, %v73
    %v3973 = vpop.permute.xlu0 %3972
    %3974 = vset.pattern.permute.xlu0 58
    %3975 = vperm.xlu0 %3974, %v74
    %v3976 = vpop.permute.xlu0 %3975
    %3977 = vset.pattern.permute.xlu0 58
    %3978 = vperm.xlu0 %3977, %v75
    %v3979 = vpop.permute.xlu0 %3978
    %3980 = vset.pattern.permute.xlu0 58
    %3981 = vperm.xlu0 %3980, %v76
    %v3982 = vpop.permute.xlu0 %3981
    %3983 = vset.pattern.permute.xlu0 58
    %3984 = vperm.xlu0 %3983, %v77
    %v3985 = vpop.permute.xlu0 %3984
    %3986 = vset.pattern.permute.xlu0 58
    %3987 = vperm.xlu0 %3986, %v78
    %v3988 = vpop.permute.xlu0 %3987
    %3989 = vset.pattern.permute.xlu0 58
    %3990 = vperm.xlu0 %3989, %v79
    %v3991 = vpop.permute.xlu0 %3990
    %v3992 = vsel %vm3824, %v3970, %v3736
    %v3993 = vsel %vm3825, %v3970, %v3737
    %v3994 = vsel %vm3826, %v3973, %v3738
    %v3995 = vsel %vm3827, %v3973, %v3739
    %v3996 = vsel %vm3828, %v3976, %v3740
    %v3997 = vsel %vm3829, %v3976, %v3741
    %v3998 = vsel %vm3830, %v3979, %v3742
    %v3999 = vsel %vm3831, %v3979, %v3743
    %v4000 = vsel %vm3832, %v3982, %v3744
    %v4001 = vsel %vm3833, %v3982, %v3745
    %v4002 = vsel %vm3834, %v3985, %v3746
    %v4003 = vsel %vm3835, %v3985, %v3747
    %v4004 = vsel %vm3836, %v3988, %v3748
    %v4005 = vsel %vm3837, %v3988, %v3749
    %v4006 = vsel %vm3838, %v3991, %v3750
    %v4007 = vsel %vm3839, %v3991, %v3751
    %v4008 = vsel %vm3840, %v3970, %v3752
    %v4009 = vsel %vm3841, %v3970, %v3753
    %v4010 = vsel %vm3842, %v3973, %v3754
    %v4011 = vsel %vm3843, %v3973, %v3755
    %v4012 = vsel %vm3844, %v3976, %v3756
    %v4013 = vsel %vm3845, %v3976, %v3757
    %v4014 = vsel %vm3846, %v3979, %v3758
    %v4015 = vsel %vm3847, %v3979, %v3759
    %v4016 = vsel %vm3848, %v3982, %v3760
    %v4017 = vsel %vm3849, %v3982, %v3761
    %v4018 = vsel %vm3850, %v3985, %v3762
    %v4019 = vsel %vm3851, %v3985, %v3763
    %v4020 = vsel %vm3852, %v3988, %v3764
    %v4021 = vsel %vm3853, %v3988, %v3765
    %v4022 = vsel %vm3854, %v3991, %v3766
    %v4023 = vsel %vm3855, %v3991, %v3767
    %4024 = vset.pattern.permute.xlu0 59
    %4025 = vperm.xlu0 %4024, %v72
    %v4026 = vpop.permute.xlu0 %4025
    %4027 = vset.pattern.permute.xlu0 59
    %4028 = vperm.xlu0 %4027, %v73
    %v4029 = vpop.permute.xlu0 %4028
    %4030 = vset.pattern.permute.xlu0 59
    %4031 = vperm.xlu0 %4030, %v74
    %v4032 = vpop.permute.xlu0 %4031
    %4033 = vset.pattern.permute.xlu0 59
    %4034 = vperm.xlu0 %4033, %v75
    %v4035 = vpop.permute.xlu0 %4034
    %4036 = vset.pattern.permute.xlu0 59
    %4037 = vperm.xlu0 %4036, %v76
    %v4038 = vpop.permute.xlu0 %4037
    %4039 = vset.pattern.permute.xlu0 59
    %4040 = vperm.xlu0 %4039, %v77
    %v4041 = vpop.permute.xlu0 %4040
    %4042 = vset.pattern.permute.xlu0 59
    %4043 = vperm.xlu0 %4042, %v78
    %v4044 = vpop.permute.xlu0 %4043
    %4045 = vset.pattern.permute.xlu0 59
    %4046 = vperm.xlu0 %4045, %v79
    %v4047 = vpop.permute.xlu0 %4046
    %v4048 = vsel %vm3824, %v4026, %v3792
    %v4049 = vsel %vm3825, %v4026, %v3793
    %v4050 = vsel %vm3826, %v4029, %v3794
    %v4051 = vsel %vm3827, %v4029, %v3795
    %v4052 = vsel %vm3828, %v4032, %v3796
    %v4053 = vsel %vm3829, %v4032, %v3797
    %v4054 = vsel %vm3830, %v4035, %v3798
    %v4055 = vsel %vm3831, %v4035, %v3799
    %v4056 = vsel %vm3832, %v4038, %v3800
    %v4057 = vsel %vm3833, %v4038, %v3801
    %v4058 = vsel %vm3834, %v4041, %v3802
    %v4059 = vsel %vm3835, %v4041, %v3803
    %v4060 = vsel %vm3836, %v4044, %v3804
    %v4061 = vsel %vm3837, %v4044, %v3805
    %v4062 = vsel %vm3838, %v4047, %v3806
    %v4063 = vsel %vm3839, %v4047, %v3807
    %v4064 = vsel %vm3840, %v4026, %v3808
    %v4065 = vsel %vm3841, %v4026, %v3809
    %v4066 = vsel %vm3842, %v4029, %v3810
    %v4067 = vsel %vm3843, %v4029, %v3811
    %v4068 = vsel %vm3844, %v4032, %v3812
    %v4069 = vsel %vm3845, %v4032, %v3813
    %v4070 = vsel %vm3846, %v4035, %v3814
    %v4071 = vsel %vm3847, %v4035, %v3815
    %v4072 = vsel %vm3848, %v4038, %v3816
    %v4073 = vsel %vm3849, %v4038, %v3817
    %v4074 = vsel %vm3850, %v4041, %v3818
    %v4075 = vsel %vm3851, %v4041, %v3819
    %v4076 = vsel %vm3852, %v4044, %v3820
    %v4077 = vsel %vm3853, %v4044, %v3821
    %v4078 = vsel %vm3854, %v4047, %v3822
    %v4079 = vsel %vm3855, %v4047, %v3823
    %vm4080 = vcmp.ge.f32.partialorder %v80, -1.0
    %vm4081 = vcmp.ge.f32.partialorder %v81, -1.0
    %vm4082 = vcmp.ge.f32.partialorder %v82, -1.0
    %vm4083 = vcmp.ge.f32.partialorder %v83, -1.0
    %vm4084 = vcmp.ge.f32.partialorder %v84, -1.0
    %vm4085 = vcmp.ge.f32.partialorder %v85, -1.0
    %vm4086 = vcmp.ge.f32.partialorder %v86, -1.0
    %vm4087 = vcmp.ge.f32.partialorder %v87, -1.0
    %vm4088 = vcmp.ge.f32.partialorder %v88, -1.0
    %vm4089 = vcmp.ge.f32.partialorder %v89, -1.0
    %vm4090 = vcmp.ge.f32.partialorder %v90, -1.0
    %vm4091 = vcmp.ge.f32.partialorder %v91, -1.0
    %vm4092 = vcmp.ge.f32.partialorder %v92, -1.0
    %vm4093 = vcmp.ge.f32.partialorder %v93, -1.0
    %vm4094 = vcmp.ge.f32.partialorder %v94, -1.0
    %vm4095 = vcmp.ge.f32.partialorder %v95, -1.0
    %vm4096 = vcmp.ge.f32.partialorder %v96, -1.0
    %vm4097 = vcmp.ge.f32.partialorder %v97, -1.0
    %vm4098 = vcmp.ge.f32.partialorder %v98, -1.0
    %vm4099 = vcmp.ge.f32.partialorder %v99, -1.0
    %vm4100 = vcmp.ge.f32.partialorder %v100, -1.0
    %vm4101 = vcmp.ge.f32.partialorder %v101, -1.0
    %vm4102 = vcmp.ge.f32.partialorder %v102, -1.0
    %vm4103 = vcmp.ge.f32.partialorder %v103, -1.0
    %vm4104 = vcmp.ge.f32.partialorder %v104, -1.0
    %vm4105 = vcmp.ge.f32.partialorder %v105, -1.0
    %vm4106 = vcmp.ge.f32.partialorder %v106, -1.0
    %vm4107 = vcmp.ge.f32.partialorder %v107, -1.0
    %vm4108 = vcmp.ge.f32.partialorder %v108, -1.0
    %vm4109 = vcmp.ge.f32.partialorder %v109, -1.0
    %vm4110 = vcmp.ge.f32.partialorder %v110, -1.0
    %vm4111 = vcmp.ge.f32.partialorder %v111, -1.0
    %4112 = vset.pattern.permute.xlu0 60
    %4113 = vperm.xlu0 %4112, %v72
    %v4114 = vpop.permute.xlu0 %4113
    %4115 = vset.pattern.permute.xlu0 60
    %4116 = vperm.xlu0 %4115, %v73
    %v4117 = vpop.permute.xlu0 %4116
    %4118 = vset.pattern.permute.xlu0 60
    %4119 = vperm.xlu0 %4118, %v74
    %v4120 = vpop.permute.xlu0 %4119
    %4121 = vset.pattern.permute.xlu0 60
    %4122 = vperm.xlu0 %4121, %v75
    %v4123 = vpop.permute.xlu0 %4122
    %4124 = vset.pattern.permute.xlu0 60
    %4125 = vperm.xlu0 %4124, %v76
    %v4126 = vpop.permute.xlu0 %4125
    %4127 = vset.pattern.permute.xlu0 60
    %4128 = vperm.xlu0 %4127, %v77
    %v4129 = vpop.permute.xlu0 %4128
    %4130 = vset.pattern.permute.xlu0 60
    %4131 = vperm.xlu0 %4130, %v78
    %v4132 = vpop.permute.xlu0 %4131
    %4133 = vset.pattern.permute.xlu0 60
    %4134 = vperm.xlu0 %4133, %v79
    %v4135 = vpop.permute.xlu0 %4134
    %v4136 = vsel %vm4080, %v4114, %v3880
    %v4137 = vsel %vm4081, %v4114, %v3881
    %v4138 = vsel %vm4082, %v4117, %v3882
    %v4139 = vsel %vm4083, %v4117, %v3883
    %v4140 = vsel %vm4084, %v4120, %v3884
    %v4141 = vsel %vm4085, %v4120, %v3885
    %v4142 = vsel %vm4086, %v4123, %v3886
    %v4143 = vsel %vm4087, %v4123, %v3887
    %v4144 = vsel %vm4088, %v4126, %v3888
    %v4145 = vsel %vm4089, %v4126, %v3889
    %v4146 = vsel %vm4090, %v4129, %v3890
    %v4147 = vsel %vm4091, %v4129, %v3891
    %v4148 = vsel %vm4092, %v4132, %v3892
    %v4149 = vsel %vm4093, %v4132, %v3893
    %v4150 = vsel %vm4094, %v4135, %v3894
    %v4151 = vsel %vm4095, %v4135, %v3895
    %v4152 = vsel %vm4096, %v4114, %v3896
    %v4153 = vsel %vm4097, %v4114, %v3897
    %v4154 = vsel %vm4098, %v4117, %v3898
    %v4155 = vsel %vm4099, %v4117, %v3899
    %v4156 = vsel %vm4100, %v4120, %v3900
    %v4157 = vsel %vm4101, %v4120, %v3901
    %v4158 = vsel %vm4102, %v4123, %v3902
    %v4159 = vsel %vm4103, %v4123, %v3903
    %v4160 = vsel %vm4104, %v4126, %v3904
    %v4161 = vsel %vm4105, %v4126, %v3905
    %v4162 = vsel %vm4106, %v4129, %v3906
    %v4163 = vsel %vm4107, %v4129, %v3907
    %v4164 = vsel %vm4108, %v4132, %v3908
    %v4165 = vsel %vm4109, %v4132, %v3909
    %v4166 = vsel %vm4110, %v4135, %v3910
    %v4167 = vsel %vm4111, %v4135, %v3911
    %4168 = vset.pattern.permute.xlu0 61
    %4169 = vperm.xlu0 %4168, %v72
    %v4170 = vpop.permute.xlu0 %4169
    %4171 = vset.pattern.permute.xlu0 61
    %4172 = vperm.xlu0 %4171, %v73
    %v4173 = vpop.permute.xlu0 %4172
    %4174 = vset.pattern.permute.xlu0 61
    %4175 = vperm.xlu0 %4174, %v74
    %v4176 = vpop.permute.xlu0 %4175
    %4177 = vset.pattern.permute.xlu0 61
    %4178 = vperm.xlu0 %4177, %v75
    %v4179 = vpop.permute.xlu0 %4178
    %4180 = vset.pattern.permute.xlu0 61
    %4181 = vperm.xlu0 %4180, %v76
    %v4182 = vpop.permute.xlu0 %4181
    %4183 = vset.pattern.permute.xlu0 61
    %4184 = vperm.xlu0 %4183, %v77
    %v4185 = vpop.permute.xlu0 %4184
    %4186 = vset.pattern.permute.xlu0 61
    %4187 = vperm.xlu0 %4186, %v78
    %v4188 = vpop.permute.xlu0 %4187
    %4189 = vset.pattern.permute.xlu0 61
    %4190 = vperm.xlu0 %4189, %v79
    %v4191 = vpop.permute.xlu0 %4190
    %v4192 = vsel %vm4080, %v4170, %v3936
    %v4193 = vsel %vm4081, %v4170, %v3937
    %v4194 = vsel %vm4082, %v4173, %v3938
    %v4195 = vsel %vm4083, %v4173, %v3939
    %v4196 = vsel %vm4084, %v4176, %v3940
    %v4197 = vsel %vm4085, %v4176, %v3941
    %v4198 = vsel %vm4086, %v4179, %v3942
    %v4199 = vsel %vm4087, %v4179, %v3943
    %v4200 = vsel %vm4088, %v4182, %v3944
    %v4201 = vsel %vm4089, %v4182, %v3945
    %v4202 = vsel %vm4090, %v4185, %v3946
    %v4203 = vsel %vm4091, %v4185, %v3947
    %v4204 = vsel %vm4092, %v4188, %v3948
    %v4205 = vsel %vm4093, %v4188, %v3949
    %v4206 = vsel %vm4094, %v4191, %v3950
    %v4207 = vsel %vm4095, %v4191, %v3951
    %v4208 = vsel %vm4096, %v4170, %v3952
    %v4209 = vsel %vm4097, %v4170, %v3953
    %v4210 = vsel %vm4098, %v4173, %v3954
    %v4211 = vsel %vm4099, %v4173, %v3955
    %v4212 = vsel %vm4100, %v4176, %v3956
    %v4213 = vsel %vm4101, %v4176, %v3957
    %v4214 = vsel %vm4102, %v4179, %v3958
    %v4215 = vsel %vm4103, %v4179, %v3959
    %v4216 = vsel %vm4104, %v4182, %v3960
    %v4217 = vsel %vm4105, %v4182, %v3961
    %v4218 = vsel %vm4106, %v4185, %v3962
    %v4219 = vsel %vm4107, %v4185, %v3963
    %v4220 = vsel %vm4108, %v4188, %v3964
    %v4221 = vsel %vm4109, %v4188, %v3965
    %v4222 = vsel %vm4110, %v4191, %v3966
    %v4223 = vsel %vm4111, %v4191, %v3967
    %4224 = vset.pattern.permute.xlu0 62
    %4225 = vperm.xlu0 %4224, %v72
    %v4226 = vpop.permute.xlu0 %4225
    %4227 = vset.pattern.permute.xlu0 62
    %4228 = vperm.xlu0 %4227, %v73
    %v4229 = vpop.permute.xlu0 %4228
    %4230 = vset.pattern.permute.xlu0 62
    %4231 = vperm.xlu0 %4230, %v74
    %v4232 = vpop.permute.xlu0 %4231
    %4233 = vset.pattern.permute.xlu0 62
    %4234 = vperm.xlu0 %4233, %v75
    %v4235 = vpop.permute.xlu0 %4234
    %4236 = vset.pattern.permute.xlu0 62
    %4237 = vperm.xlu0 %4236, %v76
    %v4238 = vpop.permute.xlu0 %4237
    %4239 = vset.pattern.permute.xlu0 62
    %4240 = vperm.xlu0 %4239, %v77
    %v4241 = vpop.permute.xlu0 %4240
    %4242 = vset.pattern.permute.xlu0 62
    %4243 = vperm.xlu0 %4242, %v78
    %v4244 = vpop.permute.xlu0 %4243
    %4245 = vset.pattern.permute.xlu0 62
    %4246 = vperm.xlu0 %4245, %v79
    %v4247 = vpop.permute.xlu0 %4246
    %v4248 = vsel %vm4080, %v4226, %v3992
    %v4249 = vsel %vm4081, %v4226, %v3993
    %v4250 = vsel %vm4082, %v4229, %v3994
    %v4251 = vsel %vm4083, %v4229, %v3995
    %v4252 = vsel %vm4084, %v4232, %v3996
    %v4253 = vsel %vm4085, %v4232, %v3997
    %v4254 = vsel %vm4086, %v4235, %v3998
    %v4255 = vsel %vm4087, %v4235, %v3999
    %v4256 = vsel %vm4088, %v4238, %v4000
    %v4257 = vsel %vm4089, %v4238, %v4001
    %v4258 = vsel %vm4090, %v4241, %v4002
    %v4259 = vsel %vm4091, %v4241, %v4003
    %v4260 = vsel %vm4092, %v4244, %v4004
    %v4261 = vsel %vm4093, %v4244, %v4005
    %v4262 = vsel %vm4094, %v4247, %v4006
    %v4263 = vsel %vm4095, %v4247, %v4007
    %v4264 = vsel %vm4096, %v4226, %v4008
    %v4265 = vsel %vm4097, %v4226, %v4009
    %v4266 = vsel %vm4098, %v4229, %v4010
    %v4267 = vsel %vm4099, %v4229, %v4011
    %v4268 = vsel %vm4100, %v4232, %v4012
    %v4269 = vsel %vm4101, %v4232, %v4013
    %v4270 = vsel %vm4102, %v4235, %v4014
    %v4271 = vsel %vm4103, %v4235, %v4015
    %v4272 = vsel %vm4104, %v4238, %v4016
    %v4273 = vsel %vm4105, %v4238, %v4017
    %v4274 = vsel %vm4106, %v4241, %v4018
    %v4275 = vsel %vm4107, %v4241, %v4019
    %v4276 = vsel %vm4108, %v4244, %v4020
    %v4277 = vsel %vm4109, %v4244, %v4021
    %v4278 = vsel %vm4110, %v4247, %v4022
    %v4279 = vsel %vm4111, %v4247, %v4023
    %4280 = vset.pattern.permute.xlu0 63
    %4281 = vperm.xlu0 %4280, %v72
    %v4282 = vpop.permute.xlu0 %4281
    %4283 = vset.pattern.permute.xlu0 63
    %4284 = vperm.xlu0 %4283, %v73
    %v4285 = vpop.permute.xlu0 %4284
    %4286 = vset.pattern.permute.xlu0 63
    %4287 = vperm.xlu0 %4286, %v74
    %v4288 = vpop.permute.xlu0 %4287
    %4289 = vset.pattern.permute.xlu0 63
    %4290 = vperm.xlu0 %4289, %v75
    %v4291 = vpop.permute.xlu0 %4290
    %4292 = vset.pattern.permute.xlu0 63
    %4293 = vperm.xlu0 %4292, %v76
    %v4294 = vpop.permute.xlu0 %4293
    %4295 = vset.pattern.permute.xlu0 63
    %4296 = vperm.xlu0 %4295, %v77
    %v4297 = vpop.permute.xlu0 %4296
    %4298 = vset.pattern.permute.xlu0 63
    %4299 = vperm.xlu0 %4298, %v78
    %v4300 = vpop.permute.xlu0 %4299
    %4301 = vset.pattern.permute.xlu0 63
    %4302 = vperm.xlu0 %4301, %v79
    %v4303 = vpop.permute.xlu0 %4302
    %v4304 = vsel %vm4080, %v4282, %v4048
    %v4305 = vsel %vm4081, %v4282, %v4049
    %v4306 = vsel %vm4082, %v4285, %v4050
    %v4307 = vsel %vm4083, %v4285, %v4051
    %v4308 = vsel %vm4084, %v4288, %v4052
    %v4309 = vsel %vm4085, %v4288, %v4053
    %v4310 = vsel %vm4086, %v4291, %v4054
    %v4311 = vsel %vm4087, %v4291, %v4055
    %v4312 = vsel %vm4088, %v4294, %v4056
    %v4313 = vsel %vm4089, %v4294, %v4057
    %v4314 = vsel %vm4090, %v4297, %v4058
    %v4315 = vsel %vm4091, %v4297, %v4059
    %v4316 = vsel %vm4092, %v4300, %v4060
    %v4317 = vsel %vm4093, %v4300, %v4061
    %v4318 = vsel %vm4094, %v4303, %v4062
    %v4319 = vsel %vm4095, %v4303, %v4063
    %v4320 = vsel %vm4096, %v4282, %v4064
    %v4321 = vsel %vm4097, %v4282, %v4065
    %v4322 = vsel %vm4098, %v4285, %v4066
    %v4323 = vsel %vm4099, %v4285, %v4067
    %v4324 = vsel %vm4100, %v4288, %v4068
    %v4325 = vsel %vm4101, %v4288, %v4069
    %v4326 = vsel %vm4102, %v4291, %v4070
    %v4327 = vsel %vm4103, %v4291, %v4071
    %v4328 = vsel %vm4104, %v4294, %v4072
    %v4329 = vsel %vm4105, %v4294, %v4073
    %v4330 = vsel %vm4106, %v4297, %v4074
    %v4331 = vsel %vm4107, %v4297, %v4075
    %v4332 = vsel %vm4108, %v4300, %v4076
    %v4333 = vsel %vm4109, %v4300, %v4077
    %v4334 = vsel %vm4110, %v4303, %v4078
    %v4335 = vsel %vm4111, %v4303, %v4079
    %vm4336 = vcmp.ge.f32.partialorder %v80, 3.0
    %vm4337 = vcmp.ge.f32.partialorder %v81, 3.0
    %vm4338 = vcmp.ge.f32.partialorder %v82, 3.0
    %vm4339 = vcmp.ge.f32.partialorder %v83, 3.0
    %vm4340 = vcmp.ge.f32.partialorder %v84, 3.0
    %vm4341 = vcmp.ge.f32.partialorder %v85, 3.0
    %vm4342 = vcmp.ge.f32.partialorder %v86, 3.0
    %vm4343 = vcmp.ge.f32.partialorder %v87, 3.0
    %vm4344 = vcmp.ge.f32.partialorder %v88, 3.0
    %vm4345 = vcmp.ge.f32.partialorder %v89, 3.0
    %vm4346 = vcmp.ge.f32.partialorder %v90, 3.0
    %vm4347 = vcmp.ge.f32.partialorder %v91, 3.0
    %vm4348 = vcmp.ge.f32.partialorder %v92, 3.0
    %vm4349 = vcmp.ge.f32.partialorder %v93, 3.0
    %vm4350 = vcmp.ge.f32.partialorder %v94, 3.0
    %vm4351 = vcmp.ge.f32.partialorder %v95, 3.0
    %vm4352 = vcmp.ge.f32.partialorder %v96, 3.0
    %vm4353 = vcmp.ge.f32.partialorder %v97, 3.0
    %vm4354 = vcmp.ge.f32.partialorder %v98, 3.0
    %vm4355 = vcmp.ge.f32.partialorder %v99, 3.0
    %vm4356 = vcmp.ge.f32.partialorder %v100, 3.0
    %vm4357 = vcmp.ge.f32.partialorder %v101, 3.0
    %vm4358 = vcmp.ge.f32.partialorder %v102, 3.0
    %vm4359 = vcmp.ge.f32.partialorder %v103, 3.0
    %vm4360 = vcmp.ge.f32.partialorder %v104, 3.0
    %vm4361 = vcmp.ge.f32.partialorder %v105, 3.0
    %vm4362 = vcmp.ge.f32.partialorder %v106, 3.0
    %vm4363 = vcmp.ge.f32.partialorder %v107, 3.0
    %vm4364 = vcmp.ge.f32.partialorder %v108, 3.0
    %vm4365 = vcmp.ge.f32.partialorder %v109, 3.0
    %vm4366 = vcmp.ge.f32.partialorder %v110, 3.0
    %vm4367 = vcmp.ge.f32.partialorder %v111, 3.0
    %4368 = vset.pattern.permute.xlu0 64
    %4369 = vperm.xlu0 %4368, %v72
    %v4370 = vpop.permute.xlu0 %4369
    %4371 = vset.pattern.permute.xlu0 64
    %4372 = vperm.xlu0 %4371, %v73
    %v4373 = vpop.permute.xlu0 %4372
    %4374 = vset.pattern.permute.xlu0 64
    %4375 = vperm.xlu0 %4374, %v74
    %v4376 = vpop.permute.xlu0 %4375
    %4377 = vset.pattern.permute.xlu0 64
    %4378 = vperm.xlu0 %4377, %v75
    %v4379 = vpop.permute.xlu0 %4378
    %4380 = vset.pattern.permute.xlu0 64
    %4381 = vperm.xlu0 %4380, %v76
    %v4382 = vpop.permute.xlu0 %4381
    %4383 = vset.pattern.permute.xlu0 64
    %4384 = vperm.xlu0 %4383, %v77
    %v4385 = vpop.permute.xlu0 %4384
    %4386 = vset.pattern.permute.xlu0 64
    %4387 = vperm.xlu0 %4386, %v78
    %v4388 = vpop.permute.xlu0 %4387
    %4389 = vset.pattern.permute.xlu0 64
    %4390 = vperm.xlu0 %4389, %v79
    %v4391 = vpop.permute.xlu0 %4390
    %v4392 = vsel %vm4336, %v4370, %v4136
    %v4393 = vsel %vm4337, %v4370, %v4137
    %v4394 = vsel %vm4338, %v4373, %v4138
    %v4395 = vsel %vm4339, %v4373, %v4139
    %v4396 = vsel %vm4340, %v4376, %v4140
    %v4397 = vsel %vm4341, %v4376, %v4141
    %v4398 = vsel %vm4342, %v4379, %v4142
    %v4399 = vsel %vm4343, %v4379, %v4143
    %v4400 = vsel %vm4344, %v4382, %v4144
    %v4401 = vsel %vm4345, %v4382, %v4145
    %v4402 = vsel %vm4346, %v4385, %v4146
    %v4403 = vsel %vm4347, %v4385, %v4147
    %v4404 = vsel %vm4348, %v4388, %v4148
    %v4405 = vsel %vm4349, %v4388, %v4149
    %v4406 = vsel %vm4350, %v4391, %v4150
    %v4407 = vsel %vm4351, %v4391, %v4151
    %v4408 = vsel %vm4352, %v4370, %v4152
    %v4409 = vsel %vm4353, %v4370, %v4153
    %v4410 = vsel %vm4354, %v4373, %v4154
    %v4411 = vsel %vm4355, %v4373, %v4155
    %v4412 = vsel %vm4356, %v4376, %v4156
    %v4413 = vsel %vm4357, %v4376, %v4157
    %v4414 = vsel %vm4358, %v4379, %v4158
    %v4415 = vsel %vm4359, %v4379, %v4159
    %v4416 = vsel %vm4360, %v4382, %v4160
    %v4417 = vsel %vm4361, %v4382, %v4161
    %v4418 = vsel %vm4362, %v4385, %v4162
    %v4419 = vsel %vm4363, %v4385, %v4163
    %v4420 = vsel %vm4364, %v4388, %v4164
    %v4421 = vsel %vm4365, %v4388, %v4165
    %v4422 = vsel %vm4366, %v4391, %v4166
    %v4423 = vsel %vm4367, %v4391, %v4167
    %4424 = vset.pattern.permute.xlu0 65
    %4425 = vperm.xlu0 %4424, %v72
    %v4426 = vpop.permute.xlu0 %4425
    %4427 = vset.pattern.permute.xlu0 65
    %4428 = vperm.xlu0 %4427, %v73
    %v4429 = vpop.permute.xlu0 %4428
    %4430 = vset.pattern.permute.xlu0 65
    %4431 = vperm.xlu0 %4430, %v74
    %v4432 = vpop.permute.xlu0 %4431
    %4433 = vset.pattern.permute.xlu0 65
    %4434 = vperm.xlu0 %4433, %v75
    %v4435 = vpop.permute.xlu0 %4434
    %4436 = vset.pattern.permute.xlu0 65
    %4437 = vperm.xlu0 %4436, %v76
    %v4438 = vpop.permute.xlu0 %4437
    %4439 = vset.pattern.permute.xlu0 65
    %4440 = vperm.xlu0 %4439, %v77
    %v4441 = vpop.permute.xlu0 %4440
    %4442 = vset.pattern.permute.xlu0 65
    %4443 = vperm.xlu0 %4442, %v78
    %v4444 = vpop.permute.xlu0 %4443
    %4445 = vset.pattern.permute.xlu0 65
    %4446 = vperm.xlu0 %4445, %v79
    %v4447 = vpop.permute.xlu0 %4446
    %v4448 = vsel %vm4336, %v4426, %v4192
    %v4449 = vsel %vm4337, %v4426, %v4193
    %v4450 = vsel %vm4338, %v4429, %v4194
    %v4451 = vsel %vm4339, %v4429, %v4195
    %v4452 = vsel %vm4340, %v4432, %v4196
    %v4453 = vsel %vm4341, %v4432, %v4197
    %v4454 = vsel %vm4342, %v4435, %v4198
    %v4455 = vsel %vm4343, %v4435, %v4199
    %v4456 = vsel %vm4344, %v4438, %v4200
    %v4457 = vsel %vm4345, %v4438, %v4201
    %v4458 = vsel %vm4346, %v4441, %v4202
    %v4459 = vsel %vm4347, %v4441, %v4203
    %v4460 = vsel %vm4348, %v4444, %v4204
    %v4461 = vsel %vm4349, %v4444, %v4205
    %v4462 = vsel %vm4350, %v4447, %v4206
    %v4463 = vsel %vm4351, %v4447, %v4207
    %v4464 = vsel %vm4352, %v4426, %v4208
    %v4465 = vsel %vm4353, %v4426, %v4209
    %v4466 = vsel %vm4354, %v4429, %v4210
    %v4467 = vsel %vm4355, %v4429, %v4211
    %v4468 = vsel %vm4356, %v4432, %v4212
    %v4469 = vsel %vm4357, %v4432, %v4213
    %v4470 = vsel %vm4358, %v4435, %v4214
    %v4471 = vsel %vm4359, %v4435, %v4215
    %v4472 = vsel %vm4360, %v4438, %v4216
    %v4473 = vsel %vm4361, %v4438, %v4217
    %v4474 = vsel %vm4362, %v4441, %v4218
    %v4475 = vsel %vm4363, %v4441, %v4219
    %v4476 = vsel %vm4364, %v4444, %v4220
    %v4477 = vsel %vm4365, %v4444, %v4221
    %v4478 = vsel %vm4366, %v4447, %v4222
    %v4479 = vsel %vm4367, %v4447, %v4223
    %4480 = vset.pattern.permute.xlu0 66
    %4481 = vperm.xlu0 %4480, %v72
    %v4482 = vpop.permute.xlu0 %4481
    %4483 = vset.pattern.permute.xlu0 66
    %4484 = vperm.xlu0 %4483, %v73
    %v4485 = vpop.permute.xlu0 %4484
    %4486 = vset.pattern.permute.xlu0 66
    %4487 = vperm.xlu0 %4486, %v74
    %v4488 = vpop.permute.xlu0 %4487
    %4489 = vset.pattern.permute.xlu0 66
    %4490 = vperm.xlu0 %4489, %v75
    %v4491 = vpop.permute.xlu0 %4490
    %4492 = vset.pattern.permute.xlu0 66
    %4493 = vperm.xlu0 %4492, %v76
    %v4494 = vpop.permute.xlu0 %4493
    %4495 = vset.pattern.permute.xlu0 66
    %4496 = vperm.xlu0 %4495, %v77
    %v4497 = vpop.permute.xlu0 %4496
    %4498 = vset.pattern.permute.xlu0 66
    %4499 = vperm.xlu0 %4498, %v78
    %v4500 = vpop.permute.xlu0 %4499
    %4501 = vset.pattern.permute.xlu0 66
    %4502 = vperm.xlu0 %4501, %v79
    %v4503 = vpop.permute.xlu0 %4502
    %v4504 = vsel %vm4336, %v4482, %v4248
    %v4505 = vsel %vm4337, %v4482, %v4249
    %v4506 = vsel %vm4338, %v4485, %v4250
    %v4507 = vsel %vm4339, %v4485, %v4251
    %v4508 = vsel %vm4340, %v4488, %v4252
    %v4509 = vsel %vm4341, %v4488, %v4253
    %v4510 = vsel %vm4342, %v4491, %v4254
    %v4511 = vsel %vm4343, %v4491, %v4255
    %v4512 = vsel %vm4344, %v4494, %v4256
    %v4513 = vsel %vm4345, %v4494, %v4257
    %v4514 = vsel %vm4346, %v4497, %v4258
    %v4515 = vsel %vm4347, %v4497, %v4259
    %v4516 = vsel %vm4348, %v4500, %v4260
    %v4517 = vsel %vm4349, %v4500, %v4261
    %v4518 = vsel %vm4350, %v4503, %v4262
    %v4519 = vsel %vm4351, %v4503, %v4263
    %v4520 = vsel %vm4352, %v4482, %v4264
    %v4521 = vsel %vm4353, %v4482, %v4265
    %v4522 = vsel %vm4354, %v4485, %v4266
    %v4523 = vsel %vm4355, %v4485, %v4267
    %v4524 = vsel %vm4356, %v4488, %v4268
    %v4525 = vsel %vm4357, %v4488, %v4269
    %v4526 = vsel %vm4358, %v4491, %v4270
    %v4527 = vsel %vm4359, %v4491, %v4271
    %v4528 = vsel %vm4360, %v4494, %v4272
    %v4529 = vsel %vm4361, %v4494, %v4273
    %v4530 = vsel %vm4362, %v4497, %v4274
    %v4531 = vsel %vm4363, %v4497, %v4275
    %v4532 = vsel %vm4364, %v4500, %v4276
    %v4533 = vsel %vm4365, %v4500, %v4277
    %v4534 = vsel %vm4366, %v4503, %v4278
    %v4535 = vsel %vm4367, %v4503, %v4279
    %4536 = vset.pattern.permute.xlu0 67
    %4537 = vperm.xlu0 %4536, %v72
    %v4538 = vpop.permute.xlu0 %4537
    %4539 = vset.pattern.permute.xlu0 67
    %4540 = vperm.xlu0 %4539, %v73
    %v4541 = vpop.permute.xlu0 %4540
    %4542 = vset.pattern.permute.xlu0 67
    %4543 = vperm.xlu0 %4542, %v74
    %v4544 = vpop.permute.xlu0 %4543
    %4545 = vset.pattern.permute.xlu0 67
    %4546 = vperm.xlu0 %4545, %v75
    %v4547 = vpop.permute.xlu0 %4546
    %4548 = vset.pattern.permute.xlu0 67
    %4549 = vperm.xlu0 %4548, %v76
    %v4550 = vpop.permute.xlu0 %4549
    %4551 = vset.pattern.permute.xlu0 67
    %4552 = vperm.xlu0 %4551, %v77
    %v4553 = vpop.permute.xlu0 %4552
    %4554 = vset.pattern.permute.xlu0 67
    %4555 = vperm.xlu0 %4554, %v78
    %v4556 = vpop.permute.xlu0 %4555
    %4557 = vset.pattern.permute.xlu0 67
    %4558 = vperm.xlu0 %4557, %v79
    %v4559 = vpop.permute.xlu0 %4558
    %v4560 = vsel %vm4336, %v4538, %v4304
    %v4561 = vsel %vm4337, %v4538, %v4305
    %v4562 = vsel %vm4338, %v4541, %v4306
    %v4563 = vsel %vm4339, %v4541, %v4307
    %v4564 = vsel %vm4340, %v4544, %v4308
    %v4565 = vsel %vm4341, %v4544, %v4309
    %v4566 = vsel %vm4342, %v4547, %v4310
    %v4567 = vsel %vm4343, %v4547, %v4311
    %v4568 = vsel %vm4344, %v4550, %v4312
    %v4569 = vsel %vm4345, %v4550, %v4313
    %v4570 = vsel %vm4346, %v4553, %v4314
    %v4571 = vsel %vm4347, %v4553, %v4315
    %v4572 = vsel %vm4348, %v4556, %v4316
    %v4573 = vsel %vm4349, %v4556, %v4317
    %v4574 = vsel %vm4350, %v4559, %v4318
    %v4575 = vsel %vm4351, %v4559, %v4319
    %v4576 = vsel %vm4352, %v4538, %v4320
    %v4577 = vsel %vm4353, %v4538, %v4321
    %v4578 = vsel %vm4354, %v4541, %v4322
    %v4579 = vsel %vm4355, %v4541, %v4323
    %v4580 = vsel %vm4356, %v4544, %v4324
    %v4581 = vsel %vm4357, %v4544, %v4325
    %v4582 = vsel %vm4358, %v4547, %v4326
    %v4583 = vsel %vm4359, %v4547, %v4327
    %v4584 = vsel %vm4360, %v4550, %v4328
    %v4585 = vsel %vm4361, %v4550, %v4329
    %v4586 = vsel %vm4362, %v4553, %v4330
    %v4587 = vsel %vm4363, %v4553, %v4331
    %v4588 = vsel %vm4364, %v4556, %v4332
    %v4589 = vsel %vm4365, %v4556, %v4333
    %v4590 = vsel %vm4366, %v4559, %v4334
    %v4591 = vsel %vm4367, %v4559, %v4335
    %vm4592 = vcmp.ge.f32.partialorder %v80, 7.0
    %vm4593 = vcmp.ge.f32.partialorder %v81, 7.0
    %vm4594 = vcmp.ge.f32.partialorder %v82, 7.0
    %vm4595 = vcmp.ge.f32.partialorder %v83, 7.0
    %vm4596 = vcmp.ge.f32.partialorder %v84, 7.0
    %vm4597 = vcmp.ge.f32.partialorder %v85, 7.0
    %vm4598 = vcmp.ge.f32.partialorder %v86, 7.0
    %vm4599 = vcmp.ge.f32.partialorder %v87, 7.0
    %vm4600 = vcmp.ge.f32.partialorder %v88, 7.0
    %vm4601 = vcmp.ge.f32.partialorder %v89, 7.0
    %vm4602 = vcmp.ge.f32.partialorder %v90, 7.0
    %vm4603 = vcmp.ge.f32.partialorder %v91, 7.0
    %vm4604 = vcmp.ge.f32.partialorder %v92, 7.0
    %vm4605 = vcmp.ge.f32.partialorder %v93, 7.0
    %vm4606 = vcmp.ge.f32.partialorder %v94, 7.0
    %vm4607 = vcmp.ge.f32.partialorder %v95, 7.0
    %vm4608 = vcmp.ge.f32.partialorder %v96, 7.0
    %vm4609 = vcmp.ge.f32.partialorder %v97, 7.0
    %vm4610 = vcmp.ge.f32.partialorder %v98, 7.0
    %vm4611 = vcmp.ge.f32.partialorder %v99, 7.0
    %vm4612 = vcmp.ge.f32.partialorder %v100, 7.0
    %vm4613 = vcmp.ge.f32.partialorder %v101, 7.0
    %vm4614 = vcmp.ge.f32.partialorder %v102, 7.0
    %vm4615 = vcmp.ge.f32.partialorder %v103, 7.0
    %vm4616 = vcmp.ge.f32.partialorder %v104, 7.0
    %vm4617 = vcmp.ge.f32.partialorder %v105, 7.0
    %vm4618 = vcmp.ge.f32.partialorder %v106, 7.0
    %vm4619 = vcmp.ge.f32.partialorder %v107, 7.0
    %vm4620 = vcmp.ge.f32.partialorder %v108, 7.0
    %vm4621 = vcmp.ge.f32.partialorder %v109, 7.0
    %vm4622 = vcmp.ge.f32.partialorder %v110, 7.0
    %vm4623 = vcmp.ge.f32.partialorder %v111, 7.0
    %4624 = vset.pattern.permute.xlu0 68
    %4625 = vperm.xlu0 %4624, %v72
    %v4626 = vpop.permute.xlu0 %4625
    %4627 = vset.pattern.permute.xlu0 68
    %4628 = vperm.xlu0 %4627, %v73
    %v4629 = vpop.permute.xlu0 %4628
    %4630 = vset.pattern.permute.xlu0 68
    %4631 = vperm.xlu0 %4630, %v74
    %v4632 = vpop.permute.xlu0 %4631
    %4633 = vset.pattern.permute.xlu0 68
    %4634 = vperm.xlu0 %4633, %v75
    %v4635 = vpop.permute.xlu0 %4634
    %4636 = vset.pattern.permute.xlu0 68
    %4637 = vperm.xlu0 %4636, %v76
    %v4638 = vpop.permute.xlu0 %4637
    %4639 = vset.pattern.permute.xlu0 68
    %4640 = vperm.xlu0 %4639, %v77
    %v4641 = vpop.permute.xlu0 %4640
    %4642 = vset.pattern.permute.xlu0 68
    %4643 = vperm.xlu0 %4642, %v78
    %v4644 = vpop.permute.xlu0 %4643
    %4645 = vset.pattern.permute.xlu0 68
    %4646 = vperm.xlu0 %4645, %v79
    %v4647 = vpop.permute.xlu0 %4646
    %v4648 = vsel %vm4592, %v4626, %v4392
    %v4649 = vsel %vm4593, %v4626, %v4393
    %v4650 = vsel %vm4594, %v4629, %v4394
    %v4651 = vsel %vm4595, %v4629, %v4395
    %v4652 = vsel %vm4596, %v4632, %v4396
    %v4653 = vsel %vm4597, %v4632, %v4397
    %v4654 = vsel %vm4598, %v4635, %v4398
    %v4655 = vsel %vm4599, %v4635, %v4399
    %v4656 = vsel %vm4600, %v4638, %v4400
    %v4657 = vsel %vm4601, %v4638, %v4401
    %v4658 = vsel %vm4602, %v4641, %v4402
    %v4659 = vsel %vm4603, %v4641, %v4403
    %v4660 = vsel %vm4604, %v4644, %v4404
    %v4661 = vsel %vm4605, %v4644, %v4405
    %v4662 = vsel %vm4606, %v4647, %v4406
    %v4663 = vsel %vm4607, %v4647, %v4407
    %v4664 = vsel %vm4608, %v4626, %v4408
    %v4665 = vsel %vm4609, %v4626, %v4409
    %v4666 = vsel %vm4610, %v4629, %v4410
    %v4667 = vsel %vm4611, %v4629, %v4411
    %v4668 = vsel %vm4612, %v4632, %v4412
    %v4669 = vsel %vm4613, %v4632, %v4413
    %v4670 = vsel %vm4614, %v4635, %v4414
    %v4671 = vsel %vm4615, %v4635, %v4415
    %v4672 = vsel %vm4616, %v4638, %v4416
    %v4673 = vsel %vm4617, %v4638, %v4417
    %v4674 = vsel %vm4618, %v4641, %v4418
    %v4675 = vsel %vm4619, %v4641, %v4419
    %v4676 = vsel %vm4620, %v4644, %v4420
    %v4677 = vsel %vm4621, %v4644, %v4421
    %v4678 = vsel %vm4622, %v4647, %v4422
    %v4679 = vsel %vm4623, %v4647, %v4423
    %4680 = vset.pattern.permute.xlu0 69
    %4681 = vperm.xlu0 %4680, %v72
    %v4682 = vpop.permute.xlu0 %4681
    %4683 = vset.pattern.permute.xlu0 69
    %4684 = vperm.xlu0 %4683, %v73
    %v4685 = vpop.permute.xlu0 %4684
    %4686 = vset.pattern.permute.xlu0 69
    %4687 = vperm.xlu0 %4686, %v74
    %v4688 = vpop.permute.xlu0 %4687
    %4689 = vset.pattern.permute.xlu0 69
    %4690 = vperm.xlu0 %4689, %v75
    %v4691 = vpop.permute.xlu0 %4690
    %4692 = vset.pattern.permute.xlu0 69
    %4693 = vperm.xlu0 %4692, %v76
    %v4694 = vpop.permute.xlu0 %4693
    %4695 = vset.pattern.permute.xlu0 69
    %4696 = vperm.xlu0 %4695, %v77
    %v4697 = vpop.permute.xlu0 %4696
    %4698 = vset.pattern.permute.xlu0 69
    %4699 = vperm.xlu0 %4698, %v78
    %v4700 = vpop.permute.xlu0 %4699
    %4701 = vset.pattern.permute.xlu0 69
    %4702 = vperm.xlu0 %4701, %v79
    %v4703 = vpop.permute.xlu0 %4702
    %v4704 = vsel %vm4592, %v4682, %v4448
    %v4705 = vsel %vm4593, %v4682, %v4449
    %v4706 = vsel %vm4594, %v4685, %v4450
    %v4707 = vsel %vm4595, %v4685, %v4451
    %v4708 = vsel %vm4596, %v4688, %v4452
    %v4709 = vsel %vm4597, %v4688, %v4453
    %v4710 = vsel %vm4598, %v4691, %v4454
    %v4711 = vsel %vm4599, %v4691, %v4455
    %v4712 = vsel %vm4600, %v4694, %v4456
    %v4713 = vsel %vm4601, %v4694, %v4457
    %v4714 = vsel %vm4602, %v4697, %v4458
    %v4715 = vsel %vm4603, %v4697, %v4459
    %v4716 = vsel %vm4604, %v4700, %v4460
    %v4717 = vsel %vm4605, %v4700, %v4461
    %v4718 = vsel %vm4606, %v4703, %v4462
    %v4719 = vsel %vm4607, %v4703, %v4463
    %v4720 = vsel %vm4608, %v4682, %v4464
    %v4721 = vsel %vm4609, %v4682, %v4465
    %v4722 = vsel %vm4610, %v4685, %v4466
    %v4723 = vsel %vm4611, %v4685, %v4467
    %v4724 = vsel %vm4612, %v4688, %v4468
    %v4725 = vsel %vm4613, %v4688, %v4469
    %v4726 = vsel %vm4614, %v4691, %v4470
    %v4727 = vsel %vm4615, %v4691, %v4471
    %v4728 = vsel %vm4616, %v4694, %v4472
    %v4729 = vsel %vm4617, %v4694, %v4473
    %v4730 = vsel %vm4618, %v4697, %v4474
    %v4731 = vsel %vm4619, %v4697, %v4475
    %v4732 = vsel %vm4620, %v4700, %v4476
    %v4733 = vsel %vm4621, %v4700, %v4477
    %v4734 = vsel %vm4622, %v4703, %v4478
    %v4735 = vsel %vm4623, %v4703, %v4479
    %4736 = vset.pattern.permute.xlu0 70
    %4737 = vperm.xlu0 %4736, %v72
    %v4738 = vpop.permute.xlu0 %4737
    %4739 = vset.pattern.permute.xlu0 70
    %4740 = vperm.xlu0 %4739, %v73
    %v4741 = vpop.permute.xlu0 %4740
    %4742 = vset.pattern.permute.xlu0 70
    %4743 = vperm.xlu0 %4742, %v74
    %v4744 = vpop.permute.xlu0 %4743
    %4745 = vset.pattern.permute.xlu0 70
    %4746 = vperm.xlu0 %4745, %v75
    %v4747 = vpop.permute.xlu0 %4746
    %4748 = vset.pattern.permute.xlu0 70
    %4749 = vperm.xlu0 %4748, %v76
    %v4750 = vpop.permute.xlu0 %4749
    %4751 = vset.pattern.permute.xlu0 70
    %4752 = vperm.xlu0 %4751, %v77
    %v4753 = vpop.permute.xlu0 %4752
    %4754 = vset.pattern.permute.xlu0 70
    %4755 = vperm.xlu0 %4754, %v78
    %v4756 = vpop.permute.xlu0 %4755
    %4757 = vset.pattern.permute.xlu0 70
    %4758 = vperm.xlu0 %4757, %v79
    %v4759 = vpop.permute.xlu0 %4758
    %v4760 = vsel %vm4592, %v4738, %v4504
    %v4761 = vsel %vm4593, %v4738, %v4505
    %v4762 = vsel %vm4594, %v4741, %v4506
    %v4763 = vsel %vm4595, %v4741, %v4507
    %v4764 = vsel %vm4596, %v4744, %v4508
    %v4765 = vsel %vm4597, %v4744, %v4509
    %v4766 = vsel %vm4598, %v4747, %v4510
    %v4767 = vsel %vm4599, %v4747, %v4511
    %v4768 = vsel %vm4600, %v4750, %v4512
    %v4769 = vsel %vm4601, %v4750, %v4513
    %v4770 = vsel %vm4602, %v4753, %v4514
    %v4771 = vsel %vm4603, %v4753, %v4515
    %v4772 = vsel %vm4604, %v4756, %v4516
    %v4773 = vsel %vm4605, %v4756, %v4517
    %v4774 = vsel %vm4606, %v4759, %v4518
    %v4775 = vsel %vm4607, %v4759, %v4519
    %v4776 = vsel %vm4608, %v4738, %v4520
    %v4777 = vsel %vm4609, %v4738, %v4521
    %v4778 = vsel %vm4610, %v4741, %v4522
    %v4779 = vsel %vm4611, %v4741, %v4523
    %v4780 = vsel %vm4612, %v4744, %v4524
    %v4781 = vsel %vm4613, %v4744, %v4525
    %v4782 = vsel %vm4614, %v4747, %v4526
    %v4783 = vsel %vm4615, %v4747, %v4527
    %v4784 = vsel %vm4616, %v4750, %v4528
    %v4785 = vsel %vm4617, %v4750, %v4529
    %v4786 = vsel %vm4618, %v4753, %v4530
    %v4787 = vsel %vm4619, %v4753, %v4531
    %v4788 = vsel %vm4620, %v4756, %v4532
    %v4789 = vsel %vm4621, %v4756, %v4533
    %v4790 = vsel %vm4622, %v4759, %v4534
    %v4791 = vsel %vm4623, %v4759, %v4535
    %4792 = vset.pattern.permute.xlu0 71
    %4793 = vperm.xlu0 %4792, %v72
    %v4794 = vpop.permute.xlu0 %4793
    %4795 = vset.pattern.permute.xlu0 71
    %4796 = vperm.xlu0 %4795, %v73
    %v4797 = vpop.permute.xlu0 %4796
    %4798 = vset.pattern.permute.xlu0 71
    %4799 = vperm.xlu0 %4798, %v74
    %v4800 = vpop.permute.xlu0 %4799
    %4801 = vset.pattern.permute.xlu0 71
    %4802 = vperm.xlu0 %4801, %v75
    %v4803 = vpop.permute.xlu0 %4802
    %4804 = vset.pattern.permute.xlu0 71
    %4805 = vperm.xlu0 %4804, %v76
    %v4806 = vpop.permute.xlu0 %4805
    %4807 = vset.pattern.permute.xlu0 71
    %4808 = vperm.xlu0 %4807, %v77
    %v4809 = vpop.permute.xlu0 %4808
    %4810 = vset.pattern.permute.xlu0 71
    %4811 = vperm.xlu0 %4810, %v78
    %v4812 = vpop.permute.xlu0 %4811
    %4813 = vset.pattern.permute.xlu0 71
    %4814 = vperm.xlu0 %4813, %v79
    %v4815 = vpop.permute.xlu0 %4814
    %v4816 = vsel %vm4592, %v4794, %v4560
    %v4817 = vsel %vm4593, %v4794, %v4561
    %v4818 = vsel %vm4594, %v4797, %v4562
    %v4819 = vsel %vm4595, %v4797, %v4563
    %v4820 = vsel %vm4596, %v4800, %v4564
    %v4821 = vsel %vm4597, %v4800, %v4565
    %v4822 = vsel %vm4598, %v4803, %v4566
    %v4823 = vsel %vm4599, %v4803, %v4567
    %v4824 = vsel %vm4600, %v4806, %v4568
    %v4825 = vsel %vm4601, %v4806, %v4569
    %v4826 = vsel %vm4602, %v4809, %v4570
    %v4827 = vsel %vm4603, %v4809, %v4571
    %v4828 = vsel %vm4604, %v4812, %v4572
    %v4829 = vsel %vm4605, %v4812, %v4573
    %v4830 = vsel %vm4606, %v4815, %v4574
    %v4831 = vsel %vm4607, %v4815, %v4575
    %v4832 = vsel %vm4608, %v4794, %v4576
    %v4833 = vsel %vm4609, %v4794, %v4577
    %v4834 = vsel %vm4610, %v4797, %v4578
    %v4835 = vsel %vm4611, %v4797, %v4579
    %v4836 = vsel %vm4612, %v4800, %v4580
    %v4837 = vsel %vm4613, %v4800, %v4581
    %v4838 = vsel %vm4614, %v4803, %v4582
    %v4839 = vsel %vm4615, %v4803, %v4583
    %v4840 = vsel %vm4616, %v4806, %v4584
    %v4841 = vsel %vm4617, %v4806, %v4585
    %v4842 = vsel %vm4618, %v4809, %v4586
    %v4843 = vsel %vm4619, %v4809, %v4587
    %v4844 = vsel %vm4620, %v4812, %v4588
    %v4845 = vsel %vm4621, %v4812, %v4589
    %v4846 = vsel %vm4622, %v4815, %v4590
    %v4847 = vsel %vm4623, %v4815, %v4591
    %vm4848 = vcmp.ge.f32.partialorder %v80, 11.0
    %vm4849 = vcmp.ge.f32.partialorder %v81, 11.0
    %vm4850 = vcmp.ge.f32.partialorder %v82, 11.0
    %vm4851 = vcmp.ge.f32.partialorder %v83, 11.0
    %vm4852 = vcmp.ge.f32.partialorder %v84, 11.0
    %vm4853 = vcmp.ge.f32.partialorder %v85, 11.0
    %vm4854 = vcmp.ge.f32.partialorder %v86, 11.0
    %vm4855 = vcmp.ge.f32.partialorder %v87, 11.0
    %vm4856 = vcmp.ge.f32.partialorder %v88, 11.0
    %vm4857 = vcmp.ge.f32.partialorder %v89, 11.0
    %vm4858 = vcmp.ge.f32.partialorder %v90, 11.0
    %vm4859 = vcmp.ge.f32.partialorder %v91, 11.0
    %vm4860 = vcmp.ge.f32.partialorder %v92, 11.0
    %vm4861 = vcmp.ge.f32.partialorder %v93, 11.0
    %vm4862 = vcmp.ge.f32.partialorder %v94, 11.0
    %vm4863 = vcmp.ge.f32.partialorder %v95, 11.0
    %vm4864 = vcmp.ge.f32.partialorder %v96, 11.0
    %vm4865 = vcmp.ge.f32.partialorder %v97, 11.0
    %vm4866 = vcmp.ge.f32.partialorder %v98, 11.0
    %vm4867 = vcmp.ge.f32.partialorder %v99, 11.0
    %vm4868 = vcmp.ge.f32.partialorder %v100, 11.0
    %vm4869 = vcmp.ge.f32.partialorder %v101, 11.0
    %vm4870 = vcmp.ge.f32.partialorder %v102, 11.0
    %vm4871 = vcmp.ge.f32.partialorder %v103, 11.0
    %vm4872 = vcmp.ge.f32.partialorder %v104, 11.0
    %vm4873 = vcmp.ge.f32.partialorder %v105, 11.0
    %vm4874 = vcmp.ge.f32.partialorder %v106, 11.0
    %vm4875 = vcmp.ge.f32.partialorder %v107, 11.0
    %vm4876 = vcmp.ge.f32.partialorder %v108, 11.0
    %vm4877 = vcmp.ge.f32.partialorder %v109, 11.0
    %vm4878 = vcmp.ge.f32.partialorder %v110, 11.0
    %vm4879 = vcmp.ge.f32.partialorder %v111, 11.0
    %4880 = vset.pattern.permute.xlu0 72
    %4881 = vperm.xlu0 %4880, %v72
    %v4882 = vpop.permute.xlu0 %4881
    %4883 = vset.pattern.permute.xlu0 72
    %4884 = vperm.xlu0 %4883, %v73
    %v4885 = vpop.permute.xlu0 %4884
    %4886 = vset.pattern.permute.xlu0 72
    %4887 = vperm.xlu0 %4886, %v74
    %v4888 = vpop.permute.xlu0 %4887
    %4889 = vset.pattern.permute.xlu0 72
    %4890 = vperm.xlu0 %4889, %v75
    %v4891 = vpop.permute.xlu0 %4890
    %4892 = vset.pattern.permute.xlu0 72
    %4893 = vperm.xlu0 %4892, %v76
    %v4894 = vpop.permute.xlu0 %4893
    %4895 = vset.pattern.permute.xlu0 72
    %4896 = vperm.xlu0 %4895, %v77
    %v4897 = vpop.permute.xlu0 %4896
    %4898 = vset.pattern.permute.xlu0 72
    %4899 = vperm.xlu0 %4898, %v78
    %v4900 = vpop.permute.xlu0 %4899
    %4901 = vset.pattern.permute.xlu0 72
    %4902 = vperm.xlu0 %4901, %v79
    %v4903 = vpop.permute.xlu0 %4902
    %v4904 = vsel %vm4848, %v4882, %v4648
    %v4905 = vsel %vm4849, %v4882, %v4649
    %v4906 = vsel %vm4850, %v4885, %v4650
    %v4907 = vsel %vm4851, %v4885, %v4651
    %v4908 = vsel %vm4852, %v4888, %v4652
    %v4909 = vsel %vm4853, %v4888, %v4653
    %v4910 = vsel %vm4854, %v4891, %v4654
    %v4911 = vsel %vm4855, %v4891, %v4655
    %v4912 = vsel %vm4856, %v4894, %v4656
    %v4913 = vsel %vm4857, %v4894, %v4657
    %v4914 = vsel %vm4858, %v4897, %v4658
    %v4915 = vsel %vm4859, %v4897, %v4659
    %v4916 = vsel %vm4860, %v4900, %v4660
    %v4917 = vsel %vm4861, %v4900, %v4661
    %v4918 = vsel %vm4862, %v4903, %v4662
    %v4919 = vsel %vm4863, %v4903, %v4663
    %v4920 = vsel %vm4864, %v4882, %v4664
    %v4921 = vsel %vm4865, %v4882, %v4665
    %v4922 = vsel %vm4866, %v4885, %v4666
    %v4923 = vsel %vm4867, %v4885, %v4667
    %v4924 = vsel %vm4868, %v4888, %v4668
    %v4925 = vsel %vm4869, %v4888, %v4669
    %v4926 = vsel %vm4870, %v4891, %v4670
    %v4927 = vsel %vm4871, %v4891, %v4671
    %v4928 = vsel %vm4872, %v4894, %v4672
    %v4929 = vsel %vm4873, %v4894, %v4673
    %v4930 = vsel %vm4874, %v4897, %v4674
    %v4931 = vsel %vm4875, %v4897, %v4675
    %v4932 = vsel %vm4876, %v4900, %v4676
    %v4933 = vsel %vm4877, %v4900, %v4677
    %v4934 = vsel %vm4878, %v4903, %v4678
    %v4935 = vsel %vm4879, %v4903, %v4679
    %4936 = vset.pattern.permute.xlu0 73
    %4937 = vperm.xlu0 %4936, %v72
    %v4938 = vpop.permute.xlu0 %4937
    %4939 = vset.pattern.permute.xlu0 73
    %4940 = vperm.xlu0 %4939, %v73
    %v4941 = vpop.permute.xlu0 %4940
    %4942 = vset.pattern.permute.xlu0 73
    %4943 = vperm.xlu0 %4942, %v74
    %v4944 = vpop.permute.xlu0 %4943
    %4945 = vset.pattern.permute.xlu0 73
    %4946 = vperm.xlu0 %4945, %v75
    %v4947 = vpop.permute.xlu0 %4946
    %4948 = vset.pattern.permute.xlu0 73
    %4949 = vperm.xlu0 %4948, %v76
    %v4950 = vpop.permute.xlu0 %4949
    %4951 = vset.pattern.permute.xlu0 73
    %4952 = vperm.xlu0 %4951, %v77
    %v4953 = vpop.permute.xlu0 %4952
    %4954 = vset.pattern.permute.xlu0 73
    %4955 = vperm.xlu0 %4954, %v78
    %v4956 = vpop.permute.xlu0 %4955
    %4957 = vset.pattern.permute.xlu0 73
    %4958 = vperm.xlu0 %4957, %v79
    %v4959 = vpop.permute.xlu0 %4958
    %v4960 = vsel %vm4848, %v4938, %v4704
    %v4961 = vsel %vm4849, %v4938, %v4705
    %v4962 = vsel %vm4850, %v4941, %v4706
    %v4963 = vsel %vm4851, %v4941, %v4707
    %v4964 = vsel %vm4852, %v4944, %v4708
    %v4965 = vsel %vm4853, %v4944, %v4709
    %v4966 = vsel %vm4854, %v4947, %v4710
    %v4967 = vsel %vm4855, %v4947, %v4711
    %v4968 = vsel %vm4856, %v4950, %v4712
    %v4969 = vsel %vm4857, %v4950, %v4713
    %v4970 = vsel %vm4858, %v4953, %v4714
    %v4971 = vsel %vm4859, %v4953, %v4715
    %v4972 = vsel %vm4860, %v4956, %v4716
    %v4973 = vsel %vm4861, %v4956, %v4717
    %v4974 = vsel %vm4862, %v4959, %v4718
    %v4975 = vsel %vm4863, %v4959, %v4719
    %v4976 = vsel %vm4864, %v4938, %v4720
    %v4977 = vsel %vm4865, %v4938, %v4721
    %v4978 = vsel %vm4866, %v4941, %v4722
    %v4979 = vsel %vm4867, %v4941, %v4723
    %v4980 = vsel %vm4868, %v4944, %v4724
    %v4981 = vsel %vm4869, %v4944, %v4725
    %v4982 = vsel %vm4870, %v4947, %v4726
    %v4983 = vsel %vm4871, %v4947, %v4727
    %v4984 = vsel %vm4872, %v4950, %v4728
    %v4985 = vsel %vm4873, %v4950, %v4729
    %v4986 = vsel %vm4874, %v4953, %v4730
    %v4987 = vsel %vm4875, %v4953, %v4731
    %v4988 = vsel %vm4876, %v4956, %v4732
    %v4989 = vsel %vm4877, %v4956, %v4733
    %v4990 = vsel %vm4878, %v4959, %v4734
    %v4991 = vsel %vm4879, %v4959, %v4735
    %4992 = vset.pattern.permute.xlu0 74
    %4993 = vperm.xlu0 %4992, %v72
    %v4994 = vpop.permute.xlu0 %4993
    %4995 = vset.pattern.permute.xlu0 74
    %4996 = vperm.xlu0 %4995, %v73
    %v4997 = vpop.permute.xlu0 %4996
    %4998 = vset.pattern.permute.xlu0 74
    %4999 = vperm.xlu0 %4998, %v74
    %v5000 = vpop.permute.xlu0 %4999
    %5001 = vset.pattern.permute.xlu0 74
    %5002 = vperm.xlu0 %5001, %v75
    %v5003 = vpop.permute.xlu0 %5002
    %5004 = vset.pattern.permute.xlu0 74
    %5005 = vperm.xlu0 %5004, %v76
    %v5006 = vpop.permute.xlu0 %5005
    %5007 = vset.pattern.permute.xlu0 74
    %5008 = vperm.xlu0 %5007, %v77
    %v5009 = vpop.permute.xlu0 %5008
    %5010 = vset.pattern.permute.xlu0 74
    %5011 = vperm.xlu0 %5010, %v78
    %v5012 = vpop.permute.xlu0 %5011
    %5013 = vset.pattern.permute.xlu0 74
    %5014 = vperm.xlu0 %5013, %v79
    %v5015 = vpop.permute.xlu0 %5014
    %v5016 = vsel %vm4848, %v4994, %v4760
    %v5017 = vsel %vm4849, %v4994, %v4761
    %v5018 = vsel %vm4850, %v4997, %v4762
    %v5019 = vsel %vm4851, %v4997, %v4763
    %v5020 = vsel %vm4852, %v5000, %v4764
    %v5021 = vsel %vm4853, %v5000, %v4765
    %v5022 = vsel %vm4854, %v5003, %v4766
    %v5023 = vsel %vm4855, %v5003, %v4767
    %v5024 = vsel %vm4856, %v5006, %v4768
    %v5025 = vsel %vm4857, %v5006, %v4769
    %v5026 = vsel %vm4858, %v5009, %v4770
    %v5027 = vsel %vm4859, %v5009, %v4771
    %v5028 = vsel %vm4860, %v5012, %v4772
    %v5029 = vsel %vm4861, %v5012, %v4773
    %v5030 = vsel %vm4862, %v5015, %v4774
    %v5031 = vsel %vm4863, %v5015, %v4775
    %v5032 = vsel %vm4864, %v4994, %v4776
    %v5033 = vsel %vm4865, %v4994, %v4777
    %v5034 = vsel %vm4866, %v4997, %v4778
    %v5035 = vsel %vm4867, %v4997, %v4779
    %v5036 = vsel %vm4868, %v5000, %v4780
    %v5037 = vsel %vm4869, %v5000, %v4781
    %v5038 = vsel %vm4870, %v5003, %v4782
    %v5039 = vsel %vm4871, %v5003, %v4783
    %v5040 = vsel %vm4872, %v5006, %v4784
    %v5041 = vsel %vm4873, %v5006, %v4785
    %v5042 = vsel %vm4874, %v5009, %v4786
    %v5043 = vsel %vm4875, %v5009, %v4787
    %v5044 = vsel %vm4876, %v5012, %v4788
    %v5045 = vsel %vm4877, %v5012, %v4789
    %v5046 = vsel %vm4878, %v5015, %v4790
    %v5047 = vsel %vm4879, %v5015, %v4791
    %5048 = vset.pattern.permute.xlu0 75
    %5049 = vperm.xlu0 %5048, %v72
    %v5050 = vpop.permute.xlu0 %5049
    %5051 = vset.pattern.permute.xlu0 75
    %5052 = vperm.xlu0 %5051, %v73
    %v5053 = vpop.permute.xlu0 %5052
    %5054 = vset.pattern.permute.xlu0 75
    %5055 = vperm.xlu0 %5054, %v74
    %v5056 = vpop.permute.xlu0 %5055
    %5057 = vset.pattern.permute.xlu0 75
    %5058 = vperm.xlu0 %5057, %v75
    %v5059 = vpop.permute.xlu0 %5058
    %5060 = vset.pattern.permute.xlu0 75
    %5061 = vperm.xlu0 %5060, %v76
    %v5062 = vpop.permute.xlu0 %5061
    %5063 = vset.pattern.permute.xlu0 75
    %5064 = vperm.xlu0 %5063, %v77
    %v5065 = vpop.permute.xlu0 %5064
    %5066 = vset.pattern.permute.xlu0 75
    %5067 = vperm.xlu0 %5066, %v78
    %v5068 = vpop.permute.xlu0 %5067
    %5069 = vset.pattern.permute.xlu0 75
    %5070 = vperm.xlu0 %5069, %v79
    %v5071 = vpop.permute.xlu0 %5070
    %v5072 = vsel %vm4848, %v5050, %v4816
    %v5073 = vsel %vm4849, %v5050, %v4817
    %v5074 = vsel %vm4850, %v5053, %v4818
    %v5075 = vsel %vm4851, %v5053, %v4819
    %v5076 = vsel %vm4852, %v5056, %v4820
    %v5077 = vsel %vm4853, %v5056, %v4821
    %v5078 = vsel %vm4854, %v5059, %v4822
    %v5079 = vsel %vm4855, %v5059, %v4823
    %v5080 = vsel %vm4856, %v5062, %v4824
    %v5081 = vsel %vm4857, %v5062, %v4825
    %v5082 = vsel %vm4858, %v5065, %v4826
    %v5083 = vsel %vm4859, %v5065, %v4827
    %v5084 = vsel %vm4860, %v5068, %v4828
    %v5085 = vsel %vm4861, %v5068, %v4829
    %v5086 = vsel %vm4862, %v5071, %v4830
    %v5087 = vsel %vm4863, %v5071, %v4831
    %v5088 = vsel %vm4864, %v5050, %v4832
    %v5089 = vsel %vm4865, %v5050, %v4833
    %v5090 = vsel %vm4866, %v5053, %v4834
    %v5091 = vsel %vm4867, %v5053, %v4835
    %v5092 = vsel %vm4868, %v5056, %v4836
    %v5093 = vsel %vm4869, %v5056, %v4837
    %v5094 = vsel %vm4870, %v5059, %v4838
    %v5095 = vsel %vm4871, %v5059, %v4839
    %v5096 = vsel %vm4872, %v5062, %v4840
    %v5097 = vsel %vm4873, %v5062, %v4841
    %v5098 = vsel %vm4874, %v5065, %v4842
    %v5099 = vsel %vm4875, %v5065, %v4843
    %v5100 = vsel %vm4876, %v5068, %v4844
    %v5101 = vsel %vm4877, %v5068, %v4845
    %v5102 = vsel %vm4878, %v5071, %v4846
    %v5103 = vsel %vm4879, %v5071, %v4847
    %vm5104 = vcmp.ge.f32.partialorder %v80, 15.0
    %vm5105 = vcmp.ge.f32.partialorder %v81, 15.0
    %vm5106 = vcmp.ge.f32.partialorder %v82, 15.0
    %vm5107 = vcmp.ge.f32.partialorder %v83, 15.0
    %vm5108 = vcmp.ge.f32.partialorder %v84, 15.0
    %vm5109 = vcmp.ge.f32.partialorder %v85, 15.0
    %vm5110 = vcmp.ge.f32.partialorder %v86, 15.0
    %vm5111 = vcmp.ge.f32.partialorder %v87, 15.0
    %vm5112 = vcmp.ge.f32.partialorder %v88, 15.0
    %vm5113 = vcmp.ge.f32.partialorder %v89, 15.0
    %vm5114 = vcmp.ge.f32.partialorder %v90, 15.0
    %vm5115 = vcmp.ge.f32.partialorder %v91, 15.0
    %vm5116 = vcmp.ge.f32.partialorder %v92, 15.0
    %vm5117 = vcmp.ge.f32.partialorder %v93, 15.0
    %vm5118 = vcmp.ge.f32.partialorder %v94, 15.0
    %vm5119 = vcmp.ge.f32.partialorder %v95, 15.0
    %vm5120 = vcmp.ge.f32.partialorder %v96, 15.0
    %vm5121 = vcmp.ge.f32.partialorder %v97, 15.0
    %vm5122 = vcmp.ge.f32.partialorder %v98, 15.0
    %vm5123 = vcmp.ge.f32.partialorder %v99, 15.0
    %vm5124 = vcmp.ge.f32.partialorder %v100, 15.0
    %vm5125 = vcmp.ge.f32.partialorder %v101, 15.0
    %vm5126 = vcmp.ge.f32.partialorder %v102, 15.0
    %vm5127 = vcmp.ge.f32.partialorder %v103, 15.0
    %vm5128 = vcmp.ge.f32.partialorder %v104, 15.0
    %vm5129 = vcmp.ge.f32.partialorder %v105, 15.0
    %vm5130 = vcmp.ge.f32.partialorder %v106, 15.0
    %vm5131 = vcmp.ge.f32.partialorder %v107, 15.0
    %vm5132 = vcmp.ge.f32.partialorder %v108, 15.0
    %vm5133 = vcmp.ge.f32.partialorder %v109, 15.0
    %vm5134 = vcmp.ge.f32.partialorder %v110, 15.0
    %vm5135 = vcmp.ge.f32.partialorder %v111, 15.0
    %5136 = vset.pattern.permute.xlu0 76
    %5137 = vperm.xlu0 %5136, %v72
    %v5138 = vpop.permute.xlu0 %5137
    %5139 = vset.pattern.permute.xlu0 76
    %5140 = vperm.xlu0 %5139, %v73
    %v5141 = vpop.permute.xlu0 %5140
    %5142 = vset.pattern.permute.xlu0 76
    %5143 = vperm.xlu0 %5142, %v74
    %v5144 = vpop.permute.xlu0 %5143
    %5145 = vset.pattern.permute.xlu0 76
    %5146 = vperm.xlu0 %5145, %v75
    %v5147 = vpop.permute.xlu0 %5146
    %5148 = vset.pattern.permute.xlu0 76
    %5149 = vperm.xlu0 %5148, %v76
    %v5150 = vpop.permute.xlu0 %5149
    %5151 = vset.pattern.permute.xlu0 76
    %5152 = vperm.xlu0 %5151, %v77
    %v5153 = vpop.permute.xlu0 %5152
    %5154 = vset.pattern.permute.xlu0 76
    %5155 = vperm.xlu0 %5154, %v78
    %v5156 = vpop.permute.xlu0 %5155
    %5157 = vset.pattern.permute.xlu0 76
    %5158 = vperm.xlu0 %5157, %v79
    %v5159 = vpop.permute.xlu0 %5158
    %v5160 = vsel %vm5104, %v5138, %v4904
    %v5161 = vsel %vm5105, %v5138, %v4905
    %v5162 = vsel %vm5106, %v5141, %v4906
    %v5163 = vsel %vm5107, %v5141, %v4907
    %v5164 = vsel %vm5108, %v5144, %v4908
    %v5165 = vsel %vm5109, %v5144, %v4909
    %v5166 = vsel %vm5110, %v5147, %v4910
    %v5167 = vsel %vm5111, %v5147, %v4911
    %v5168 = vsel %vm5112, %v5150, %v4912
    %v5169 = vsel %vm5113, %v5150, %v4913
    %v5170 = vsel %vm5114, %v5153, %v4914
    %v5171 = vsel %vm5115, %v5153, %v4915
    %v5172 = vsel %vm5116, %v5156, %v4916
    %v5173 = vsel %vm5117, %v5156, %v4917
    %v5174 = vsel %vm5118, %v5159, %v4918
    %v5175 = vsel %vm5119, %v5159, %v4919
    %v5176 = vsel %vm5120, %v5138, %v4920
    %v5177 = vsel %vm5121, %v5138, %v4921
    %v5178 = vsel %vm5122, %v5141, %v4922
    %v5179 = vsel %vm5123, %v5141, %v4923
    %v5180 = vsel %vm5124, %v5144, %v4924
    %v5181 = vsel %vm5125, %v5144, %v4925
    %v5182 = vsel %vm5126, %v5147, %v4926
    %v5183 = vsel %vm5127, %v5147, %v4927
    %v5184 = vsel %vm5128, %v5150, %v4928
    %v5185 = vsel %vm5129, %v5150, %v4929
    %v5186 = vsel %vm5130, %v5153, %v4930
    %v5187 = vsel %vm5131, %v5153, %v4931
    %v5188 = vsel %vm5132, %v5156, %v4932
    %v5189 = vsel %vm5133, %v5156, %v4933
    %v5190 = vsel %vm5134, %v5159, %v4934
    %v5191 = vsel %vm5135, %v5159, %v4935
    %5192 = vset.pattern.permute.xlu0 77
    %5193 = vperm.xlu0 %5192, %v72
    %v5194 = vpop.permute.xlu0 %5193
    %5195 = vset.pattern.permute.xlu0 77
    %5196 = vperm.xlu0 %5195, %v73
    %v5197 = vpop.permute.xlu0 %5196
    %5198 = vset.pattern.permute.xlu0 77
    %5199 = vperm.xlu0 %5198, %v74
    %v5200 = vpop.permute.xlu0 %5199
    %5201 = vset.pattern.permute.xlu0 77
    %5202 = vperm.xlu0 %5201, %v75
    %v5203 = vpop.permute.xlu0 %5202
    %5204 = vset.pattern.permute.xlu0 77
    %5205 = vperm.xlu0 %5204, %v76
    %v5206 = vpop.permute.xlu0 %5205
    %5207 = vset.pattern.permute.xlu0 77
    %5208 = vperm.xlu0 %5207, %v77
    %v5209 = vpop.permute.xlu0 %5208
    %5210 = vset.pattern.permute.xlu0 77
    %5211 = vperm.xlu0 %5210, %v78
    %v5212 = vpop.permute.xlu0 %5211
    %5213 = vset.pattern.permute.xlu0 77
    %5214 = vperm.xlu0 %5213, %v79
    %v5215 = vpop.permute.xlu0 %5214
    %v5216 = vsel %vm5104, %v5194, %v4960
    %v5217 = vsel %vm5105, %v5194, %v4961
    %v5218 = vsel %vm5106, %v5197, %v4962
    %v5219 = vsel %vm5107, %v5197, %v4963
    %v5220 = vsel %vm5108, %v5200, %v4964
    %v5221 = vsel %vm5109, %v5200, %v4965
    %v5222 = vsel %vm5110, %v5203, %v4966
    %v5223 = vsel %vm5111, %v5203, %v4967
    %v5224 = vsel %vm5112, %v5206, %v4968
    %v5225 = vsel %vm5113, %v5206, %v4969
    %v5226 = vsel %vm5114, %v5209, %v4970
    %v5227 = vsel %vm5115, %v5209, %v4971
    %v5228 = vsel %vm5116, %v5212, %v4972
    %v5229 = vsel %vm5117, %v5212, %v4973
    %v5230 = vsel %vm5118, %v5215, %v4974
    %v5231 = vsel %vm5119, %v5215, %v4975
    %v5232 = vsel %vm5120, %v5194, %v4976
    %v5233 = vsel %vm5121, %v5194, %v4977
    %v5234 = vsel %vm5122, %v5197, %v4978
    %v5235 = vsel %vm5123, %v5197, %v4979
    %v5236 = vsel %vm5124, %v5200, %v4980
    %v5237 = vsel %vm5125, %v5200, %v4981
    %v5238 = vsel %vm5126, %v5203, %v4982
    %v5239 = vsel %vm5127, %v5203, %v4983
    %v5240 = vsel %vm5128, %v5206, %v4984
    %v5241 = vsel %vm5129, %v5206, %v4985
    %v5242 = vsel %vm5130, %v5209, %v4986
    %v5243 = vsel %vm5131, %v5209, %v4987
    %v5244 = vsel %vm5132, %v5212, %v4988
    %v5245 = vsel %vm5133, %v5212, %v4989
    %v5246 = vsel %vm5134, %v5215, %v4990
    %v5247 = vsel %vm5135, %v5215, %v4991
    %5248 = vset.pattern.permute.xlu0 78
    %5249 = vperm.xlu0 %5248, %v72
    %v5250 = vpop.permute.xlu0 %5249
    %5251 = vset.pattern.permute.xlu0 78
    %5252 = vperm.xlu0 %5251, %v73
    %v5253 = vpop.permute.xlu0 %5252
    %5254 = vset.pattern.permute.xlu0 78
    %5255 = vperm.xlu0 %5254, %v74
    %v5256 = vpop.permute.xlu0 %5255
    %5257 = vset.pattern.permute.xlu0 78
    %5258 = vperm.xlu0 %5257, %v75
    %v5259 = vpop.permute.xlu0 %5258
    %5260 = vset.pattern.permute.xlu0 78
    %5261 = vperm.xlu0 %5260, %v76
    %v5262 = vpop.permute.xlu0 %5261
    %5263 = vset.pattern.permute.xlu0 78
    %5264 = vperm.xlu0 %5263, %v77
    %v5265 = vpop.permute.xlu0 %5264
    %5266 = vset.pattern.permute.xlu0 78
    %5267 = vperm.xlu0 %5266, %v78
    %v5268 = vpop.permute.xlu0 %5267
    %5269 = vset.pattern.permute.xlu0 78
    %5270 = vperm.xlu0 %5269, %v79
    %v5271 = vpop.permute.xlu0 %5270
    %v5272 = vsel %vm5104, %v5250, %v5016
    %v5273 = vsel %vm5105, %v5250, %v5017
    %v5274 = vsel %vm5106, %v5253, %v5018
    %v5275 = vsel %vm5107, %v5253, %v5019
    %v5276 = vsel %vm5108, %v5256, %v5020
    %v5277 = vsel %vm5109, %v5256, %v5021
    %v5278 = vsel %vm5110, %v5259, %v5022
    %v5279 = vsel %vm5111, %v5259, %v5023
    %v5280 = vsel %vm5112, %v5262, %v5024
    %v5281 = vsel %vm5113, %v5262, %v5025
    %v5282 = vsel %vm5114, %v5265, %v5026
    %v5283 = vsel %vm5115, %v5265, %v5027
    %v5284 = vsel %vm5116, %v5268, %v5028
    %v5285 = vsel %vm5117, %v5268, %v5029
    %v5286 = vsel %vm5118, %v5271, %v5030
    %v5287 = vsel %vm5119, %v5271, %v5031
    %v5288 = vsel %vm5120, %v5250, %v5032
    %v5289 = vsel %vm5121, %v5250, %v5033
    %v5290 = vsel %vm5122, %v5253, %v5034
    %v5291 = vsel %vm5123, %v5253, %v5035
    %v5292 = vsel %vm5124, %v5256, %v5036
    %v5293 = vsel %vm5125, %v5256, %v5037
    %v5294 = vsel %vm5126, %v5259, %v5038
    %v5295 = vsel %vm5127, %v5259, %v5039
    %v5296 = vsel %vm5128, %v5262, %v5040
    %v5297 = vsel %vm5129, %v5262, %v5041
    %v5298 = vsel %vm5130, %v5265, %v5042
    %v5299 = vsel %vm5131, %v5265, %v5043
    %v5300 = vsel %vm5132, %v5268, %v5044
    %v5301 = vsel %vm5133, %v5268, %v5045
    %v5302 = vsel %vm5134, %v5271, %v5046
    %v5303 = vsel %vm5135, %v5271, %v5047
    %5304 = vset.pattern.permute.xlu0 79
    %5305 = vperm.xlu0 %5304, %v72
    %v5306 = vpop.permute.xlu0 %5305
    %5307 = vset.pattern.permute.xlu0 79
    %5308 = vperm.xlu0 %5307, %v73
    %v5309 = vpop.permute.xlu0 %5308
    %5310 = vset.pattern.permute.xlu0 79
    %5311 = vperm.xlu0 %5310, %v74
    %v5312 = vpop.permute.xlu0 %5311
    %5313 = vset.pattern.permute.xlu0 79
    %5314 = vperm.xlu0 %5313, %v75
    %v5315 = vpop.permute.xlu0 %5314
    %5316 = vset.pattern.permute.xlu0 79
    %5317 = vperm.xlu0 %5316, %v76
    %v5318 = vpop.permute.xlu0 %5317
    %5319 = vset.pattern.permute.xlu0 79
    %5320 = vperm.xlu0 %5319, %v77
    %v5321 = vpop.permute.xlu0 %5320
    %5322 = vset.pattern.permute.xlu0 79
    %5323 = vperm.xlu0 %5322, %v78
    %v5324 = vpop.permute.xlu0 %5323
    %5325 = vset.pattern.permute.xlu0 79
    %5326 = vperm.xlu0 %5325, %v79
    %v5327 = vpop.permute.xlu0 %5326
    %v5328 = vsel %vm5104, %v5306, %v5072
    %v5329 = vsel %vm5105, %v5306, %v5073
    %v5330 = vsel %vm5106, %v5309, %v5074
    %v5331 = vsel %vm5107, %v5309, %v5075
    %v5332 = vsel %vm5108, %v5312, %v5076
    %v5333 = vsel %vm5109, %v5312, %v5077
    %v5334 = vsel %vm5110, %v5315, %v5078
    %v5335 = vsel %vm5111, %v5315, %v5079
    %v5336 = vsel %vm5112, %v5318, %v5080
    %v5337 = vsel %vm5113, %v5318, %v5081
    %v5338 = vsel %vm5114, %v5321, %v5082
    %v5339 = vsel %vm5115, %v5321, %v5083
    %v5340 = vsel %vm5116, %v5324, %v5084
    %v5341 = vsel %vm5117, %v5324, %v5085
    %v5342 = vsel %vm5118, %v5327, %v5086
    %v5343 = vsel %vm5119, %v5327, %v5087
    %v5344 = vsel %vm5120, %v5306, %v5088
    %v5345 = vsel %vm5121, %v5306, %v5089
    %v5346 = vsel %vm5122, %v5309, %v5090
    %v5347 = vsel %vm5123, %v5309, %v5091
    %v5348 = vsel %vm5124, %v5312, %v5092
    %v5349 = vsel %vm5125, %v5312, %v5093
    %v5350 = vsel %vm5126, %v5315, %v5094
    %v5351 = vsel %vm5127, %v5315, %v5095
    %v5352 = vsel %vm5128, %v5318, %v5096
    %v5353 = vsel %vm5129, %v5318, %v5097
    %v5354 = vsel %vm5130, %v5321, %v5098
    %v5355 = vsel %vm5131, %v5321, %v5099
    %v5356 = vsel %vm5132, %v5324, %v5100
    %v5357 = vsel %vm5133, %v5324, %v5101
    %v5358 = vsel %vm5134, %v5327, %v5102
    %v5359 = vsel %vm5135, %v5327, %v5103
    %vm5360 = vcmp.ge.f32.partialorder %v80, 19.0
    %vm5361 = vcmp.ge.f32.partialorder %v81, 19.0
    %vm5362 = vcmp.ge.f32.partialorder %v82, 19.0
    %vm5363 = vcmp.ge.f32.partialorder %v83, 19.0
    %vm5364 = vcmp.ge.f32.partialorder %v84, 19.0
    %vm5365 = vcmp.ge.f32.partialorder %v85, 19.0
    %vm5366 = vcmp.ge.f32.partialorder %v86, 19.0
    %vm5367 = vcmp.ge.f32.partialorder %v87, 19.0
    %vm5368 = vcmp.ge.f32.partialorder %v88, 19.0
    %vm5369 = vcmp.ge.f32.partialorder %v89, 19.0
    %vm5370 = vcmp.ge.f32.partialorder %v90, 19.0
    %vm5371 = vcmp.ge.f32.partialorder %v91, 19.0
    %vm5372 = vcmp.ge.f32.partialorder %v92, 19.0
    %vm5373 = vcmp.ge.f32.partialorder %v93, 19.0
    %vm5374 = vcmp.ge.f32.partialorder %v94, 19.0
    %vm5375 = vcmp.ge.f32.partialorder %v95, 19.0
    %vm5376 = vcmp.ge.f32.partialorder %v96, 19.0
    %vm5377 = vcmp.ge.f32.partialorder %v97, 19.0
    %vm5378 = vcmp.ge.f32.partialorder %v98, 19.0
    %vm5379 = vcmp.ge.f32.partialorder %v99, 19.0
    %vm5380 = vcmp.ge.f32.partialorder %v100, 19.0
    %vm5381 = vcmp.ge.f32.partialorder %v101, 19.0
    %vm5382 = vcmp.ge.f32.partialorder %v102, 19.0
    %vm5383 = vcmp.ge.f32.partialorder %v103, 19.0
    %vm5384 = vcmp.ge.f32.partialorder %v104, 19.0
    %vm5385 = vcmp.ge.f32.partialorder %v105, 19.0
    %vm5386 = vcmp.ge.f32.partialorder %v106, 19.0
    %vm5387 = vcmp.ge.f32.partialorder %v107, 19.0
    %vm5388 = vcmp.ge.f32.partialorder %v108, 19.0
    %vm5389 = vcmp.ge.f32.partialorder %v109, 19.0
    %vm5390 = vcmp.ge.f32.partialorder %v110, 19.0
    %vm5391 = vcmp.ge.f32.partialorder %v111, 19.0
    %5392 = vset.pattern.permute.xlu0 80
    %5393 = vperm.xlu0 %5392, %v72
    %v5394 = vpop.permute.xlu0 %5393
    %5395 = vset.pattern.permute.xlu0 80
    %5396 = vperm.xlu0 %5395, %v73
    %v5397 = vpop.permute.xlu0 %5396
    %5398 = vset.pattern.permute.xlu0 80
    %5399 = vperm.xlu0 %5398, %v74
    %v5400 = vpop.permute.xlu0 %5399
    %5401 = vset.pattern.permute.xlu0 80
    %5402 = vperm.xlu0 %5401, %v75
    %v5403 = vpop.permute.xlu0 %5402
    %5404 = vset.pattern.permute.xlu0 80
    %5405 = vperm.xlu0 %5404, %v76
    %v5406 = vpop.permute.xlu0 %5405
    %5407 = vset.pattern.permute.xlu0 80
    %5408 = vperm.xlu0 %5407, %v77
    %v5409 = vpop.permute.xlu0 %5408
    %5410 = vset.pattern.permute.xlu0 80
    %5411 = vperm.xlu0 %5410, %v78
    %v5412 = vpop.permute.xlu0 %5411
    %5413 = vset.pattern.permute.xlu0 80
    %5414 = vperm.xlu0 %5413, %v79
    %v5415 = vpop.permute.xlu0 %5414
    %v5416 = vsel %vm5360, %v5394, %v5160
    %v5417 = vsel %vm5361, %v5394, %v5161
    %v5418 = vsel %vm5362, %v5397, %v5162
    %v5419 = vsel %vm5363, %v5397, %v5163
    %v5420 = vsel %vm5364, %v5400, %v5164
    %v5421 = vsel %vm5365, %v5400, %v5165
    %v5422 = vsel %vm5366, %v5403, %v5166
    %v5423 = vsel %vm5367, %v5403, %v5167
    %v5424 = vsel %vm5368, %v5406, %v5168
    %v5425 = vsel %vm5369, %v5406, %v5169
    %v5426 = vsel %vm5370, %v5409, %v5170
    %v5427 = vsel %vm5371, %v5409, %v5171
    %v5428 = vsel %vm5372, %v5412, %v5172
    %v5429 = vsel %vm5373, %v5412, %v5173
    %v5430 = vsel %vm5374, %v5415, %v5174
    %v5431 = vsel %vm5375, %v5415, %v5175
    %v5432 = vsel %vm5376, %v5394, %v5176
    %v5433 = vsel %vm5377, %v5394, %v5177
    %v5434 = vsel %vm5378, %v5397, %v5178
    %v5435 = vsel %vm5379, %v5397, %v5179
    %v5436 = vsel %vm5380, %v5400, %v5180
    %v5437 = vsel %vm5381, %v5400, %v5181
    %v5438 = vsel %vm5382, %v5403, %v5182
    %v5439 = vsel %vm5383, %v5403, %v5183
    %v5440 = vsel %vm5384, %v5406, %v5184
    %v5441 = vsel %vm5385, %v5406, %v5185
    %v5442 = vsel %vm5386, %v5409, %v5186
    %v5443 = vsel %vm5387, %v5409, %v5187
    %v5444 = vsel %vm5388, %v5412, %v5188
    %v5445 = vsel %vm5389, %v5412, %v5189
    %v5446 = vsel %vm5390, %v5415, %v5190
    %v5447 = vsel %vm5391, %v5415, %v5191
    %5448 = vset.pattern.permute.xlu0 81
    %5449 = vperm.xlu0 %5448, %v72
    %v5450 = vpop.permute.xlu0 %5449
    %5451 = vset.pattern.permute.xlu0 81
    %5452 = vperm.xlu0 %5451, %v73
    %v5453 = vpop.permute.xlu0 %5452
    %5454 = vset.pattern.permute.xlu0 81
    %5455 = vperm.xlu0 %5454, %v74
    %v5456 = vpop.permute.xlu0 %5455
    %5457 = vset.pattern.permute.xlu0 81
    %5458 = vperm.xlu0 %5457, %v75
    %v5459 = vpop.permute.xlu0 %5458
    %5460 = vset.pattern.permute.xlu0 81
    %5461 = vperm.xlu0 %5460, %v76
    %v5462 = vpop.permute.xlu0 %5461
    %5463 = vset.pattern.permute.xlu0 81
    %5464 = vperm.xlu0 %5463, %v77
    %v5465 = vpop.permute.xlu0 %5464
    %5466 = vset.pattern.permute.xlu0 81
    %5467 = vperm.xlu0 %5466, %v78
    %v5468 = vpop.permute.xlu0 %5467
    %5469 = vset.pattern.permute.xlu0 81
    %5470 = vperm.xlu0 %5469, %v79
    %v5471 = vpop.permute.xlu0 %5470
    %v5472 = vsel %vm5360, %v5450, %v5216
    %v5473 = vsel %vm5361, %v5450, %v5217
    %v5474 = vsel %vm5362, %v5453, %v5218
    %v5475 = vsel %vm5363, %v5453, %v5219
    %v5476 = vsel %vm5364, %v5456, %v5220
    %v5477 = vsel %vm5365, %v5456, %v5221
    %v5478 = vsel %vm5366, %v5459, %v5222
    %v5479 = vsel %vm5367, %v5459, %v5223
    %v5480 = vsel %vm5368, %v5462, %v5224
    %v5481 = vsel %vm5369, %v5462, %v5225
    %v5482 = vsel %vm5370, %v5465, %v5226
    %v5483 = vsel %vm5371, %v5465, %v5227
    %v5484 = vsel %vm5372, %v5468, %v5228
    %v5485 = vsel %vm5373, %v5468, %v5229
    %v5486 = vsel %vm5374, %v5471, %v5230
    %v5487 = vsel %vm5375, %v5471, %v5231
    %v5488 = vsel %vm5376, %v5450, %v5232
    %v5489 = vsel %vm5377, %v5450, %v5233
    %v5490 = vsel %vm5378, %v5453, %v5234
    %v5491 = vsel %vm5379, %v5453, %v5235
    %v5492 = vsel %vm5380, %v5456, %v5236
    %v5493 = vsel %vm5381, %v5456, %v5237
    %v5494 = vsel %vm5382, %v5459, %v5238
    %v5495 = vsel %vm5383, %v5459, %v5239
    %v5496 = vsel %vm5384, %v5462, %v5240
    %v5497 = vsel %vm5385, %v5462, %v5241
    %v5498 = vsel %vm5386, %v5465, %v5242
    %v5499 = vsel %vm5387, %v5465, %v5243
    %v5500 = vsel %vm5388, %v5468, %v5244
    %v5501 = vsel %vm5389, %v5468, %v5245
    %v5502 = vsel %vm5390, %v5471, %v5246
    %v5503 = vsel %vm5391, %v5471, %v5247
    %5504 = vset.pattern.permute.xlu0 82
    %5505 = vperm.xlu0 %5504, %v72
    %v5506 = vpop.permute.xlu0 %5505
    %5507 = vset.pattern.permute.xlu0 82
    %5508 = vperm.xlu0 %5507, %v73
    %v5509 = vpop.permute.xlu0 %5508
    %5510 = vset.pattern.permute.xlu0 82
    %5511 = vperm.xlu0 %5510, %v74
    %v5512 = vpop.permute.xlu0 %5511
    %5513 = vset.pattern.permute.xlu0 82
    %5514 = vperm.xlu0 %5513, %v75
    %v5515 = vpop.permute.xlu0 %5514
    %5516 = vset.pattern.permute.xlu0 82
    %5517 = vperm.xlu0 %5516, %v76
    %v5518 = vpop.permute.xlu0 %5517
    %5519 = vset.pattern.permute.xlu0 82
    %5520 = vperm.xlu0 %5519, %v77
    %v5521 = vpop.permute.xlu0 %5520
    %5522 = vset.pattern.permute.xlu0 82
    %5523 = vperm.xlu0 %5522, %v78
    %v5524 = vpop.permute.xlu0 %5523
    %5525 = vset.pattern.permute.xlu0 82
    %5526 = vperm.xlu0 %5525, %v79
    %v5527 = vpop.permute.xlu0 %5526
    %v5528 = vsel %vm5360, %v5506, %v5272
    %v5529 = vsel %vm5361, %v5506, %v5273
    %v5530 = vsel %vm5362, %v5509, %v5274
    %v5531 = vsel %vm5363, %v5509, %v5275
    %v5532 = vsel %vm5364, %v5512, %v5276
    %v5533 = vsel %vm5365, %v5512, %v5277
    %v5534 = vsel %vm5366, %v5515, %v5278
    %v5535 = vsel %vm5367, %v5515, %v5279
    %v5536 = vsel %vm5368, %v5518, %v5280
    %v5537 = vsel %vm5369, %v5518, %v5281
    %v5538 = vsel %vm5370, %v5521, %v5282
    %v5539 = vsel %vm5371, %v5521, %v5283
    %v5540 = vsel %vm5372, %v5524, %v5284
    %v5541 = vsel %vm5373, %v5524, %v5285
    %v5542 = vsel %vm5374, %v5527, %v5286
    %v5543 = vsel %vm5375, %v5527, %v5287
    %v5544 = vsel %vm5376, %v5506, %v5288
    %v5545 = vsel %vm5377, %v5506, %v5289
    %v5546 = vsel %vm5378, %v5509, %v5290
    %v5547 = vsel %vm5379, %v5509, %v5291
    %v5548 = vsel %vm5380, %v5512, %v5292
    %v5549 = vsel %vm5381, %v5512, %v5293
    %v5550 = vsel %vm5382, %v5515, %v5294
    %v5551 = vsel %vm5383, %v5515, %v5295
    %v5552 = vsel %vm5384, %v5518, %v5296
    %v5553 = vsel %vm5385, %v5518, %v5297
    %v5554 = vsel %vm5386, %v5521, %v5298
    %v5555 = vsel %vm5387, %v5521, %v5299
    %v5556 = vsel %vm5388, %v5524, %v5300
    %v5557 = vsel %vm5389, %v5524, %v5301
    %v5558 = vsel %vm5390, %v5527, %v5302
    %v5559 = vsel %vm5391, %v5527, %v5303
    %5560 = vset.pattern.permute.xlu0 83
    %5561 = vperm.xlu0 %5560, %v72
    %v5562 = vpop.permute.xlu0 %5561
    %5563 = vset.pattern.permute.xlu0 83
    %5564 = vperm.xlu0 %5563, %v73
    %v5565 = vpop.permute.xlu0 %5564
    %5566 = vset.pattern.permute.xlu0 83
    %5567 = vperm.xlu0 %5566, %v74
    %v5568 = vpop.permute.xlu0 %5567
    %5569 = vset.pattern.permute.xlu0 83
    %5570 = vperm.xlu0 %5569, %v75
    %v5571 = vpop.permute.xlu0 %5570
    %5572 = vset.pattern.permute.xlu0 83
    %5573 = vperm.xlu0 %5572, %v76
    %v5574 = vpop.permute.xlu0 %5573
    %5575 = vset.pattern.permute.xlu0 83
    %5576 = vperm.xlu0 %5575, %v77
    %v5577 = vpop.permute.xlu0 %5576
    %5578 = vset.pattern.permute.xlu0 83
    %5579 = vperm.xlu0 %5578, %v78
    %v5580 = vpop.permute.xlu0 %5579
    %5581 = vset.pattern.permute.xlu0 83
    %5582 = vperm.xlu0 %5581, %v79
    %v5583 = vpop.permute.xlu0 %5582
    %v5584 = vsel %vm5360, %v5562, %v5328
    %v5585 = vsel %vm5361, %v5562, %v5329
    %v5586 = vsel %vm5362, %v5565, %v5330
    %v5587 = vsel %vm5363, %v5565, %v5331
    %v5588 = vsel %vm5364, %v5568, %v5332
    %v5589 = vsel %vm5365, %v5568, %v5333
    %v5590 = vsel %vm5366, %v5571, %v5334
    %v5591 = vsel %vm5367, %v5571, %v5335
    %v5592 = vsel %vm5368, %v5574, %v5336
    %v5593 = vsel %vm5369, %v5574, %v5337
    %v5594 = vsel %vm5370, %v5577, %v5338
    %v5595 = vsel %vm5371, %v5577, %v5339
    %v5596 = vsel %vm5372, %v5580, %v5340
    %v5597 = vsel %vm5373, %v5580, %v5341
    %v5598 = vsel %vm5374, %v5583, %v5342
    %v5599 = vsel %vm5375, %v5583, %v5343
    %v5600 = vsel %vm5376, %v5562, %v5344
    %v5601 = vsel %vm5377, %v5562, %v5345
    %v5602 = vsel %vm5378, %v5565, %v5346
    %v5603 = vsel %vm5379, %v5565, %v5347
    %v5604 = vsel %vm5380, %v5568, %v5348
    %v5605 = vsel %vm5381, %v5568, %v5349
    %v5606 = vsel %vm5382, %v5571, %v5350
    %v5607 = vsel %vm5383, %v5571, %v5351
    %v5608 = vsel %vm5384, %v5574, %v5352
    %v5609 = vsel %vm5385, %v5574, %v5353
    %v5610 = vsel %vm5386, %v5577, %v5354
    %v5611 = vsel %vm5387, %v5577, %v5355
    %v5612 = vsel %vm5388, %v5580, %v5356
    %v5613 = vsel %vm5389, %v5580, %v5357
    %v5614 = vsel %vm5390, %v5583, %v5358
    %v5615 = vsel %vm5391, %v5583, %v5359
    %vm5616 = vcmp.ge.f32.partialorder %v80, 23.0
    %vm5617 = vcmp.ge.f32.partialorder %v81, 23.0
    %vm5618 = vcmp.ge.f32.partialorder %v82, 23.0
    %vm5619 = vcmp.ge.f32.partialorder %v83, 23.0
    %vm5620 = vcmp.ge.f32.partialorder %v84, 23.0
    %vm5621 = vcmp.ge.f32.partialorder %v85, 23.0
    %vm5622 = vcmp.ge.f32.partialorder %v86, 23.0
    %vm5623 = vcmp.ge.f32.partialorder %v87, 23.0
    %vm5624 = vcmp.ge.f32.partialorder %v88, 23.0
    %vm5625 = vcmp.ge.f32.partialorder %v89, 23.0
    %vm5626 = vcmp.ge.f32.partialorder %v90, 23.0
    %vm5627 = vcmp.ge.f32.partialorder %v91, 23.0
    %vm5628 = vcmp.ge.f32.partialorder %v92, 23.0
    %vm5629 = vcmp.ge.f32.partialorder %v93, 23.0
    %vm5630 = vcmp.ge.f32.partialorder %v94, 23.0
    %vm5631 = vcmp.ge.f32.partialorder %v95, 23.0
    %vm5632 = vcmp.ge.f32.partialorder %v96, 23.0
    %vm5633 = vcmp.ge.f32.partialorder %v97, 23.0
    %vm5634 = vcmp.ge.f32.partialorder %v98, 23.0
    %vm5635 = vcmp.ge.f32.partialorder %v99, 23.0
    %vm5636 = vcmp.ge.f32.partialorder %v100, 23.0
    %vm5637 = vcmp.ge.f32.partialorder %v101, 23.0
    %vm5638 = vcmp.ge.f32.partialorder %v102, 23.0
    %vm5639 = vcmp.ge.f32.partialorder %v103, 23.0
    %vm5640 = vcmp.ge.f32.partialorder %v104, 23.0
    %vm5641 = vcmp.ge.f32.partialorder %v105, 23.0
    %vm5642 = vcmp.ge.f32.partialorder %v106, 23.0
    %vm5643 = vcmp.ge.f32.partialorder %v107, 23.0
    %vm5644 = vcmp.ge.f32.partialorder %v108, 23.0
    %vm5645 = vcmp.ge.f32.partialorder %v109, 23.0
    %vm5646 = vcmp.ge.f32.partialorder %v110, 23.0
    %vm5647 = vcmp.ge.f32.partialorder %v111, 23.0
    %5648 = vset.pattern.permute.xlu0 84
    %5649 = vperm.xlu0 %5648, %v72
    %v5650 = vpop.permute.xlu0 %5649
    %5651 = vset.pattern.permute.xlu0 84
    %5652 = vperm.xlu0 %5651, %v73
    %v5653 = vpop.permute.xlu0 %5652
    %5654 = vset.pattern.permute.xlu0 84
    %5655 = vperm.xlu0 %5654, %v74
    %v5656 = vpop.permute.xlu0 %5655
    %5657 = vset.pattern.permute.xlu0 84
    %5658 = vperm.xlu0 %5657, %v75
    %v5659 = vpop.permute.xlu0 %5658
    %5660 = vset.pattern.permute.xlu0 84
    %5661 = vperm.xlu0 %5660, %v76
    %v5662 = vpop.permute.xlu0 %5661
    %5663 = vset.pattern.permute.xlu0 84
    %5664 = vperm.xlu0 %5663, %v77
    %v5665 = vpop.permute.xlu0 %5664
    %5666 = vset.pattern.permute.xlu0 84
    %5667 = vperm.xlu0 %5666, %v78
    %v5668 = vpop.permute.xlu0 %5667
    %5669 = vset.pattern.permute.xlu0 84
    %5670 = vperm.xlu0 %5669, %v79
    %v5671 = vpop.permute.xlu0 %5670
    %v5672 = vsel %vm5616, %v5650, %v5416
    %v5673 = vsel %vm5617, %v5650, %v5417
    %v5674 = vsel %vm5618, %v5653, %v5418
    %v5675 = vsel %vm5619, %v5653, %v5419
    %v5676 = vsel %vm5620, %v5656, %v5420
    %v5677 = vsel %vm5621, %v5656, %v5421
    %v5678 = vsel %vm5622, %v5659, %v5422
    %v5679 = vsel %vm5623, %v5659, %v5423
    %v5680 = vsel %vm5624, %v5662, %v5424
    %v5681 = vsel %vm5625, %v5662, %v5425
    %v5682 = vsel %vm5626, %v5665, %v5426
    %v5683 = vsel %vm5627, %v5665, %v5427
    %v5684 = vsel %vm5628, %v5668, %v5428
    %v5685 = vsel %vm5629, %v5668, %v5429
    %v5686 = vsel %vm5630, %v5671, %v5430
    %v5687 = vsel %vm5631, %v5671, %v5431
    %v5688 = vsel %vm5632, %v5650, %v5432
    %v5689 = vsel %vm5633, %v5650, %v5433
    %v5690 = vsel %vm5634, %v5653, %v5434
    %v5691 = vsel %vm5635, %v5653, %v5435
    %v5692 = vsel %vm5636, %v5656, %v5436
    %v5693 = vsel %vm5637, %v5656, %v5437
    %v5694 = vsel %vm5638, %v5659, %v5438
    %v5695 = vsel %vm5639, %v5659, %v5439
    %v5696 = vsel %vm5640, %v5662, %v5440
    %v5697 = vsel %vm5641, %v5662, %v5441
    %v5698 = vsel %vm5642, %v5665, %v5442
    %v5699 = vsel %vm5643, %v5665, %v5443
    %v5700 = vsel %vm5644, %v5668, %v5444
    %v5701 = vsel %vm5645, %v5668, %v5445
    %v5702 = vsel %vm5646, %v5671, %v5446
    %v5703 = vsel %vm5647, %v5671, %v5447
    %5704 = vset.pattern.permute.xlu0 85
    %5705 = vperm.xlu0 %5704, %v72
    %v5706 = vpop.permute.xlu0 %5705
    %5707 = vset.pattern.permute.xlu0 85
    %5708 = vperm.xlu0 %5707, %v73
    %v5709 = vpop.permute.xlu0 %5708
    %5710 = vset.pattern.permute.xlu0 85
    %5711 = vperm.xlu0 %5710, %v74
    %v5712 = vpop.permute.xlu0 %5711
    %5713 = vset.pattern.permute.xlu0 85
    %5714 = vperm.xlu0 %5713, %v75
    %v5715 = vpop.permute.xlu0 %5714
    %5716 = vset.pattern.permute.xlu0 85
    %5717 = vperm.xlu0 %5716, %v76
    %v5718 = vpop.permute.xlu0 %5717
    %5719 = vset.pattern.permute.xlu0 85
    %5720 = vperm.xlu0 %5719, %v77
    %v5721 = vpop.permute.xlu0 %5720
    %5722 = vset.pattern.permute.xlu0 85
    %5723 = vperm.xlu0 %5722, %v78
    %v5724 = vpop.permute.xlu0 %5723
    %5725 = vset.pattern.permute.xlu0 85
    %5726 = vperm.xlu0 %5725, %v79
    %v5727 = vpop.permute.xlu0 %5726
    %v5728 = vsel %vm5616, %v5706, %v5472
    %v5729 = vsel %vm5617, %v5706, %v5473
    %v5730 = vsel %vm5618, %v5709, %v5474
    %v5731 = vsel %vm5619, %v5709, %v5475
    %v5732 = vsel %vm5620, %v5712, %v5476
    %v5733 = vsel %vm5621, %v5712, %v5477
    %v5734 = vsel %vm5622, %v5715, %v5478
    %v5735 = vsel %vm5623, %v5715, %v5479
    %v5736 = vsel %vm5624, %v5718, %v5480
    %v5737 = vsel %vm5625, %v5718, %v5481
    %v5738 = vsel %vm5626, %v5721, %v5482
    %v5739 = vsel %vm5627, %v5721, %v5483
    %v5740 = vsel %vm5628, %v5724, %v5484
    %v5741 = vsel %vm5629, %v5724, %v5485
    %v5742 = vsel %vm5630, %v5727, %v5486
    %v5743 = vsel %vm5631, %v5727, %v5487
    %v5744 = vsel %vm5632, %v5706, %v5488
    %v5745 = vsel %vm5633, %v5706, %v5489
    %v5746 = vsel %vm5634, %v5709, %v5490
    %v5747 = vsel %vm5635, %v5709, %v5491
    %v5748 = vsel %vm5636, %v5712, %v5492
    %v5749 = vsel %vm5637, %v5712, %v5493
    %v5750 = vsel %vm5638, %v5715, %v5494
    %v5751 = vsel %vm5639, %v5715, %v5495
    %v5752 = vsel %vm5640, %v5718, %v5496
    %v5753 = vsel %vm5641, %v5718, %v5497
    %v5754 = vsel %vm5642, %v5721, %v5498
    %v5755 = vsel %vm5643, %v5721, %v5499
    %v5756 = vsel %vm5644, %v5724, %v5500
    %v5757 = vsel %vm5645, %v5724, %v5501
    %v5758 = vsel %vm5646, %v5727, %v5502
    %v5759 = vsel %vm5647, %v5727, %v5503
    %5760 = vset.pattern.permute.xlu0 86
    %5761 = vperm.xlu0 %5760, %v72
    %v5762 = vpop.permute.xlu0 %5761
    %5763 = vset.pattern.permute.xlu0 86
    %5764 = vperm.xlu0 %5763, %v73
    %v5765 = vpop.permute.xlu0 %5764
    %5766 = vset.pattern.permute.xlu0 86
    %5767 = vperm.xlu0 %5766, %v74
    %v5768 = vpop.permute.xlu0 %5767
    %5769 = vset.pattern.permute.xlu0 86
    %5770 = vperm.xlu0 %5769, %v75
    %v5771 = vpop.permute.xlu0 %5770
    %5772 = vset.pattern.permute.xlu0 86
    %5773 = vperm.xlu0 %5772, %v76
    %v5774 = vpop.permute.xlu0 %5773
    %5775 = vset.pattern.permute.xlu0 86
    %5776 = vperm.xlu0 %5775, %v77
    %v5777 = vpop.permute.xlu0 %5776
    %5778 = vset.pattern.permute.xlu0 86
    %5779 = vperm.xlu0 %5778, %v78
    %v5780 = vpop.permute.xlu0 %5779
    %5781 = vset.pattern.permute.xlu0 86
    %5782 = vperm.xlu0 %5781, %v79
    %v5783 = vpop.permute.xlu0 %5782
    %v5784 = vsel %vm5616, %v5762, %v5528
    %v5785 = vsel %vm5617, %v5762, %v5529
    %v5786 = vsel %vm5618, %v5765, %v5530
    %v5787 = vsel %vm5619, %v5765, %v5531
    %v5788 = vsel %vm5620, %v5768, %v5532
    %v5789 = vsel %vm5621, %v5768, %v5533
    %v5790 = vsel %vm5622, %v5771, %v5534
    %v5791 = vsel %vm5623, %v5771, %v5535
    %v5792 = vsel %vm5624, %v5774, %v5536
    %v5793 = vsel %vm5625, %v5774, %v5537
    %v5794 = vsel %vm5626, %v5777, %v5538
    %v5795 = vsel %vm5627, %v5777, %v5539
    %v5796 = vsel %vm5628, %v5780, %v5540
    %v5797 = vsel %vm5629, %v5780, %v5541
    %v5798 = vsel %vm5630, %v5783, %v5542
    %v5799 = vsel %vm5631, %v5783, %v5543
    %v5800 = vsel %vm5632, %v5762, %v5544
    %v5801 = vsel %vm5633, %v5762, %v5545
    %v5802 = vsel %vm5634, %v5765, %v5546
    %v5803 = vsel %vm5635, %v5765, %v5547
    %v5804 = vsel %vm5636, %v5768, %v5548
    %v5805 = vsel %vm5637, %v5768, %v5549
    %v5806 = vsel %vm5638, %v5771, %v5550
    %v5807 = vsel %vm5639, %v5771, %v5551
    %v5808 = vsel %vm5640, %v5774, %v5552
    %v5809 = vsel %vm5641, %v5774, %v5553
    %v5810 = vsel %vm5642, %v5777, %v5554
    %v5811 = vsel %vm5643, %v5777, %v5555
    %v5812 = vsel %vm5644, %v5780, %v5556
    %v5813 = vsel %vm5645, %v5780, %v5557
    %v5814 = vsel %vm5646, %v5783, %v5558
    %v5815 = vsel %vm5647, %v5783, %v5559
    %5816 = vset.pattern.permute.xlu0 87
    %5817 = vperm.xlu0 %5816, %v72
    %v5818 = vpop.permute.xlu0 %5817
    %5819 = vset.pattern.permute.xlu0 87
    %5820 = vperm.xlu0 %5819, %v73
    %v5821 = vpop.permute.xlu0 %5820
    %5822 = vset.pattern.permute.xlu0 87
    %5823 = vperm.xlu0 %5822, %v74
    %v5824 = vpop.permute.xlu0 %5823
    %5825 = vset.pattern.permute.xlu0 87
    %5826 = vperm.xlu0 %5825, %v75
    %v5827 = vpop.permute.xlu0 %5826
    %5828 = vset.pattern.permute.xlu0 87
    %5829 = vperm.xlu0 %5828, %v76
    %v5830 = vpop.permute.xlu0 %5829
    %5831 = vset.pattern.permute.xlu0 87
    %5832 = vperm.xlu0 %5831, %v77
    %v5833 = vpop.permute.xlu0 %5832
    %5834 = vset.pattern.permute.xlu0 87
    %5835 = vperm.xlu0 %5834, %v78
    %v5836 = vpop.permute.xlu0 %5835
    %5837 = vset.pattern.permute.xlu0 87
    %5838 = vperm.xlu0 %5837, %v79
    %v5839 = vpop.permute.xlu0 %5838
    %v5840 = vsel %vm5616, %v5818, %v5584
    %v5841 = vsel %vm5617, %v5818, %v5585
    %v5842 = vsel %vm5618, %v5821, %v5586
    %v5843 = vsel %vm5619, %v5821, %v5587
    %v5844 = vsel %vm5620, %v5824, %v5588
    %v5845 = vsel %vm5621, %v5824, %v5589
    %v5846 = vsel %vm5622, %v5827, %v5590
    %v5847 = vsel %vm5623, %v5827, %v5591
    %v5848 = vsel %vm5624, %v5830, %v5592
    %v5849 = vsel %vm5625, %v5830, %v5593
    %v5850 = vsel %vm5626, %v5833, %v5594
    %v5851 = vsel %vm5627, %v5833, %v5595
    %v5852 = vsel %vm5628, %v5836, %v5596
    %v5853 = vsel %vm5629, %v5836, %v5597
    %v5854 = vsel %vm5630, %v5839, %v5598
    %v5855 = vsel %vm5631, %v5839, %v5599
    %v5856 = vsel %vm5632, %v5818, %v5600
    %v5857 = vsel %vm5633, %v5818, %v5601
    %v5858 = vsel %vm5634, %v5821, %v5602
    %v5859 = vsel %vm5635, %v5821, %v5603
    %v5860 = vsel %vm5636, %v5824, %v5604
    %v5861 = vsel %vm5637, %v5824, %v5605
    %v5862 = vsel %vm5638, %v5827, %v5606
    %v5863 = vsel %vm5639, %v5827, %v5607
    %v5864 = vsel %vm5640, %v5830, %v5608
    %v5865 = vsel %vm5641, %v5830, %v5609
    %v5866 = vsel %vm5642, %v5833, %v5610
    %v5867 = vsel %vm5643, %v5833, %v5611
    %v5868 = vsel %vm5644, %v5836, %v5612
    %v5869 = vsel %vm5645, %v5836, %v5613
    %v5870 = vsel %vm5646, %v5839, %v5614
    %v5871 = vsel %vm5647, %v5839, %v5615
    %vm5872 = vcmp.ge.f32.partialorder %v80, 27.0
    %vm5873 = vcmp.ge.f32.partialorder %v81, 27.0
    %vm5874 = vcmp.ge.f32.partialorder %v82, 27.0
    %vm5875 = vcmp.ge.f32.partialorder %v83, 27.0
    %vm5876 = vcmp.ge.f32.partialorder %v84, 27.0
    %vm5877 = vcmp.ge.f32.partialorder %v85, 27.0
    %vm5878 = vcmp.ge.f32.partialorder %v86, 27.0
    %vm5879 = vcmp.ge.f32.partialorder %v87, 27.0
    %vm5880 = vcmp.ge.f32.partialorder %v88, 27.0
    %vm5881 = vcmp.ge.f32.partialorder %v89, 27.0
    %vm5882 = vcmp.ge.f32.partialorder %v90, 27.0
    %vm5883 = vcmp.ge.f32.partialorder %v91, 27.0
    %vm5884 = vcmp.ge.f32.partialorder %v92, 27.0
    %vm5885 = vcmp.ge.f32.partialorder %v93, 27.0
    %vm5886 = vcmp.ge.f32.partialorder %v94, 27.0
    %vm5887 = vcmp.ge.f32.partialorder %v95, 27.0
    %vm5888 = vcmp.ge.f32.partialorder %v96, 27.0
    %vm5889 = vcmp.ge.f32.partialorder %v97, 27.0
    %vm5890 = vcmp.ge.f32.partialorder %v98, 27.0
    %vm5891 = vcmp.ge.f32.partialorder %v99, 27.0
    %vm5892 = vcmp.ge.f32.partialorder %v100, 27.0
    %vm5893 = vcmp.ge.f32.partialorder %v101, 27.0
    %vm5894 = vcmp.ge.f32.partialorder %v102, 27.0
    %vm5895 = vcmp.ge.f32.partialorder %v103, 27.0
    %vm5896 = vcmp.ge.f32.partialorder %v104, 27.0
    %vm5897 = vcmp.ge.f32.partialorder %v105, 27.0
    %vm5898 = vcmp.ge.f32.partialorder %v106, 27.0
    %vm5899 = vcmp.ge.f32.partialorder %v107, 27.0
    %vm5900 = vcmp.ge.f32.partialorder %v108, 27.0
    %vm5901 = vcmp.ge.f32.partialorder %v109, 27.0
    %vm5902 = vcmp.ge.f32.partialorder %v110, 27.0
    %vm5903 = vcmp.ge.f32.partialorder %v111, 27.0
    %5904 = vset.pattern.permute.xlu0 88
    %5905 = vperm.xlu0 %5904, %v72
    %v5906 = vpop.permute.xlu0 %5905
    %5907 = vset.pattern.permute.xlu0 88
    %5908 = vperm.xlu0 %5907, %v73
    %v5909 = vpop.permute.xlu0 %5908
    %5910 = vset.pattern.permute.xlu0 88
    %5911 = vperm.xlu0 %5910, %v74
    %v5912 = vpop.permute.xlu0 %5911
    %5913 = vset.pattern.permute.xlu0 88
    %5914 = vperm.xlu0 %5913, %v75
    %v5915 = vpop.permute.xlu0 %5914
    %5916 = vset.pattern.permute.xlu0 88
    %5917 = vperm.xlu0 %5916, %v76
    %v5918 = vpop.permute.xlu0 %5917
    %5919 = vset.pattern.permute.xlu0 88
    %5920 = vperm.xlu0 %5919, %v77
    %v5921 = vpop.permute.xlu0 %5920
    %5922 = vset.pattern.permute.xlu0 88
    %5923 = vperm.xlu0 %5922, %v78
    %v5924 = vpop.permute.xlu0 %5923
    %5925 = vset.pattern.permute.xlu0 88
    %5926 = vperm.xlu0 %5925, %v79
    %v5927 = vpop.permute.xlu0 %5926
    %v5928 = vsel %vm5872, %v5906, %v5672
    %v5929 = vsel %vm5873, %v5906, %v5673
    %v5930 = vsel %vm5874, %v5909, %v5674
    %v5931 = vsel %vm5875, %v5909, %v5675
    %v5932 = vsel %vm5876, %v5912, %v5676
    %v5933 = vsel %vm5877, %v5912, %v5677
    %v5934 = vsel %vm5878, %v5915, %v5678
    %v5935 = vsel %vm5879, %v5915, %v5679
    %v5936 = vsel %vm5880, %v5918, %v5680
    %v5937 = vsel %vm5881, %v5918, %v5681
    %v5938 = vsel %vm5882, %v5921, %v5682
    %v5939 = vsel %vm5883, %v5921, %v5683
    %v5940 = vsel %vm5884, %v5924, %v5684
    %v5941 = vsel %vm5885, %v5924, %v5685
    %v5942 = vsel %vm5886, %v5927, %v5686
    %v5943 = vsel %vm5887, %v5927, %v5687
    %v5944 = vsel %vm5888, %v5906, %v5688
    %v5945 = vsel %vm5889, %v5906, %v5689
    %v5946 = vsel %vm5890, %v5909, %v5690
    %v5947 = vsel %vm5891, %v5909, %v5691
    %v5948 = vsel %vm5892, %v5912, %v5692
    %v5949 = vsel %vm5893, %v5912, %v5693
    %v5950 = vsel %vm5894, %v5915, %v5694
    %v5951 = vsel %vm5895, %v5915, %v5695
    %v5952 = vsel %vm5896, %v5918, %v5696
    %v5953 = vsel %vm5897, %v5918, %v5697
    %v5954 = vsel %vm5898, %v5921, %v5698
    %v5955 = vsel %vm5899, %v5921, %v5699
    %v5956 = vsel %vm5900, %v5924, %v5700
    %v5957 = vsel %vm5901, %v5924, %v5701
    %v5958 = vsel %vm5902, %v5927, %v5702
    %v5959 = vsel %vm5903, %v5927, %v5703
    %5960 = vset.pattern.permute.xlu0 89
    %5961 = vperm.xlu0 %5960, %v72
    %v5962 = vpop.permute.xlu0 %5961
    %5963 = vset.pattern.permute.xlu0 89
    %5964 = vperm.xlu0 %5963, %v73
    %v5965 = vpop.permute.xlu0 %5964
    %5966 = vset.pattern.permute.xlu0 89
    %5967 = vperm.xlu0 %5966, %v74
    %v5968 = vpop.permute.xlu0 %5967
    %5969 = vset.pattern.permute.xlu0 89
    %5970 = vperm.xlu0 %5969, %v75
    %v5971 = vpop.permute.xlu0 %5970
    %5972 = vset.pattern.permute.xlu0 89
    %5973 = vperm.xlu0 %5972, %v76
    %v5974 = vpop.permute.xlu0 %5973
    %5975 = vset.pattern.permute.xlu0 89
    %5976 = vperm.xlu0 %5975, %v77
    %v5977 = vpop.permute.xlu0 %5976
    %5978 = vset.pattern.permute.xlu0 89
    %5979 = vperm.xlu0 %5978, %v78
    %v5980 = vpop.permute.xlu0 %5979
    %5981 = vset.pattern.permute.xlu0 89
    %5982 = vperm.xlu0 %5981, %v79
    %v5983 = vpop.permute.xlu0 %5982
    %v5984 = vsel %vm5872, %v5962, %v5728
    %v5985 = vsel %vm5873, %v5962, %v5729
    %v5986 = vsel %vm5874, %v5965, %v5730
    %v5987 = vsel %vm5875, %v5965, %v5731
    %v5988 = vsel %vm5876, %v5968, %v5732
    %v5989 = vsel %vm5877, %v5968, %v5733
    %v5990 = vsel %vm5878, %v5971, %v5734
    %v5991 = vsel %vm5879, %v5971, %v5735
    %v5992 = vsel %vm5880, %v5974, %v5736
    %v5993 = vsel %vm5881, %v5974, %v5737
    %v5994 = vsel %vm5882, %v5977, %v5738
    %v5995 = vsel %vm5883, %v5977, %v5739
    %v5996 = vsel %vm5884, %v5980, %v5740
    %v5997 = vsel %vm5885, %v5980, %v5741
    %v5998 = vsel %vm5886, %v5983, %v5742
    %v5999 = vsel %vm5887, %v5983, %v5743
    %v6000 = vsel %vm5888, %v5962, %v5744
    %v6001 = vsel %vm5889, %v5962, %v5745
    %v6002 = vsel %vm5890, %v5965, %v5746
    %v6003 = vsel %vm5891, %v5965, %v5747
    %v6004 = vsel %vm5892, %v5968, %v5748
    %v6005 = vsel %vm5893, %v5968, %v5749
    %v6006 = vsel %vm5894, %v5971, %v5750
    %v6007 = vsel %vm5895, %v5971, %v5751
    %v6008 = vsel %vm5896, %v5974, %v5752
    %v6009 = vsel %vm5897, %v5974, %v5753
    %v6010 = vsel %vm5898, %v5977, %v5754
    %v6011 = vsel %vm5899, %v5977, %v5755
    %v6012 = vsel %vm5900, %v5980, %v5756
    %v6013 = vsel %vm5901, %v5980, %v5757
    %v6014 = vsel %vm5902, %v5983, %v5758
    %v6015 = vsel %vm5903, %v5983, %v5759
    %6016 = vset.pattern.permute.xlu0 90
    %6017 = vperm.xlu0 %6016, %v72
    %v6018 = vpop.permute.xlu0 %6017
    %6019 = vset.pattern.permute.xlu0 90
    %6020 = vperm.xlu0 %6019, %v73
    %v6021 = vpop.permute.xlu0 %6020
    %6022 = vset.pattern.permute.xlu0 90
    %6023 = vperm.xlu0 %6022, %v74
    %v6024 = vpop.permute.xlu0 %6023
    %6025 = vset.pattern.permute.xlu0 90
    %6026 = vperm.xlu0 %6025, %v75
    %v6027 = vpop.permute.xlu0 %6026
    %6028 = vset.pattern.permute.xlu0 90
    %6029 = vperm.xlu0 %6028, %v76
    %v6030 = vpop.permute.xlu0 %6029
    %6031 = vset.pattern.permute.xlu0 90
    %6032 = vperm.xlu0 %6031, %v77
    %v6033 = vpop.permute.xlu0 %6032
    %6034 = vset.pattern.permute.xlu0 90
    %6035 = vperm.xlu0 %6034, %v78
    %v6036 = vpop.permute.xlu0 %6035
    %6037 = vset.pattern.permute.xlu0 90
    %6038 = vperm.xlu0 %6037, %v79
    %v6039 = vpop.permute.xlu0 %6038
    %v6040 = vsel %vm5872, %v6018, %v5784
    %v6041 = vsel %vm5873, %v6018, %v5785
    %v6042 = vsel %vm5874, %v6021, %v5786
    %v6043 = vsel %vm5875, %v6021, %v5787
    %v6044 = vsel %vm5876, %v6024, %v5788
    %v6045 = vsel %vm5877, %v6024, %v5789
    %v6046 = vsel %vm5878, %v6027, %v5790
    %v6047 = vsel %vm5879, %v6027, %v5791
    %v6048 = vsel %vm5880, %v6030, %v5792
    %v6049 = vsel %vm5881, %v6030, %v5793
    %v6050 = vsel %vm5882, %v6033, %v5794
    %v6051 = vsel %vm5883, %v6033, %v5795
    %v6052 = vsel %vm5884, %v6036, %v5796
    %v6053 = vsel %vm5885, %v6036, %v5797
    %v6054 = vsel %vm5886, %v6039, %v5798
    %v6055 = vsel %vm5887, %v6039, %v5799
    %v6056 = vsel %vm5888, %v6018, %v5800
    %v6057 = vsel %vm5889, %v6018, %v5801
    %v6058 = vsel %vm5890, %v6021, %v5802
    %v6059 = vsel %vm5891, %v6021, %v5803
    %v6060 = vsel %vm5892, %v6024, %v5804
    %v6061 = vsel %vm5893, %v6024, %v5805
    %v6062 = vsel %vm5894, %v6027, %v5806
    %v6063 = vsel %vm5895, %v6027, %v5807
    %v6064 = vsel %vm5896, %v6030, %v5808
    %v6065 = vsel %vm5897, %v6030, %v5809
    %v6066 = vsel %vm5898, %v6033, %v5810
    %v6067 = vsel %vm5899, %v6033, %v5811
    %v6068 = vsel %vm5900, %v6036, %v5812
    %v6069 = vsel %vm5901, %v6036, %v5813
    %v6070 = vsel %vm5902, %v6039, %v5814
    %v6071 = vsel %vm5903, %v6039, %v5815
    %6072 = vset.pattern.permute.xlu0 91
    %6073 = vperm.xlu0 %6072, %v72
    %v6074 = vpop.permute.xlu0 %6073
    %6075 = vset.pattern.permute.xlu0 91
    %6076 = vperm.xlu0 %6075, %v73
    %v6077 = vpop.permute.xlu0 %6076
    %6078 = vset.pattern.permute.xlu0 91
    %6079 = vperm.xlu0 %6078, %v74
    %v6080 = vpop.permute.xlu0 %6079
    %6081 = vset.pattern.permute.xlu0 91
    %6082 = vperm.xlu0 %6081, %v75
    %v6083 = vpop.permute.xlu0 %6082
    %6084 = vset.pattern.permute.xlu0 91
    %6085 = vperm.xlu0 %6084, %v76
    %v6086 = vpop.permute.xlu0 %6085
    %6087 = vset.pattern.permute.xlu0 91
    %6088 = vperm.xlu0 %6087, %v77
    %v6089 = vpop.permute.xlu0 %6088
    %6090 = vset.pattern.permute.xlu0 91
    %6091 = vperm.xlu0 %6090, %v78
    %v6092 = vpop.permute.xlu0 %6091
    %6093 = vset.pattern.permute.xlu0 91
    %6094 = vperm.xlu0 %6093, %v79
    %v6095 = vpop.permute.xlu0 %6094
    %v6096 = vsel %vm5872, %v6074, %v5840
    %v6097 = vsel %vm5873, %v6074, %v5841
    %v6098 = vsel %vm5874, %v6077, %v5842
    %v6099 = vsel %vm5875, %v6077, %v5843
    %v6100 = vsel %vm5876, %v6080, %v5844
    %v6101 = vsel %vm5877, %v6080, %v5845
    %v6102 = vsel %vm5878, %v6083, %v5846
    %v6103 = vsel %vm5879, %v6083, %v5847
    %v6104 = vsel %vm5880, %v6086, %v5848
    %v6105 = vsel %vm5881, %v6086, %v5849
    %v6106 = vsel %vm5882, %v6089, %v5850
    %v6107 = vsel %vm5883, %v6089, %v5851
    %v6108 = vsel %vm5884, %v6092, %v5852
    %v6109 = vsel %vm5885, %v6092, %v5853
    %v6110 = vsel %vm5886, %v6095, %v5854
    %v6111 = vsel %vm5887, %v6095, %v5855
    %v6112 = vsel %vm5888, %v6074, %v5856
    %v6113 = vsel %vm5889, %v6074, %v5857
    %v6114 = vsel %vm5890, %v6077, %v5858
    %v6115 = vsel %vm5891, %v6077, %v5859
    %v6116 = vsel %vm5892, %v6080, %v5860
    %v6117 = vsel %vm5893, %v6080, %v5861
    %v6118 = vsel %vm5894, %v6083, %v5862
    %v6119 = vsel %vm5895, %v6083, %v5863
    %v6120 = vsel %vm5896, %v6086, %v5864
    %v6121 = vsel %vm5897, %v6086, %v5865
    %v6122 = vsel %vm5898, %v6089, %v5866
    %v6123 = vsel %vm5899, %v6089, %v5867
    %v6124 = vsel %vm5900, %v6092, %v5868
    %v6125 = vsel %vm5901, %v6092, %v5869
    %v6126 = vsel %vm5902, %v6095, %v5870
    %v6127 = vsel %vm5903, %v6095, %v5871
    %vm6128 = vcmp.ge.f32.partialorder %v80, 31.0
    %vm6129 = vcmp.ge.f32.partialorder %v81, 31.0
    %vm6130 = vcmp.ge.f32.partialorder %v82, 31.0
    %vm6131 = vcmp.ge.f32.partialorder %v83, 31.0
    %vm6132 = vcmp.ge.f32.partialorder %v84, 31.0
    %vm6133 = vcmp.ge.f32.partialorder %v85, 31.0
    %vm6134 = vcmp.ge.f32.partialorder %v86, 31.0
    %vm6135 = vcmp.ge.f32.partialorder %v87, 31.0
    %vm6136 = vcmp.ge.f32.partialorder %v88, 31.0
    %vm6137 = vcmp.ge.f32.partialorder %v89, 31.0
    %vm6138 = vcmp.ge.f32.partialorder %v90, 31.0
    %vm6139 = vcmp.ge.f32.partialorder %v91, 31.0
    %vm6140 = vcmp.ge.f32.partialorder %v92, 31.0
    %vm6141 = vcmp.ge.f32.partialorder %v93, 31.0
    %vm6142 = vcmp.ge.f32.partialorder %v94, 31.0
    %vm6143 = vcmp.ge.f32.partialorder %v95, 31.0
    %vm6144 = vcmp.ge.f32.partialorder %v96, 31.0
    %vm6145 = vcmp.ge.f32.partialorder %v97, 31.0
    %vm6146 = vcmp.ge.f32.partialorder %v98, 31.0
    %vm6147 = vcmp.ge.f32.partialorder %v99, 31.0
    %vm6148 = vcmp.ge.f32.partialorder %v100, 31.0
    %vm6149 = vcmp.ge.f32.partialorder %v101, 31.0
    %vm6150 = vcmp.ge.f32.partialorder %v102, 31.0
    %vm6151 = vcmp.ge.f32.partialorder %v103, 31.0
    %vm6152 = vcmp.ge.f32.partialorder %v104, 31.0
    %vm6153 = vcmp.ge.f32.partialorder %v105, 31.0
    %vm6154 = vcmp.ge.f32.partialorder %v106, 31.0
    %vm6155 = vcmp.ge.f32.partialorder %v107, 31.0
    %vm6156 = vcmp.ge.f32.partialorder %v108, 31.0
    %vm6157 = vcmp.ge.f32.partialorder %v109, 31.0
    %vm6158 = vcmp.ge.f32.partialorder %v110, 31.0
    %vm6159 = vcmp.ge.f32.partialorder %v111, 31.0
    %6160 = vset.pattern.permute.xlu0 92
    %6161 = vperm.xlu0 %6160, %v72
    %v6162 = vpop.permute.xlu0 %6161
    %6163 = vset.pattern.permute.xlu0 92
    %6164 = vperm.xlu0 %6163, %v73
    %v6165 = vpop.permute.xlu0 %6164
    %6166 = vset.pattern.permute.xlu0 92
    %6167 = vperm.xlu0 %6166, %v74
    %v6168 = vpop.permute.xlu0 %6167
    %6169 = vset.pattern.permute.xlu0 92
    %6170 = vperm.xlu0 %6169, %v75
    %v6171 = vpop.permute.xlu0 %6170
    %6172 = vset.pattern.permute.xlu0 92
    %6173 = vperm.xlu0 %6172, %v76
    %v6174 = vpop.permute.xlu0 %6173
    %6175 = vset.pattern.permute.xlu0 92
    %6176 = vperm.xlu0 %6175, %v77
    %v6177 = vpop.permute.xlu0 %6176
    %6178 = vset.pattern.permute.xlu0 92
    %6179 = vperm.xlu0 %6178, %v78
    %v6180 = vpop.permute.xlu0 %6179
    %6181 = vset.pattern.permute.xlu0 92
    %6182 = vperm.xlu0 %6181, %v79
    %v6183 = vpop.permute.xlu0 %6182
    %v6184 = vsel %vm6128, %v6162, %v5928
    %v6185 = vsel %vm6129, %v6162, %v5929
    %v6186 = vsel %vm6130, %v6165, %v5930
    %v6187 = vsel %vm6131, %v6165, %v5931
    %v6188 = vsel %vm6132, %v6168, %v5932
    %v6189 = vsel %vm6133, %v6168, %v5933
    %v6190 = vsel %vm6134, %v6171, %v5934
    %v6191 = vsel %vm6135, %v6171, %v5935
    %v6192 = vsel %vm6136, %v6174, %v5936
    %v6193 = vsel %vm6137, %v6174, %v5937
    %v6194 = vsel %vm6138, %v6177, %v5938
    %v6195 = vsel %vm6139, %v6177, %v5939
    %v6196 = vsel %vm6140, %v6180, %v5940
    %v6197 = vsel %vm6141, %v6180, %v5941
    %v6198 = vsel %vm6142, %v6183, %v5942
    %v6199 = vsel %vm6143, %v6183, %v5943
    %v6200 = vsel %vm6144, %v6162, %v5944
    %v6201 = vsel %vm6145, %v6162, %v5945
    %v6202 = vsel %vm6146, %v6165, %v5946
    %v6203 = vsel %vm6147, %v6165, %v5947
    %v6204 = vsel %vm6148, %v6168, %v5948
    %v6205 = vsel %vm6149, %v6168, %v5949
    %v6206 = vsel %vm6150, %v6171, %v5950
    %v6207 = vsel %vm6151, %v6171, %v5951
    %v6208 = vsel %vm6152, %v6174, %v5952
    %v6209 = vsel %vm6153, %v6174, %v5953
    %v6210 = vsel %vm6154, %v6177, %v5954
    %v6211 = vsel %vm6155, %v6177, %v5955
    %v6212 = vsel %vm6156, %v6180, %v5956
    %v6213 = vsel %vm6157, %v6180, %v5957
    %v6214 = vsel %vm6158, %v6183, %v5958
    %v6215 = vsel %vm6159, %v6183, %v5959
    %6216 = vset.pattern.permute.xlu0 93
    %6217 = vperm.xlu0 %6216, %v72
    %v6218 = vpop.permute.xlu0 %6217
    %6219 = vset.pattern.permute.xlu0 93
    %6220 = vperm.xlu0 %6219, %v73
    %v6221 = vpop.permute.xlu0 %6220
    %6222 = vset.pattern.permute.xlu0 93
    %6223 = vperm.xlu0 %6222, %v74
    %v6224 = vpop.permute.xlu0 %6223
    %6225 = vset.pattern.permute.xlu0 93
    %6226 = vperm.xlu0 %6225, %v75
    %v6227 = vpop.permute.xlu0 %6226
    %6228 = vset.pattern.permute.xlu0 93
    %6229 = vperm.xlu0 %6228, %v76
    %v6230 = vpop.permute.xlu0 %6229
    %6231 = vset.pattern.permute.xlu0 93
    %6232 = vperm.xlu0 %6231, %v77
    %v6233 = vpop.permute.xlu0 %6232
    %6234 = vset.pattern.permute.xlu0 93
    %6235 = vperm.xlu0 %6234, %v78
    %v6236 = vpop.permute.xlu0 %6235
    %6237 = vset.pattern.permute.xlu0 93
    %6238 = vperm.xlu0 %6237, %v79
    %v6239 = vpop.permute.xlu0 %6238
    %v6240 = vsel %vm6128, %v6218, %v5984
    %v6241 = vsel %vm6129, %v6218, %v5985
    %v6242 = vsel %vm6130, %v6221, %v5986
    %v6243 = vsel %vm6131, %v6221, %v5987
    %v6244 = vsel %vm6132, %v6224, %v5988
    %v6245 = vsel %vm6133, %v6224, %v5989
    %v6246 = vsel %vm6134, %v6227, %v5990
    %v6247 = vsel %vm6135, %v6227, %v5991
    %v6248 = vsel %vm6136, %v6230, %v5992
    %v6249 = vsel %vm6137, %v6230, %v5993
    %v6250 = vsel %vm6138, %v6233, %v5994
    %v6251 = vsel %vm6139, %v6233, %v5995
    %v6252 = vsel %vm6140, %v6236, %v5996
    %v6253 = vsel %vm6141, %v6236, %v5997
    %v6254 = vsel %vm6142, %v6239, %v5998
    %v6255 = vsel %vm6143, %v6239, %v5999
    %v6256 = vsel %vm6144, %v6218, %v6000
    %v6257 = vsel %vm6145, %v6218, %v6001
    %v6258 = vsel %vm6146, %v6221, %v6002
    %v6259 = vsel %vm6147, %v6221, %v6003
    %v6260 = vsel %vm6148, %v6224, %v6004
    %v6261 = vsel %vm6149, %v6224, %v6005
    %v6262 = vsel %vm6150, %v6227, %v6006
    %v6263 = vsel %vm6151, %v6227, %v6007
    %v6264 = vsel %vm6152, %v6230, %v6008
    %v6265 = vsel %vm6153, %v6230, %v6009
    %v6266 = vsel %vm6154, %v6233, %v6010
    %v6267 = vsel %vm6155, %v6233, %v6011
    %v6268 = vsel %vm6156, %v6236, %v6012
    %v6269 = vsel %vm6157, %v6236, %v6013
    %v6270 = vsel %vm6158, %v6239, %v6014
    %v6271 = vsel %vm6159, %v6239, %v6015
    %6272 = vset.pattern.permute.xlu0 94
    %6273 = vperm.xlu0 %6272, %v72
    %v6274 = vpop.permute.xlu0 %6273
    %6275 = vset.pattern.permute.xlu0 94
    %6276 = vperm.xlu0 %6275, %v73
    %v6277 = vpop.permute.xlu0 %6276
    %6278 = vset.pattern.permute.xlu0 94
    %6279 = vperm.xlu0 %6278, %v74
    %v6280 = vpop.permute.xlu0 %6279
    %6281 = vset.pattern.permute.xlu0 94
    %6282 = vperm.xlu0 %6281, %v75
    %v6283 = vpop.permute.xlu0 %6282
    %6284 = vset.pattern.permute.xlu0 94
    %6285 = vperm.xlu0 %6284, %v76
    %v6286 = vpop.permute.xlu0 %6285
    %6287 = vset.pattern.permute.xlu0 94
    %6288 = vperm.xlu0 %6287, %v77
    %v6289 = vpop.permute.xlu0 %6288
    %6290 = vset.pattern.permute.xlu0 94
    %6291 = vperm.xlu0 %6290, %v78
    %v6292 = vpop.permute.xlu0 %6291
    %6293 = vset.pattern.permute.xlu0 94
    %6294 = vperm.xlu0 %6293, %v79
    %v6295 = vpop.permute.xlu0 %6294
    %v6296 = vsel %vm6128, %v6274, %v6040
    %v6297 = vsel %vm6129, %v6274, %v6041
    %v6298 = vsel %vm6130, %v6277, %v6042
    %v6299 = vsel %vm6131, %v6277, %v6043
    %v6300 = vsel %vm6132, %v6280, %v6044
    %v6301 = vsel %vm6133, %v6280, %v6045
    %v6302 = vsel %vm6134, %v6283, %v6046
    %v6303 = vsel %vm6135, %v6283, %v6047
    %v6304 = vsel %vm6136, %v6286, %v6048
    %v6305 = vsel %vm6137, %v6286, %v6049
    %v6306 = vsel %vm6138, %v6289, %v6050
    %v6307 = vsel %vm6139, %v6289, %v6051
    %v6308 = vsel %vm6140, %v6292, %v6052
    %v6309 = vsel %vm6141, %v6292, %v6053
    %v6310 = vsel %vm6142, %v6295, %v6054
    %v6311 = vsel %vm6143, %v6295, %v6055
    %v6312 = vsel %vm6144, %v6274, %v6056
    %v6313 = vsel %vm6145, %v6274, %v6057
    %v6314 = vsel %vm6146, %v6277, %v6058
    %v6315 = vsel %vm6147, %v6277, %v6059
    %v6316 = vsel %vm6148, %v6280, %v6060
    %v6317 = vsel %vm6149, %v6280, %v6061
    %v6318 = vsel %vm6150, %v6283, %v6062
    %v6319 = vsel %vm6151, %v6283, %v6063
    %v6320 = vsel %vm6152, %v6286, %v6064
    %v6321 = vsel %vm6153, %v6286, %v6065
    %v6322 = vsel %vm6154, %v6289, %v6066
    %v6323 = vsel %vm6155, %v6289, %v6067
    %v6324 = vsel %vm6156, %v6292, %v6068
    %v6325 = vsel %vm6157, %v6292, %v6069
    %v6326 = vsel %vm6158, %v6295, %v6070
    %v6327 = vsel %vm6159, %v6295, %v6071
    %6328 = vset.pattern.permute.xlu0 95
    %6329 = vperm.xlu0 %6328, %v72
    %v6330 = vpop.permute.xlu0 %6329
    %6331 = vset.pattern.permute.xlu0 95
    %6332 = vperm.xlu0 %6331, %v73
    %v6333 = vpop.permute.xlu0 %6332
    %6334 = vset.pattern.permute.xlu0 95
    %6335 = vperm.xlu0 %6334, %v74
    %v6336 = vpop.permute.xlu0 %6335
    %6337 = vset.pattern.permute.xlu0 95
    %6338 = vperm.xlu0 %6337, %v75
    %v6339 = vpop.permute.xlu0 %6338
    %6340 = vset.pattern.permute.xlu0 95
    %6341 = vperm.xlu0 %6340, %v76
    %v6342 = vpop.permute.xlu0 %6341
    %6343 = vset.pattern.permute.xlu0 95
    %6344 = vperm.xlu0 %6343, %v77
    %v6345 = vpop.permute.xlu0 %6344
    %6346 = vset.pattern.permute.xlu0 95
    %6347 = vperm.xlu0 %6346, %v78
    %v6348 = vpop.permute.xlu0 %6347
    %6349 = vset.pattern.permute.xlu0 95
    %6350 = vperm.xlu0 %6349, %v79
    %v6351 = vpop.permute.xlu0 %6350
    %v6352 = vsel %vm6128, %v6330, %v6096
    %v6353 = vsel %vm6129, %v6330, %v6097
    %v6354 = vsel %vm6130, %v6333, %v6098
    %v6355 = vsel %vm6131, %v6333, %v6099
    %v6356 = vsel %vm6132, %v6336, %v6100
    %v6357 = vsel %vm6133, %v6336, %v6101
    %v6358 = vsel %vm6134, %v6339, %v6102
    %v6359 = vsel %vm6135, %v6339, %v6103
    %v6360 = vsel %vm6136, %v6342, %v6104
    %v6361 = vsel %vm6137, %v6342, %v6105
    %v6362 = vsel %vm6138, %v6345, %v6106
    %v6363 = vsel %vm6139, %v6345, %v6107
    %v6364 = vsel %vm6140, %v6348, %v6108
    %v6365 = vsel %vm6141, %v6348, %v6109
    %v6366 = vsel %vm6142, %v6351, %v6110
    %v6367 = vsel %vm6143, %v6351, %v6111
    %v6368 = vsel %vm6144, %v6330, %v6112
    %v6369 = vsel %vm6145, %v6330, %v6113
    %v6370 = vsel %vm6146, %v6333, %v6114
    %v6371 = vsel %vm6147, %v6333, %v6115
    %v6372 = vsel %vm6148, %v6336, %v6116
    %v6373 = vsel %vm6149, %v6336, %v6117
    %v6374 = vsel %vm6150, %v6339, %v6118
    %v6375 = vsel %vm6151, %v6339, %v6119
    %v6376 = vsel %vm6152, %v6342, %v6120
    %v6377 = vsel %vm6153, %v6342, %v6121
    %v6378 = vsel %vm6154, %v6345, %v6122
    %v6379 = vsel %vm6155, %v6345, %v6123
    %v6380 = vsel %vm6156, %v6348, %v6124
    %v6381 = vsel %vm6157, %v6348, %v6125
    %v6382 = vsel %vm6158, %v6351, %v6126
    %v6383 = vsel %vm6159, %v6351, %v6127
    %vm6384 = vcmp.ge.f32.partialorder %v80, 35.0
    %vm6385 = vcmp.ge.f32.partialorder %v81, 35.0
    %vm6386 = vcmp.ge.f32.partialorder %v82, 35.0
    %vm6387 = vcmp.ge.f32.partialorder %v83, 35.0
    %vm6388 = vcmp.ge.f32.partialorder %v84, 35.0
    %vm6389 = vcmp.ge.f32.partialorder %v85, 35.0
    %vm6390 = vcmp.ge.f32.partialorder %v86, 35.0
    %vm6391 = vcmp.ge.f32.partialorder %v87, 35.0
    %vm6392 = vcmp.ge.f32.partialorder %v88, 35.0
    %vm6393 = vcmp.ge.f32.partialorder %v89, 35.0
    %vm6394 = vcmp.ge.f32.partialorder %v90, 35.0
    %vm6395 = vcmp.ge.f32.partialorder %v91, 35.0
    %vm6396 = vcmp.ge.f32.partialorder %v92, 35.0
    %vm6397 = vcmp.ge.f32.partialorder %v93, 35.0
    %vm6398 = vcmp.ge.f32.partialorder %v94, 35.0
    %vm6399 = vcmp.ge.f32.partialorder %v95, 35.0
    %vm6400 = vcmp.ge.f32.partialorder %v96, 35.0
    %vm6401 = vcmp.ge.f32.partialorder %v97, 35.0
    %vm6402 = vcmp.ge.f32.partialorder %v98, 35.0
    %vm6403 = vcmp.ge.f32.partialorder %v99, 35.0
    %vm6404 = vcmp.ge.f32.partialorder %v100, 35.0
    %vm6405 = vcmp.ge.f32.partialorder %v101, 35.0
    %vm6406 = vcmp.ge.f32.partialorder %v102, 35.0
    %vm6407 = vcmp.ge.f32.partialorder %v103, 35.0
    %vm6408 = vcmp.ge.f32.partialorder %v104, 35.0
    %vm6409 = vcmp.ge.f32.partialorder %v105, 35.0
    %vm6410 = vcmp.ge.f32.partialorder %v106, 35.0
    %vm6411 = vcmp.ge.f32.partialorder %v107, 35.0
    %vm6412 = vcmp.ge.f32.partialorder %v108, 35.0
    %vm6413 = vcmp.ge.f32.partialorder %v109, 35.0
    %vm6414 = vcmp.ge.f32.partialorder %v110, 35.0
    %vm6415 = vcmp.ge.f32.partialorder %v111, 35.0
    %6416 = vset.pattern.permute.xlu0 96
    %6417 = vperm.xlu0 %6416, %v72
    %v6418 = vpop.permute.xlu0 %6417
    %6419 = vset.pattern.permute.xlu0 96
    %6420 = vperm.xlu0 %6419, %v73
    %v6421 = vpop.permute.xlu0 %6420
    %6422 = vset.pattern.permute.xlu0 96
    %6423 = vperm.xlu0 %6422, %v74
    %v6424 = vpop.permute.xlu0 %6423
    %6425 = vset.pattern.permute.xlu0 96
    %6426 = vperm.xlu0 %6425, %v75
    %v6427 = vpop.permute.xlu0 %6426
    %6428 = vset.pattern.permute.xlu0 96
    %6429 = vperm.xlu0 %6428, %v76
    %v6430 = vpop.permute.xlu0 %6429
    %6431 = vset.pattern.permute.xlu0 96
    %6432 = vperm.xlu0 %6431, %v77
    %v6433 = vpop.permute.xlu0 %6432
    %6434 = vset.pattern.permute.xlu0 96
    %6435 = vperm.xlu0 %6434, %v78
    %v6436 = vpop.permute.xlu0 %6435
    %6437 = vset.pattern.permute.xlu0 96
    %6438 = vperm.xlu0 %6437, %v79
    %v6439 = vpop.permute.xlu0 %6438
    %v6440 = vsel %vm6384, %v6418, %v6184
    %v6441 = vsel %vm6385, %v6418, %v6185
    %v6442 = vsel %vm6386, %v6421, %v6186
    %v6443 = vsel %vm6387, %v6421, %v6187
    %v6444 = vsel %vm6388, %v6424, %v6188
    %v6445 = vsel %vm6389, %v6424, %v6189
    %v6446 = vsel %vm6390, %v6427, %v6190
    %v6447 = vsel %vm6391, %v6427, %v6191
    %v6448 = vsel %vm6392, %v6430, %v6192
    %v6449 = vsel %vm6393, %v6430, %v6193
    %v6450 = vsel %vm6394, %v6433, %v6194
    %v6451 = vsel %vm6395, %v6433, %v6195
    %v6452 = vsel %vm6396, %v6436, %v6196
    %v6453 = vsel %vm6397, %v6436, %v6197
    %v6454 = vsel %vm6398, %v6439, %v6198
    %v6455 = vsel %vm6399, %v6439, %v6199
    %v6456 = vsel %vm6400, %v6418, %v6200
    %v6457 = vsel %vm6401, %v6418, %v6201
    %v6458 = vsel %vm6402, %v6421, %v6202
    %v6459 = vsel %vm6403, %v6421, %v6203
    %v6460 = vsel %vm6404, %v6424, %v6204
    %v6461 = vsel %vm6405, %v6424, %v6205
    %v6462 = vsel %vm6406, %v6427, %v6206
    %v6463 = vsel %vm6407, %v6427, %v6207
    %v6464 = vsel %vm6408, %v6430, %v6208
    %v6465 = vsel %vm6409, %v6430, %v6209
    %v6466 = vsel %vm6410, %v6433, %v6210
    %v6467 = vsel %vm6411, %v6433, %v6211
    %v6468 = vsel %vm6412, %v6436, %v6212
    %v6469 = vsel %vm6413, %v6436, %v6213
    %v6470 = vsel %vm6414, %v6439, %v6214
    %v6471 = vsel %vm6415, %v6439, %v6215
    %6472 = vset.pattern.permute.xlu0 97
    %6473 = vperm.xlu0 %6472, %v72
    %v6474 = vpop.permute.xlu0 %6473
    %6475 = vset.pattern.permute.xlu0 97
    %6476 = vperm.xlu0 %6475, %v73
    %v6477 = vpop.permute.xlu0 %6476
    %6478 = vset.pattern.permute.xlu0 97
    %6479 = vperm.xlu0 %6478, %v74
    %v6480 = vpop.permute.xlu0 %6479
    %6481 = vset.pattern.permute.xlu0 97
    %6482 = vperm.xlu0 %6481, %v75
    %v6483 = vpop.permute.xlu0 %6482
    %6484 = vset.pattern.permute.xlu0 97
    %6485 = vperm.xlu0 %6484, %v76
    %v6486 = vpop.permute.xlu0 %6485
    %6487 = vset.pattern.permute.xlu0 97
    %6488 = vperm.xlu0 %6487, %v77
    %v6489 = vpop.permute.xlu0 %6488
    %6490 = vset.pattern.permute.xlu0 97
    %6491 = vperm.xlu0 %6490, %v78
    %v6492 = vpop.permute.xlu0 %6491
    %6493 = vset.pattern.permute.xlu0 97
    %6494 = vperm.xlu0 %6493, %v79
    %v6495 = vpop.permute.xlu0 %6494
    %v6496 = vsel %vm6384, %v6474, %v6240
    %v6497 = vsel %vm6385, %v6474, %v6241
    %v6498 = vsel %vm6386, %v6477, %v6242
    %v6499 = vsel %vm6387, %v6477, %v6243
    %v6500 = vsel %vm6388, %v6480, %v6244
    %v6501 = vsel %vm6389, %v6480, %v6245
    %v6502 = vsel %vm6390, %v6483, %v6246
    %v6503 = vsel %vm6391, %v6483, %v6247
    %v6504 = vsel %vm6392, %v6486, %v6248
    %v6505 = vsel %vm6393, %v6486, %v6249
    %v6506 = vsel %vm6394, %v6489, %v6250
    %v6507 = vsel %vm6395, %v6489, %v6251
    %v6508 = vsel %vm6396, %v6492, %v6252
    %v6509 = vsel %vm6397, %v6492, %v6253
    %v6510 = vsel %vm6398, %v6495, %v6254
    %v6511 = vsel %vm6399, %v6495, %v6255
    %v6512 = vsel %vm6400, %v6474, %v6256
    %v6513 = vsel %vm6401, %v6474, %v6257
    %v6514 = vsel %vm6402, %v6477, %v6258
    %v6515 = vsel %vm6403, %v6477, %v6259
    %v6516 = vsel %vm6404, %v6480, %v6260
    %v6517 = vsel %vm6405, %v6480, %v6261
    %v6518 = vsel %vm6406, %v6483, %v6262
    %v6519 = vsel %vm6407, %v6483, %v6263
    %v6520 = vsel %vm6408, %v6486, %v6264
    %v6521 = vsel %vm6409, %v6486, %v6265
    %v6522 = vsel %vm6410, %v6489, %v6266
    %v6523 = vsel %vm6411, %v6489, %v6267
    %v6524 = vsel %vm6412, %v6492, %v6268
    %v6525 = vsel %vm6413, %v6492, %v6269
    %v6526 = vsel %vm6414, %v6495, %v6270
    %v6527 = vsel %vm6415, %v6495, %v6271
    %6528 = vset.pattern.permute.xlu0 98
    %6529 = vperm.xlu0 %6528, %v72
    %v6530 = vpop.permute.xlu0 %6529
    %6531 = vset.pattern.permute.xlu0 98
    %6532 = vperm.xlu0 %6531, %v73
    %v6533 = vpop.permute.xlu0 %6532
    %6534 = vset.pattern.permute.xlu0 98
    %6535 = vperm.xlu0 %6534, %v74
    %v6536 = vpop.permute.xlu0 %6535
    %6537 = vset.pattern.permute.xlu0 98
    %6538 = vperm.xlu0 %6537, %v75
    %v6539 = vpop.permute.xlu0 %6538
    %6540 = vset.pattern.permute.xlu0 98
    %6541 = vperm.xlu0 %6540, %v76
    %v6542 = vpop.permute.xlu0 %6541
    %6543 = vset.pattern.permute.xlu0 98
    %6544 = vperm.xlu0 %6543, %v77
    %v6545 = vpop.permute.xlu0 %6544
    %6546 = vset.pattern.permute.xlu0 98
    %6547 = vperm.xlu0 %6546, %v78
    %v6548 = vpop.permute.xlu0 %6547
    %6549 = vset.pattern.permute.xlu0 98
    %6550 = vperm.xlu0 %6549, %v79
    %v6551 = vpop.permute.xlu0 %6550
    %v6552 = vsel %vm6384, %v6530, %v6296
    %v6553 = vsel %vm6385, %v6530, %v6297
    %v6554 = vsel %vm6386, %v6533, %v6298
    %v6555 = vsel %vm6387, %v6533, %v6299
    %v6556 = vsel %vm6388, %v6536, %v6300
    %v6557 = vsel %vm6389, %v6536, %v6301
    %v6558 = vsel %vm6390, %v6539, %v6302
    %v6559 = vsel %vm6391, %v6539, %v6303
    %v6560 = vsel %vm6392, %v6542, %v6304
    %v6561 = vsel %vm6393, %v6542, %v6305
    %v6562 = vsel %vm6394, %v6545, %v6306
    %v6563 = vsel %vm6395, %v6545, %v6307
    %v6564 = vsel %vm6396, %v6548, %v6308
    %v6565 = vsel %vm6397, %v6548, %v6309
    %v6566 = vsel %vm6398, %v6551, %v6310
    %v6567 = vsel %vm6399, %v6551, %v6311
    %v6568 = vsel %vm6400, %v6530, %v6312
    %v6569 = vsel %vm6401, %v6530, %v6313
    %v6570 = vsel %vm6402, %v6533, %v6314
    %v6571 = vsel %vm6403, %v6533, %v6315
    %v6572 = vsel %vm6404, %v6536, %v6316
    %v6573 = vsel %vm6405, %v6536, %v6317
    %v6574 = vsel %vm6406, %v6539, %v6318
    %v6575 = vsel %vm6407, %v6539, %v6319
    %v6576 = vsel %vm6408, %v6542, %v6320
    %v6577 = vsel %vm6409, %v6542, %v6321
    %v6578 = vsel %vm6410, %v6545, %v6322
    %v6579 = vsel %vm6411, %v6545, %v6323
    %v6580 = vsel %vm6412, %v6548, %v6324
    %v6581 = vsel %vm6413, %v6548, %v6325
    %v6582 = vsel %vm6414, %v6551, %v6326
    %v6583 = vsel %vm6415, %v6551, %v6327
    %6584 = vset.pattern.permute.xlu0 99
    %6585 = vperm.xlu0 %6584, %v72
    %v6586 = vpop.permute.xlu0 %6585
    %6587 = vset.pattern.permute.xlu0 99
    %6588 = vperm.xlu0 %6587, %v73
    %v6589 = vpop.permute.xlu0 %6588
    %6590 = vset.pattern.permute.xlu0 99
    %6591 = vperm.xlu0 %6590, %v74
    %v6592 = vpop.permute.xlu0 %6591
    %6593 = vset.pattern.permute.xlu0 99
    %6594 = vperm.xlu0 %6593, %v75
    %v6595 = vpop.permute.xlu0 %6594
    %6596 = vset.pattern.permute.xlu0 99
    %6597 = vperm.xlu0 %6596, %v76
    %v6598 = vpop.permute.xlu0 %6597
    %6599 = vset.pattern.permute.xlu0 99
    %6600 = vperm.xlu0 %6599, %v77
    %v6601 = vpop.permute.xlu0 %6600
    %6602 = vset.pattern.permute.xlu0 99
    %6603 = vperm.xlu0 %6602, %v78
    %v6604 = vpop.permute.xlu0 %6603
    %6605 = vset.pattern.permute.xlu0 99
    %6606 = vperm.xlu0 %6605, %v79
    %v6607 = vpop.permute.xlu0 %6606
    %v6608 = vsel %vm6384, %v6586, %v6352
    %v6609 = vsel %vm6385, %v6586, %v6353
    %v6610 = vsel %vm6386, %v6589, %v6354
    %v6611 = vsel %vm6387, %v6589, %v6355
    %v6612 = vsel %vm6388, %v6592, %v6356
    %v6613 = vsel %vm6389, %v6592, %v6357
    %v6614 = vsel %vm6390, %v6595, %v6358
    %v6615 = vsel %vm6391, %v6595, %v6359
    %v6616 = vsel %vm6392, %v6598, %v6360
    %v6617 = vsel %vm6393, %v6598, %v6361
    %v6618 = vsel %vm6394, %v6601, %v6362
    %v6619 = vsel %vm6395, %v6601, %v6363
    %v6620 = vsel %vm6396, %v6604, %v6364
    %v6621 = vsel %vm6397, %v6604, %v6365
    %v6622 = vsel %vm6398, %v6607, %v6366
    %v6623 = vsel %vm6399, %v6607, %v6367
    %v6624 = vsel %vm6400, %v6586, %v6368
    %v6625 = vsel %vm6401, %v6586, %v6369
    %v6626 = vsel %vm6402, %v6589, %v6370
    %v6627 = vsel %vm6403, %v6589, %v6371
    %v6628 = vsel %vm6404, %v6592, %v6372
    %v6629 = vsel %vm6405, %v6592, %v6373
    %v6630 = vsel %vm6406, %v6595, %v6374
    %v6631 = vsel %vm6407, %v6595, %v6375
    %v6632 = vsel %vm6408, %v6598, %v6376
    %v6633 = vsel %vm6409, %v6598, %v6377
    %v6634 = vsel %vm6410, %v6601, %v6378
    %v6635 = vsel %vm6411, %v6601, %v6379
    %v6636 = vsel %vm6412, %v6604, %v6380
    %v6637 = vsel %vm6413, %v6604, %v6381
    %v6638 = vsel %vm6414, %v6607, %v6382
    %v6639 = vsel %vm6415, %v6607, %v6383
    %vm6640 = vcmp.ge.f32.partialorder %v80, 39.0
    %vm6641 = vcmp.ge.f32.partialorder %v81, 39.0
    %vm6642 = vcmp.ge.f32.partialorder %v82, 39.0
    %vm6643 = vcmp.ge.f32.partialorder %v83, 39.0
    %vm6644 = vcmp.ge.f32.partialorder %v84, 39.0
    %vm6645 = vcmp.ge.f32.partialorder %v85, 39.0
    %vm6646 = vcmp.ge.f32.partialorder %v86, 39.0
    %vm6647 = vcmp.ge.f32.partialorder %v87, 39.0
    %vm6648 = vcmp.ge.f32.partialorder %v88, 39.0
    %vm6649 = vcmp.ge.f32.partialorder %v89, 39.0
    %vm6650 = vcmp.ge.f32.partialorder %v90, 39.0
    %vm6651 = vcmp.ge.f32.partialorder %v91, 39.0
    %vm6652 = vcmp.ge.f32.partialorder %v92, 39.0
    %vm6653 = vcmp.ge.f32.partialorder %v93, 39.0
    %vm6654 = vcmp.ge.f32.partialorder %v94, 39.0
    %vm6655 = vcmp.ge.f32.partialorder %v95, 39.0
    %vm6656 = vcmp.ge.f32.partialorder %v96, 39.0
    %vm6657 = vcmp.ge.f32.partialorder %v97, 39.0
    %vm6658 = vcmp.ge.f32.partialorder %v98, 39.0
    %vm6659 = vcmp.ge.f32.partialorder %v99, 39.0
    %vm6660 = vcmp.ge.f32.partialorder %v100, 39.0
    %vm6661 = vcmp.ge.f32.partialorder %v101, 39.0
    %vm6662 = vcmp.ge.f32.partialorder %v102, 39.0
    %vm6663 = vcmp.ge.f32.partialorder %v103, 39.0
    %vm6664 = vcmp.ge.f32.partialorder %v104, 39.0
    %vm6665 = vcmp.ge.f32.partialorder %v105, 39.0
    %vm6666 = vcmp.ge.f32.partialorder %v106, 39.0
    %vm6667 = vcmp.ge.f32.partialorder %v107, 39.0
    %vm6668 = vcmp.ge.f32.partialorder %v108, 39.0
    %vm6669 = vcmp.ge.f32.partialorder %v109, 39.0
    %vm6670 = vcmp.ge.f32.partialorder %v110, 39.0
    %vm6671 = vcmp.ge.f32.partialorder %v111, 39.0
    %6672 = vset.pattern.permute.xlu0 100
    %6673 = vperm.xlu0 %6672, %v72
    %v6674 = vpop.permute.xlu0 %6673
    %6675 = vset.pattern.permute.xlu0 100
    %6676 = vperm.xlu0 %6675, %v73
    %v6677 = vpop.permute.xlu0 %6676
    %6678 = vset.pattern.permute.xlu0 100
    %6679 = vperm.xlu0 %6678, %v74
    %v6680 = vpop.permute.xlu0 %6679
    %6681 = vset.pattern.permute.xlu0 100
    %6682 = vperm.xlu0 %6681, %v75
    %v6683 = vpop.permute.xlu0 %6682
    %6684 = vset.pattern.permute.xlu0 100
    %6685 = vperm.xlu0 %6684, %v76
    %v6686 = vpop.permute.xlu0 %6685
    %6687 = vset.pattern.permute.xlu0 100
    %6688 = vperm.xlu0 %6687, %v77
    %v6689 = vpop.permute.xlu0 %6688
    %6690 = vset.pattern.permute.xlu0 100
    %6691 = vperm.xlu0 %6690, %v78
    %v6692 = vpop.permute.xlu0 %6691
    %6693 = vset.pattern.permute.xlu0 100
    %6694 = vperm.xlu0 %6693, %v79
    %v6695 = vpop.permute.xlu0 %6694
    %v6696 = vsel %vm6640, %v6674, %v6440
    %v6697 = vsel %vm6641, %v6674, %v6441
    %v6698 = vsel %vm6642, %v6677, %v6442
    %v6699 = vsel %vm6643, %v6677, %v6443
    %v6700 = vsel %vm6644, %v6680, %v6444
    %v6701 = vsel %vm6645, %v6680, %v6445
    %v6702 = vsel %vm6646, %v6683, %v6446
    %v6703 = vsel %vm6647, %v6683, %v6447
    %v6704 = vsel %vm6648, %v6686, %v6448
    %v6705 = vsel %vm6649, %v6686, %v6449
    %v6706 = vsel %vm6650, %v6689, %v6450
    %v6707 = vsel %vm6651, %v6689, %v6451
    %v6708 = vsel %vm6652, %v6692, %v6452
    %v6709 = vsel %vm6653, %v6692, %v6453
    %v6710 = vsel %vm6654, %v6695, %v6454
    %v6711 = vsel %vm6655, %v6695, %v6455
    %v6712 = vsel %vm6656, %v6674, %v6456
    %v6713 = vsel %vm6657, %v6674, %v6457
    %v6714 = vsel %vm6658, %v6677, %v6458
    %v6715 = vsel %vm6659, %v6677, %v6459
    %v6716 = vsel %vm6660, %v6680, %v6460
    %v6717 = vsel %vm6661, %v6680, %v6461
    %v6718 = vsel %vm6662, %v6683, %v6462
    %v6719 = vsel %vm6663, %v6683, %v6463
    %v6720 = vsel %vm6664, %v6686, %v6464
    %v6721 = vsel %vm6665, %v6686, %v6465
    %v6722 = vsel %vm6666, %v6689, %v6466
    %v6723 = vsel %vm6667, %v6689, %v6467
    %v6724 = vsel %vm6668, %v6692, %v6468
    %v6725 = vsel %vm6669, %v6692, %v6469
    %v6726 = vsel %vm6670, %v6695, %v6470
    %v6727 = vsel %vm6671, %v6695, %v6471
    %6728 = vset.pattern.permute.xlu0 101
    %6729 = vperm.xlu0 %6728, %v72
    %v6730 = vpop.permute.xlu0 %6729
    %6731 = vset.pattern.permute.xlu0 101
    %6732 = vperm.xlu0 %6731, %v73
    %v6733 = vpop.permute.xlu0 %6732
    %6734 = vset.pattern.permute.xlu0 101
    %6735 = vperm.xlu0 %6734, %v74
    %v6736 = vpop.permute.xlu0 %6735
    %6737 = vset.pattern.permute.xlu0 101
    %6738 = vperm.xlu0 %6737, %v75
    %v6739 = vpop.permute.xlu0 %6738
    %6740 = vset.pattern.permute.xlu0 101
    %6741 = vperm.xlu0 %6740, %v76
    %v6742 = vpop.permute.xlu0 %6741
    %6743 = vset.pattern.permute.xlu0 101
    %6744 = vperm.xlu0 %6743, %v77
    %v6745 = vpop.permute.xlu0 %6744
    %6746 = vset.pattern.permute.xlu0 101
    %6747 = vperm.xlu0 %6746, %v78
    %v6748 = vpop.permute.xlu0 %6747
    %6749 = vset.pattern.permute.xlu0 101
    %6750 = vperm.xlu0 %6749, %v79
    %v6751 = vpop.permute.xlu0 %6750
    %v6752 = vsel %vm6640, %v6730, %v6496
    %v6753 = vsel %vm6641, %v6730, %v6497
    %v6754 = vsel %vm6642, %v6733, %v6498
    %v6755 = vsel %vm6643, %v6733, %v6499
    %v6756 = vsel %vm6644, %v6736, %v6500
    %v6757 = vsel %vm6645, %v6736, %v6501
    %v6758 = vsel %vm6646, %v6739, %v6502
    %v6759 = vsel %vm6647, %v6739, %v6503
    %v6760 = vsel %vm6648, %v6742, %v6504
    %v6761 = vsel %vm6649, %v6742, %v6505
    %v6762 = vsel %vm6650, %v6745, %v6506
    %v6763 = vsel %vm6651, %v6745, %v6507
    %v6764 = vsel %vm6652, %v6748, %v6508
    %v6765 = vsel %vm6653, %v6748, %v6509
    %v6766 = vsel %vm6654, %v6751, %v6510
    %v6767 = vsel %vm6655, %v6751, %v6511
    %v6768 = vsel %vm6656, %v6730, %v6512
    %v6769 = vsel %vm6657, %v6730, %v6513
    %v6770 = vsel %vm6658, %v6733, %v6514
    %v6771 = vsel %vm6659, %v6733, %v6515
    %v6772 = vsel %vm6660, %v6736, %v6516
    %v6773 = vsel %vm6661, %v6736, %v6517
    %v6774 = vsel %vm6662, %v6739, %v6518
    %v6775 = vsel %vm6663, %v6739, %v6519
    %v6776 = vsel %vm6664, %v6742, %v6520
    %v6777 = vsel %vm6665, %v6742, %v6521
    %v6778 = vsel %vm6666, %v6745, %v6522
    %v6779 = vsel %vm6667, %v6745, %v6523
    %v6780 = vsel %vm6668, %v6748, %v6524
    %v6781 = vsel %vm6669, %v6748, %v6525
    %v6782 = vsel %vm6670, %v6751, %v6526
    %v6783 = vsel %vm6671, %v6751, %v6527
    %6784 = vset.pattern.permute.xlu0 102
    %6785 = vperm.xlu0 %6784, %v72
    %v6786 = vpop.permute.xlu0 %6785
    %6787 = vset.pattern.permute.xlu0 102
    %6788 = vperm.xlu0 %6787, %v73
    %v6789 = vpop.permute.xlu0 %6788
    %6790 = vset.pattern.permute.xlu0 102
    %6791 = vperm.xlu0 %6790, %v74
    %v6792 = vpop.permute.xlu0 %6791
    %6793 = vset.pattern.permute.xlu0 102
    %6794 = vperm.xlu0 %6793, %v75
    %v6795 = vpop.permute.xlu0 %6794
    %6796 = vset.pattern.permute.xlu0 102
    %6797 = vperm.xlu0 %6796, %v76
    %v6798 = vpop.permute.xlu0 %6797
    %6799 = vset.pattern.permute.xlu0 102
    %6800 = vperm.xlu0 %6799, %v77
    %v6801 = vpop.permute.xlu0 %6800
    %6802 = vset.pattern.permute.xlu0 102
    %6803 = vperm.xlu0 %6802, %v78
    %v6804 = vpop.permute.xlu0 %6803
    %6805 = vset.pattern.permute.xlu0 102
    %6806 = vperm.xlu0 %6805, %v79
    %v6807 = vpop.permute.xlu0 %6806
    %v6808 = vsel %vm6640, %v6786, %v6552
    %v6809 = vsel %vm6641, %v6786, %v6553
    %v6810 = vsel %vm6642, %v6789, %v6554
    %v6811 = vsel %vm6643, %v6789, %v6555
    %v6812 = vsel %vm6644, %v6792, %v6556
    %v6813 = vsel %vm6645, %v6792, %v6557
    %v6814 = vsel %vm6646, %v6795, %v6558
    %v6815 = vsel %vm6647, %v6795, %v6559
    %v6816 = vsel %vm6648, %v6798, %v6560
    %v6817 = vsel %vm6649, %v6798, %v6561
    %v6818 = vsel %vm6650, %v6801, %v6562
    %v6819 = vsel %vm6651, %v6801, %v6563
    %v6820 = vsel %vm6652, %v6804, %v6564
    %v6821 = vsel %vm6653, %v6804, %v6565
    %v6822 = vsel %vm6654, %v6807, %v6566
    %v6823 = vsel %vm6655, %v6807, %v6567
    %v6824 = vsel %vm6656, %v6786, %v6568
    %v6825 = vsel %vm6657, %v6786, %v6569
    %v6826 = vsel %vm6658, %v6789, %v6570
    %v6827 = vsel %vm6659, %v6789, %v6571
    %v6828 = vsel %vm6660, %v6792, %v6572
    %v6829 = vsel %vm6661, %v6792, %v6573
    %v6830 = vsel %vm6662, %v6795, %v6574
    %v6831 = vsel %vm6663, %v6795, %v6575
    %v6832 = vsel %vm6664, %v6798, %v6576
    %v6833 = vsel %vm6665, %v6798, %v6577
    %v6834 = vsel %vm6666, %v6801, %v6578
    %v6835 = vsel %vm6667, %v6801, %v6579
    %v6836 = vsel %vm6668, %v6804, %v6580
    %v6837 = vsel %vm6669, %v6804, %v6581
    %v6838 = vsel %vm6670, %v6807, %v6582
    %v6839 = vsel %vm6671, %v6807, %v6583
    %6840 = vset.pattern.permute.xlu0 103
    %6841 = vperm.xlu0 %6840, %v72
    %v6842 = vpop.permute.xlu0 %6841
    %6843 = vset.pattern.permute.xlu0 103
    %6844 = vperm.xlu0 %6843, %v73
    %v6845 = vpop.permute.xlu0 %6844
    %6846 = vset.pattern.permute.xlu0 103
    %6847 = vperm.xlu0 %6846, %v74
    %v6848 = vpop.permute.xlu0 %6847
    %6849 = vset.pattern.permute.xlu0 103
    %6850 = vperm.xlu0 %6849, %v75
    %v6851 = vpop.permute.xlu0 %6850
    %6852 = vset.pattern.permute.xlu0 103
    %6853 = vperm.xlu0 %6852, %v76
    %v6854 = vpop.permute.xlu0 %6853
    %6855 = vset.pattern.permute.xlu0 103
    %6856 = vperm.xlu0 %6855, %v77
    %v6857 = vpop.permute.xlu0 %6856
    %6858 = vset.pattern.permute.xlu0 103
    %6859 = vperm.xlu0 %6858, %v78
    %v6860 = vpop.permute.xlu0 %6859
    %6861 = vset.pattern.permute.xlu0 103
    %6862 = vperm.xlu0 %6861, %v79
    %v6863 = vpop.permute.xlu0 %6862
    %v6864 = vsel %vm6640, %v6842, %v6608
    %v6865 = vsel %vm6641, %v6842, %v6609
    %v6866 = vsel %vm6642, %v6845, %v6610
    %v6867 = vsel %vm6643, %v6845, %v6611
    %v6868 = vsel %vm6644, %v6848, %v6612
    %v6869 = vsel %vm6645, %v6848, %v6613
    %v6870 = vsel %vm6646, %v6851, %v6614
    %v6871 = vsel %vm6647, %v6851, %v6615
    %v6872 = vsel %vm6648, %v6854, %v6616
    %v6873 = vsel %vm6649, %v6854, %v6617
    %v6874 = vsel %vm6650, %v6857, %v6618
    %v6875 = vsel %vm6651, %v6857, %v6619
    %v6876 = vsel %vm6652, %v6860, %v6620
    %v6877 = vsel %vm6653, %v6860, %v6621
    %v6878 = vsel %vm6654, %v6863, %v6622
    %v6879 = vsel %vm6655, %v6863, %v6623
    %v6880 = vsel %vm6656, %v6842, %v6624
    %v6881 = vsel %vm6657, %v6842, %v6625
    %v6882 = vsel %vm6658, %v6845, %v6626
    %v6883 = vsel %vm6659, %v6845, %v6627
    %v6884 = vsel %vm6660, %v6848, %v6628
    %v6885 = vsel %vm6661, %v6848, %v6629
    %v6886 = vsel %vm6662, %v6851, %v6630
    %v6887 = vsel %vm6663, %v6851, %v6631
    %v6888 = vsel %vm6664, %v6854, %v6632
    %v6889 = vsel %vm6665, %v6854, %v6633
    %v6890 = vsel %vm6666, %v6857, %v6634
    %v6891 = vsel %vm6667, %v6857, %v6635
    %v6892 = vsel %vm6668, %v6860, %v6636
    %v6893 = vsel %vm6669, %v6860, %v6637
    %v6894 = vsel %vm6670, %v6863, %v6638
    %v6895 = vsel %vm6671, %v6863, %v6639
    %vm6896 = vcmp.ge.f32.partialorder %v80, 43.0
    %vm6897 = vcmp.ge.f32.partialorder %v81, 43.0
    %vm6898 = vcmp.ge.f32.partialorder %v82, 43.0
    %vm6899 = vcmp.ge.f32.partialorder %v83, 43.0
    %vm6900 = vcmp.ge.f32.partialorder %v84, 43.0
    %vm6901 = vcmp.ge.f32.partialorder %v85, 43.0
    %vm6902 = vcmp.ge.f32.partialorder %v86, 43.0
    %vm6903 = vcmp.ge.f32.partialorder %v87, 43.0
    %vm6904 = vcmp.ge.f32.partialorder %v88, 43.0
    %vm6905 = vcmp.ge.f32.partialorder %v89, 43.0
    %vm6906 = vcmp.ge.f32.partialorder %v90, 43.0
    %vm6907 = vcmp.ge.f32.partialorder %v91, 43.0
    %vm6908 = vcmp.ge.f32.partialorder %v92, 43.0
    %vm6909 = vcmp.ge.f32.partialorder %v93, 43.0
    %vm6910 = vcmp.ge.f32.partialorder %v94, 43.0
    %vm6911 = vcmp.ge.f32.partialorder %v95, 43.0
    %vm6912 = vcmp.ge.f32.partialorder %v96, 43.0
    %vm6913 = vcmp.ge.f32.partialorder %v97, 43.0
    %vm6914 = vcmp.ge.f32.partialorder %v98, 43.0
    %vm6915 = vcmp.ge.f32.partialorder %v99, 43.0
    %vm6916 = vcmp.ge.f32.partialorder %v100, 43.0
    %vm6917 = vcmp.ge.f32.partialorder %v101, 43.0
    %vm6918 = vcmp.ge.f32.partialorder %v102, 43.0
    %vm6919 = vcmp.ge.f32.partialorder %v103, 43.0
    %vm6920 = vcmp.ge.f32.partialorder %v104, 43.0
    %vm6921 = vcmp.ge.f32.partialorder %v105, 43.0
    %vm6922 = vcmp.ge.f32.partialorder %v106, 43.0
    %vm6923 = vcmp.ge.f32.partialorder %v107, 43.0
    %vm6924 = vcmp.ge.f32.partialorder %v108, 43.0
    %vm6925 = vcmp.ge.f32.partialorder %v109, 43.0
    %vm6926 = vcmp.ge.f32.partialorder %v110, 43.0
    %vm6927 = vcmp.ge.f32.partialorder %v111, 43.0
    %6928 = vset.pattern.permute.xlu0 104
    %6929 = vperm.xlu0 %6928, %v72
    %v6930 = vpop.permute.xlu0 %6929
    %6931 = vset.pattern.permute.xlu0 104
    %6932 = vperm.xlu0 %6931, %v73
    %v6933 = vpop.permute.xlu0 %6932
    %6934 = vset.pattern.permute.xlu0 104
    %6935 = vperm.xlu0 %6934, %v74
    %v6936 = vpop.permute.xlu0 %6935
    %6937 = vset.pattern.permute.xlu0 104
    %6938 = vperm.xlu0 %6937, %v75
    %v6939 = vpop.permute.xlu0 %6938
    %6940 = vset.pattern.permute.xlu0 104
    %6941 = vperm.xlu0 %6940, %v76
    %v6942 = vpop.permute.xlu0 %6941
    %6943 = vset.pattern.permute.xlu0 104
    %6944 = vperm.xlu0 %6943, %v77
    %v6945 = vpop.permute.xlu0 %6944
    %6946 = vset.pattern.permute.xlu0 104
    %6947 = vperm.xlu0 %6946, %v78
    %v6948 = vpop.permute.xlu0 %6947
    %6949 = vset.pattern.permute.xlu0 104
    %6950 = vperm.xlu0 %6949, %v79
    %v6951 = vpop.permute.xlu0 %6950
    %v6952 = vsel %vm6896, %v6930, %v6696
    %v6953 = vsel %vm6897, %v6930, %v6697
    %v6954 = vsel %vm6898, %v6933, %v6698
    %v6955 = vsel %vm6899, %v6933, %v6699
    %v6956 = vsel %vm6900, %v6936, %v6700
    %v6957 = vsel %vm6901, %v6936, %v6701
    %v6958 = vsel %vm6902, %v6939, %v6702
    %v6959 = vsel %vm6903, %v6939, %v6703
    %v6960 = vsel %vm6904, %v6942, %v6704
    %v6961 = vsel %vm6905, %v6942, %v6705
    %v6962 = vsel %vm6906, %v6945, %v6706
    %v6963 = vsel %vm6907, %v6945, %v6707
    %v6964 = vsel %vm6908, %v6948, %v6708
    %v6965 = vsel %vm6909, %v6948, %v6709
    %v6966 = vsel %vm6910, %v6951, %v6710
    %v6967 = vsel %vm6911, %v6951, %v6711
    %v6968 = vsel %vm6912, %v6930, %v6712
    %v6969 = vsel %vm6913, %v6930, %v6713
    %v6970 = vsel %vm6914, %v6933, %v6714
    %v6971 = vsel %vm6915, %v6933, %v6715
    %v6972 = vsel %vm6916, %v6936, %v6716
    %v6973 = vsel %vm6917, %v6936, %v6717
    %v6974 = vsel %vm6918, %v6939, %v6718
    %v6975 = vsel %vm6919, %v6939, %v6719
    %v6976 = vsel %vm6920, %v6942, %v6720
    %v6977 = vsel %vm6921, %v6942, %v6721
    %v6978 = vsel %vm6922, %v6945, %v6722
    %v6979 = vsel %vm6923, %v6945, %v6723
    %v6980 = vsel %vm6924, %v6948, %v6724
    %v6981 = vsel %vm6925, %v6948, %v6725
    %v6982 = vsel %vm6926, %v6951, %v6726
    %v6983 = vsel %vm6927, %v6951, %v6727
    %6984 = vset.pattern.permute.xlu0 105
    %6985 = vperm.xlu0 %6984, %v72
    %v6986 = vpop.permute.xlu0 %6985
    %6987 = vset.pattern.permute.xlu0 105
    %6988 = vperm.xlu0 %6987, %v73
    %v6989 = vpop.permute.xlu0 %6988
    %6990 = vset.pattern.permute.xlu0 105
    %6991 = vperm.xlu0 %6990, %v74
    %v6992 = vpop.permute.xlu0 %6991
    %6993 = vset.pattern.permute.xlu0 105
    %6994 = vperm.xlu0 %6993, %v75
    %v6995 = vpop.permute.xlu0 %6994
    %6996 = vset.pattern.permute.xlu0 105
    %6997 = vperm.xlu0 %6996, %v76
    %v6998 = vpop.permute.xlu0 %6997
    %6999 = vset.pattern.permute.xlu0 105
    %7000 = vperm.xlu0 %6999, %v77
    %v7001 = vpop.permute.xlu0 %7000
    %7002 = vset.pattern.permute.xlu0 105
    %7003 = vperm.xlu0 %7002, %v78
    %v7004 = vpop.permute.xlu0 %7003
    %7005 = vset.pattern.permute.xlu0 105
    %7006 = vperm.xlu0 %7005, %v79
    %v7007 = vpop.permute.xlu0 %7006
    %v7008 = vsel %vm6896, %v6986, %v6752
    %v7009 = vsel %vm6897, %v6986, %v6753
    %v7010 = vsel %vm6898, %v6989, %v6754
    %v7011 = vsel %vm6899, %v6989, %v6755
    %v7012 = vsel %vm6900, %v6992, %v6756
    %v7013 = vsel %vm6901, %v6992, %v6757
    %v7014 = vsel %vm6902, %v6995, %v6758
    %v7015 = vsel %vm6903, %v6995, %v6759
    %v7016 = vsel %vm6904, %v6998, %v6760
    %v7017 = vsel %vm6905, %v6998, %v6761
    %v7018 = vsel %vm6906, %v7001, %v6762
    %v7019 = vsel %vm6907, %v7001, %v6763
    %v7020 = vsel %vm6908, %v7004, %v6764
    %v7021 = vsel %vm6909, %v7004, %v6765
    %v7022 = vsel %vm6910, %v7007, %v6766
    %v7023 = vsel %vm6911, %v7007, %v6767
    %v7024 = vsel %vm6912, %v6986, %v6768
    %v7025 = vsel %vm6913, %v6986, %v6769
    %v7026 = vsel %vm6914, %v6989, %v6770
    %v7027 = vsel %vm6915, %v6989, %v6771
    %v7028 = vsel %vm6916, %v6992, %v6772
    %v7029 = vsel %vm6917, %v6992, %v6773
    %v7030 = vsel %vm6918, %v6995, %v6774
    %v7031 = vsel %vm6919, %v6995, %v6775
    %v7032 = vsel %vm6920, %v6998, %v6776
    %v7033 = vsel %vm6921, %v6998, %v6777
    %v7034 = vsel %vm6922, %v7001, %v6778
    %v7035 = vsel %vm6923, %v7001, %v6779
    %v7036 = vsel %vm6924, %v7004, %v6780
    %v7037 = vsel %vm6925, %v7004, %v6781
    %v7038 = vsel %vm6926, %v7007, %v6782
    %v7039 = vsel %vm6927, %v7007, %v6783
    %7040 = vset.pattern.permute.xlu0 106
    %7041 = vperm.xlu0 %7040, %v72
    %v7042 = vpop.permute.xlu0 %7041
    %7043 = vset.pattern.permute.xlu0 106
    %7044 = vperm.xlu0 %7043, %v73
    %v7045 = vpop.permute.xlu0 %7044
    %7046 = vset.pattern.permute.xlu0 106
    %7047 = vperm.xlu0 %7046, %v74
    %v7048 = vpop.permute.xlu0 %7047
    %7049 = vset.pattern.permute.xlu0 106
    %7050 = vperm.xlu0 %7049, %v75
    %v7051 = vpop.permute.xlu0 %7050
    %7052 = vset.pattern.permute.xlu0 106
    %7053 = vperm.xlu0 %7052, %v76
    %v7054 = vpop.permute.xlu0 %7053
    %7055 = vset.pattern.permute.xlu0 106
    %7056 = vperm.xlu0 %7055, %v77
    %v7057 = vpop.permute.xlu0 %7056
    %7058 = vset.pattern.permute.xlu0 106
    %7059 = vperm.xlu0 %7058, %v78
    %v7060 = vpop.permute.xlu0 %7059
    %7061 = vset.pattern.permute.xlu0 106
    %7062 = vperm.xlu0 %7061, %v79
    %v7063 = vpop.permute.xlu0 %7062
    %v7064 = vsel %vm6896, %v7042, %v6808
    %v7065 = vsel %vm6897, %v7042, %v6809
    %v7066 = vsel %vm6898, %v7045, %v6810
    %v7067 = vsel %vm6899, %v7045, %v6811
    %v7068 = vsel %vm6900, %v7048, %v6812
    %v7069 = vsel %vm6901, %v7048, %v6813
    %v7070 = vsel %vm6902, %v7051, %v6814
    %v7071 = vsel %vm6903, %v7051, %v6815
    %v7072 = vsel %vm6904, %v7054, %v6816
    %v7073 = vsel %vm6905, %v7054, %v6817
    %v7074 = vsel %vm6906, %v7057, %v6818
    %v7075 = vsel %vm6907, %v7057, %v6819
    %v7076 = vsel %vm6908, %v7060, %v6820
    %v7077 = vsel %vm6909, %v7060, %v6821
    %v7078 = vsel %vm6910, %v7063, %v6822
    %v7079 = vsel %vm6911, %v7063, %v6823
    %v7080 = vsel %vm6912, %v7042, %v6824
    %v7081 = vsel %vm6913, %v7042, %v6825
    %v7082 = vsel %vm6914, %v7045, %v6826
    %v7083 = vsel %vm6915, %v7045, %v6827
    %v7084 = vsel %vm6916, %v7048, %v6828
    %v7085 = vsel %vm6917, %v7048, %v6829
    %v7086 = vsel %vm6918, %v7051, %v6830
    %v7087 = vsel %vm6919, %v7051, %v6831
    %v7088 = vsel %vm6920, %v7054, %v6832
    %v7089 = vsel %vm6921, %v7054, %v6833
    %v7090 = vsel %vm6922, %v7057, %v6834
    %v7091 = vsel %vm6923, %v7057, %v6835
    %v7092 = vsel %vm6924, %v7060, %v6836
    %v7093 = vsel %vm6925, %v7060, %v6837
    %v7094 = vsel %vm6926, %v7063, %v6838
    %v7095 = vsel %vm6927, %v7063, %v6839
    %7096 = vset.pattern.permute.xlu0 107
    %7097 = vperm.xlu0 %7096, %v72
    %v7098 = vpop.permute.xlu0 %7097
    %7099 = vset.pattern.permute.xlu0 107
    %7100 = vperm.xlu0 %7099, %v73
    %v7101 = vpop.permute.xlu0 %7100
    %7102 = vset.pattern.permute.xlu0 107
    %7103 = vperm.xlu0 %7102, %v74
    %v7104 = vpop.permute.xlu0 %7103
    %7105 = vset.pattern.permute.xlu0 107
    %7106 = vperm.xlu0 %7105, %v75
    %v7107 = vpop.permute.xlu0 %7106
    %7108 = vset.pattern.permute.xlu0 107
    %7109 = vperm.xlu0 %7108, %v76
    %v7110 = vpop.permute.xlu0 %7109
    %7111 = vset.pattern.permute.xlu0 107
    %7112 = vperm.xlu0 %7111, %v77
    %v7113 = vpop.permute.xlu0 %7112
    %7114 = vset.pattern.permute.xlu0 107
    %7115 = vperm.xlu0 %7114, %v78
    %v7116 = vpop.permute.xlu0 %7115
    %7117 = vset.pattern.permute.xlu0 107
    %7118 = vperm.xlu0 %7117, %v79
    %v7119 = vpop.permute.xlu0 %7118
    %v7120 = vsel %vm6896, %v7098, %v6864
    %v7121 = vsel %vm6897, %v7098, %v6865
    %v7122 = vsel %vm6898, %v7101, %v6866
    %v7123 = vsel %vm6899, %v7101, %v6867
    %v7124 = vsel %vm6900, %v7104, %v6868
    %v7125 = vsel %vm6901, %v7104, %v6869
    %v7126 = vsel %vm6902, %v7107, %v6870
    %v7127 = vsel %vm6903, %v7107, %v6871
    %v7128 = vsel %vm6904, %v7110, %v6872
    %v7129 = vsel %vm6905, %v7110, %v6873
    %v7130 = vsel %vm6906, %v7113, %v6874
    %v7131 = vsel %vm6907, %v7113, %v6875
    %v7132 = vsel %vm6908, %v7116, %v6876
    %v7133 = vsel %vm6909, %v7116, %v6877
    %v7134 = vsel %vm6910, %v7119, %v6878
    %v7135 = vsel %vm6911, %v7119, %v6879
    %v7136 = vsel %vm6912, %v7098, %v6880
    %v7137 = vsel %vm6913, %v7098, %v6881
    %v7138 = vsel %vm6914, %v7101, %v6882
    %v7139 = vsel %vm6915, %v7101, %v6883
    %v7140 = vsel %vm6916, %v7104, %v6884
    %v7141 = vsel %vm6917, %v7104, %v6885
    %v7142 = vsel %vm6918, %v7107, %v6886
    %v7143 = vsel %vm6919, %v7107, %v6887
    %v7144 = vsel %vm6920, %v7110, %v6888
    %v7145 = vsel %vm6921, %v7110, %v6889
    %v7146 = vsel %vm6922, %v7113, %v6890
    %v7147 = vsel %vm6923, %v7113, %v6891
    %v7148 = vsel %vm6924, %v7116, %v6892
    %v7149 = vsel %vm6925, %v7116, %v6893
    %v7150 = vsel %vm6926, %v7119, %v6894
    %v7151 = vsel %vm6927, %v7119, %v6895
    %vm7152 = vcmp.ge.f32.partialorder %v80, 47.0
    %vm7153 = vcmp.ge.f32.partialorder %v81, 47.0
    %vm7154 = vcmp.ge.f32.partialorder %v82, 47.0
    %vm7155 = vcmp.ge.f32.partialorder %v83, 47.0
    %vm7156 = vcmp.ge.f32.partialorder %v84, 47.0
    %vm7157 = vcmp.ge.f32.partialorder %v85, 47.0
    %vm7158 = vcmp.ge.f32.partialorder %v86, 47.0
    %vm7159 = vcmp.ge.f32.partialorder %v87, 47.0
    %vm7160 = vcmp.ge.f32.partialorder %v88, 47.0
    %vm7161 = vcmp.ge.f32.partialorder %v89, 47.0
    %vm7162 = vcmp.ge.f32.partialorder %v90, 47.0
    %vm7163 = vcmp.ge.f32.partialorder %v91, 47.0
    %vm7164 = vcmp.ge.f32.partialorder %v92, 47.0
    %vm7165 = vcmp.ge.f32.partialorder %v93, 47.0
    %vm7166 = vcmp.ge.f32.partialorder %v94, 47.0
    %vm7167 = vcmp.ge.f32.partialorder %v95, 47.0
    %vm7168 = vcmp.ge.f32.partialorder %v96, 47.0
    %vm7169 = vcmp.ge.f32.partialorder %v97, 47.0
    %vm7170 = vcmp.ge.f32.partialorder %v98, 47.0
    %vm7171 = vcmp.ge.f32.partialorder %v99, 47.0
    %vm7172 = vcmp.ge.f32.partialorder %v100, 47.0
    %vm7173 = vcmp.ge.f32.partialorder %v101, 47.0
    %vm7174 = vcmp.ge.f32.partialorder %v102, 47.0
    %vm7175 = vcmp.ge.f32.partialorder %v103, 47.0
    %vm7176 = vcmp.ge.f32.partialorder %v104, 47.0
    %vm7177 = vcmp.ge.f32.partialorder %v105, 47.0
    %vm7178 = vcmp.ge.f32.partialorder %v106, 47.0
    %vm7179 = vcmp.ge.f32.partialorder %v107, 47.0
    %vm7180 = vcmp.ge.f32.partialorder %v108, 47.0
    %vm7181 = vcmp.ge.f32.partialorder %v109, 47.0
    %vm7182 = vcmp.ge.f32.partialorder %v110, 47.0
    %vm7183 = vcmp.ge.f32.partialorder %v111, 47.0
    %7184 = vset.pattern.permute.xlu0 108
    %7185 = vperm.xlu0 %7184, %v72
    %v7186 = vpop.permute.xlu0 %7185
    %7187 = vset.pattern.permute.xlu0 108
    %7188 = vperm.xlu0 %7187, %v73
    %v7189 = vpop.permute.xlu0 %7188
    %7190 = vset.pattern.permute.xlu0 108
    %7191 = vperm.xlu0 %7190, %v74
    %v7192 = vpop.permute.xlu0 %7191
    %7193 = vset.pattern.permute.xlu0 108
    %7194 = vperm.xlu0 %7193, %v75
    %v7195 = vpop.permute.xlu0 %7194
    %7196 = vset.pattern.permute.xlu0 108
    %7197 = vperm.xlu0 %7196, %v76
    %v7198 = vpop.permute.xlu0 %7197
    %7199 = vset.pattern.permute.xlu0 108
    %7200 = vperm.xlu0 %7199, %v77
    %v7201 = vpop.permute.xlu0 %7200
    %7202 = vset.pattern.permute.xlu0 108
    %7203 = vperm.xlu0 %7202, %v78
    %v7204 = vpop.permute.xlu0 %7203
    %7205 = vset.pattern.permute.xlu0 108
    %7206 = vperm.xlu0 %7205, %v79
    %v7207 = vpop.permute.xlu0 %7206
    %v7208 = vsel %vm7152, %v7186, %v6952
    %v7209 = vsel %vm7153, %v7186, %v6953
    %v7210 = vsel %vm7154, %v7189, %v6954
    %v7211 = vsel %vm7155, %v7189, %v6955
    %v7212 = vsel %vm7156, %v7192, %v6956
    %v7213 = vsel %vm7157, %v7192, %v6957
    %v7214 = vsel %vm7158, %v7195, %v6958
    %v7215 = vsel %vm7159, %v7195, %v6959
    %v7216 = vsel %vm7160, %v7198, %v6960
    %v7217 = vsel %vm7161, %v7198, %v6961
    %v7218 = vsel %vm7162, %v7201, %v6962
    %v7219 = vsel %vm7163, %v7201, %v6963
    %v7220 = vsel %vm7164, %v7204, %v6964
    %v7221 = vsel %vm7165, %v7204, %v6965
    %v7222 = vsel %vm7166, %v7207, %v6966
    %v7223 = vsel %vm7167, %v7207, %v6967
    %v7224 = vsel %vm7168, %v7186, %v6968
    %v7225 = vsel %vm7169, %v7186, %v6969
    %v7226 = vsel %vm7170, %v7189, %v6970
    %v7227 = vsel %vm7171, %v7189, %v6971
    %v7228 = vsel %vm7172, %v7192, %v6972
    %v7229 = vsel %vm7173, %v7192, %v6973
    %v7230 = vsel %vm7174, %v7195, %v6974
    %v7231 = vsel %vm7175, %v7195, %v6975
    %v7232 = vsel %vm7176, %v7198, %v6976
    %v7233 = vsel %vm7177, %v7198, %v6977
    %v7234 = vsel %vm7178, %v7201, %v6978
    %v7235 = vsel %vm7179, %v7201, %v6979
    %v7236 = vsel %vm7180, %v7204, %v6980
    %v7237 = vsel %vm7181, %v7204, %v6981
    %v7238 = vsel %vm7182, %v7207, %v6982
    %v7239 = vsel %vm7183, %v7207, %v6983
    %7240 = vset.pattern.permute.xlu0 109
    %7241 = vperm.xlu0 %7240, %v72
    %v7242 = vpop.permute.xlu0 %7241
    %7243 = vset.pattern.permute.xlu0 109
    %7244 = vperm.xlu0 %7243, %v73
    %v7245 = vpop.permute.xlu0 %7244
    %7246 = vset.pattern.permute.xlu0 109
    %7247 = vperm.xlu0 %7246, %v74
    %v7248 = vpop.permute.xlu0 %7247
    %7249 = vset.pattern.permute.xlu0 109
    %7250 = vperm.xlu0 %7249, %v75
    %v7251 = vpop.permute.xlu0 %7250
    %7252 = vset.pattern.permute.xlu0 109
    %7253 = vperm.xlu0 %7252, %v76
    %v7254 = vpop.permute.xlu0 %7253
    %7255 = vset.pattern.permute.xlu0 109
    %7256 = vperm.xlu0 %7255, %v77
    %v7257 = vpop.permute.xlu0 %7256
    %7258 = vset.pattern.permute.xlu0 109
    %7259 = vperm.xlu0 %7258, %v78
    %v7260 = vpop.permute.xlu0 %7259
    %7261 = vset.pattern.permute.xlu0 109
    %7262 = vperm.xlu0 %7261, %v79
    %v7263 = vpop.permute.xlu0 %7262
    %v7264 = vsel %vm7152, %v7242, %v7008
    %v7265 = vsel %vm7153, %v7242, %v7009
    %v7266 = vsel %vm7154, %v7245, %v7010
    %v7267 = vsel %vm7155, %v7245, %v7011
    %v7268 = vsel %vm7156, %v7248, %v7012
    %v7269 = vsel %vm7157, %v7248, %v7013
    %v7270 = vsel %vm7158, %v7251, %v7014
    %v7271 = vsel %vm7159, %v7251, %v7015
    %v7272 = vsel %vm7160, %v7254, %v7016
    %v7273 = vsel %vm7161, %v7254, %v7017
    %v7274 = vsel %vm7162, %v7257, %v7018
    %v7275 = vsel %vm7163, %v7257, %v7019
    %v7276 = vsel %vm7164, %v7260, %v7020
    %v7277 = vsel %vm7165, %v7260, %v7021
    %v7278 = vsel %vm7166, %v7263, %v7022
    %v7279 = vsel %vm7167, %v7263, %v7023
    %v7280 = vsel %vm7168, %v7242, %v7024
    %v7281 = vsel %vm7169, %v7242, %v7025
    %v7282 = vsel %vm7170, %v7245, %v7026
    %v7283 = vsel %vm7171, %v7245, %v7027
    %v7284 = vsel %vm7172, %v7248, %v7028
    %v7285 = vsel %vm7173, %v7248, %v7029
    %v7286 = vsel %vm7174, %v7251, %v7030
    %v7287 = vsel %vm7175, %v7251, %v7031
    %v7288 = vsel %vm7176, %v7254, %v7032
    %v7289 = vsel %vm7177, %v7254, %v7033
    %v7290 = vsel %vm7178, %v7257, %v7034
    %v7291 = vsel %vm7179, %v7257, %v7035
    %v7292 = vsel %vm7180, %v7260, %v7036
    %v7293 = vsel %vm7181, %v7260, %v7037
    %v7294 = vsel %vm7182, %v7263, %v7038
    %v7295 = vsel %vm7183, %v7263, %v7039
    %7296 = vset.pattern.permute.xlu0 110
    %7297 = vperm.xlu0 %7296, %v72
    %v7298 = vpop.permute.xlu0 %7297
    %7299 = vset.pattern.permute.xlu0 110
    %7300 = vperm.xlu0 %7299, %v73
    %v7301 = vpop.permute.xlu0 %7300
    %7302 = vset.pattern.permute.xlu0 110
    %7303 = vperm.xlu0 %7302, %v74
    %v7304 = vpop.permute.xlu0 %7303
    %7305 = vset.pattern.permute.xlu0 110
    %7306 = vperm.xlu0 %7305, %v75
    %v7307 = vpop.permute.xlu0 %7306
    %7308 = vset.pattern.permute.xlu0 110
    %7309 = vperm.xlu0 %7308, %v76
    %v7310 = vpop.permute.xlu0 %7309
    %7311 = vset.pattern.permute.xlu0 110
    %7312 = vperm.xlu0 %7311, %v77
    %v7313 = vpop.permute.xlu0 %7312
    %7314 = vset.pattern.permute.xlu0 110
    %7315 = vperm.xlu0 %7314, %v78
    %v7316 = vpop.permute.xlu0 %7315
    %7317 = vset.pattern.permute.xlu0 110
    %7318 = vperm.xlu0 %7317, %v79
    %v7319 = vpop.permute.xlu0 %7318
    %v7320 = vsel %vm7152, %v7298, %v7064
    %v7321 = vsel %vm7153, %v7298, %v7065
    %v7322 = vsel %vm7154, %v7301, %v7066
    %v7323 = vsel %vm7155, %v7301, %v7067
    %v7324 = vsel %vm7156, %v7304, %v7068
    %v7325 = vsel %vm7157, %v7304, %v7069
    %v7326 = vsel %vm7158, %v7307, %v7070
    %v7327 = vsel %vm7159, %v7307, %v7071
    %v7328 = vsel %vm7160, %v7310, %v7072
    %v7329 = vsel %vm7161, %v7310, %v7073
    %v7330 = vsel %vm7162, %v7313, %v7074
    %v7331 = vsel %vm7163, %v7313, %v7075
    %v7332 = vsel %vm7164, %v7316, %v7076
    %v7333 = vsel %vm7165, %v7316, %v7077
    %v7334 = vsel %vm7166, %v7319, %v7078
    %v7335 = vsel %vm7167, %v7319, %v7079
    %v7336 = vsel %vm7168, %v7298, %v7080
    %v7337 = vsel %vm7169, %v7298, %v7081
    %v7338 = vsel %vm7170, %v7301, %v7082
    %v7339 = vsel %vm7171, %v7301, %v7083
    %v7340 = vsel %vm7172, %v7304, %v7084
    %v7341 = vsel %vm7173, %v7304, %v7085
    %v7342 = vsel %vm7174, %v7307, %v7086
    %v7343 = vsel %vm7175, %v7307, %v7087
    %v7344 = vsel %vm7176, %v7310, %v7088
    %v7345 = vsel %vm7177, %v7310, %v7089
    %v7346 = vsel %vm7178, %v7313, %v7090
    %v7347 = vsel %vm7179, %v7313, %v7091
    %v7348 = vsel %vm7180, %v7316, %v7092
    %v7349 = vsel %vm7181, %v7316, %v7093
    %v7350 = vsel %vm7182, %v7319, %v7094
    %v7351 = vsel %vm7183, %v7319, %v7095
    %7352 = vset.pattern.permute.xlu0 111
    %7353 = vperm.xlu0 %7352, %v72
    %v7354 = vpop.permute.xlu0 %7353
    %7355 = vset.pattern.permute.xlu0 111
    %7356 = vperm.xlu0 %7355, %v73
    %v7357 = vpop.permute.xlu0 %7356
    %7358 = vset.pattern.permute.xlu0 111
    %7359 = vperm.xlu0 %7358, %v74
    %v7360 = vpop.permute.xlu0 %7359
    %7361 = vset.pattern.permute.xlu0 111
    %7362 = vperm.xlu0 %7361, %v75
    %v7363 = vpop.permute.xlu0 %7362
    %7364 = vset.pattern.permute.xlu0 111
    %7365 = vperm.xlu0 %7364, %v76
    %v7366 = vpop.permute.xlu0 %7365
    %7367 = vset.pattern.permute.xlu0 111
    %7368 = vperm.xlu0 %7367, %v77
    %v7369 = vpop.permute.xlu0 %7368
    %7370 = vset.pattern.permute.xlu0 111
    %7371 = vperm.xlu0 %7370, %v78
    %v7372 = vpop.permute.xlu0 %7371
    %7373 = vset.pattern.permute.xlu0 111
    %7374 = vperm.xlu0 %7373, %v79
    %v7375 = vpop.permute.xlu0 %7374
    %v7376 = vsel %vm7152, %v7354, %v7120
    %v7377 = vsel %vm7153, %v7354, %v7121
    %v7378 = vsel %vm7154, %v7357, %v7122
    %v7379 = vsel %vm7155, %v7357, %v7123
    %v7380 = vsel %vm7156, %v7360, %v7124
    %v7381 = vsel %vm7157, %v7360, %v7125
    %v7382 = vsel %vm7158, %v7363, %v7126
    %v7383 = vsel %vm7159, %v7363, %v7127
    %v7384 = vsel %vm7160, %v7366, %v7128
    %v7385 = vsel %vm7161, %v7366, %v7129
    %v7386 = vsel %vm7162, %v7369, %v7130
    %v7387 = vsel %vm7163, %v7369, %v7131
    %v7388 = vsel %vm7164, %v7372, %v7132
    %v7389 = vsel %vm7165, %v7372, %v7133
    %v7390 = vsel %vm7166, %v7375, %v7134
    %v7391 = vsel %vm7167, %v7375, %v7135
    %v7392 = vsel %vm7168, %v7354, %v7136
    %v7393 = vsel %vm7169, %v7354, %v7137
    %v7394 = vsel %vm7170, %v7357, %v7138
    %v7395 = vsel %vm7171, %v7357, %v7139
    %v7396 = vsel %vm7172, %v7360, %v7140
    %v7397 = vsel %vm7173, %v7360, %v7141
    %v7398 = vsel %vm7174, %v7363, %v7142
    %v7399 = vsel %vm7175, %v7363, %v7143
    %v7400 = vsel %vm7176, %v7366, %v7144
    %v7401 = vsel %vm7177, %v7366, %v7145
    %v7402 = vsel %vm7178, %v7369, %v7146
    %v7403 = vsel %vm7179, %v7369, %v7147
    %v7404 = vsel %vm7180, %v7372, %v7148
    %v7405 = vsel %vm7181, %v7372, %v7149
    %v7406 = vsel %vm7182, %v7375, %v7150
    %v7407 = vsel %vm7183, %v7375, %v7151
    %vm7408 = vcmp.ge.f32.partialorder %v80, 51.0
    %vm7409 = vcmp.ge.f32.partialorder %v81, 51.0
    %vm7410 = vcmp.ge.f32.partialorder %v82, 51.0
    %vm7411 = vcmp.ge.f32.partialorder %v83, 51.0
    %vm7412 = vcmp.ge.f32.partialorder %v84, 51.0
    %vm7413 = vcmp.ge.f32.partialorder %v85, 51.0
    %vm7414 = vcmp.ge.f32.partialorder %v86, 51.0
    %vm7415 = vcmp.ge.f32.partialorder %v87, 51.0
    %vm7416 = vcmp.ge.f32.partialorder %v88, 51.0
    %vm7417 = vcmp.ge.f32.partialorder %v89, 51.0
    %vm7418 = vcmp.ge.f32.partialorder %v90, 51.0
    %vm7419 = vcmp.ge.f32.partialorder %v91, 51.0
    %vm7420 = vcmp.ge.f32.partialorder %v92, 51.0
    %vm7421 = vcmp.ge.f32.partialorder %v93, 51.0
    %vm7422 = vcmp.ge.f32.partialorder %v94, 51.0
    %vm7423 = vcmp.ge.f32.partialorder %v95, 51.0
    %vm7424 = vcmp.ge.f32.partialorder %v96, 51.0
    %vm7425 = vcmp.ge.f32.partialorder %v97, 51.0
    %vm7426 = vcmp.ge.f32.partialorder %v98, 51.0
    %vm7427 = vcmp.ge.f32.partialorder %v99, 51.0
    %vm7428 = vcmp.ge.f32.partialorder %v100, 51.0
    %vm7429 = vcmp.ge.f32.partialorder %v101, 51.0
    %vm7430 = vcmp.ge.f32.partialorder %v102, 51.0
    %vm7431 = vcmp.ge.f32.partialorder %v103, 51.0
    %vm7432 = vcmp.ge.f32.partialorder %v104, 51.0
    %vm7433 = vcmp.ge.f32.partialorder %v105, 51.0
    %vm7434 = vcmp.ge.f32.partialorder %v106, 51.0
    %vm7435 = vcmp.ge.f32.partialorder %v107, 51.0
    %vm7436 = vcmp.ge.f32.partialorder %v108, 51.0
    %vm7437 = vcmp.ge.f32.partialorder %v109, 51.0
    %vm7438 = vcmp.ge.f32.partialorder %v110, 51.0
    %vm7439 = vcmp.ge.f32.partialorder %v111, 51.0
    %7440 = vset.pattern.permute.xlu0 112
    %7441 = vperm.xlu0 %7440, %v72
    %v7442 = vpop.permute.xlu0 %7441
    %7443 = vset.pattern.permute.xlu0 112
    %7444 = vperm.xlu0 %7443, %v73
    %v7445 = vpop.permute.xlu0 %7444
    %7446 = vset.pattern.permute.xlu0 112
    %7447 = vperm.xlu0 %7446, %v74
    %v7448 = vpop.permute.xlu0 %7447
    %7449 = vset.pattern.permute.xlu0 112
    %7450 = vperm.xlu0 %7449, %v75
    %v7451 = vpop.permute.xlu0 %7450
    %7452 = vset.pattern.permute.xlu0 112
    %7453 = vperm.xlu0 %7452, %v76
    %v7454 = vpop.permute.xlu0 %7453
    %7455 = vset.pattern.permute.xlu0 112
    %7456 = vperm.xlu0 %7455, %v77
    %v7457 = vpop.permute.xlu0 %7456
    %7458 = vset.pattern.permute.xlu0 112
    %7459 = vperm.xlu0 %7458, %v78
    %v7460 = vpop.permute.xlu0 %7459
    %7461 = vset.pattern.permute.xlu0 112
    %7462 = vperm.xlu0 %7461, %v79
    %v7463 = vpop.permute.xlu0 %7462
    %v7464 = vsel %vm7408, %v7442, %v7208
    %v7465 = vsel %vm7409, %v7442, %v7209
    %v7466 = vsel %vm7410, %v7445, %v7210
    %v7467 = vsel %vm7411, %v7445, %v7211
    %v7468 = vsel %vm7412, %v7448, %v7212
    %v7469 = vsel %vm7413, %v7448, %v7213
    %v7470 = vsel %vm7414, %v7451, %v7214
    %v7471 = vsel %vm7415, %v7451, %v7215
    %v7472 = vsel %vm7416, %v7454, %v7216
    %v7473 = vsel %vm7417, %v7454, %v7217
    %v7474 = vsel %vm7418, %v7457, %v7218
    %v7475 = vsel %vm7419, %v7457, %v7219
    %v7476 = vsel %vm7420, %v7460, %v7220
    %v7477 = vsel %vm7421, %v7460, %v7221
    %v7478 = vsel %vm7422, %v7463, %v7222
    %v7479 = vsel %vm7423, %v7463, %v7223
    %v7480 = vsel %vm7424, %v7442, %v7224
    %v7481 = vsel %vm7425, %v7442, %v7225
    %v7482 = vsel %vm7426, %v7445, %v7226
    %v7483 = vsel %vm7427, %v7445, %v7227
    %v7484 = vsel %vm7428, %v7448, %v7228
    %v7485 = vsel %vm7429, %v7448, %v7229
    %v7486 = vsel %vm7430, %v7451, %v7230
    %v7487 = vsel %vm7431, %v7451, %v7231
    %v7488 = vsel %vm7432, %v7454, %v7232
    %v7489 = vsel %vm7433, %v7454, %v7233
    %v7490 = vsel %vm7434, %v7457, %v7234
    %v7491 = vsel %vm7435, %v7457, %v7235
    %v7492 = vsel %vm7436, %v7460, %v7236
    %v7493 = vsel %vm7437, %v7460, %v7237
    %v7494 = vsel %vm7438, %v7463, %v7238
    %v7495 = vsel %vm7439, %v7463, %v7239
    %7496 = vset.pattern.permute.xlu0 113
    %7497 = vperm.xlu0 %7496, %v72
    %v7498 = vpop.permute.xlu0 %7497
    %7499 = vset.pattern.permute.xlu0 113
    %7500 = vperm.xlu0 %7499, %v73
    %v7501 = vpop.permute.xlu0 %7500
    %7502 = vset.pattern.permute.xlu0 113
    %7503 = vperm.xlu0 %7502, %v74
    %v7504 = vpop.permute.xlu0 %7503
    %7505 = vset.pattern.permute.xlu0 113
    %7506 = vperm.xlu0 %7505, %v75
    %v7507 = vpop.permute.xlu0 %7506
    %7508 = vset.pattern.permute.xlu0 113
    %7509 = vperm.xlu0 %7508, %v76
    %v7510 = vpop.permute.xlu0 %7509
    %7511 = vset.pattern.permute.xlu0 113
    %7512 = vperm.xlu0 %7511, %v77
    %v7513 = vpop.permute.xlu0 %7512
    %7514 = vset.pattern.permute.xlu0 113
    %7515 = vperm.xlu0 %7514, %v78
    %v7516 = vpop.permute.xlu0 %7515
    %7517 = vset.pattern.permute.xlu0 113
    %7518 = vperm.xlu0 %7517, %v79
    %v7519 = vpop.permute.xlu0 %7518
    %v7520 = vsel %vm7408, %v7498, %v7264
    %v7521 = vsel %vm7409, %v7498, %v7265
    %v7522 = vsel %vm7410, %v7501, %v7266
    %v7523 = vsel %vm7411, %v7501, %v7267
    %v7524 = vsel %vm7412, %v7504, %v7268
    %v7525 = vsel %vm7413, %v7504, %v7269
    %v7526 = vsel %vm7414, %v7507, %v7270
    %v7527 = vsel %vm7415, %v7507, %v7271
    %v7528 = vsel %vm7416, %v7510, %v7272
    %v7529 = vsel %vm7417, %v7510, %v7273
    %v7530 = vsel %vm7418, %v7513, %v7274
    %v7531 = vsel %vm7419, %v7513, %v7275
    %v7532 = vsel %vm7420, %v7516, %v7276
    %v7533 = vsel %vm7421, %v7516, %v7277
    %v7534 = vsel %vm7422, %v7519, %v7278
    %v7535 = vsel %vm7423, %v7519, %v7279
    %v7536 = vsel %vm7424, %v7498, %v7280
    %v7537 = vsel %vm7425, %v7498, %v7281
    %v7538 = vsel %vm7426, %v7501, %v7282
    %v7539 = vsel %vm7427, %v7501, %v7283
    %v7540 = vsel %vm7428, %v7504, %v7284
    %v7541 = vsel %vm7429, %v7504, %v7285
    %v7542 = vsel %vm7430, %v7507, %v7286
    %v7543 = vsel %vm7431, %v7507, %v7287
    %v7544 = vsel %vm7432, %v7510, %v7288
    %v7545 = vsel %vm7433, %v7510, %v7289
    %v7546 = vsel %vm7434, %v7513, %v7290
    %v7547 = vsel %vm7435, %v7513, %v7291
    %v7548 = vsel %vm7436, %v7516, %v7292
    %v7549 = vsel %vm7437, %v7516, %v7293
    %v7550 = vsel %vm7438, %v7519, %v7294
    %v7551 = vsel %vm7439, %v7519, %v7295
    %7552 = vset.pattern.permute.xlu0 114
    %7553 = vperm.xlu0 %7552, %v72
    %v7554 = vpop.permute.xlu0 %7553
    %7555 = vset.pattern.permute.xlu0 114
    %7556 = vperm.xlu0 %7555, %v73
    %v7557 = vpop.permute.xlu0 %7556
    %7558 = vset.pattern.permute.xlu0 114
    %7559 = vperm.xlu0 %7558, %v74
    %v7560 = vpop.permute.xlu0 %7559
    %7561 = vset.pattern.permute.xlu0 114
    %7562 = vperm.xlu0 %7561, %v75
    %v7563 = vpop.permute.xlu0 %7562
    %7564 = vset.pattern.permute.xlu0 114
    %7565 = vperm.xlu0 %7564, %v76
    %v7566 = vpop.permute.xlu0 %7565
    %7567 = vset.pattern.permute.xlu0 114
    %7568 = vperm.xlu0 %7567, %v77
    %v7569 = vpop.permute.xlu0 %7568
    %7570 = vset.pattern.permute.xlu0 114
    %7571 = vperm.xlu0 %7570, %v78
    %v7572 = vpop.permute.xlu0 %7571
    %7573 = vset.pattern.permute.xlu0 114
    %7574 = vperm.xlu0 %7573, %v79
    %v7575 = vpop.permute.xlu0 %7574
    %v7576 = vsel %vm7408, %v7554, %v7320
    %v7577 = vsel %vm7409, %v7554, %v7321
    %v7578 = vsel %vm7410, %v7557, %v7322
    %v7579 = vsel %vm7411, %v7557, %v7323
    %v7580 = vsel %vm7412, %v7560, %v7324
    %v7581 = vsel %vm7413, %v7560, %v7325
    %v7582 = vsel %vm7414, %v7563, %v7326
    %v7583 = vsel %vm7415, %v7563, %v7327
    %v7584 = vsel %vm7416, %v7566, %v7328
    %v7585 = vsel %vm7417, %v7566, %v7329
    %v7586 = vsel %vm7418, %v7569, %v7330
    %v7587 = vsel %vm7419, %v7569, %v7331
    %v7588 = vsel %vm7420, %v7572, %v7332
    %v7589 = vsel %vm7421, %v7572, %v7333
    %v7590 = vsel %vm7422, %v7575, %v7334
    %v7591 = vsel %vm7423, %v7575, %v7335
    %v7592 = vsel %vm7424, %v7554, %v7336
    %v7593 = vsel %vm7425, %v7554, %v7337
    %v7594 = vsel %vm7426, %v7557, %v7338
    %v7595 = vsel %vm7427, %v7557, %v7339
    %v7596 = vsel %vm7428, %v7560, %v7340
    %v7597 = vsel %vm7429, %v7560, %v7341
    %v7598 = vsel %vm7430, %v7563, %v7342
    %v7599 = vsel %vm7431, %v7563, %v7343
    %v7600 = vsel %vm7432, %v7566, %v7344
    %v7601 = vsel %vm7433, %v7566, %v7345
    %v7602 = vsel %vm7434, %v7569, %v7346
    %v7603 = vsel %vm7435, %v7569, %v7347
    %v7604 = vsel %vm7436, %v7572, %v7348
    %v7605 = vsel %vm7437, %v7572, %v7349
    %v7606 = vsel %vm7438, %v7575, %v7350
    %v7607 = vsel %vm7439, %v7575, %v7351
    %7608 = vset.pattern.permute.xlu0 115
    %7609 = vperm.xlu0 %7608, %v72
    %v7610 = vpop.permute.xlu0 %7609
    %7611 = vset.pattern.permute.xlu0 115
    %7612 = vperm.xlu0 %7611, %v73
    %v7613 = vpop.permute.xlu0 %7612
    %7614 = vset.pattern.permute.xlu0 115
    %7615 = vperm.xlu0 %7614, %v74
    %v7616 = vpop.permute.xlu0 %7615
    %7617 = vset.pattern.permute.xlu0 115
    %7618 = vperm.xlu0 %7617, %v75
    %v7619 = vpop.permute.xlu0 %7618
    %7620 = vset.pattern.permute.xlu0 115
    %7621 = vperm.xlu0 %7620, %v76
    %v7622 = vpop.permute.xlu0 %7621
    %7623 = vset.pattern.permute.xlu0 115
    %7624 = vperm.xlu0 %7623, %v77
    %v7625 = vpop.permute.xlu0 %7624
    %7626 = vset.pattern.permute.xlu0 115
    %7627 = vperm.xlu0 %7626, %v78
    %v7628 = vpop.permute.xlu0 %7627
    %7629 = vset.pattern.permute.xlu0 115
    %7630 = vperm.xlu0 %7629, %v79
    %v7631 = vpop.permute.xlu0 %7630
    %v7632 = vsel %vm7408, %v7610, %v7376
    %v7633 = vsel %vm7409, %v7610, %v7377
    %v7634 = vsel %vm7410, %v7613, %v7378
    %v7635 = vsel %vm7411, %v7613, %v7379
    %v7636 = vsel %vm7412, %v7616, %v7380
    %v7637 = vsel %vm7413, %v7616, %v7381
    %v7638 = vsel %vm7414, %v7619, %v7382
    %v7639 = vsel %vm7415, %v7619, %v7383
    %v7640 = vsel %vm7416, %v7622, %v7384
    %v7641 = vsel %vm7417, %v7622, %v7385
    %v7642 = vsel %vm7418, %v7625, %v7386
    %v7643 = vsel %vm7419, %v7625, %v7387
    %v7644 = vsel %vm7420, %v7628, %v7388
    %v7645 = vsel %vm7421, %v7628, %v7389
    %v7646 = vsel %vm7422, %v7631, %v7390
    %v7647 = vsel %vm7423, %v7631, %v7391
    %v7648 = vsel %vm7424, %v7610, %v7392
    %v7649 = vsel %vm7425, %v7610, %v7393
    %v7650 = vsel %vm7426, %v7613, %v7394
    %v7651 = vsel %vm7427, %v7613, %v7395
    %v7652 = vsel %vm7428, %v7616, %v7396
    %v7653 = vsel %vm7429, %v7616, %v7397
    %v7654 = vsel %vm7430, %v7619, %v7398
    %v7655 = vsel %vm7431, %v7619, %v7399
    %v7656 = vsel %vm7432, %v7622, %v7400
    %v7657 = vsel %vm7433, %v7622, %v7401
    %v7658 = vsel %vm7434, %v7625, %v7402
    %v7659 = vsel %vm7435, %v7625, %v7403
    %v7660 = vsel %vm7436, %v7628, %v7404
    %v7661 = vsel %vm7437, %v7628, %v7405
    %v7662 = vsel %vm7438, %v7631, %v7406
    %v7663 = vsel %vm7439, %v7631, %v7407
    %vm7664 = vcmp.ge.f32.partialorder %v80, 55.0
    %vm7665 = vcmp.ge.f32.partialorder %v81, 55.0
    %vm7666 = vcmp.ge.f32.partialorder %v82, 55.0
    %vm7667 = vcmp.ge.f32.partialorder %v83, 55.0
    %vm7668 = vcmp.ge.f32.partialorder %v84, 55.0
    %vm7669 = vcmp.ge.f32.partialorder %v85, 55.0
    %vm7670 = vcmp.ge.f32.partialorder %v86, 55.0
    %vm7671 = vcmp.ge.f32.partialorder %v87, 55.0
    %vm7672 = vcmp.ge.f32.partialorder %v88, 55.0
    %vm7673 = vcmp.ge.f32.partialorder %v89, 55.0
    %vm7674 = vcmp.ge.f32.partialorder %v90, 55.0
    %vm7675 = vcmp.ge.f32.partialorder %v91, 55.0
    %vm7676 = vcmp.ge.f32.partialorder %v92, 55.0
    %vm7677 = vcmp.ge.f32.partialorder %v93, 55.0
    %vm7678 = vcmp.ge.f32.partialorder %v94, 55.0
    %vm7679 = vcmp.ge.f32.partialorder %v95, 55.0
    %vm7680 = vcmp.ge.f32.partialorder %v96, 55.0
    %vm7681 = vcmp.ge.f32.partialorder %v97, 55.0
    %vm7682 = vcmp.ge.f32.partialorder %v98, 55.0
    %vm7683 = vcmp.ge.f32.partialorder %v99, 55.0
    %vm7684 = vcmp.ge.f32.partialorder %v100, 55.0
    %vm7685 = vcmp.ge.f32.partialorder %v101, 55.0
    %vm7686 = vcmp.ge.f32.partialorder %v102, 55.0
    %vm7687 = vcmp.ge.f32.partialorder %v103, 55.0
    %vm7688 = vcmp.ge.f32.partialorder %v104, 55.0
    %vm7689 = vcmp.ge.f32.partialorder %v105, 55.0
    %vm7690 = vcmp.ge.f32.partialorder %v106, 55.0
    %vm7691 = vcmp.ge.f32.partialorder %v107, 55.0
    %vm7692 = vcmp.ge.f32.partialorder %v108, 55.0
    %vm7693 = vcmp.ge.f32.partialorder %v109, 55.0
    %vm7694 = vcmp.ge.f32.partialorder %v110, 55.0
    %vm7695 = vcmp.ge.f32.partialorder %v111, 55.0
    %7696 = vset.pattern.permute.xlu0 116
    %7697 = vperm.xlu0 %7696, %v72
    %v7698 = vpop.permute.xlu0 %7697
    %7699 = vset.pattern.permute.xlu0 116
    %7700 = vperm.xlu0 %7699, %v73
    %v7701 = vpop.permute.xlu0 %7700
    %7702 = vset.pattern.permute.xlu0 116
    %7703 = vperm.xlu0 %7702, %v74
    %v7704 = vpop.permute.xlu0 %7703
    %7705 = vset.pattern.permute.xlu0 116
    %7706 = vperm.xlu0 %7705, %v75
    %v7707 = vpop.permute.xlu0 %7706
    %7708 = vset.pattern.permute.xlu0 116
    %7709 = vperm.xlu0 %7708, %v76
    %v7710 = vpop.permute.xlu0 %7709
    %7711 = vset.pattern.permute.xlu0 116
    %7712 = vperm.xlu0 %7711, %v77
    %v7713 = vpop.permute.xlu0 %7712
    %7714 = vset.pattern.permute.xlu0 116
    %7715 = vperm.xlu0 %7714, %v78
    %v7716 = vpop.permute.xlu0 %7715
    %7717 = vset.pattern.permute.xlu0 116
    %7718 = vperm.xlu0 %7717, %v79
    %v7719 = vpop.permute.xlu0 %7718
    %v7720 = vsel %vm7664, %v7698, %v7464
    %v7721 = vsel %vm7665, %v7698, %v7465
    %v7722 = vsel %vm7666, %v7701, %v7466
    %v7723 = vsel %vm7667, %v7701, %v7467
    %v7724 = vsel %vm7668, %v7704, %v7468
    %v7725 = vsel %vm7669, %v7704, %v7469
    %v7726 = vsel %vm7670, %v7707, %v7470
    %v7727 = vsel %vm7671, %v7707, %v7471
    %v7728 = vsel %vm7672, %v7710, %v7472
    %v7729 = vsel %vm7673, %v7710, %v7473
    %v7730 = vsel %vm7674, %v7713, %v7474
    %v7731 = vsel %vm7675, %v7713, %v7475
    %v7732 = vsel %vm7676, %v7716, %v7476
    %v7733 = vsel %vm7677, %v7716, %v7477
    %v7734 = vsel %vm7678, %v7719, %v7478
    %v7735 = vsel %vm7679, %v7719, %v7479
    %v7736 = vsel %vm7680, %v7698, %v7480
    %v7737 = vsel %vm7681, %v7698, %v7481
    %v7738 = vsel %vm7682, %v7701, %v7482
    %v7739 = vsel %vm7683, %v7701, %v7483
    %v7740 = vsel %vm7684, %v7704, %v7484
    %v7741 = vsel %vm7685, %v7704, %v7485
    %v7742 = vsel %vm7686, %v7707, %v7486
    %v7743 = vsel %vm7687, %v7707, %v7487
    %v7744 = vsel %vm7688, %v7710, %v7488
    %v7745 = vsel %vm7689, %v7710, %v7489
    %v7746 = vsel %vm7690, %v7713, %v7490
    %v7747 = vsel %vm7691, %v7713, %v7491
    %v7748 = vsel %vm7692, %v7716, %v7492
    %v7749 = vsel %vm7693, %v7716, %v7493
    %v7750 = vsel %vm7694, %v7719, %v7494
    %v7751 = vsel %vm7695, %v7719, %v7495
    %7752 = vset.pattern.permute.xlu0 117
    %7753 = vperm.xlu0 %7752, %v72
    %v7754 = vpop.permute.xlu0 %7753
    %7755 = vset.pattern.permute.xlu0 117
    %7756 = vperm.xlu0 %7755, %v73
    %v7757 = vpop.permute.xlu0 %7756
    %7758 = vset.pattern.permute.xlu0 117
    %7759 = vperm.xlu0 %7758, %v74
    %v7760 = vpop.permute.xlu0 %7759
    %7761 = vset.pattern.permute.xlu0 117
    %7762 = vperm.xlu0 %7761, %v75
    %v7763 = vpop.permute.xlu0 %7762
    %7764 = vset.pattern.permute.xlu0 117
    %7765 = vperm.xlu0 %7764, %v76
    %v7766 = vpop.permute.xlu0 %7765
    %7767 = vset.pattern.permute.xlu0 117
    %7768 = vperm.xlu0 %7767, %v77
    %v7769 = vpop.permute.xlu0 %7768
    %7770 = vset.pattern.permute.xlu0 117
    %7771 = vperm.xlu0 %7770, %v78
    %v7772 = vpop.permute.xlu0 %7771
    %7773 = vset.pattern.permute.xlu0 117
    %7774 = vperm.xlu0 %7773, %v79
    %v7775 = vpop.permute.xlu0 %7774
    %v7776 = vsel %vm7664, %v7754, %v7520
    %v7777 = vsel %vm7665, %v7754, %v7521
    %v7778 = vsel %vm7666, %v7757, %v7522
    %v7779 = vsel %vm7667, %v7757, %v7523
    %v7780 = vsel %vm7668, %v7760, %v7524
    %v7781 = vsel %vm7669, %v7760, %v7525
    %v7782 = vsel %vm7670, %v7763, %v7526
    %v7783 = vsel %vm7671, %v7763, %v7527
    %v7784 = vsel %vm7672, %v7766, %v7528
    %v7785 = vsel %vm7673, %v7766, %v7529
    %v7786 = vsel %vm7674, %v7769, %v7530
    %v7787 = vsel %vm7675, %v7769, %v7531
    %v7788 = vsel %vm7676, %v7772, %v7532
    %v7789 = vsel %vm7677, %v7772, %v7533
    %v7790 = vsel %vm7678, %v7775, %v7534
    %v7791 = vsel %vm7679, %v7775, %v7535
    %v7792 = vsel %vm7680, %v7754, %v7536
    %v7793 = vsel %vm7681, %v7754, %v7537
    %v7794 = vsel %vm7682, %v7757, %v7538
    %v7795 = vsel %vm7683, %v7757, %v7539
    %v7796 = vsel %vm7684, %v7760, %v7540
    %v7797 = vsel %vm7685, %v7760, %v7541
    %v7798 = vsel %vm7686, %v7763, %v7542
    %v7799 = vsel %vm7687, %v7763, %v7543
    %v7800 = vsel %vm7688, %v7766, %v7544
    %v7801 = vsel %vm7689, %v7766, %v7545
    %v7802 = vsel %vm7690, %v7769, %v7546
    %v7803 = vsel %vm7691, %v7769, %v7547
    %v7804 = vsel %vm7692, %v7772, %v7548
    %v7805 = vsel %vm7693, %v7772, %v7549
    %v7806 = vsel %vm7694, %v7775, %v7550
    %v7807 = vsel %vm7695, %v7775, %v7551
    %7808 = vset.pattern.permute.xlu0 118
    %7809 = vperm.xlu0 %7808, %v72
    %v7810 = vpop.permute.xlu0 %7809
    %7811 = vset.pattern.permute.xlu0 118
    %7812 = vperm.xlu0 %7811, %v73
    %v7813 = vpop.permute.xlu0 %7812
    %7814 = vset.pattern.permute.xlu0 118
    %7815 = vperm.xlu0 %7814, %v74
    %v7816 = vpop.permute.xlu0 %7815
    %7817 = vset.pattern.permute.xlu0 118
    %7818 = vperm.xlu0 %7817, %v75
    %v7819 = vpop.permute.xlu0 %7818
    %7820 = vset.pattern.permute.xlu0 118
    %7821 = vperm.xlu0 %7820, %v76
    %v7822 = vpop.permute.xlu0 %7821
    %7823 = vset.pattern.permute.xlu0 118
    %7824 = vperm.xlu0 %7823, %v77
    %v7825 = vpop.permute.xlu0 %7824
    %7826 = vset.pattern.permute.xlu0 118
    %7827 = vperm.xlu0 %7826, %v78
    %v7828 = vpop.permute.xlu0 %7827
    %7829 = vset.pattern.permute.xlu0 118
    %7830 = vperm.xlu0 %7829, %v79
    %v7831 = vpop.permute.xlu0 %7830
    %v7832 = vsel %vm7664, %v7810, %v7576
    %v7833 = vsel %vm7665, %v7810, %v7577
    %v7834 = vsel %vm7666, %v7813, %v7578
    %v7835 = vsel %vm7667, %v7813, %v7579
    %v7836 = vsel %vm7668, %v7816, %v7580
    %v7837 = vsel %vm7669, %v7816, %v7581
    %v7838 = vsel %vm7670, %v7819, %v7582
    %v7839 = vsel %vm7671, %v7819, %v7583
    %v7840 = vsel %vm7672, %v7822, %v7584
    %v7841 = vsel %vm7673, %v7822, %v7585
    %v7842 = vsel %vm7674, %v7825, %v7586
    %v7843 = vsel %vm7675, %v7825, %v7587
    %v7844 = vsel %vm7676, %v7828, %v7588
    %v7845 = vsel %vm7677, %v7828, %v7589
    %v7846 = vsel %vm7678, %v7831, %v7590
    %v7847 = vsel %vm7679, %v7831, %v7591
    %v7848 = vsel %vm7680, %v7810, %v7592
    %v7849 = vsel %vm7681, %v7810, %v7593
    %v7850 = vsel %vm7682, %v7813, %v7594
    %v7851 = vsel %vm7683, %v7813, %v7595
    %v7852 = vsel %vm7684, %v7816, %v7596
    %v7853 = vsel %vm7685, %v7816, %v7597
    %v7854 = vsel %vm7686, %v7819, %v7598
    %v7855 = vsel %vm7687, %v7819, %v7599
    %v7856 = vsel %vm7688, %v7822, %v7600
    %v7857 = vsel %vm7689, %v7822, %v7601
    %v7858 = vsel %vm7690, %v7825, %v7602
    %v7859 = vsel %vm7691, %v7825, %v7603
    %v7860 = vsel %vm7692, %v7828, %v7604
    %v7861 = vsel %vm7693, %v7828, %v7605
    %v7862 = vsel %vm7694, %v7831, %v7606
    %v7863 = vsel %vm7695, %v7831, %v7607
    %7864 = vset.pattern.permute.xlu0 119
    %7865 = vperm.xlu0 %7864, %v72
    %v7866 = vpop.permute.xlu0 %7865
    %7867 = vset.pattern.permute.xlu0 119
    %7868 = vperm.xlu0 %7867, %v73
    %v7869 = vpop.permute.xlu0 %7868
    %7870 = vset.pattern.permute.xlu0 119
    %7871 = vperm.xlu0 %7870, %v74
    %v7872 = vpop.permute.xlu0 %7871
    %7873 = vset.pattern.permute.xlu0 119
    %7874 = vperm.xlu0 %7873, %v75
    %v7875 = vpop.permute.xlu0 %7874
    %7876 = vset.pattern.permute.xlu0 119
    %7877 = vperm.xlu0 %7876, %v76
    %v7878 = vpop.permute.xlu0 %7877
    %7879 = vset.pattern.permute.xlu0 119
    %7880 = vperm.xlu0 %7879, %v77
    %v7881 = vpop.permute.xlu0 %7880
    %7882 = vset.pattern.permute.xlu0 119
    %7883 = vperm.xlu0 %7882, %v78
    %v7884 = vpop.permute.xlu0 %7883
    %7885 = vset.pattern.permute.xlu0 119
    %7886 = vperm.xlu0 %7885, %v79
    %v7887 = vpop.permute.xlu0 %7886
    %v7888 = vsel %vm7664, %v7866, %v7632
    %v7889 = vsel %vm7665, %v7866, %v7633
    %v7890 = vsel %vm7666, %v7869, %v7634
    %v7891 = vsel %vm7667, %v7869, %v7635
    %v7892 = vsel %vm7668, %v7872, %v7636
    %v7893 = vsel %vm7669, %v7872, %v7637
    %v7894 = vsel %vm7670, %v7875, %v7638
    %v7895 = vsel %vm7671, %v7875, %v7639
    %v7896 = vsel %vm7672, %v7878, %v7640
    %v7897 = vsel %vm7673, %v7878, %v7641
    %v7898 = vsel %vm7674, %v7881, %v7642
    %v7899 = vsel %vm7675, %v7881, %v7643
    %v7900 = vsel %vm7676, %v7884, %v7644
    %v7901 = vsel %vm7677, %v7884, %v7645
    %v7902 = vsel %vm7678, %v7887, %v7646
    %v7903 = vsel %vm7679, %v7887, %v7647
    %v7904 = vsel %vm7680, %v7866, %v7648
    %v7905 = vsel %vm7681, %v7866, %v7649
    %v7906 = vsel %vm7682, %v7869, %v7650
    %v7907 = vsel %vm7683, %v7869, %v7651
    %v7908 = vsel %vm7684, %v7872, %v7652
    %v7909 = vsel %vm7685, %v7872, %v7653
    %v7910 = vsel %vm7686, %v7875, %v7654
    %v7911 = vsel %vm7687, %v7875, %v7655
    %v7912 = vsel %vm7688, %v7878, %v7656
    %v7913 = vsel %vm7689, %v7878, %v7657
    %v7914 = vsel %vm7690, %v7881, %v7658
    %v7915 = vsel %vm7691, %v7881, %v7659
    %v7916 = vsel %vm7692, %v7884, %v7660
    %v7917 = vsel %vm7693, %v7884, %v7661
    %v7918 = vsel %vm7694, %v7887, %v7662
    %v7919 = vsel %vm7695, %v7887, %v7663
    %vm7920 = vcmp.ge.f32.partialorder %v80, 59.0
    %vm7921 = vcmp.ge.f32.partialorder %v81, 59.0
    %vm7922 = vcmp.ge.f32.partialorder %v82, 59.0
    %vm7923 = vcmp.ge.f32.partialorder %v83, 59.0
    %vm7924 = vcmp.ge.f32.partialorder %v84, 59.0
    %vm7925 = vcmp.ge.f32.partialorder %v85, 59.0
    %vm7926 = vcmp.ge.f32.partialorder %v86, 59.0
    %vm7927 = vcmp.ge.f32.partialorder %v87, 59.0
    %vm7928 = vcmp.ge.f32.partialorder %v88, 59.0
    %vm7929 = vcmp.ge.f32.partialorder %v89, 59.0
    %vm7930 = vcmp.ge.f32.partialorder %v90, 59.0
    %vm7931 = vcmp.ge.f32.partialorder %v91, 59.0
    %vm7932 = vcmp.ge.f32.partialorder %v92, 59.0
    %vm7933 = vcmp.ge.f32.partialorder %v93, 59.0
    %vm7934 = vcmp.ge.f32.partialorder %v94, 59.0
    %vm7935 = vcmp.ge.f32.partialorder %v95, 59.0
    %vm7936 = vcmp.ge.f32.partialorder %v96, 59.0
    %vm7937 = vcmp.ge.f32.partialorder %v97, 59.0
    %vm7938 = vcmp.ge.f32.partialorder %v98, 59.0
    %vm7939 = vcmp.ge.f32.partialorder %v99, 59.0
    %vm7940 = vcmp.ge.f32.partialorder %v100, 59.0
    %vm7941 = vcmp.ge.f32.partialorder %v101, 59.0
    %vm7942 = vcmp.ge.f32.partialorder %v102, 59.0
    %vm7943 = vcmp.ge.f32.partialorder %v103, 59.0
    %vm7944 = vcmp.ge.f32.partialorder %v104, 59.0
    %vm7945 = vcmp.ge.f32.partialorder %v105, 59.0
    %vm7946 = vcmp.ge.f32.partialorder %v106, 59.0
    %vm7947 = vcmp.ge.f32.partialorder %v107, 59.0
    %vm7948 = vcmp.ge.f32.partialorder %v108, 59.0
    %vm7949 = vcmp.ge.f32.partialorder %v109, 59.0
    %vm7950 = vcmp.ge.f32.partialorder %v110, 59.0
    %vm7951 = vcmp.ge.f32.partialorder %v111, 59.0
    %7952 = vset.pattern.permute.xlu0 120
    %7953 = vperm.xlu0 %7952, %v72
    %v7954 = vpop.permute.xlu0 %7953
    %7955 = vset.pattern.permute.xlu0 120
    %7956 = vperm.xlu0 %7955, %v73
    %v7957 = vpop.permute.xlu0 %7956
    %7958 = vset.pattern.permute.xlu0 120
    %7959 = vperm.xlu0 %7958, %v74
    %v7960 = vpop.permute.xlu0 %7959
    %7961 = vset.pattern.permute.xlu0 120
    %7962 = vperm.xlu0 %7961, %v75
    %v7963 = vpop.permute.xlu0 %7962
    %7964 = vset.pattern.permute.xlu0 120
    %7965 = vperm.xlu0 %7964, %v76
    %v7966 = vpop.permute.xlu0 %7965
    %7967 = vset.pattern.permute.xlu0 120
    %7968 = vperm.xlu0 %7967, %v77
    %v7969 = vpop.permute.xlu0 %7968
    %7970 = vset.pattern.permute.xlu0 120
    %7971 = vperm.xlu0 %7970, %v78
    %v7972 = vpop.permute.xlu0 %7971
    %7973 = vset.pattern.permute.xlu0 120
    %7974 = vperm.xlu0 %7973, %v79
    %v7975 = vpop.permute.xlu0 %7974
    %v7976 = vsel %vm7920, %v7954, %v7720
    %v7977 = vsel %vm7921, %v7954, %v7721
    %v7978 = vsel %vm7922, %v7957, %v7722
    %v7979 = vsel %vm7923, %v7957, %v7723
    %v7980 = vsel %vm7924, %v7960, %v7724
    %v7981 = vsel %vm7925, %v7960, %v7725
    %v7982 = vsel %vm7926, %v7963, %v7726
    %v7983 = vsel %vm7927, %v7963, %v7727
    %v7984 = vsel %vm7928, %v7966, %v7728
    %v7985 = vsel %vm7929, %v7966, %v7729
    %v7986 = vsel %vm7930, %v7969, %v7730
    %v7987 = vsel %vm7931, %v7969, %v7731
    %v7988 = vsel %vm7932, %v7972, %v7732
    %v7989 = vsel %vm7933, %v7972, %v7733
    %v7990 = vsel %vm7934, %v7975, %v7734
    %v7991 = vsel %vm7935, %v7975, %v7735
    %v7992 = vsel %vm7936, %v7954, %v7736
    %v7993 = vsel %vm7937, %v7954, %v7737
    %v7994 = vsel %vm7938, %v7957, %v7738
    %v7995 = vsel %vm7939, %v7957, %v7739
    %v7996 = vsel %vm7940, %v7960, %v7740
    %v7997 = vsel %vm7941, %v7960, %v7741
    %v7998 = vsel %vm7942, %v7963, %v7742
    %v7999 = vsel %vm7943, %v7963, %v7743
    %v8000 = vsel %vm7944, %v7966, %v7744
    %v8001 = vsel %vm7945, %v7966, %v7745
    %v8002 = vsel %vm7946, %v7969, %v7746
    %v8003 = vsel %vm7947, %v7969, %v7747
    %v8004 = vsel %vm7948, %v7972, %v7748
    %v8005 = vsel %vm7949, %v7972, %v7749
    %v8006 = vsel %vm7950, %v7975, %v7750
    %v8007 = vsel %vm7951, %v7975, %v7751
    %8008 = vset.pattern.permute.xlu0 121
    %8009 = vperm.xlu0 %8008, %v72
    %v8010 = vpop.permute.xlu0 %8009
    %8011 = vset.pattern.permute.xlu0 121
    %8012 = vperm.xlu0 %8011, %v73
    %v8013 = vpop.permute.xlu0 %8012
    %8014 = vset.pattern.permute.xlu0 121
    %8015 = vperm.xlu0 %8014, %v74
    %v8016 = vpop.permute.xlu0 %8015
    %8017 = vset.pattern.permute.xlu0 121
    %8018 = vperm.xlu0 %8017, %v75
    %v8019 = vpop.permute.xlu0 %8018
    %8020 = vset.pattern.permute.xlu0 121
    %8021 = vperm.xlu0 %8020, %v76
    %v8022 = vpop.permute.xlu0 %8021
    %8023 = vset.pattern.permute.xlu0 121
    %8024 = vperm.xlu0 %8023, %v77
    %v8025 = vpop.permute.xlu0 %8024
    %8026 = vset.pattern.permute.xlu0 121
    %8027 = vperm.xlu0 %8026, %v78
    %v8028 = vpop.permute.xlu0 %8027
    %8029 = vset.pattern.permute.xlu0 121
    %8030 = vperm.xlu0 %8029, %v79
    %v8031 = vpop.permute.xlu0 %8030
    %v8032 = vsel %vm7920, %v8010, %v7776
    %v8033 = vsel %vm7921, %v8010, %v7777
    %v8034 = vsel %vm7922, %v8013, %v7778
    %v8035 = vsel %vm7923, %v8013, %v7779
    %v8036 = vsel %vm7924, %v8016, %v7780
    %v8037 = vsel %vm7925, %v8016, %v7781
    %v8038 = vsel %vm7926, %v8019, %v7782
    %v8039 = vsel %vm7927, %v8019, %v7783
    %v8040 = vsel %vm7928, %v8022, %v7784
    %v8041 = vsel %vm7929, %v8022, %v7785
    %v8042 = vsel %vm7930, %v8025, %v7786
    %v8043 = vsel %vm7931, %v8025, %v7787
    %v8044 = vsel %vm7932, %v8028, %v7788
    %v8045 = vsel %vm7933, %v8028, %v7789
    %v8046 = vsel %vm7934, %v8031, %v7790
    %v8047 = vsel %vm7935, %v8031, %v7791
    %v8048 = vsel %vm7936, %v8010, %v7792
    %v8049 = vsel %vm7937, %v8010, %v7793
    %v8050 = vsel %vm7938, %v8013, %v7794
    %v8051 = vsel %vm7939, %v8013, %v7795
    %v8052 = vsel %vm7940, %v8016, %v7796
    %v8053 = vsel %vm7941, %v8016, %v7797
    %v8054 = vsel %vm7942, %v8019, %v7798
    %v8055 = vsel %vm7943, %v8019, %v7799
    %v8056 = vsel %vm7944, %v8022, %v7800
    %v8057 = vsel %vm7945, %v8022, %v7801
    %v8058 = vsel %vm7946, %v8025, %v7802
    %v8059 = vsel %vm7947, %v8025, %v7803
    %v8060 = vsel %vm7948, %v8028, %v7804
    %v8061 = vsel %vm7949, %v8028, %v7805
    %v8062 = vsel %vm7950, %v8031, %v7806
    %v8063 = vsel %vm7951, %v8031, %v7807
    %8064 = vset.pattern.permute.xlu0 122
    %8065 = vperm.xlu0 %8064, %v72
    %v8066 = vpop.permute.xlu0 %8065
    %8067 = vset.pattern.permute.xlu0 122
    %8068 = vperm.xlu0 %8067, %v73
    %v8069 = vpop.permute.xlu0 %8068
    %8070 = vset.pattern.permute.xlu0 122
    %8071 = vperm.xlu0 %8070, %v74
    %v8072 = vpop.permute.xlu0 %8071
    %8073 = vset.pattern.permute.xlu0 122
    %8074 = vperm.xlu0 %8073, %v75
    %v8075 = vpop.permute.xlu0 %8074
    %8076 = vset.pattern.permute.xlu0 122
    %8077 = vperm.xlu0 %8076, %v76
    %v8078 = vpop.permute.xlu0 %8077
    %8079 = vset.pattern.permute.xlu0 122
    %8080 = vperm.xlu0 %8079, %v77
    %v8081 = vpop.permute.xlu0 %8080
    %8082 = vset.pattern.permute.xlu0 122
    %8083 = vperm.xlu0 %8082, %v78
    %v8084 = vpop.permute.xlu0 %8083
    %8085 = vset.pattern.permute.xlu0 122
    %8086 = vperm.xlu0 %8085, %v79
    %v8087 = vpop.permute.xlu0 %8086
    %v8088 = vsel %vm7920, %v8066, %v7832
    %v8089 = vsel %vm7921, %v8066, %v7833
    %v8090 = vsel %vm7922, %v8069, %v7834
    %v8091 = vsel %vm7923, %v8069, %v7835
    %v8092 = vsel %vm7924, %v8072, %v7836
    %v8093 = vsel %vm7925, %v8072, %v7837
    %v8094 = vsel %vm7926, %v8075, %v7838
    %v8095 = vsel %vm7927, %v8075, %v7839
    %v8096 = vsel %vm7928, %v8078, %v7840
    %v8097 = vsel %vm7929, %v8078, %v7841
    %v8098 = vsel %vm7930, %v8081, %v7842
    %v8099 = vsel %vm7931, %v8081, %v7843
    %v8100 = vsel %vm7932, %v8084, %v7844
    %v8101 = vsel %vm7933, %v8084, %v7845
    %v8102 = vsel %vm7934, %v8087, %v7846
    %v8103 = vsel %vm7935, %v8087, %v7847
    %v8104 = vsel %vm7936, %v8066, %v7848
    %v8105 = vsel %vm7937, %v8066, %v7849
    %v8106 = vsel %vm7938, %v8069, %v7850
    %v8107 = vsel %vm7939, %v8069, %v7851
    %v8108 = vsel %vm7940, %v8072, %v7852
    %v8109 = vsel %vm7941, %v8072, %v7853
    %v8110 = vsel %vm7942, %v8075, %v7854
    %v8111 = vsel %vm7943, %v8075, %v7855
    %v8112 = vsel %vm7944, %v8078, %v7856
    %v8113 = vsel %vm7945, %v8078, %v7857
    %v8114 = vsel %vm7946, %v8081, %v7858
    %v8115 = vsel %vm7947, %v8081, %v7859
    %v8116 = vsel %vm7948, %v8084, %v7860
    %v8117 = vsel %vm7949, %v8084, %v7861
    %v8118 = vsel %vm7950, %v8087, %v7862
    %v8119 = vsel %vm7951, %v8087, %v7863
    %8120 = vset.pattern.permute.xlu0 123
    %8121 = vperm.xlu0 %8120, %v72
    %v8122 = vpop.permute.xlu0 %8121
    %8123 = vset.pattern.permute.xlu0 123
    %8124 = vperm.xlu0 %8123, %v73
    %v8125 = vpop.permute.xlu0 %8124
    %8126 = vset.pattern.permute.xlu0 123
    %8127 = vperm.xlu0 %8126, %v74
    %v8128 = vpop.permute.xlu0 %8127
    %8129 = vset.pattern.permute.xlu0 123
    %8130 = vperm.xlu0 %8129, %v75
    %v8131 = vpop.permute.xlu0 %8130
    %8132 = vset.pattern.permute.xlu0 123
    %8133 = vperm.xlu0 %8132, %v76
    %v8134 = vpop.permute.xlu0 %8133
    %8135 = vset.pattern.permute.xlu0 123
    %8136 = vperm.xlu0 %8135, %v77
    %v8137 = vpop.permute.xlu0 %8136
    %8138 = vset.pattern.permute.xlu0 123
    %8139 = vperm.xlu0 %8138, %v78
    %v8140 = vpop.permute.xlu0 %8139
    %8141 = vset.pattern.permute.xlu0 123
    %8142 = vperm.xlu0 %8141, %v79
    %v8143 = vpop.permute.xlu0 %8142
    %v8144 = vsel %vm7920, %v8122, %v7888
    %v8145 = vsel %vm7921, %v8122, %v7889
    %v8146 = vsel %vm7922, %v8125, %v7890
    %v8147 = vsel %vm7923, %v8125, %v7891
    %v8148 = vsel %vm7924, %v8128, %v7892
    %v8149 = vsel %vm7925, %v8128, %v7893
    %v8150 = vsel %vm7926, %v8131, %v7894
    %v8151 = vsel %vm7927, %v8131, %v7895
    %v8152 = vsel %vm7928, %v8134, %v7896
    %v8153 = vsel %vm7929, %v8134, %v7897
    %v8154 = vsel %vm7930, %v8137, %v7898
    %v8155 = vsel %vm7931, %v8137, %v7899
    %v8156 = vsel %vm7932, %v8140, %v7900
    %v8157 = vsel %vm7933, %v8140, %v7901
    %v8158 = vsel %vm7934, %v8143, %v7902
    %v8159 = vsel %vm7935, %v8143, %v7903
    %v8160 = vsel %vm7936, %v8122, %v7904
    %v8161 = vsel %vm7937, %v8122, %v7905
    %v8162 = vsel %vm7938, %v8125, %v7906
    %v8163 = vsel %vm7939, %v8125, %v7907
    %v8164 = vsel %vm7940, %v8128, %v7908
    %v8165 = vsel %vm7941, %v8128, %v7909
    %v8166 = vsel %vm7942, %v8131, %v7910
    %v8167 = vsel %vm7943, %v8131, %v7911
    %v8168 = vsel %vm7944, %v8134, %v7912
    %v8169 = vsel %vm7945, %v8134, %v7913
    %v8170 = vsel %vm7946, %v8137, %v7914
    %v8171 = vsel %vm7947, %v8137, %v7915
    %v8172 = vsel %vm7948, %v8140, %v7916
    %v8173 = vsel %vm7949, %v8140, %v7917
    %v8174 = vsel %vm7950, %v8143, %v7918
    %v8175 = vsel %vm7951, %v8143, %v7919
    %v8176 = vsel %vm304, %v8032, %v7976
    %v8177 = vsel %vm305, %v8033, %v7977
    %v8178 = vsel %vm306, %v8034, %v7978
    %v8179 = vsel %vm307, %v8035, %v7979
    %v8180 = vsel %vm308, %v8036, %v7980
    %v8181 = vsel %vm309, %v8037, %v7981
    %v8182 = vsel %vm310, %v8038, %v7982
    %v8183 = vsel %vm311, %v8039, %v7983
    %v8184 = vsel %vm312, %v8040, %v7984
    %v8185 = vsel %vm313, %v8041, %v7985
    %v8186 = vsel %vm314, %v8042, %v7986
    %v8187 = vsel %vm315, %v8043, %v7987
    %v8188 = vsel %vm316, %v8044, %v7988
    %v8189 = vsel %vm317, %v8045, %v7989
    %v8190 = vsel %vm318, %v8046, %v7990
    %v8191 = vsel %vm319, %v8047, %v7991
    %v8192 = vsel %vm320, %v8048, %v7992
    %v8193 = vsel %vm321, %v8049, %v7993
    %v8194 = vsel %vm322, %v8050, %v7994
    %v8195 = vsel %vm323, %v8051, %v7995
    %v8196 = vsel %vm324, %v8052, %v7996
    %v8197 = vsel %vm325, %v8053, %v7997
    %v8198 = vsel %vm326, %v8054, %v7998
    %v8199 = vsel %vm327, %v8055, %v7999
    %v8200 = vsel %vm328, %v8056, %v8000
    %v8201 = vsel %vm329, %v8057, %v8001
    %v8202 = vsel %vm330, %v8058, %v8002
    %v8203 = vsel %vm331, %v8059, %v8003
    %v8204 = vsel %vm332, %v8060, %v8004
    %v8205 = vsel %vm333, %v8061, %v8005
    %v8206 = vsel %vm334, %v8062, %v8006
    %v8207 = vsel %vm335, %v8063, %v8007
    %v8208 = vsel %vm304, %v8144, %v8088
    %v8209 = vsel %vm305, %v8145, %v8089
    %v8210 = vsel %vm306, %v8146, %v8090
    %v8211 = vsel %vm307, %v8147, %v8091
    %v8212 = vsel %vm308, %v8148, %v8092
    %v8213 = vsel %vm309, %v8149, %v8093
    %v8214 = vsel %vm310, %v8150, %v8094
    %v8215 = vsel %vm311, %v8151, %v8095
    %v8216 = vsel %vm312, %v8152, %v8096
    %v8217 = vsel %vm313, %v8153, %v8097
    %v8218 = vsel %vm314, %v8154, %v8098
    %v8219 = vsel %vm315, %v8155, %v8099
    %v8220 = vsel %vm316, %v8156, %v8100
    %v8221 = vsel %vm317, %v8157, %v8101
    %v8222 = vsel %vm318, %v8158, %v8102
    %v8223 = vsel %vm319, %v8159, %v8103
    %v8224 = vsel %vm320, %v8160, %v8104
    %v8225 = vsel %vm321, %v8161, %v8105
    %v8226 = vsel %vm322, %v8162, %v8106
    %v8227 = vsel %vm323, %v8163, %v8107
    %v8228 = vsel %vm324, %v8164, %v8108
    %v8229 = vsel %vm325, %v8165, %v8109
    %v8230 = vsel %vm326, %v8166, %v8110
    %v8231 = vsel %vm327, %v8167, %v8111
    %v8232 = vsel %vm328, %v8168, %v8112
    %v8233 = vsel %vm329, %v8169, %v8113
    %v8234 = vsel %vm330, %v8170, %v8114
    %v8235 = vsel %vm331, %v8171, %v8115
    %v8236 = vsel %vm332, %v8172, %v8116
    %v8237 = vsel %vm333, %v8173, %v8117
    %v8238 = vsel %vm334, %v8174, %v8118
    %v8239 = vsel %vm335, %v8175, %v8119
    %v8240 = vsel %vm368, %v8208, %v8176
    %v8241 = vsel %vm369, %v8209, %v8177
    %v8242 = vsel %vm370, %v8210, %v8178
    %v8243 = vsel %vm371, %v8211, %v8179
    %v8244 = vsel %vm372, %v8212, %v8180
    %v8245 = vsel %vm373, %v8213, %v8181
    %v8246 = vsel %vm374, %v8214, %v8182
    %v8247 = vsel %vm375, %v8215, %v8183
    %v8248 = vsel %vm376, %v8216, %v8184
    %v8249 = vsel %vm377, %v8217, %v8185
    %v8250 = vsel %vm378, %v8218, %v8186
    %v8251 = vsel %vm379, %v8219, %v8187
    %v8252 = vsel %vm380, %v8220, %v8188
    %v8253 = vsel %vm381, %v8221, %v8189
    %v8254 = vsel %vm382, %v8222, %v8190
    %v8255 = vsel %vm383, %v8223, %v8191
    %v8256 = vsel %vm384, %v8224, %v8192
    %v8257 = vsel %vm385, %v8225, %v8193
    %v8258 = vsel %vm386, %v8226, %v8194
    %v8259 = vsel %vm387, %v8227, %v8195
    %v8260 = vsel %vm388, %v8228, %v8196
    %v8261 = vsel %vm389, %v8229, %v8197
    %v8262 = vsel %vm390, %v8230, %v8198
    %v8263 = vsel %vm391, %v8231, %v8199
    %v8264 = vsel %vm392, %v8232, %v8200
    %v8265 = vsel %vm393, %v8233, %v8201
    %v8266 = vsel %vm394, %v8234, %v8202
    %v8267 = vsel %vm395, %v8235, %v8203
    %v8268 = vsel %vm396, %v8236, %v8204
    %v8269 = vsel %vm397, %v8237, %v8205
    %v8270 = vsel %vm398, %v8238, %v8206
    %v8271 = vsel %vm399, %v8239, %v8207
    %v8272 = vand.u32 %v8240, 4294901760
    %v8273 = vand.u32 %v8241, 4294901760
    %v8274 = vand.u32 %v8242, 4294901760
    %v8275 = vand.u32 %v8243, 4294901760
    %v8276 = vand.u32 %v8244, 4294901760
    %v8277 = vand.u32 %v8245, 4294901760
    %v8278 = vand.u32 %v8246, 4294901760
    %v8279 = vand.u32 %v8247, 4294901760
    %v8280 = vand.u32 %v8248, 4294901760
    %v8281 = vand.u32 %v8249, 4294901760
    %v8282 = vand.u32 %v8250, 4294901760
    %v8283 = vand.u32 %v8251, 4294901760
    %v8284 = vand.u32 %v8252, 4294901760
    %v8285 = vand.u32 %v8253, 4294901760
    %v8286 = vand.u32 %v8254, 4294901760
    %v8287 = vand.u32 %v8255, 4294901760
    %v8288 = vand.u32 %v8256, 4294901760
    %v8289 = vand.u32 %v8257, 4294901760
    %v8290 = vand.u32 %v8258, 4294901760
    %v8291 = vand.u32 %v8259, 4294901760
    %v8292 = vand.u32 %v8260, 4294901760
    %v8293 = vand.u32 %v8261, 4294901760
    %v8294 = vand.u32 %v8262, 4294901760
    %v8295 = vand.u32 %v8263, 4294901760
    %v8296 = vand.u32 %v8264, 4294901760
    %v8297 = vand.u32 %v8265, 4294901760
    %v8298 = vand.u32 %v8266, 4294901760
    %v8299 = vand.u32 %v8267, 4294901760
    %v8300 = vand.u32 %v8268, 4294901760
    %v8301 = vand.u32 %v8269, 4294901760
    %v8302 = vand.u32 %v8270, 4294901760
    %v8303 = vand.u32 %v8271, 4294901760
    %v8336 = vshll.u32 %v8240, 16
    %v8337 = vshll.u32 %v8241, 16
    %v8338 = vshll.u32 %v8242, 16
    %v8339 = vshll.u32 %v8243, 16
    %v8340 = vshll.u32 %v8244, 16
    %v8341 = vshll.u32 %v8245, 16
    %v8342 = vshll.u32 %v8246, 16
    %v8343 = vshll.u32 %v8247, 16
    %v8344 = vshll.u32 %v8248, 16
    %v8345 = vshll.u32 %v8249, 16
    %v8346 = vshll.u32 %v8250, 16
    %v8347 = vshll.u32 %v8251, 16
    %v8348 = vshll.u32 %v8252, 16
    %v8349 = vshll.u32 %v8253, 16
    %v8350 = vshll.u32 %v8254, 16
    %v8351 = vshll.u32 %v8255, 16
    %v8352 = vshll.u32 %v8256, 16
    %v8353 = vshll.u32 %v8257, 16
    %v8354 = vshll.u32 %v8258, 16
    %v8355 = vshll.u32 %v8259, 16
    %v8356 = vshll.u32 %v8260, 16
    %v8357 = vshll.u32 %v8261, 16
    %v8358 = vshll.u32 %v8262, 16
    %v8359 = vshll.u32 %v8263, 16
    %v8360 = vshll.u32 %v8264, 16
    %v8361 = vshll.u32 %v8265, 16
    %v8362 = vshll.u32 %v8266, 16
    %v8363 = vshll.u32 %v8267, 16
    %v8364 = vshll.u32 %v8268, 16
    %v8365 = vshll.u32 %v8269, 16
    %v8366 = vshll.u32 %v8270, 16
    %v8367 = vshll.u32 %v8271, 16
    %v8400 = vmul.f32 %v40, %v8272
    %v8401 = vmul.f32 %v41, %v8273
    %v8402 = vmul.f32 %v42, %v8274
    %v8403 = vmul.f32 %v43, %v8275
    %v8404 = vmul.f32 %v44, %v8276
    %v8405 = vmul.f32 %v45, %v8277
    %v8406 = vmul.f32 %v46, %v8278
    %v8407 = vmul.f32 %v47, %v8279
    %v8408 = vmul.f32 %v48, %v8280
    %v8409 = vmul.f32 %v49, %v8281
    %v8410 = vmul.f32 %v50, %v8282
    %v8411 = vmul.f32 %v51, %v8283
    %v8412 = vmul.f32 %v52, %v8284
    %v8413 = vmul.f32 %v53, %v8285
    %v8414 = vmul.f32 %v54, %v8286
    %v8415 = vmul.f32 %v55, %v8287
    %v8416 = vmul.f32 %v56, %v8288
    %v8417 = vmul.f32 %v57, %v8289
    %v8418 = vmul.f32 %v58, %v8290
    %v8419 = vmul.f32 %v59, %v8291
    %v8420 = vmul.f32 %v60, %v8292
    %v8421 = vmul.f32 %v61, %v8293
    %v8422 = vmul.f32 %v62, %v8294
    %v8423 = vmul.f32 %v63, %v8295
    %v8424 = vmul.f32 %v64, %v8296
    %v8425 = vmul.f32 %v65, %v8297
    %v8426 = vmul.f32 %v66, %v8298
    %v8427 = vmul.f32 %v67, %v8299
    %v8428 = vmul.f32 %v68, %v8300
    %v8429 = vmul.f32 %v69, %v8301
    %v8430 = vmul.f32 %v70, %v8302
    %v8431 = vmul.f32 %v71, %v8303
    %v8432 = vadd.f32 %v8400, %v8336
    %v8433 = vadd.f32 %v8401, %v8337
    %v8434 = vadd.f32 %v8402, %v8338
    %v8435 = vadd.f32 %v8403, %v8339
    %v8436 = vadd.f32 %v8404, %v8340
    %v8437 = vadd.f32 %v8405, %v8341
    %v8438 = vadd.f32 %v8406, %v8342
    %v8439 = vadd.f32 %v8407, %v8343
    %v8440 = vadd.f32 %v8408, %v8344
    %v8441 = vadd.f32 %v8409, %v8345
    %v8442 = vadd.f32 %v8410, %v8346
    %v8443 = vadd.f32 %v8411, %v8347
    %v8444 = vadd.f32 %v8412, %v8348
    %v8445 = vadd.f32 %v8413, %v8349
    %v8446 = vadd.f32 %v8414, %v8350
    %v8447 = vadd.f32 %v8415, %v8351
    %v8448 = vadd.f32 %v8416, %v8352
    %v8449 = vadd.f32 %v8417, %v8353
    %v8450 = vadd.f32 %v8418, %v8354
    %v8451 = vadd.f32 %v8419, %v8355
    %v8452 = vadd.f32 %v8420, %v8356
    %v8453 = vadd.f32 %v8421, %v8357
    %v8454 = vadd.f32 %v8422, %v8358
    %v8455 = vadd.f32 %v8423, %v8359
    %v8456 = vadd.f32 %v8424, %v8360
    %v8457 = vadd.f32 %v8425, %v8361
    %v8458 = vadd.f32 %v8426, %v8362
    %v8459 = vadd.f32 %v8427, %v8363
    %v8460 = vadd.f32 %v8428, %v8364
    %v8461 = vadd.f32 %v8429, %v8365
    %v8462 = vadd.f32 %v8430, %v8366
    %v8463 = vadd.f32 %v8431, %v8367
    %8464 = vst [vmem:[#allocation7] sm:$0xff] %v8432
    %8465 = vst [vmem:[#allocation7 + $0x8] sm:$0xff] %v8433
    %8466 = vst [vmem:[#allocation7 + $0x10] sm:$0xff] %v8434
    %8467 = vst [vmem:[#allocation7 + $0x18] sm:$0xff] %v8435
    %8468 = vst [vmem:[#allocation7 + $0x20] sm:$0xff] %v8436
    %8469 = vst [vmem:[#allocation7 + $0x28] sm:$0xff] %v8437
    %8470 = vst [vmem:[#allocation7 + $0x30] sm:$0xff] %v8438
    %8471 = vst [vmem:[#allocation7 + $0x38] sm:$0xff] %v8439
    %8472 = vst [vmem:[#allocation7 + $0x40] sm:$0xff] %v8440
    %8473 = vst [vmem:[#allocation7 + $0x48] sm:$0xff] %v8441
    %8474 = vst [vmem:[#allocation7 + $0x50] sm:$0xff] %v8442
    %8475 = vst [vmem:[#allocation7 + $0x58] sm:$0xff] %v8443
    %8476 = vst [vmem:[#allocation7 + $0x60] sm:$0xff] %v8444
    %8477 = vst [vmem:[#allocation7 + $0x68] sm:$0xff] %v8445
    %8478 = vst [vmem:[#allocation7 + $0x70] sm:$0xff] %v8446
    %8479 = vst [vmem:[#allocation7 + $0x78] sm:$0xff] %v8447
    %8480 = vst [vmem:[#allocation7 + $0x80] sm:$0xff] %v8448
    %8481 = vst [vmem:[#allocation7 + $0x88] sm:$0xff] %v8449
    %8482 = vst [vmem:[#allocation7 + $0x90] sm:$0xff] %v8450
    %8483 = vst [vmem:[#allocation7 + $0x98] sm:$0xff] %v8451
    %8484 = vst [vmem:[#allocation7 + $0xa0] sm:$0xff] %v8452
    %8485 = vst [vmem:[#allocation7 + $0xa8] sm:$0xff] %v8453
    %8486 = vst [vmem:[#allocation7 + $0xb0] sm:$0xff] %v8454
    %8487 = vst [vmem:[#allocation7 + $0xb8] sm:$0xff] %v8455
    %8488 = vst [vmem:[#allocation7 + $0xc0] sm:$0xff] %v8456
    %8489 = vst [vmem:[#allocation7 + $0xc8] sm:$0xff] %v8457
    %8490 = vst [vmem:[#allocation7 + $0xd0] sm:$0xff] %v8458
    %8491 = vst [vmem:[#allocation7 + $0xd8] sm:$0xff] %v8459
    %8492 = vst [vmem:[#allocation7 + $0xe0] sm:$0xff] %v8460
    %8493 = vst [vmem:[#allocation7 + $0xe8] sm:$0xff] %v8461
    %8494 = vst [vmem:[#allocation7 + $0xf0] sm:$0xff] %v8462
    %8495 = vst [vmem:[#allocation7 + $0xf8] sm:$0xff] %v8463
    // Predicated region
    $region18: #{tpu_custom_call.1} parent=1 // pred_check
      _
    $region19: #{tpu_custom_call.1} parent=1 // pred_check_branch
      %8497 = sbr.rel (0) target = $region21
    $region20: #{tpu_custom_call.1} parent=1 // pred_region
      %s8499 = ssub.s32 4096, 4096
      %8500 = vsyncadd [#allocation4], %s8499
      %s8501 = sshll.u32 [#allocation7], 4
      %s8502 = int_to_ptr.vmem [resolvable:$true] %s8501
      %8507 = dma.vmem_to_hbm [thread:$0]  %s8502, 4096, %s2, [#allocation4], 256, 256, 16
    $region21: #{tpu_custom_call.1} parent=1 // pred_fallthru
      _
    // Predicated region
    $region22: #{tpu_custom_call.1} parent=1 // pred_check
      _
    $region23: #{tpu_custom_call.1} parent=1 // pred_check_branch
      %8509 = sbr.rel (0) target = $region25
    $region24: #{tpu_custom_call.1} parent=1 // pred_region
      %8510 = dma.done [#allocation4], 4096
    $region25: #{tpu_custom_call.1} parent=1 // pred_fallthru
      _
    %8511 = vsyncpa [#allocation3], 1
    %8512 = vsyncpa [#allocation6], 1
    %8513 = vsyncpa [#allocation4], 1

</llo_original>
